<compile_context>
chip_gen: v7x
topology: tpu7x:2x2x1
jax: 0.10.0
libtpu: 0.0.40
codegen_flags: <defaults>
</compile_context>

<pallas_src>
import functools

import jax
import jax.numpy as jnp
from jax.experimental import pallas as pl
from jax.experimental.pallas import tpu as pltpu


# ---------------------------------------------------------------------------
# Fused encoder+decoder kernel (single invocation, no grid)
# ---------------------------------------------------------------------------

def _seq2seq_kernel(tf_ref,                                   # SMEM (T,) int32
                    src_emb_ref, tgt_emb_ref, emb_dec_ref,
                    enc_w_ref, enc_b_ref, dec_w_ref, dec_b_ref,
                    fcw_ref, fcb_ref,
                    out_ref,                                  # (T, B, V) f32
                    xh_sc, c_sc, pred_sc):
    batch, e_plus_h = xh_sc.shape
    embed = src_emb_ref.shape[-1]
    hidden = e_plus_h - embed
    vocab = out_ref.shape[-1]
    src_len = src_emb_ref.shape[0]
    n_dec = out_ref.shape[0] - 1                              # tgt_len - 1 steps

    def lstm_step(w_ref, b_ref):
        # Fused single gate matmul over the resident [x, h] scratch.
        # bf16 MXU inputs, f32 accumulation; gate order i, f, g, o (PyTorch).
        gates = (jnp.dot(xh_sc[...].astype(jnp.bfloat16), w_ref[...],
                         preferred_element_type=jnp.float32)
                 + b_ref[...])                                # (B, 4H) f32
        i_g = jax.nn.sigmoid(gates[:, 0 * hidden:1 * hidden])
        f_g = jax.nn.sigmoid(gates[:, 1 * hidden:2 * hidden])
        g_g = jnp.tanh(gates[:, 2 * hidden:3 * hidden])
        o_g = jax.nn.sigmoid(gates[:, 3 * hidden:4 * hidden])
        c_new = f_g * c_sc[...] + i_g * g_g
        h_new = o_g * jnp.tanh(c_new)
        xh_sc[:, embed:] = h_new                              # h lives in xh scratch
        c_sc[...] = c_new
        return h_new

    # ---- init state + outputs[0] == 0 (matches torch.zeros of row 0) ----
    xh_sc[:, embed:] = jnp.zeros((batch, hidden), jnp.float32)
    c_sc[...] = jnp.zeros_like(c_sc)
    pred_sc[...] = jnp.zeros_like(pred_sc)
    out_ref[0] = jnp.zeros((batch, vocab), jnp.float32)

    # ---- encoder recurrence: all src_len steps in-kernel ----
    def enc_body(t, carry):
        xh_sc[:, :embed] = src_emb_ref[t]
        lstm_step(enc_w_ref, enc_b_ref)
        return carry

    jax.lax.fori_loop(0, src_len, enc_body, 0, unroll=True)

    # ---- decoder recurrence: all tgt_len-1 steps in-kernel ----
    # h/c carry straight over from the encoder via the VMEM scratches.
    def dec_body(i, carry):
        # Input token: teacher token (pre-embedded) or previous prediction.
        use_teacher = jnp.logical_or(i == 0, tf_ref[i] != 0)

        @pl.when(use_teacher)
        def _():
            xh_sc[:, :embed] = tgt_emb_ref[i]

        @pl.when(jnp.logical_not(use_teacher))
        def _():
            xh_sc[:, :embed] = pred_sc[...]

        h_new = lstm_step(dec_w_ref, dec_b_ref)
        logits = (jnp.dot(h_new.astype(jnp.bfloat16), fcw_ref[...],
                          preferred_element_type=jnp.float32)
                  + fcb_ref[...])                             # (B, V) f32
        out_ref[i + 1] = logits

        # Only build the predicted-token embedding if the NEXT step uses it.
        # (tf_ref has length T = n_dec + 1, so tf_ref[i + 1] is always in-bounds.)
        next_needs_pred = jnp.logical_and(i + 1 < n_dec, tf_ref[i + 1] == 0)

        @pl.when(next_needs_pred)
        def _():
            # first-occurrence argmax -> one-hot -> MXU "gather" from emb table
            col = jax.lax.broadcasted_iota(jnp.int32, logits.shape, 1)    # (B, V)
            m = jnp.max(logits, axis=-1, keepdims=True)                   # (B, 1)
            idx = jnp.min(jnp.where(logits == m, col, vocab),
                          axis=-1, keepdims=True)
            onehot = (col == idx).astype(jnp.bfloat16)                    # (B, V)
            pred_sc[...] = jnp.dot(onehot, emb_dec_ref[...],
                                   preferred_element_type=jnp.float32)    # (B, E)

        return carry

    jax.lax.fori_loop(0, n_dec, dec_body, 0, unroll=True)


def seq2seq_pallas(tf_mask, src_emb, tgt_emb, emb_dec_bf16,
                   enc_w, enc_b, dec_w, dec_b, fc_w, fc_b):
    """Runs the full encoder+decoder recurrence in one pallas_call.

    Returns outputs of shape (tgt_len, B, V); outputs[0] == 0.
    """
    src_len, batch, embed = src_emb.shape
    tgt_len = tgt_emb.shape[0]
    hidden = enc_w.shape[1] // 4
    vocab = fc_w.shape[1]

    vmem = pl.BlockSpec(memory_space=pltpu.MemorySpace.VMEM)
    smem = pl.BlockSpec(memory_space=pltpu.MemorySpace.SMEM)

    return pl.pallas_call(
        _seq2seq_kernel,
        out_shape=jax.ShapeDtypeStruct((tgt_len, batch, vocab), jnp.float32),
        in_specs=[smem,                 # tf_mask
                  vmem, vmem, vmem,     # src_emb, tgt_emb, emb_dec
                  vmem, vmem,           # enc_w, enc_b
                  vmem, vmem,           # dec_w, dec_b
                  vmem, vmem],          # fc_w, fc_b
        out_specs=vmem,
        scratch_shapes=[pltpu.VMEM((batch, embed + hidden), jnp.float32),  # [x, h]
                        pltpu.VMEM((batch, hidden), jnp.float32),          # c
                        pltpu.VMEM((batch, embed), jnp.float32)],          # pred emb
    )(tf_mask, src_emb, tgt_emb, emb_dec_bf16,
      enc_w, enc_b, dec_w, dec_b, fc_w, fc_b)


# ---------------------------------------------------------------------------
# Parameters (deterministic init) and Seq2Seq forward
# ---------------------------------------------------------------------------

def init_params(key, vocab_size, embed_dim, hidden_dim):
    keys = jax.random.split(key, 10)
    s = 0.1

    def rn(k, shape):
        return (s * jax.random.normal(k, shape)).astype(jnp.float32)

    return {
        # encoder (single summed bias == PyTorch's bias_ih + bias_hh)
        "emb_enc": rn(keys[0], (vocab_size, embed_dim)),
        "enc_w_ih": rn(keys[1], (embed_dim, 4 * hidden_dim)),
        "enc_w_hh": rn(keys[2], (hidden_dim, 4 * hidden_dim)),
        "enc_b":    rn(keys[3], (1, 4 * hidden_dim)),
        # decoder
        "emb_dec": rn(keys[4], (vocab_size, embed_dim)),
        "dec_w_ih": rn(keys[5], (embed_dim, 4 * hidden_dim)),
        "dec_w_hh": rn(keys[6], (hidden_dim, 4 * hidden_dim)),
        "dec_b":    rn(keys[7], (1, 4 * hidden_dim)),
        # output projection
        "fc_w": rn(keys[8], (hidden_dim, vocab_size)),
        "fc_b": rn(keys[9], (1, vocab_size)),
    }


def seq2seq_forward(params, source, target, tf_key, teacher_force_ratio=0.5):
    """source:(src_len,B) int32, target:(tgt_len,B) int32
       -> outputs:(tgt_len,B,vocab) float32, outputs[0] == 0 (as in reference)."""
    batch = source.shape[1]
    tgt_len = target.shape[0]
    hidden = params["enc_w_hh"].shape[0]
    vocab = params["fc_w"].shape[1]

    # Deterministic stand-in for python-level random.random() per time step.
    # TODO(synk): python random.random() per step has no in-graph equivalent.
    u = jax.random.uniform(tf_key, (tgt_len,))
    tf_mask = (u < teacher_force_ratio).astype(jnp.int32)

    # Fuse the two gate matmuls: [x, h] @ [w_ih; w_hh] + b.  Weights in bf16
    # (MXU inputs); biases pre-broadcast so the per-step add is a plain vadd.
    enc_w = jnp.concatenate([params["enc_w_ih"], params["enc_w_hh"]],
                            axis=0).astype(jnp.bfloat16)
    dec_w = jnp.concatenate([params["dec_w_ih"], params["dec_w_hh"]],
                            axis=0).astype(jnp.bfloat16)
    fc_w = params["fc_w"].astype(jnp.bfloat16)
    emb_dec_bf16 = params["emb_dec"].astype(jnp.bfloat16)
    enc_b = jnp.broadcast_to(params["enc_b"], (batch, 4 * hidden))
    dec_b = jnp.broadcast_to(params["dec_b"], (batch, 4 * hidden))
    fc_b = jnp.broadcast_to(params["fc_b"], (batch, vocab))

    # Token embedding lookups (integer gather) stay in XLA outside the kernel.
    src_emb = jnp.take(params["emb_enc"], source, axis=0)          # (S, B, E)
    tgt_emb = jnp.take(params["emb_dec"], target, axis=0)          # (T, B, E)

    return seq2seq_pallas(tf_mask, src_emb, tgt_emb, emb_dec_bf16,
                          enc_w, enc_b, dec_w, dec_b, fc_w, fc_b)


# ---------------------------------------------------------------------------
# Main
# ---------------------------------------------------------------------------

if __name__ == "__main__":
    # Lane-dense sizes: multiples of 128 on feature/vocab dims, 8 on batch.
    # (For throughput work, raise BATCH — B=8 fills only 8 MXU rows.)
    VOCAB = 128
    EMBED = 128
    HIDDEN = 128
    BATCH = 8
    SRC_LEN = 8
    TGT_LEN = 8

    root = jax.random.PRNGKey(0)
    k_params, k_src, k_tgt, k_tf = jax.random.split(root, 4)

    params = init_params(k_params, VOCAB, EMBED, HIDDEN)

    source = jax.random.randint(k_src, (SRC_LEN, BATCH), 0, VOCAB, jnp.int32)
    target = jax.random.randint(k_tgt, (TGT_LEN, BATCH), 0, VOCAB, jnp.int32)

    fwd = jax.jit(functools.partial(seq2seq_forward, teacher_force_ratio=0.5))
    outputs = fwd(params, source, target, k_tf)
    outputs = jax.block_until_ready(outputs)

    assert outputs.shape == (TGT_LEN, BATCH, VOCAB)
    assert bool(jnp.all(jnp.isfinite(outputs)))
    assert bool(jnp.all(outputs[0] == 0.0))  # matches torch.zeros init of row 0

    print("KERNEL_OK")
</pallas_src>

<mosaic_0001>
module attributes {stable_mosaic.version = 11 : i64} {
  func.func @_seq2seq_kernel(%arg0: memref<8xi32, #tpu.memory_space<smem>>, %arg1: memref<8x8x128xf32, #tpu.memory_space<vmem>>, %arg2: memref<8x8x128xf32, #tpu.memory_space<vmem>>, %arg3: memref<128x128xbf16, #tpu.memory_space<vmem>>, %arg4: memref<256x512xbf16, #tpu.memory_space<vmem>>, %arg5: memref<8x512xf32, #tpu.memory_space<vmem>>, %arg6: memref<256x512xbf16, #tpu.memory_space<vmem>>, %arg7: memref<8x512xf32, #tpu.memory_space<vmem>>, %arg8: memref<128x128xbf16, #tpu.memory_space<vmem>>, %arg9: memref<8x128xf32, #tpu.memory_space<vmem>>, %arg10: memref<8x8x128xf32, #tpu.memory_space<vmem>>, %arg11: memref<8x256xf32, #tpu.memory_space<vmem>>, %arg12: memref<8x128xf32, #tpu.memory_space<vmem>>, %arg13: memref<8x128xf32, #tpu.memory_space<vmem>>) attributes {dimension_semantics = [], scalar_prefetch = 0 : i64, scratch_operands = 3 : i64, tpu.core_type = #tpu.core_type<tc>} {
    %cst = arith.constant 0.000000e+00 : f32
    %0 = vector.broadcast %cst : f32 to vector<8x128xf32>
    %c0 = arith.constant 0 : index
    %c128 = arith.constant 128 : index
    %1 = vector.load %arg11[%c0, %c128] : memref<8x256xf32, #tpu.memory_space<vmem>>, vector<8x128xf32>
    tpu.vector_store %arg11[%c0, %c128], %0 {strides = array<i32>} : memref<8x256xf32, #tpu.memory_space<vmem>>, vector<8x128xf32>,
    %cst_0 = arith.constant 0.000000e+00 : f32
    %2 = vector.broadcast %cst_0 : f32 to vector<8x128xf32>
    %c0_1 = arith.constant 0 : index
    %c0_2 = arith.constant 0 : index
    %3 = vector.load %arg12[%c0_1, %c0_2] : memref<8x128xf32, #tpu.memory_space<vmem>>, vector<8x128xf32>
    tpu.vector_store %arg12[%c0_1, %c0_2], %2 {strides = array<i32>} : memref<8x128xf32, #tpu.memory_space<vmem>>, vector<8x128xf32>,
    %cst_3 = arith.constant 0.000000e+00 : f32
    %4 = vector.broadcast %cst_3 : f32 to vector<8x128xf32>
    %c0_4 = arith.constant 0 : index
    %c0_5 = arith.constant 0 : index
    %5 = vector.load %arg13[%c0_4, %c0_5] : memref<8x128xf32, #tpu.memory_space<vmem>>, vector<8x128xf32>
    tpu.vector_store %arg13[%c0_4, %c0_5], %4 {strides = array<i32>} : memref<8x128xf32, #tpu.memory_space<vmem>>, vector<8x128xf32>,
    %cst_6 = arith.constant 0.000000e+00 : f32
    %6 = vector.broadcast %cst_6 : f32 to vector<8x128xf32>
    %c0_7 = arith.constant 0 : index
    %c0_8 = arith.constant 0 : index
    %c0_9 = arith.constant 0 : index
    %7 = vector.load %arg10[%c0_7, %c0_8, %c0_9] : memref<8x8x128xf32, #tpu.memory_space<vmem>>, vector<1x8x128xf32>
    %8 = vector.shape_cast %7 : vector<1x8x128xf32> to vector<8x128xf32>
    %9 = vector.shape_cast %6 : vector<8x128xf32> to vector<1x8x128xf32>
    tpu.vector_store %arg10[%c0_7, %c0_8, %c0_9], %9 {strides = array<i32>} : memref<8x8x128xf32, #tpu.memory_space<vmem>>, vector<1x8x128xf32>,
    %c0_i32 = arith.constant 0 : i32
    %10 = arith.index_cast %c0_i32 : i32 to index
    %c0_10 = arith.constant 0 : index
    %c0_11 = arith.constant 0 : index
    %11 = vector.load %arg1[%10, %c0_10, %c0_11] : memref<8x8x128xf32, #tpu.memory_space<vmem>>, vector<1x8x128xf32>
    %12 = vector.shape_cast %11 : vector<1x8x128xf32> to vector<8x128xf32>
    %c0_12 = arith.constant 0 : index
    %c0_13 = arith.constant 0 : index
    %13 = vector.load %arg11[%c0_12, %c0_13] : memref<8x256xf32, #tpu.memory_space<vmem>>, vector<8x128xf32>
    tpu.vector_store %arg11[%c0_12, %c0_13], %12 {strides = array<i32>} : memref<8x256xf32, #tpu.memory_space<vmem>>, vector<8x128xf32>,
    %c0_14 = arith.constant 0 : index
    %c0_15 = arith.constant 0 : index
    %14 = vector.load %arg11[%c0_14, %c0_15] : memref<8x256xf32, #tpu.memory_space<vmem>>, vector<8x256xf32>
    %15 = arith.truncf %14 : vector<8x256xf32> to vector<8x256xbf16>
    %c0_16 = arith.constant 0 : index
    %c0_17 = arith.constant 0 : index
    %16 = vector.load %arg4[%c0_16, %c0_17] : memref<256x512xbf16, #tpu.memory_space<vmem>>, vector<256x512xbf16>
    %cst_18 = arith.constant dense<0.000000e+00> : vector<8x512xf32>
    %17 = tpu.matmul %15, %16, %cst_18 {dimension_numbers = #tpu.dot_dimension_numbers<[1], [0], [0], [1], [0, 0, 1, 1], [], []>} : vector<8x256xbf16>, vector<256x512xbf16>, vector<8x512xf32> -> vector<8x512xf32>
    %c0_19 = arith.constant 0 : index
    %c0_20 = arith.constant 0 : index
    %18 = vector.load %arg5[%c0_19, %c0_20] : memref<8x512xf32, #tpu.memory_space<vmem>>, vector<8x512xf32>
    %19 = arith.addf %17, %18 : vector<8x512xf32>
    %20 = vector.extract_strided_slice %19 {offsets = [0, 0], sizes = [8, 128], strides = [1, 1]} : vector<8x512xf32> to vector<8x128xf32>
    %21 = arith.negf %20 : vector<8x128xf32>
    %22 = math.exp %21 : vector<8x128xf32>
    %cst_21 = arith.constant 1.000000e+00 : f32
    %23 = vector.broadcast %cst_21 : f32 to vector<8x128xf32>
    %24 = arith.addf %23, %22 : vector<8x128xf32>
    %25 = arith.divf %23, %24 : vector<8x128xf32>
    %26 = vector.extract_strided_slice %19 {offsets = [0, 128], sizes = [8, 128], strides = [1, 1]} : vector<8x512xf32> to vector<8x128xf32>
    %27 = arith.negf %26 : vector<8x128xf32>
    %28 = math.exp %27 : vector<8x128xf32>
    %cst_22 = arith.constant 1.000000e+00 : f32
    %29 = vector.broadcast %cst_22 : f32 to vector<8x128xf32>
    %30 = arith.addf %29, %28 : vector<8x128xf32>
    %31 = arith.divf %29, %30 : vector<8x128xf32>
    %32 = vector.extract_strided_slice %19 {offsets = [0, 256], sizes = [8, 128], strides = [1, 1]} : vector<8x512xf32> to vector<8x128xf32>
    %33 = math.tanh %32 : vector<8x128xf32>
    %34 = vector.extract_strided_slice %19 {offsets = [0, 384], sizes = [8, 128], strides = [1, 1]} : vector<8x512xf32> to vector<8x128xf32>
    %35 = arith.negf %34 : vector<8x128xf32>
    %36 = math.exp %35 : vector<8x128xf32>
    %cst_23 = arith.constant 1.000000e+00 : f32
    %37 = vector.broadcast %cst_23 : f32 to vector<8x128xf32>
    %38 = arith.addf %37, %36 : vector<8x128xf32>
    %39 = arith.divf %37, %38 : vector<8x128xf32>
    %c0_24 = arith.constant 0 : index
    %c0_25 = arith.constant 0 : index
    %40 = vector.load %arg12[%c0_24, %c0_25] : memref<8x128xf32, #tpu.memory_space<vmem>>, vector<8x128xf32>
    %41 = arith.mulf %31, %40 : vector<8x128xf32>
    %42 = arith.mulf %25, %33 : vector<8x128xf32>
    %43 = arith.addf %41, %42 : vector<8x128xf32>
    %44 = math.tanh %43 : vector<8x128xf32>
    %45 = arith.mulf %39, %44 : vector<8x128xf32>
    %c0_26 = arith.constant 0 : index
    %c128_27 = arith.constant 128 : index
    %46 = vector.load %arg11[%c0_26, %c128_27] : memref<8x256xf32, #tpu.memory_space<vmem>>, vector<8x128xf32>
    tpu.vector_store %arg11[%c0_26, %c128_27], %45 {strides = array<i32>} : memref<8x256xf32, #tpu.memory_space<vmem>>, vector<8x128xf32>,
    %c0_28 = arith.constant 0 : index
    %c0_29 = arith.constant 0 : index
    %47 = vector.load %arg12[%c0_28, %c0_29] : memref<8x128xf32, #tpu.memory_space<vmem>>, vector<8x128xf32>
    tpu.vector_store %arg12[%c0_28, %c0_29], %43 {strides = array<i32>} : memref<8x128xf32, #tpu.memory_space<vmem>>, vector<8x128xf32>,
    %c1_i32 = arith.constant 1 : i32
    %48 = arith.index_cast %c1_i32 : i32 to index
    %c0_30 = arith.constant 0 : index
    %c0_31 = arith.constant 0 : index
    %49 = vector.load %arg1[%48, %c0_30, %c0_31] : memref<8x8x128xf32, #tpu.memory_space<vmem>>, vector<1x8x128xf32>
    %50 = vector.shape_cast %49 : vector<1x8x128xf32> to vector<8x128xf32>
    %c0_32 = arith.constant 0 : index
    %c0_33 = arith.constant 0 : index
    %51 = vector.load %arg11[%c0_32, %c0_33] : memref<8x256xf32, #tpu.memory_space<vmem>>, vector<8x128xf32>
    tpu.vector_store %arg11[%c0_32, %c0_33], %50 {strides = array<i32>} : memref<8x256xf32, #tpu.memory_space<vmem>>, vector<8x128xf32>,
    %c0_34 = arith.constant 0 : index
    %c0_35 = arith.constant 0 : index
    %52 = vector.load %arg11[%c0_34, %c0_35] : memref<8x256xf32, #tpu.memory_space<vmem>>, vector<8x256xf32>
    %53 = arith.truncf %52 : vector<8x256xf32> to vector<8x256xbf16>
    %c0_36 = arith.constant 0 : index
    %c0_37 = arith.constant 0 : index
    %54 = vector.load %arg4[%c0_36, %c0_37] : memref<256x512xbf16, #tpu.memory_space<vmem>>, vector<256x512xbf16>
    %cst_38 = arith.constant dense<0.000000e+00> : vector<8x512xf32>
    %55 = tpu.matmul %53, %54, %cst_38 {dimension_numbers = #tpu.dot_dimension_numbers<[1], [0], [0], [1], [0, 0, 1, 1], [], []>} : vector<8x256xbf16>, vector<256x512xbf16>, vector<8x512xf32> -> vector<8x512xf32>
    %c0_39 = arith.constant 0 : index
    %c0_40 = arith.constant 0 : index
    %56 = vector.load %arg5[%c0_39, %c0_40] : memref<8x512xf32, #tpu.memory_space<vmem>>, vector<8x512xf32>
    %57 = arith.addf %55, %56 : vector<8x512xf32>
    %58 = vector.extract_strided_slice %57 {offsets = [0, 0], sizes = [8, 128], strides = [1, 1]} : vector<8x512xf32> to vector<8x128xf32>
    %59 = arith.negf %58 : vector<8x128xf32>
    %60 = math.exp %59 : vector<8x128xf32>
    %cst_41 = arith.constant 1.000000e+00 : f32
    %61 = vector.broadcast %cst_41 : f32 to vector<8x128xf32>
    %62 = arith.addf %61, %60 : vector<8x128xf32>
    %63 = arith.divf %61, %62 : vector<8x128xf32>
    %64 = vector.extract_strided_slice %57 {offsets = [0, 128], sizes = [8, 128], strides = [1, 1]} : vector<8x512xf32> to vector<8x128xf32>
    %65 = arith.negf %64 : vector<8x128xf32>
    %66 = math.exp %65 : vector<8x128xf32>
    %cst_42 = arith.constant 1.000000e+00 : f32
    %67 = vector.broadcast %cst_42 : f32 to vector<8x128xf32>
    %68 = arith.addf %67, %66 : vector<8x128xf32>
    %69 = arith.divf %67, %68 : vector<8x128xf32>
    %70 = vector.extract_strided_slice %57 {offsets = [0, 256], sizes = [8, 128], strides = [1, 1]} : vector<8x512xf32> to vector<8x128xf32>
    %71 = math.tanh %70 : vector<8x128xf32>
    %72 = vector.extract_strided_slice %57 {offsets = [0, 384], sizes = [8, 128], strides = [1, 1]} : vector<8x512xf32> to vector<8x128xf32>
    %73 = arith.negf %72 : vector<8x128xf32>
    %74 = math.exp %73 : vector<8x128xf32>
    %cst_43 = arith.constant 1.000000e+00 : f32
    %75 = vector.broadcast %cst_43 : f32 to vector<8x128xf32>
    %76 = arith.addf %75, %74 : vector<8x128xf32>
    %77 = arith.divf %75, %76 : vector<8x128xf32>
    %c0_44 = arith.constant 0 : index
    %c0_45 = arith.constant 0 : index
    %78 = vector.load %arg12[%c0_44, %c0_45] : memref<8x128xf32, #tpu.memory_space<vmem>>, vector<8x128xf32>
    %79 = arith.mulf %69, %78 : vector<8x128xf32>
    %80 = arith.mulf %63, %71 : vector<8x128xf32>
    %81 = arith.addf %79, %80 : vector<8x128xf32>
    %82 = math.tanh %81 : vector<8x128xf32>
    %83 = arith.mulf %77, %82 : vector<8x128xf32>
    %c0_46 = arith.constant 0 : index
    %c128_47 = arith.constant 128 : index
    %84 = vector.load %arg11[%c0_46, %c128_47] : memref<8x256xf32, #tpu.memory_space<vmem>>, vector<8x128xf32>
    tpu.vector_store %arg11[%c0_46, %c128_47], %83 {strides = array<i32>} : memref<8x256xf32, #tpu.memory_space<vmem>>, vector<8x128xf32>,
    %c0_48 = arith.constant 0 : index
    %c0_49 = arith.constant 0 : index
    %85 = vector.load %arg12[%c0_48, %c0_49] : memref<8x128xf32, #tpu.memory_space<vmem>>, vector<8x128xf32>
    tpu.vector_store %arg12[%c0_48, %c0_49], %81 {strides = array<i32>} : memref<8x128xf32, #tpu.memory_space<vmem>>, vector<8x128xf32>,
    %c2_i32 = arith.constant 2 : i32
    %86 = arith.index_cast %c2_i32 : i32 to index
    %c0_50 = arith.constant 0 : index
    %c0_51 = arith.constant 0 : index
    %87 = vector.load %arg1[%86, %c0_50, %c0_51] : memref<8x8x128xf32, #tpu.memory_space<vmem>>, vector<1x8x128xf32>
    %88 = vector.shape_cast %87 : vector<1x8x128xf32> to vector<8x128xf32>
    %c0_52 = arith.constant 0 : index
    %c0_53 = arith.constant 0 : index
    %89 = vector.load %arg11[%c0_52, %c0_53] : memref<8x256xf32, #tpu.memory_space<vmem>>, vector<8x128xf32>
    tpu.vector_store %arg11[%c0_52, %c0_53], %88 {strides = array<i32>} : memref<8x256xf32, #tpu.memory_space<vmem>>, vector<8x128xf32>,
    %c0_54 = arith.constant 0 : index
    %c0_55 = arith.constant 0 : index
    %90 = vector.load %arg11[%c0_54, %c0_55] : memref<8x256xf32, #tpu.memory_space<vmem>>, vector<8x256xf32>
    %91 = arith.truncf %90 : vector<8x256xf32> to vector<8x256xbf16>
    %c0_56 = arith.constant 0 : index
    %c0_57 = arith.constant 0 : index
    %92 = vector.load %arg4[%c0_56, %c0_57] : memref<256x512xbf16, #tpu.memory_space<vmem>>, vector<256x512xbf16>
    %cst_58 = arith.constant dense<0.000000e+00> : vector<8x512xf32>
    %93 = tpu.matmul %91, %92, %cst_58 {dimension_numbers = #tpu.dot_dimension_numbers<[1], [0], [0], [1], [0, 0, 1, 1], [], []>} : vector<8x256xbf16>, vector<256x512xbf16>, vector<8x512xf32> -> vector<8x512xf32>
    %c0_59 = arith.constant 0 : index
    %c0_60 = arith.constant 0 : index
    %94 = vector.load %arg5[%c0_59, %c0_60] : memref<8x512xf32, #tpu.memory_space<vmem>>, vector<8x512xf32>
    %95 = arith.addf %93, %94 : vector<8x512xf32>
    %96 = vector.extract_strided_slice %95 {offsets = [0, 0], sizes = [8, 128], strides = [1, 1]} : vector<8x512xf32> to vector<8x128xf32>
    %97 = arith.negf %96 : vector<8x128xf32>
    %98 = math.exp %97 : vector<8x128xf32>
    %cst_61 = arith.constant 1.000000e+00 : f32
    %99 = vector.broadcast %cst_61 : f32 to vector<8x128xf32>
    %100 = arith.addf %99, %98 : vector<8x128xf32>
    %101 = arith.divf %99, %100 : vector<8x128xf32>
    %102 = vector.extract_strided_slice %95 {offsets = [0, 128], sizes = [8, 128], strides = [1, 1]} : vector<8x512xf32> to vector<8x128xf32>
    %103 = arith.negf %102 : vector<8x128xf32>
    %104 = math.exp %103 : vector<8x128xf32>
    %cst_62 = arith.constant 1.000000e+00 : f32
    %105 = vector.broadcast %cst_62 : f32 to vector<8x128xf32>
    %106 = arith.addf %105, %104 : vector<8x128xf32>
    %107 = arith.divf %105, %106 : vector<8x128xf32>
    %108 = vector.extract_strided_slice %95 {offsets = [0, 256], sizes = [8, 128], strides = [1, 1]} : vector<8x512xf32> to vector<8x128xf32>
    %109 = math.tanh %108 : vector<8x128xf32>
    %110 = vector.extract_strided_slice %95 {offsets = [0, 384], sizes = [8, 128], strides = [1, 1]} : vector<8x512xf32> to vector<8x128xf32>
    %111 = arith.negf %110 : vector<8x128xf32>
    %112 = math.exp %111 : vector<8x128xf32>
    %cst_63 = arith.constant 1.000000e+00 : f32
    %113 = vector.broadcast %cst_63 : f32 to vector<8x128xf32>
    %114 = arith.addf %113, %112 : vector<8x128xf32>
    %115 = arith.divf %113, %114 : vector<8x128xf32>
    %c0_64 = arith.constant 0 : index
    %c0_65 = arith.constant 0 : index
    %116 = vector.load %arg12[%c0_64, %c0_65] : memref<8x128xf32, #tpu.memory_space<vmem>>, vector<8x128xf32>
    %117 = arith.mulf %107, %116 : vector<8x128xf32>
    %118 = arith.mulf %101, %109 : vector<8x128xf32>
    %119 = arith.addf %117, %118 : vector<8x128xf32>
    %120 = math.tanh %119 : vector<8x128xf32>
    %121 = arith.mulf %115, %120 : vector<8x128xf32>
    %c0_66 = arith.constant 0 : index
    %c128_67 = arith.constant 128 : index
    %122 = vector.load %arg11[%c0_66, %c128_67] : memref<8x256xf32, #tpu.memory_space<vmem>>, vector<8x128xf32>
    tpu.vector_store %arg11[%c0_66, %c128_67], %121 {strides = array<i32>} : memref<8x256xf32, #tpu.memory_space<vmem>>, vector<8x128xf32>,
    %c0_68 = arith.constant 0 : index
    %c0_69 = arith.constant 0 : index
    %123 = vector.load %arg12[%c0_68, %c0_69] : memref<8x128xf32, #tpu.memory_space<vmem>>, vector<8x128xf32>
    tpu.vector_store %arg12[%c0_68, %c0_69], %119 {strides = array<i32>} : memref<8x128xf32, #tpu.memory_space<vmem>>, vector<8x128xf32>,
    %c3_i32 = arith.constant 3 : i32
    %124 = arith.index_cast %c3_i32 : i32 to index
    %c0_70 = arith.constant 0 : index
    %c0_71 = arith.constant 0 : index
    %125 = vector.load %arg1[%124, %c0_70, %c0_71] : memref<8x8x128xf32, #tpu.memory_space<vmem>>, vector<1x8x128xf32>
    %126 = vector.shape_cast %125 : vector<1x8x128xf32> to vector<8x128xf32>
    %c0_72 = arith.constant 0 : index
    %c0_73 = arith.constant 0 : index
    %127 = vector.load %arg11[%c0_72, %c0_73] : memref<8x256xf32, #tpu.memory_space<vmem>>, vector<8x128xf32>
    tpu.vector_store %arg11[%c0_72, %c0_73], %126 {strides = array<i32>} : memref<8x256xf32, #tpu.memory_space<vmem>>, vector<8x128xf32>,
    %c0_74 = arith.constant 0 : index
    %c0_75 = arith.constant 0 : index
    %128 = vector.load %arg11[%c0_74, %c0_75] : memref<8x256xf32, #tpu.memory_space<vmem>>, vector<8x256xf32>
    %129 = arith.truncf %128 : vector<8x256xf32> to vector<8x256xbf16>
    %c0_76 = arith.constant 0 : index
    %c0_77 = arith.constant 0 : index
    %130 = vector.load %arg4[%c0_76, %c0_77] : memref<256x512xbf16, #tpu.memory_space<vmem>>, vector<256x512xbf16>
    %cst_78 = arith.constant dense<0.000000e+00> : vector<8x512xf32>
    %131 = tpu.matmul %129, %130, %cst_78 {dimension_numbers = #tpu.dot_dimension_numbers<[1], [0], [0], [1], [0, 0, 1, 1], [], []>} : vector<8x256xbf16>, vector<256x512xbf16>, vector<8x512xf32> -> vector<8x512xf32>
    %c0_79 = arith.constant 0 : index
    %c0_80 = arith.constant 0 : index
    %132 = vector.load %arg5[%c0_79, %c0_80] : memref<8x512xf32, #tpu.memory_space<vmem>>, vector<8x512xf32>
    %133 = arith.addf %131, %132 : vector<8x512xf32>
    %134 = vector.extract_strided_slice %133 {offsets = [0, 0], sizes = [8, 128], strides = [1, 1]} : vector<8x512xf32> to vector<8x128xf32>
    %135 = arith.negf %134 : vector<8x128xf32>
    %136 = math.exp %135 : vector<8x128xf32>
    %cst_81 = arith.constant 1.000000e+00 : f32
    %137 = vector.broadcast %cst_81 : f32 to vector<8x128xf32>
    %138 = arith.addf %137, %136 : vector<8x128xf32>
    %139 = arith.divf %137, %138 : vector<8x128xf32>
    %140 = vector.extract_strided_slice %133 {offsets = [0, 128], sizes = [8, 128], strides = [1, 1]} : vector<8x512xf32> to vector<8x128xf32>
    %141 = arith.negf %140 : vector<8x128xf32>
    %142 = math.exp %141 : vector<8x128xf32>
    %cst_82 = arith.constant 1.000000e+00 : f32
    %143 = vector.broadcast %cst_82 : f32 to vector<8x128xf32>
    %144 = arith.addf %143, %142 : vector<8x128xf32>
    %145 = arith.divf %143, %144 : vector<8x128xf32>
    %146 = vector.extract_strided_slice %133 {offsets = [0, 256], sizes = [8, 128], strides = [1, 1]} : vector<8x512xf32> to vector<8x128xf32>
    %147 = math.tanh %146 : vector<8x128xf32>
    %148 = vector.extract_strided_slice %133 {offsets = [0, 384], sizes = [8, 128], strides = [1, 1]} : vector<8x512xf32> to vector<8x128xf32>
    %149 = arith.negf %148 : vector<8x128xf32>
    %150 = math.exp %149 : vector<8x128xf32>
    %cst_83 = arith.constant 1.000000e+00 : f32
    %151 = vector.broadcast %cst_83 : f32 to vector<8x128xf32>
    %152 = arith.addf %151, %150 : vector<8x128xf32>
    %153 = arith.divf %151, %152 : vector<8x128xf32>
    %c0_84 = arith.constant 0 : index
    %c0_85 = arith.constant 0 : index
    %154 = vector.load %arg12[%c0_84, %c0_85] : memref<8x128xf32, #tpu.memory_space<vmem>>, vector<8x128xf32>
    %155 = arith.mulf %145, %154 : vector<8x128xf32>
    %156 = arith.mulf %139, %147 : vector<8x128xf32>
    %157 = arith.addf %155, %156 : vector<8x128xf32>
    %158 = math.tanh %157 : vector<8x128xf32>
    %159 = arith.mulf %153, %158 : vector<8x128xf32>
    %c0_86 = arith.constant 0 : index
    %c128_87 = arith.constant 128 : index
    %160 = vector.load %arg11[%c0_86, %c128_87] : memref<8x256xf32, #tpu.memory_space<vmem>>, vector<8x128xf32>
    tpu.vector_store %arg11[%c0_86, %c128_87], %159 {strides = array<i32>} : memref<8x256xf32, #tpu.memory_space<vmem>>, vector<8x128xf32>,
    %c0_88 = arith.constant 0 : index
    %c0_89 = arith.constant 0 : index
    %161 = vector.load %arg12[%c0_88, %c0_89] : memref<8x128xf32, #tpu.memory_space<vmem>>, vector<8x128xf32>
    tpu.vector_store %arg12[%c0_88, %c0_89], %157 {strides = array<i32>} : memref<8x128xf32, #tpu.memory_space<vmem>>, vector<8x128xf32>,
    %c4_i32 = arith.constant 4 : i32
    %162 = arith.index_cast %c4_i32 : i32 to index
    %c0_90 = arith.constant 0 : index
    %c0_91 = arith.constant 0 : index
    %163 = vector.load %arg1[%162, %c0_90, %c0_91] : memref<8x8x128xf32, #tpu.memory_space<vmem>>, vector<1x8x128xf32>
    %164 = vector.shape_cast %163 : vector<1x8x128xf32> to vector<8x128xf32>
    %c0_92 = arith.constant 0 : index
    %c0_93 = arith.constant 0 : index
    %165 = vector.load %arg11[%c0_92, %c0_93] : memref<8x256xf32, #tpu.memory_space<vmem>>, vector<8x128xf32>
    tpu.vector_store %arg11[%c0_92, %c0_93], %164 {strides = array<i32>} : memref<8x256xf32, #tpu.memory_space<vmem>>, vector<8x128xf32>,
    %c0_94 = arith.constant 0 : index
    %c0_95 = arith.constant 0 : index
    %166 = vector.load %arg11[%c0_94, %c0_95] : memref<8x256xf32, #tpu.memory_space<vmem>>, vector<8x256xf32>
    %167 = arith.truncf %166 : vector<8x256xf32> to vector<8x256xbf16>
    %c0_96 = arith.constant 0 : index
    %c0_97 = arith.constant 0 : index
    %168 = vector.load %arg4[%c0_96, %c0_97] : memref<256x512xbf16, #tpu.memory_space<vmem>>, vector<256x512xbf16>
    %cst_98 = arith.constant dense<0.000000e+00> : vector<8x512xf32>
    %169 = tpu.matmul %167, %168, %cst_98 {dimension_numbers = #tpu.dot_dimension_numbers<[1], [0], [0], [1], [0, 0, 1, 1], [], []>} : vector<8x256xbf16>, vector<256x512xbf16>, vector<8x512xf32> -> vector<8x512xf32>
    %c0_99 = arith.constant 0 : index
    %c0_100 = arith.constant 0 : index
    %170 = vector.load %arg5[%c0_99, %c0_100] : memref<8x512xf32, #tpu.memory_space<vmem>>, vector<8x512xf32>
    %171 = arith.addf %169, %170 : vector<8x512xf32>
    %172 = vector.extract_strided_slice %171 {offsets = [0, 0], sizes = [8, 128], strides = [1, 1]} : vector<8x512xf32> to vector<8x128xf32>
    %173 = arith.negf %172 : vector<8x128xf32>
    %174 = math.exp %173 : vector<8x128xf32>
    %cst_101 = arith.constant 1.000000e+00 : f32
    %175 = vector.broadcast %cst_101 : f32 to vector<8x128xf32>
    %176 = arith.addf %175, %174 : vector<8x128xf32>
    %177 = arith.divf %175, %176 : vector<8x128xf32>
    %178 = vector.extract_strided_slice %171 {offsets = [0, 128], sizes = [8, 128], strides = [1, 1]} : vector<8x512xf32> to vector<8x128xf32>
    %179 = arith.negf %178 : vector<8x128xf32>
    %180 = math.exp %179 : vector<8x128xf32>
    %cst_102 = arith.constant 1.000000e+00 : f32
    %181 = vector.broadcast %cst_102 : f32 to vector<8x128xf32>
    %182 = arith.addf %181, %180 : vector<8x128xf32>
    %183 = arith.divf %181, %182 : vector<8x128xf32>
    %184 = vector.extract_strided_slice %171 {offsets = [0, 256], sizes = [8, 128], strides = [1, 1]} : vector<8x512xf32> to vector<8x128xf32>
    %185 = math.tanh %184 : vector<8x128xf32>
    %186 = vector.extract_strided_slice %171 {offsets = [0, 384], sizes = [8, 128], strides = [1, 1]} : vector<8x512xf32> to vector<8x128xf32>
    %187 = arith.negf %186 : vector<8x128xf32>
    %188 = math.exp %187 : vector<8x128xf32>
    %cst_103 = arith.constant 1.000000e+00 : f32
    %189 = vector.broadcast %cst_103 : f32 to vector<8x128xf32>
    %190 = arith.addf %189, %188 : vector<8x128xf32>
    %191 = arith.divf %189, %190 : vector<8x128xf32>
    %c0_104 = arith.constant 0 : index
    %c0_105 = arith.constant 0 : index
    %192 = vector.load %arg12[%c0_104, %c0_105] : memref<8x128xf32, #tpu.memory_space<vmem>>, vector<8x128xf32>
    %193 = arith.mulf %183, %192 : vector<8x128xf32>
    %194 = arith.mulf %177, %185 : vector<8x128xf32>
    %195 = arith.addf %193, %194 : vector<8x128xf32>
    %196 = math.tanh %195 : vector<8x128xf32>
    %197 = arith.mulf %191, %196 : vector<8x128xf32>
    %c0_106 = arith.constant 0 : index
    %c128_107 = arith.constant 128 : index
    %198 = vector.load %arg11[%c0_106, %c128_107] : memref<8x256xf32, #tpu.memory_space<vmem>>, vector<8x128xf32>
    tpu.vector_store %arg11[%c0_106, %c128_107], %197 {strides = array<i32>} : memref<8x256xf32, #tpu.memory_space<vmem>>, vector<8x128xf32>,
    %c0_108 = arith.constant 0 : index
    %c0_109 = arith.constant 0 : index
    %199 = vector.load %arg12[%c0_108, %c0_109] : memref<8x128xf32, #tpu.memory_space<vmem>>, vector<8x128xf32>
    tpu.vector_store %arg12[%c0_108, %c0_109], %195 {strides = array<i32>} : memref<8x128xf32, #tpu.memory_space<vmem>>, vector<8x128xf32>,
    %c5_i32 = arith.constant 5 : i32
    %200 = arith.index_cast %c5_i32 : i32 to index
    %c0_110 = arith.constant 0 : index
    %c0_111 = arith.constant 0 : index
    %201 = vector.load %arg1[%200, %c0_110, %c0_111] : memref<8x8x128xf32, #tpu.memory_space<vmem>>, vector<1x8x128xf32>
    %202 = vector.shape_cast %201 : vector<1x8x128xf32> to vector<8x128xf32>
    %c0_112 = arith.constant 0 : index
    %c0_113 = arith.constant 0 : index
    %203 = vector.load %arg11[%c0_112, %c0_113] : memref<8x256xf32, #tpu.memory_space<vmem>>, vector<8x128xf32>
    tpu.vector_store %arg11[%c0_112, %c0_113], %202 {strides = array<i32>} : memref<8x256xf32, #tpu.memory_space<vmem>>, vector<8x128xf32>,
    %c0_114 = arith.constant 0 : index
    %c0_115 = arith.constant 0 : index
    %204 = vector.load %arg11[%c0_114, %c0_115] : memref<8x256xf32, #tpu.memory_space<vmem>>, vector<8x256xf32>
    %205 = arith.truncf %204 : vector<8x256xf32> to vector<8x256xbf16>
    %c0_116 = arith.constant 0 : index
    %c0_117 = arith.constant 0 : index
    %206 = vector.load %arg4[%c0_116, %c0_117] : memref<256x512xbf16, #tpu.memory_space<vmem>>, vector<256x512xbf16>
    %cst_118 = arith.constant dense<0.000000e+00> : vector<8x512xf32>
    %207 = tpu.matmul %205, %206, %cst_118 {dimension_numbers = #tpu.dot_dimension_numbers<[1], [0], [0], [1], [0, 0, 1, 1], [], []>} : vector<8x256xbf16>, vector<256x512xbf16>, vector<8x512xf32> -> vector<8x512xf32>
    %c0_119 = arith.constant 0 : index
    %c0_120 = arith.constant 0 : index
    %208 = vector.load %arg5[%c0_119, %c0_120] : memref<8x512xf32, #tpu.memory_space<vmem>>, vector<8x512xf32>
    %209 = arith.addf %207, %208 : vector<8x512xf32>
    %210 = vector.extract_strided_slice %209 {offsets = [0, 0], sizes = [8, 128], strides = [1, 1]} : vector<8x512xf32> to vector<8x128xf32>
    %211 = arith.negf %210 : vector<8x128xf32>
    %212 = math.exp %211 : vector<8x128xf32>
    %cst_121 = arith.constant 1.000000e+00 : f32
    %213 = vector.broadcast %cst_121 : f32 to vector<8x128xf32>
    %214 = arith.addf %213, %212 : vector<8x128xf32>
    %215 = arith.divf %213, %214 : vector<8x128xf32>
    %216 = vector.extract_strided_slice %209 {offsets = [0, 128], sizes = [8, 128], strides = [1, 1]} : vector<8x512xf32> to vector<8x128xf32>
    %217 = arith.negf %216 : vector<8x128xf32>
    %218 = math.exp %217 : vector<8x128xf32>
    %cst_122 = arith.constant 1.000000e+00 : f32
    %219 = vector.broadcast %cst_122 : f32 to vector<8x128xf32>
    %220 = arith.addf %219, %218 : vector<8x128xf32>
    %221 = arith.divf %219, %220 : vector<8x128xf32>
    %222 = vector.extract_strided_slice %209 {offsets = [0, 256], sizes = [8, 128], strides = [1, 1]} : vector<8x512xf32> to vector<8x128xf32>
    %223 = math.tanh %222 : vector<8x128xf32>
    %224 = vector.extract_strided_slice %209 {offsets = [0, 384], sizes = [8, 128], strides = [1, 1]} : vector<8x512xf32> to vector<8x128xf32>
    %225 = arith.negf %224 : vector<8x128xf32>
    %226 = math.exp %225 : vector<8x128xf32>
    %cst_123 = arith.constant 1.000000e+00 : f32
    %227 = vector.broadcast %cst_123 : f32 to vector<8x128xf32>
    %228 = arith.addf %227, %226 : vector<8x128xf32>
    %229 = arith.divf %227, %228 : vector<8x128xf32>
    %c0_124 = arith.constant 0 : index
    %c0_125 = arith.constant 0 : index
    %230 = vector.load %arg12[%c0_124, %c0_125] : memref<8x128xf32, #tpu.memory_space<vmem>>, vector<8x128xf32>
    %231 = arith.mulf %221, %230 : vector<8x128xf32>
    %232 = arith.mulf %215, %223 : vector<8x128xf32>
    %233 = arith.addf %231, %232 : vector<8x128xf32>
    %234 = math.tanh %233 : vector<8x128xf32>
    %235 = arith.mulf %229, %234 : vector<8x128xf32>
    %c0_126 = arith.constant 0 : index
    %c128_127 = arith.constant 128 : index
    %236 = vector.load %arg11[%c0_126, %c128_127] : memref<8x256xf32, #tpu.memory_space<vmem>>, vector<8x128xf32>
    tpu.vector_store %arg11[%c0_126, %c128_127], %235 {strides = array<i32>} : memref<8x256xf32, #tpu.memory_space<vmem>>, vector<8x128xf32>,
    %c0_128 = arith.constant 0 : index
    %c0_129 = arith.constant 0 : index
    %237 = vector.load %arg12[%c0_128, %c0_129] : memref<8x128xf32, #tpu.memory_space<vmem>>, vector<8x128xf32>
    tpu.vector_store %arg12[%c0_128, %c0_129], %233 {strides = array<i32>} : memref<8x128xf32, #tpu.memory_space<vmem>>, vector<8x128xf32>,
    %c6_i32 = arith.constant 6 : i32
    %238 = arith.index_cast %c6_i32 : i32 to index
    %c0_130 = arith.constant 0 : index
    %c0_131 = arith.constant 0 : index
    %239 = vector.load %arg1[%238, %c0_130, %c0_131] : memref<8x8x128xf32, #tpu.memory_space<vmem>>, vector<1x8x128xf32>
    %240 = vector.shape_cast %239 : vector<1x8x128xf32> to vector<8x128xf32>
    %c0_132 = arith.constant 0 : index
    %c0_133 = arith.constant 0 : index
    %241 = vector.load %arg11[%c0_132, %c0_133] : memref<8x256xf32, #tpu.memory_space<vmem>>, vector<8x128xf32>
    tpu.vector_store %arg11[%c0_132, %c0_133], %240 {strides = array<i32>} : memref<8x256xf32, #tpu.memory_space<vmem>>, vector<8x128xf32>,
    %c0_134 = arith.constant 0 : index
    %c0_135 = arith.constant 0 : index
    %242 = vector.load %arg11[%c0_134, %c0_135] : memref<8x256xf32, #tpu.memory_space<vmem>>, vector<8x256xf32>
    %243 = arith.truncf %242 : vector<8x256xf32> to vector<8x256xbf16>
    %c0_136 = arith.constant 0 : index
    %c0_137 = arith.constant 0 : index
    %244 = vector.load %arg4[%c0_136, %c0_137] : memref<256x512xbf16, #tpu.memory_space<vmem>>, vector<256x512xbf16>
    %cst_138 = arith.constant dense<0.000000e+00> : vector<8x512xf32>
    %245 = tpu.matmul %243, %244, %cst_138 {dimension_numbers = #tpu.dot_dimension_numbers<[1], [0], [0], [1], [0, 0, 1, 1], [], []>} : vector<8x256xbf16>, vector<256x512xbf16>, vector<8x512xf32> -> vector<8x512xf32>
    %c0_139 = arith.constant 0 : index
    %c0_140 = arith.constant 0 : index
    %246 = vector.load %arg5[%c0_139, %c0_140] : memref<8x512xf32, #tpu.memory_space<vmem>>, vector<8x512xf32>
    %247 = arith.addf %245, %246 : vector<8x512xf32>
    %248 = vector.extract_strided_slice %247 {offsets = [0, 0], sizes = [8, 128], strides = [1, 1]} : vector<8x512xf32> to vector<8x128xf32>
    %249 = arith.negf %248 : vector<8x128xf32>
    %250 = math.exp %249 : vector<8x128xf32>
    %cst_141 = arith.constant 1.000000e+00 : f32
    %251 = vector.broadcast %cst_141 : f32 to vector<8x128xf32>
    %252 = arith.addf %251, %250 : vector<8x128xf32>
    %253 = arith.divf %251, %252 : vector<8x128xf32>
    %254 = vector.extract_strided_slice %247 {offsets = [0, 128], sizes = [8, 128], strides = [1, 1]} : vector<8x512xf32> to vector<8x128xf32>
    %255 = arith.negf %254 : vector<8x128xf32>
    %256 = math.exp %255 : vector<8x128xf32>
    %cst_142 = arith.constant 1.000000e+00 : f32
    %257 = vector.broadcast %cst_142 : f32 to vector<8x128xf32>
    %258 = arith.addf %257, %256 : vector<8x128xf32>
    %259 = arith.divf %257, %258 : vector<8x128xf32>
    %260 = vector.extract_strided_slice %247 {offsets = [0, 256], sizes = [8, 128], strides = [1, 1]} : vector<8x512xf32> to vector<8x128xf32>
    %261 = math.tanh %260 : vector<8x128xf32>
    %262 = vector.extract_strided_slice %247 {offsets = [0, 384], sizes = [8, 128], strides = [1, 1]} : vector<8x512xf32> to vector<8x128xf32>
    %263 = arith.negf %262 : vector<8x128xf32>
    %264 = math.exp %263 : vector<8x128xf32>
    %cst_143 = arith.constant 1.000000e+00 : f32
    %265 = vector.broadcast %cst_143 : f32 to vector<8x128xf32>
    %266 = arith.addf %265, %264 : vector<8x128xf32>
    %267 = arith.divf %265, %266 : vector<8x128xf32>
    %c0_144 = arith.constant 0 : index
    %c0_145 = arith.constant 0 : index
    %268 = vector.load %arg12[%c0_144, %c0_145] : memref<8x128xf32, #tpu.memory_space<vmem>>, vector<8x128xf32>
    %269 = arith.mulf %259, %268 : vector<8x128xf32>
    %270 = arith.mulf %253, %261 : vector<8x128xf32>
    %271 = arith.addf %269, %270 : vector<8x128xf32>
    %272 = math.tanh %271 : vector<8x128xf32>
    %273 = arith.mulf %267, %272 : vector<8x128xf32>
    %c0_146 = arith.constant 0 : index
    %c128_147 = arith.constant 128 : index
    %274 = vector.load %arg11[%c0_146, %c128_147] : memref<8x256xf32, #tpu.memory_space<vmem>>, vector<8x128xf32>
    tpu.vector_store %arg11[%c0_146, %c128_147], %273 {strides = array<i32>} : memref<8x256xf32, #tpu.memory_space<vmem>>, vector<8x128xf32>,
    %c0_148 = arith.constant 0 : index
    %c0_149 = arith.constant 0 : index
    %275 = vector.load %arg12[%c0_148, %c0_149] : memref<8x128xf32, #tpu.memory_space<vmem>>, vector<8x128xf32>
    tpu.vector_store %arg12[%c0_148, %c0_149], %271 {strides = array<i32>} : memref<8x128xf32, #tpu.memory_space<vmem>>, vector<8x128xf32>,
    %c7_i32 = arith.constant 7 : i32
    %276 = arith.index_cast %c7_i32 : i32 to index
    %c0_150 = arith.constant 0 : index
    %c0_151 = arith.constant 0 : index
    %277 = vector.load %arg1[%276, %c0_150, %c0_151] : memref<8x8x128xf32, #tpu.memory_space<vmem>>, vector<1x8x128xf32>
    %278 = vector.shape_cast %277 : vector<1x8x128xf32> to vector<8x128xf32>
    %c0_152 = arith.constant 0 : index
    %c0_153 = arith.constant 0 : index
    %279 = vector.load %arg11[%c0_152, %c0_153] : memref<8x256xf32, #tpu.memory_space<vmem>>, vector<8x128xf32>
    tpu.vector_store %arg11[%c0_152, %c0_153], %278 {strides = array<i32>} : memref<8x256xf32, #tpu.memory_space<vmem>>, vector<8x128xf32>,
    %c0_154 = arith.constant 0 : index
    %c0_155 = arith.constant 0 : index
    %280 = vector.load %arg11[%c0_154, %c0_155] : memref<8x256xf32, #tpu.memory_space<vmem>>, vector<8x256xf32>
    %281 = arith.truncf %280 : vector<8x256xf32> to vector<8x256xbf16>
    %c0_156 = arith.constant 0 : index
    %c0_157 = arith.constant 0 : index
    %282 = vector.load %arg4[%c0_156, %c0_157] : memref<256x512xbf16, #tpu.memory_space<vmem>>, vector<256x512xbf16>
    %cst_158 = arith.constant dense<0.000000e+00> : vector<8x512xf32>
    %283 = tpu.matmul %281, %282, %cst_158 {dimension_numbers = #tpu.dot_dimension_numbers<[1], [0], [0], [1], [0, 0, 1, 1], [], []>} : vector<8x256xbf16>, vector<256x512xbf16>, vector<8x512xf32> -> vector<8x512xf32>
    %c0_159 = arith.constant 0 : index
    %c0_160 = arith.constant 0 : index
    %284 = vector.load %arg5[%c0_159, %c0_160] : memref<8x512xf32, #tpu.memory_space<vmem>>, vector<8x512xf32>
    %285 = arith.addf %283, %284 : vector<8x512xf32>
    %286 = vector.extract_strided_slice %285 {offsets = [0, 0], sizes = [8, 128], strides = [1, 1]} : vector<8x512xf32> to vector<8x128xf32>
    %287 = arith.negf %286 : vector<8x128xf32>
    %288 = math.exp %287 : vector<8x128xf32>
    %cst_161 = arith.constant 1.000000e+00 : f32
    %289 = vector.broadcast %cst_161 : f32 to vector<8x128xf32>
    %290 = arith.addf %289, %288 : vector<8x128xf32>
    %291 = arith.divf %289, %290 : vector<8x128xf32>
    %292 = vector.extract_strided_slice %285 {offsets = [0, 128], sizes = [8, 128], strides = [1, 1]} : vector<8x512xf32> to vector<8x128xf32>
    %293 = arith.negf %292 : vector<8x128xf32>
    %294 = math.exp %293 : vector<8x128xf32>
    %cst_162 = arith.constant 1.000000e+00 : f32
    %295 = vector.broadcast %cst_162 : f32 to vector<8x128xf32>
    %296 = arith.addf %295, %294 : vector<8x128xf32>
    %297 = arith.divf %295, %296 : vector<8x128xf32>
    %298 = vector.extract_strided_slice %285 {offsets = [0, 256], sizes = [8, 128], strides = [1, 1]} : vector<8x512xf32> to vector<8x128xf32>
    %299 = math.tanh %298 : vector<8x128xf32>
    %300 = vector.extract_strided_slice %285 {offsets = [0, 384], sizes = [8, 128], strides = [1, 1]} : vector<8x512xf32> to vector<8x128xf32>
    %301 = arith.negf %300 : vector<8x128xf32>
    %302 = math.exp %301 : vector<8x128xf32>
    %cst_163 = arith.constant 1.000000e+00 : f32
    %303 = vector.broadcast %cst_163 : f32 to vector<8x128xf32>
    %304 = arith.addf %303, %302 : vector<8x128xf32>
    %305 = arith.divf %303, %304 : vector<8x128xf32>
    %c0_164 = arith.constant 0 : index
    %c0_165 = arith.constant 0 : index
    %306 = vector.load %arg12[%c0_164, %c0_165] : memref<8x128xf32, #tpu.memory_space<vmem>>, vector<8x128xf32>
    %307 = arith.mulf %297, %306 : vector<8x128xf32>
    %308 = arith.mulf %291, %299 : vector<8x128xf32>
    %309 = arith.addf %307, %308 : vector<8x128xf32>
    %310 = math.tanh %309 : vector<8x128xf32>
    %311 = arith.mulf %305, %310 : vector<8x128xf32>
    %c0_166 = arith.constant 0 : index
    %c128_167 = arith.constant 128 : index
    %312 = vector.load %arg11[%c0_166, %c128_167] : memref<8x256xf32, #tpu.memory_space<vmem>>, vector<8x128xf32>
    tpu.vector_store %arg11[%c0_166, %c128_167], %311 {strides = array<i32>} : memref<8x256xf32, #tpu.memory_space<vmem>>, vector<8x128xf32>,
    %c0_168 = arith.constant 0 : index
    %c0_169 = arith.constant 0 : index
    %313 = vector.load %arg12[%c0_168, %c0_169] : memref<8x128xf32, #tpu.memory_space<vmem>>, vector<8x128xf32>
    tpu.vector_store %arg12[%c0_168, %c0_169], %309 {strides = array<i32>} : memref<8x128xf32, #tpu.memory_space<vmem>>, vector<8x128xf32>,
    %c8_i32 = arith.constant 8 : i32
    %c0_i32_170 = arith.constant 0 : i32
    %c0_i32_171 = arith.constant 0 : i32
    %314 = arith.cmpi eq, %c0_i32_170, %c0_i32_171 : i32
    %315 = arith.index_cast %c0_i32_170 : i32 to index
    %316 = memref.load %arg0[%315] : memref<8xi32, #tpu.memory_space<smem>>
    %c0_i32_172 = arith.constant 0 : i32
    %317 = arith.cmpi ne, %316, %c0_i32_172 : i32
    %318 = arith.ori %314, %317 : i1
    %319 = arith.extui %318 : i1 to i32
    %c0_i32_173 = arith.constant 0 : i32
    %320 = arith.cmpi ne, %319, %c0_i32_173 : i32
    scf.if %320 {
      %755 = arith.index_cast %c0_i32_170 : i32 to index
      %c0_415 = arith.constant 0 : index
      %c0_416 = arith.constant 0 : index
      %756 = vector.load %arg2[%755, %c0_415, %c0_416] : memref<8x8x128xf32, #tpu.memory_space<vmem>>, vector<1x8x128xf32>
      %757 = vector.shape_cast %756 : vector<1x8x128xf32> to vector<8x128xf32>
      %c0_417 = arith.constant 0 : index
      %c0_418 = arith.constant 0 : index
      %758 = vector.load %arg11[%c0_417, %c0_418] : memref<8x256xf32, #tpu.memory_space<vmem>>, vector<8x128xf32>
      tpu.vector_store %arg11[%c0_417, %c0_418], %757 {strides = array<i32>} : memref<8x256xf32, #tpu.memory_space<vmem>>, vector<8x128xf32>,
    } else {
    }
    %true = arith.constant true
    %321 = arith.xori %318, %true : i1
    %322 = arith.extui %321 : i1 to i32
    %c0_i32_174 = arith.constant 0 : i32
    %323 = arith.cmpi ne, %322, %c0_i32_174 : i32
    scf.if %323 {
      %c0_415 = arith.constant 0 : index
      %c0_416 = arith.constant 0 : index
      %755 = vector.load %arg13[%c0_415, %c0_416] : memref<8x128xf32, #tpu.memory_space<vmem>>, vector<8x128xf32>
      %c0_417 = arith.constant 0 : index
      %c0_418 = arith.constant 0 : index
      %756 = vector.load %arg11[%c0_417, %c0_418] : memref<8x256xf32, #tpu.memory_space<vmem>>, vector<8x128xf32>
      tpu.vector_store %arg11[%c0_417, %c0_418], %755 {strides = array<i32>} : memref<8x256xf32, #tpu.memory_space<vmem>>, vector<8x128xf32>,
    } else {
    }
    %c0_175 = arith.constant 0 : index
    %c0_176 = arith.constant 0 : index
    %324 = vector.load %arg11[%c0_175, %c0_176] : memref<8x256xf32, #tpu.memory_space<vmem>>, vector<8x256xf32>
    %325 = arith.truncf %324 : vector<8x256xf32> to vector<8x256xbf16>
    %c0_177 = arith.constant 0 : index
    %c0_178 = arith.constant 0 : index
    %326 = vector.load %arg6[%c0_177, %c0_178] : memref<256x512xbf16, #tpu.memory_space<vmem>>, vector<256x512xbf16>
    %cst_179 = arith.constant dense<0.000000e+00> : vector<8x512xf32>
    %327 = tpu.matmul %325, %326, %cst_179 {dimension_numbers = #tpu.dot_dimension_numbers<[1], [0], [0], [1], [0, 0, 1, 1], [], []>} : vector<8x256xbf16>, vector<256x512xbf16>, vector<8x512xf32> -> vector<8x512xf32>
    %c0_180 = arith.constant 0 : index
    %c0_181 = arith.constant 0 : index
    %328 = vector.load %arg7[%c0_180, %c0_181] : memref<8x512xf32, #tpu.memory_space<vmem>>, vector<8x512xf32>
    %329 = arith.addf %327, %328 : vector<8x512xf32>
    %330 = vector.extract_strided_slice %329 {offsets = [0, 0], sizes = [8, 128], strides = [1, 1]} : vector<8x512xf32> to vector<8x128xf32>
    %331 = arith.negf %330 : vector<8x128xf32>
    %332 = math.exp %331 : vector<8x128xf32>
    %cst_182 = arith.constant 1.000000e+00 : f32
    %333 = vector.broadcast %cst_182 : f32 to vector<8x128xf32>
    %334 = arith.addf %333, %332 : vector<8x128xf32>
    %335 = arith.divf %333, %334 : vector<8x128xf32>
    %336 = vector.extract_strided_slice %329 {offsets = [0, 128], sizes = [8, 128], strides = [1, 1]} : vector<8x512xf32> to vector<8x128xf32>
    %337 = arith.negf %336 : vector<8x128xf32>
    %338 = math.exp %337 : vector<8x128xf32>
    %cst_183 = arith.constant 1.000000e+00 : f32
    %339 = vector.broadcast %cst_183 : f32 to vector<8x128xf32>
    %340 = arith.addf %339, %338 : vector<8x128xf32>
    %341 = arith.divf %339, %340 : vector<8x128xf32>
    %342 = vector.extract_strided_slice %329 {offsets = [0, 256], sizes = [8, 128], strides = [1, 1]} : vector<8x512xf32> to vector<8x128xf32>
    %343 = math.tanh %342 : vector<8x128xf32>
    %344 = vector.extract_strided_slice %329 {offsets = [0, 384], sizes = [8, 128], strides = [1, 1]} : vector<8x512xf32> to vector<8x128xf32>
    %345 = arith.negf %344 : vector<8x128xf32>
    %346 = math.exp %345 : vector<8x128xf32>
    %cst_184 = arith.constant 1.000000e+00 : f32
    %347 = vector.broadcast %cst_184 : f32 to vector<8x128xf32>
    %348 = arith.addf %347, %346 : vector<8x128xf32>
    %349 = arith.divf %347, %348 : vector<8x128xf32>
    %c0_185 = arith.constant 0 : index
    %c0_186 = arith.constant 0 : index
    %350 = vector.load %arg12[%c0_185, %c0_186] : memref<8x128xf32, #tpu.memory_space<vmem>>, vector<8x128xf32>
    %351 = arith.mulf %341, %350 : vector<8x128xf32>
    %352 = arith.mulf %335, %343 : vector<8x128xf32>
    %353 = arith.addf %351, %352 : vector<8x128xf32>
    %354 = math.tanh %353 : vector<8x128xf32>
    %355 = arith.mulf %349, %354 : vector<8x128xf32>
    %c0_187 = arith.constant 0 : index
    %c128_188 = arith.constant 128 : index
    %356 = vector.load %arg11[%c0_187, %c128_188] : memref<8x256xf32, #tpu.memory_space<vmem>>, vector<8x128xf32>
    tpu.vector_store %arg11[%c0_187, %c128_188], %355 {strides = array<i32>} : memref<8x256xf32, #tpu.memory_space<vmem>>, vector<8x128xf32>,
    %c0_189 = arith.constant 0 : index
    %c0_190 = arith.constant 0 : index
    %357 = vector.load %arg12[%c0_189, %c0_190] : memref<8x128xf32, #tpu.memory_space<vmem>>, vector<8x128xf32>
    tpu.vector_store %arg12[%c0_189, %c0_190], %353 {strides = array<i32>} : memref<8x128xf32, #tpu.memory_space<vmem>>, vector<8x128xf32>,
    %358 = arith.truncf %355 : vector<8x128xf32> to vector<8x128xbf16>
    %c0_191 = arith.constant 0 : index
    %c0_192 = arith.constant 0 : index
    %359 = vector.load %arg8[%c0_191, %c0_192] : memref<128x128xbf16, #tpu.memory_space<vmem>>, vector<128x128xbf16>
    %cst_193 = arith.constant dense<0.000000e+00> : vector<8x128xf32>
    %360 = tpu.matmul %358, %359, %cst_193 {dimension_numbers = #tpu.dot_dimension_numbers<[1], [0], [0], [1], [0, 0, 1, 1], [], []>} : vector<8x128xbf16>, vector<128x128xbf16>, vector<8x128xf32> -> vector<8x128xf32>
    %c0_194 = arith.constant 0 : index
    %c0_195 = arith.constant 0 : index
    %361 = vector.load %arg9[%c0_194, %c0_195] : memref<8x128xf32, #tpu.memory_space<vmem>>, vector<8x128xf32>
    %362 = arith.addf %360, %361 : vector<8x128xf32>
    %c1_i32_196 = arith.constant 1 : i32
    %363 = arith.addi %c0_i32_170, %c1_i32_196 : i32
    %364 = arith.index_cast %363 : i32 to index
    %c0_197 = arith.constant 0 : index
    %c0_198 = arith.constant 0 : index
    %365 = vector.load %arg10[%364, %c0_197, %c0_198] : memref<8x8x128xf32, #tpu.memory_space<vmem>>, vector<1x8x128xf32>
    %366 = vector.shape_cast %365 : vector<1x8x128xf32> to vector<8x128xf32>
    %367 = vector.shape_cast %362 : vector<8x128xf32> to vector<1x8x128xf32>
    tpu.vector_store %arg10[%364, %c0_197, %c0_198], %367 {strides = array<i32>} : memref<8x8x128xf32, #tpu.memory_space<vmem>>, vector<1x8x128xf32>,
    %c1_i32_199 = arith.constant 1 : i32
    %368 = arith.addi %c0_i32_170, %c1_i32_199 : i32
    %c7_i32_200 = arith.constant 7 : i32
    %369 = arith.cmpi slt, %368, %c7_i32_200 : i32
    %c1_i32_201 = arith.constant 1 : i32
    %370 = arith.addi %c0_i32_170, %c1_i32_201 : i32
    %371 = arith.index_cast %370 : i32 to index
    %372 = memref.load %arg0[%371] : memref<8xi32, #tpu.memory_space<smem>>
    %c0_i32_202 = arith.constant 0 : i32
    %373 = arith.cmpi eq, %372, %c0_i32_202 : i32
    %374 = arith.andi %369, %373 : i1
    %375 = arith.extui %374 : i1 to i32
    %c0_i32_203 = arith.constant 0 : i32
    %376 = arith.cmpi ne, %375, %c0_i32_203 : i32
    scf.if %376 {
      %755 = tpu.iota {dimensions = array<i32: 1>} : vector<8x128xi32>
      %cst_415 = arith.constant dense<0xFF800000> : vector<8xf32>
      %756 = vector.multi_reduction <maximumf>, %362, %cst_415 [1] : vector<8x128xf32> to vector<8xf32>
      %757 = vector.shape_cast %756 : vector<8xf32> to vector<8x1xf32>
      %758 = vector.broadcast %757 : vector<8x1xf32> to vector<8x128xf32>
      %759 = arith.cmpf oeq, %362, %758 : vector<8x128xf32>
      %c128_i32 = arith.constant 128 : i32
      %760 = vector.broadcast %c128_i32 : i32 to vector<8x128xi32>
      %761 = arith.select %759, %755, %760 : vector<8x128xi1>, vector<8x128xi32>
      %cst_416 = arith.constant dense<2147483647> : vector<8xi32>
      %762 = vector.multi_reduction <minsi>, %761, %cst_416 [1] : vector<8x128xi32> to vector<8xi32>
      %763 = vector.shape_cast %762 : vector<8xi32> to vector<8x1xi32>
      %764 = vector.broadcast %763 : vector<8x1xi32> to vector<8x128xi32>
      %765 = arith.cmpi eq, %755, %764 : vector<8x128xi32>
      %766 = arith.extui %765 : vector<8x128xi1> to vector<8x128xi32>
      %767 = arith.sitofp %766 : vector<8x128xi32> to vector<8x128xf32>
      %768 = arith.truncf %767 : vector<8x128xf32> to vector<8x128xbf16>
      %c0_417 = arith.constant 0 : index
      %c0_418 = arith.constant 0 : index
      %769 = vector.load %arg3[%c0_417, %c0_418] : memref<128x128xbf16, #tpu.memory_space<vmem>>, vector<128x128xbf16>
      %cst_419 = arith.constant dense<0.000000e+00> : vector<8x128xf32>
      %770 = tpu.matmul %768, %769, %cst_419 {dimension_numbers = #tpu.dot_dimension_numbers<[1], [0], [0], [1], [0, 0, 1, 1], [], []>} : vector<8x128xbf16>, vector<128x128xbf16>, vector<8x128xf32> -> vector<8x128xf32>
      %c0_420 = arith.constant 0 : index
      %c0_421 = arith.constant 0 : index
      %771 = vector.load %arg13[%c0_420, %c0_421] : memref<8x128xf32, #tpu.memory_space<vmem>>, vector<8x128xf32>
      tpu.vector_store %arg13[%c0_420, %c0_421], %770 {strides = array<i32>} : memref<8x128xf32, #tpu.memory_space<vmem>>, vector<8x128xf32>,
    } else {
    }
    %c1_i32_204 = arith.constant 1 : i32
    %c0_i32_205 = arith.constant 0 : i32
    %377 = arith.cmpi eq, %c1_i32_204, %c0_i32_205 : i32
    %378 = arith.index_cast %c1_i32_204 : i32 to index
    %379 = memref.load %arg0[%378] : memref<8xi32, #tpu.memory_space<smem>>
    %c0_i32_206 = arith.constant 0 : i32
    %380 = arith.cmpi ne, %379, %c0_i32_206 : i32
    %381 = arith.ori %377, %380 : i1
    %382 = arith.extui %381 : i1 to i32
    %c0_i32_207 = arith.constant 0 : i32
    %383 = arith.cmpi ne, %382, %c0_i32_207 : i32
    scf.if %383 {
      %755 = arith.index_cast %c1_i32_204 : i32 to index
      %c0_415 = arith.constant 0 : index
      %c0_416 = arith.constant 0 : index
      %756 = vector.load %arg2[%755, %c0_415, %c0_416] : memref<8x8x128xf32, #tpu.memory_space<vmem>>, vector<1x8x128xf32>
      %757 = vector.shape_cast %756 : vector<1x8x128xf32> to vector<8x128xf32>
      %c0_417 = arith.constant 0 : index
      %c0_418 = arith.constant 0 : index
      %758 = vector.load %arg11[%c0_417, %c0_418] : memref<8x256xf32, #tpu.memory_space<vmem>>, vector<8x128xf32>
      tpu.vector_store %arg11[%c0_417, %c0_418], %757 {strides = array<i32>} : memref<8x256xf32, #tpu.memory_space<vmem>>, vector<8x128xf32>,
    } else {
    }
    %true_208 = arith.constant true
    %384 = arith.xori %381, %true_208 : i1
    %385 = arith.extui %384 : i1 to i32
    %c0_i32_209 = arith.constant 0 : i32
    %386 = arith.cmpi ne, %385, %c0_i32_209 : i32
    scf.if %386 {
      %c0_415 = arith.constant 0 : index
      %c0_416 = arith.constant 0 : index
      %755 = vector.load %arg13[%c0_415, %c0_416] : memref<8x128xf32, #tpu.memory_space<vmem>>, vector<8x128xf32>
      %c0_417 = arith.constant 0 : index
      %c0_418 = arith.constant 0 : index
      %756 = vector.load %arg11[%c0_417, %c0_418] : memref<8x256xf32, #tpu.memory_space<vmem>>, vector<8x128xf32>
      tpu.vector_store %arg11[%c0_417, %c0_418], %755 {strides = array<i32>} : memref<8x256xf32, #tpu.memory_space<vmem>>, vector<8x128xf32>,
    } else {
    }
    %c0_210 = arith.constant 0 : index
    %c0_211 = arith.constant 0 : index
    %387 = vector.load %arg11[%c0_210, %c0_211] : memref<8x256xf32, #tpu.memory_space<vmem>>, vector<8x256xf32>
    %388 = arith.truncf %387 : vector<8x256xf32> to vector<8x256xbf16>
    %c0_212 = arith.constant 0 : index
    %c0_213 = arith.constant 0 : index
    %389 = vector.load %arg6[%c0_212, %c0_213] : memref<256x512xbf16, #tpu.memory_space<vmem>>, vector<256x512xbf16>
    %cst_214 = arith.constant dense<0.000000e+00> : vector<8x512xf32>
    %390 = tpu.matmul %388, %389, %cst_214 {dimension_numbers = #tpu.dot_dimension_numbers<[1], [0], [0], [1], [0, 0, 1, 1], [], []>} : vector<8x256xbf16>, vector<256x512xbf16>, vector<8x512xf32> -> vector<8x512xf32>
    %c0_215 = arith.constant 0 : index
    %c0_216 = arith.constant 0 : index
    %391 = vector.load %arg7[%c0_215, %c0_216] : memref<8x512xf32, #tpu.memory_space<vmem>>, vector<8x512xf32>
    %392 = arith.addf %390, %391 : vector<8x512xf32>
    %393 = vector.extract_strided_slice %392 {offsets = [0, 0], sizes = [8, 128], strides = [1, 1]} : vector<8x512xf32> to vector<8x128xf32>
    %394 = arith.negf %393 : vector<8x128xf32>
    %395 = math.exp %394 : vector<8x128xf32>
    %cst_217 = arith.constant 1.000000e+00 : f32
    %396 = vector.broadcast %cst_217 : f32 to vector<8x128xf32>
    %397 = arith.addf %396, %395 : vector<8x128xf32>
    %398 = arith.divf %396, %397 : vector<8x128xf32>
    %399 = vector.extract_strided_slice %392 {offsets = [0, 128], sizes = [8, 128], strides = [1, 1]} : vector<8x512xf32> to vector<8x128xf32>
    %400 = arith.negf %399 : vector<8x128xf32>
    %401 = math.exp %400 : vector<8x128xf32>
    %cst_218 = arith.constant 1.000000e+00 : f32
    %402 = vector.broadcast %cst_218 : f32 to vector<8x128xf32>
    %403 = arith.addf %402, %401 : vector<8x128xf32>
    %404 = arith.divf %402, %403 : vector<8x128xf32>
    %405 = vector.extract_strided_slice %392 {offsets = [0, 256], sizes = [8, 128], strides = [1, 1]} : vector<8x512xf32> to vector<8x128xf32>
    %406 = math.tanh %405 : vector<8x128xf32>
    %407 = vector.extract_strided_slice %392 {offsets = [0, 384], sizes = [8, 128], strides = [1, 1]} : vector<8x512xf32> to vector<8x128xf32>
    %408 = arith.negf %407 : vector<8x128xf32>
    %409 = math.exp %408 : vector<8x128xf32>
    %cst_219 = arith.constant 1.000000e+00 : f32
    %410 = vector.broadcast %cst_219 : f32 to vector<8x128xf32>
    %411 = arith.addf %410, %409 : vector<8x128xf32>
    %412 = arith.divf %410, %411 : vector<8x128xf32>
    %c0_220 = arith.constant 0 : index
    %c0_221 = arith.constant 0 : index
    %413 = vector.load %arg12[%c0_220, %c0_221] : memref<8x128xf32, #tpu.memory_space<vmem>>, vector<8x128xf32>
    %414 = arith.mulf %404, %413 : vector<8x128xf32>
    %415 = arith.mulf %398, %406 : vector<8x128xf32>
    %416 = arith.addf %414, %415 : vector<8x128xf32>
    %417 = math.tanh %416 : vector<8x128xf32>
    %418 = arith.mulf %412, %417 : vector<8x128xf32>
    %c0_222 = arith.constant 0 : index
    %c128_223 = arith.constant 128 : index
    %419 = vector.load %arg11[%c0_222, %c128_223] : memref<8x256xf32, #tpu.memory_space<vmem>>, vector<8x128xf32>
    tpu.vector_store %arg11[%c0_222, %c128_223], %418 {strides = array<i32>} : memref<8x256xf32, #tpu.memory_space<vmem>>, vector<8x128xf32>,
    %c0_224 = arith.constant 0 : index
    %c0_225 = arith.constant 0 : index
    %420 = vector.load %arg12[%c0_224, %c0_225] : memref<8x128xf32, #tpu.memory_space<vmem>>, vector<8x128xf32>
    tpu.vector_store %arg12[%c0_224, %c0_225], %416 {strides = array<i32>} : memref<8x128xf32, #tpu.memory_space<vmem>>, vector<8x128xf32>,
    %421 = arith.truncf %418 : vector<8x128xf32> to vector<8x128xbf16>
    %c0_226 = arith.constant 0 : index
    %c0_227 = arith.constant 0 : index
    %422 = vector.load %arg8[%c0_226, %c0_227] : memref<128x128xbf16, #tpu.memory_space<vmem>>, vector<128x128xbf16>
    %cst_228 = arith.constant dense<0.000000e+00> : vector<8x128xf32>
    %423 = tpu.matmul %421, %422, %cst_228 {dimension_numbers = #tpu.dot_dimension_numbers<[1], [0], [0], [1], [0, 0, 1, 1], [], []>} : vector<8x128xbf16>, vector<128x128xbf16>, vector<8x128xf32> -> vector<8x128xf32>
    %c0_229 = arith.constant 0 : index
    %c0_230 = arith.constant 0 : index
    %424 = vector.load %arg9[%c0_229, %c0_230] : memref<8x128xf32, #tpu.memory_space<vmem>>, vector<8x128xf32>
    %425 = arith.addf %423, %424 : vector<8x128xf32>
    %c1_i32_231 = arith.constant 1 : i32
    %426 = arith.addi %c1_i32_204, %c1_i32_231 : i32
    %427 = arith.index_cast %426 : i32 to index
    %c0_232 = arith.constant 0 : index
    %c0_233 = arith.constant 0 : index
    %428 = vector.load %arg10[%427, %c0_232, %c0_233] : memref<8x8x128xf32, #tpu.memory_space<vmem>>, vector<1x8x128xf32>
    %429 = vector.shape_cast %428 : vector<1x8x128xf32> to vector<8x128xf32>
    %430 = vector.shape_cast %425 : vector<8x128xf32> to vector<1x8x128xf32>
    tpu.vector_store %arg10[%427, %c0_232, %c0_233], %430 {strides = array<i32>} : memref<8x8x128xf32, #tpu.memory_space<vmem>>, vector<1x8x128xf32>,
    %c1_i32_234 = arith.constant 1 : i32
    %431 = arith.addi %c1_i32_204, %c1_i32_234 : i32
    %c7_i32_235 = arith.constant 7 : i32
    %432 = arith.cmpi slt, %431, %c7_i32_235 : i32
    %c1_i32_236 = arith.constant 1 : i32
    %433 = arith.addi %c1_i32_204, %c1_i32_236 : i32
    %434 = arith.index_cast %433 : i32 to index
    %435 = memref.load %arg0[%434] : memref<8xi32, #tpu.memory_space<smem>>
    %c0_i32_237 = arith.constant 0 : i32
    %436 = arith.cmpi eq, %435, %c0_i32_237 : i32
    %437 = arith.andi %432, %436 : i1
    %438 = arith.extui %437 : i1 to i32
    %c0_i32_238 = arith.constant 0 : i32
    %439 = arith.cmpi ne, %438, %c0_i32_238 : i32
    scf.if %439 {
      %755 = tpu.iota {dimensions = array<i32: 1>} : vector<8x128xi32>
      %cst_415 = arith.constant dense<0xFF800000> : vector<8xf32>
      %756 = vector.multi_reduction <maximumf>, %425, %cst_415 [1] : vector<8x128xf32> to vector<8xf32>
      %757 = vector.shape_cast %756 : vector<8xf32> to vector<8x1xf32>
      %758 = vector.broadcast %757 : vector<8x1xf32> to vector<8x128xf32>
      %759 = arith.cmpf oeq, %425, %758 : vector<8x128xf32>
      %c128_i32 = arith.constant 128 : i32
      %760 = vector.broadcast %c128_i32 : i32 to vector<8x128xi32>
      %761 = arith.select %759, %755, %760 : vector<8x128xi1>, vector<8x128xi32>
      %cst_416 = arith.constant dense<2147483647> : vector<8xi32>
      %762 = vector.multi_reduction <minsi>, %761, %cst_416 [1] : vector<8x128xi32> to vector<8xi32>
      %763 = vector.shape_cast %762 : vector<8xi32> to vector<8x1xi32>
      %764 = vector.broadcast %763 : vector<8x1xi32> to vector<8x128xi32>
      %765 = arith.cmpi eq, %755, %764 : vector<8x128xi32>
      %766 = arith.extui %765 : vector<8x128xi1> to vector<8x128xi32>
      %767 = arith.sitofp %766 : vector<8x128xi32> to vector<8x128xf32>
      %768 = arith.truncf %767 : vector<8x128xf32> to vector<8x128xbf16>
      %c0_417 = arith.constant 0 : index
      %c0_418 = arith.constant 0 : index
      %769 = vector.load %arg3[%c0_417, %c0_418] : memref<128x128xbf16, #tpu.memory_space<vmem>>, vector<128x128xbf16>
      %cst_419 = arith.constant dense<0.000000e+00> : vector<8x128xf32>
      %770 = tpu.matmul %768, %769, %cst_419 {dimension_numbers = #tpu.dot_dimension_numbers<[1], [0], [0], [1], [0, 0, 1, 1], [], []>} : vector<8x128xbf16>, vector<128x128xbf16>, vector<8x128xf32> -> vector<8x128xf32>
      %c0_420 = arith.constant 0 : index
      %c0_421 = arith.constant 0 : index
      %771 = vector.load %arg13[%c0_420, %c0_421] : memref<8x128xf32, #tpu.memory_space<vmem>>, vector<8x128xf32>
      tpu.vector_store %arg13[%c0_420, %c0_421], %770 {strides = array<i32>} : memref<8x128xf32, #tpu.memory_space<vmem>>, vector<8x128xf32>,
    } else {
    }
    %c2_i32_239 = arith.constant 2 : i32
    %c0_i32_240 = arith.constant 0 : i32
    %440 = arith.cmpi eq, %c2_i32_239, %c0_i32_240 : i32
    %441 = arith.index_cast %c2_i32_239 : i32 to index
    %442 = memref.load %arg0[%441] : memref<8xi32, #tpu.memory_space<smem>>
    %c0_i32_241 = arith.constant 0 : i32
    %443 = arith.cmpi ne, %442, %c0_i32_241 : i32
    %444 = arith.ori %440, %443 : i1
    %445 = arith.extui %444 : i1 to i32
    %c0_i32_242 = arith.constant 0 : i32
    %446 = arith.cmpi ne, %445, %c0_i32_242 : i32
    scf.if %446 {
      %755 = arith.index_cast %c2_i32_239 : i32 to index
      %c0_415 = arith.constant 0 : index
      %c0_416 = arith.constant 0 : index
      %756 = vector.load %arg2[%755, %c0_415, %c0_416] : memref<8x8x128xf32, #tpu.memory_space<vmem>>, vector<1x8x128xf32>
      %757 = vector.shape_cast %756 : vector<1x8x128xf32> to vector<8x128xf32>
      %c0_417 = arith.constant 0 : index
      %c0_418 = arith.constant 0 : index
      %758 = vector.load %arg11[%c0_417, %c0_418] : memref<8x256xf32, #tpu.memory_space<vmem>>, vector<8x128xf32>
      tpu.vector_store %arg11[%c0_417, %c0_418], %757 {strides = array<i32>} : memref<8x256xf32, #tpu.memory_space<vmem>>, vector<8x128xf32>,
    } else {
    }
    %true_243 = arith.constant true
    %447 = arith.xori %444, %true_243 : i1
    %448 = arith.extui %447 : i1 to i32
    %c0_i32_244 = arith.constant 0 : i32
    %449 = arith.cmpi ne, %448, %c0_i32_244 : i32
    scf.if %449 {
      %c0_415 = arith.constant 0 : index
      %c0_416 = arith.constant 0 : index
      %755 = vector.load %arg13[%c0_415, %c0_416] : memref<8x128xf32, #tpu.memory_space<vmem>>, vector<8x128xf32>
      %c0_417 = arith.constant 0 : index
      %c0_418 = arith.constant 0 : index
      %756 = vector.load %arg11[%c0_417, %c0_418] : memref<8x256xf32, #tpu.memory_space<vmem>>, vector<8x128xf32>
      tpu.vector_store %arg11[%c0_417, %c0_418], %755 {strides = array<i32>} : memref<8x256xf32, #tpu.memory_space<vmem>>, vector<8x128xf32>,
    } else {
    }
    %c0_245 = arith.constant 0 : index
    %c0_246 = arith.constant 0 : index
    %450 = vector.load %arg11[%c0_245, %c0_246] : memref<8x256xf32, #tpu.memory_space<vmem>>, vector<8x256xf32>
    %451 = arith.truncf %450 : vector<8x256xf32> to vector<8x256xbf16>
    %c0_247 = arith.constant 0 : index
    %c0_248 = arith.constant 0 : index
    %452 = vector.load %arg6[%c0_247, %c0_248] : memref<256x512xbf16, #tpu.memory_space<vmem>>, vector<256x512xbf16>
    %cst_249 = arith.constant dense<0.000000e+00> : vector<8x512xf32>
    %453 = tpu.matmul %451, %452, %cst_249 {dimension_numbers = #tpu.dot_dimension_numbers<[1], [0], [0], [1], [0, 0, 1, 1], [], []>} : vector<8x256xbf16>, vector<256x512xbf16>, vector<8x512xf32> -> vector<8x512xf32>
    %c0_250 = arith.constant 0 : index
    %c0_251 = arith.constant 0 : index
    %454 = vector.load %arg7[%c0_250, %c0_251] : memref<8x512xf32, #tpu.memory_space<vmem>>, vector<8x512xf32>
    %455 = arith.addf %453, %454 : vector<8x512xf32>
    %456 = vector.extract_strided_slice %455 {offsets = [0, 0], sizes = [8, 128], strides = [1, 1]} : vector<8x512xf32> to vector<8x128xf32>
    %457 = arith.negf %456 : vector<8x128xf32>
    %458 = math.exp %457 : vector<8x128xf32>
    %cst_252 = arith.constant 1.000000e+00 : f32
    %459 = vector.broadcast %cst_252 : f32 to vector<8x128xf32>
    %460 = arith.addf %459, %458 : vector<8x128xf32>
    %461 = arith.divf %459, %460 : vector<8x128xf32>
    %462 = vector.extract_strided_slice %455 {offsets = [0, 128], sizes = [8, 128], strides = [1, 1]} : vector<8x512xf32> to vector<8x128xf32>
    %463 = arith.negf %462 : vector<8x128xf32>
    %464 = math.exp %463 : vector<8x128xf32>
    %cst_253 = arith.constant 1.000000e+00 : f32
    %465 = vector.broadcast %cst_253 : f32 to vector<8x128xf32>
    %466 = arith.addf %465, %464 : vector<8x128xf32>
    %467 = arith.divf %465, %466 : vector<8x128xf32>
    %468 = vector.extract_strided_slice %455 {offsets = [0, 256], sizes = [8, 128], strides = [1, 1]} : vector<8x512xf32> to vector<8x128xf32>
    %469 = math.tanh %468 : vector<8x128xf32>
    %470 = vector.extract_strided_slice %455 {offsets = [0, 384], sizes = [8, 128], strides = [1, 1]} : vector<8x512xf32> to vector<8x128xf32>
    %471 = arith.negf %470 : vector<8x128xf32>
    %472 = math.exp %471 : vector<8x128xf32>
    %cst_254 = arith.constant 1.000000e+00 : f32
    %473 = vector.broadcast %cst_254 : f32 to vector<8x128xf32>
    %474 = arith.addf %473, %472 : vector<8x128xf32>
    %475 = arith.divf %473, %474 : vector<8x128xf32>
    %c0_255 = arith.constant 0 : index
    %c0_256 = arith.constant 0 : index
    %476 = vector.load %arg12[%c0_255, %c0_256] : memref<8x128xf32, #tpu.memory_space<vmem>>, vector<8x128xf32>
    %477 = arith.mulf %467, %476 : vector<8x128xf32>
    %478 = arith.mulf %461, %469 : vector<8x128xf32>
    %479 = arith.addf %477, %478 : vector<8x128xf32>
    %480 = math.tanh %479 : vector<8x128xf32>
    %481 = arith.mulf %475, %480 : vector<8x128xf32>
    %c0_257 = arith.constant 0 : index
    %c128_258 = arith.constant 128 : index
    %482 = vector.load %arg11[%c0_257, %c128_258] : memref<8x256xf32, #tpu.memory_space<vmem>>, vector<8x128xf32>
    tpu.vector_store %arg11[%c0_257, %c128_258], %481 {strides = array<i32>} : memref<8x256xf32, #tpu.memory_space<vmem>>, vector<8x128xf32>,
    %c0_259 = arith.constant 0 : index
    %c0_260 = arith.constant 0 : index
    %483 = vector.load %arg12[%c0_259, %c0_260] : memref<8x128xf32, #tpu.memory_space<vmem>>, vector<8x128xf32>
    tpu.vector_store %arg12[%c0_259, %c0_260], %479 {strides = array<i32>} : memref<8x128xf32, #tpu.memory_space<vmem>>, vector<8x128xf32>,
    %484 = arith.truncf %481 : vector<8x128xf32> to vector<8x128xbf16>
    %c0_261 = arith.constant 0 : index
    %c0_262 = arith.constant 0 : index
    %485 = vector.load %arg8[%c0_261, %c0_262] : memref<128x128xbf16, #tpu.memory_space<vmem>>, vector<128x128xbf16>
    %cst_263 = arith.constant dense<0.000000e+00> : vector<8x128xf32>
    %486 = tpu.matmul %484, %485, %cst_263 {dimension_numbers = #tpu.dot_dimension_numbers<[1], [0], [0], [1], [0, 0, 1, 1], [], []>} : vector<8x128xbf16>, vector<128x128xbf16>, vector<8x128xf32> -> vector<8x128xf32>
    %c0_264 = arith.constant 0 : index
    %c0_265 = arith.constant 0 : index
    %487 = vector.load %arg9[%c0_264, %c0_265] : memref<8x128xf32, #tpu.memory_space<vmem>>, vector<8x128xf32>
    %488 = arith.addf %486, %487 : vector<8x128xf32>
    %c1_i32_266 = arith.constant 1 : i32
    %489 = arith.addi %c2_i32_239, %c1_i32_266 : i32
    %490 = arith.index_cast %489 : i32 to index
    %c0_267 = arith.constant 0 : index
    %c0_268 = arith.constant 0 : index
    %491 = vector.load %arg10[%490, %c0_267, %c0_268] : memref<8x8x128xf32, #tpu.memory_space<vmem>>, vector<1x8x128xf32>
    %492 = vector.shape_cast %491 : vector<1x8x128xf32> to vector<8x128xf32>
    %493 = vector.shape_cast %488 : vector<8x128xf32> to vector<1x8x128xf32>
    tpu.vector_store %arg10[%490, %c0_267, %c0_268], %493 {strides = array<i32>} : memref<8x8x128xf32, #tpu.memory_space<vmem>>, vector<1x8x128xf32>,
    %c1_i32_269 = arith.constant 1 : i32
    %494 = arith.addi %c2_i32_239, %c1_i32_269 : i32
    %c7_i32_270 = arith.constant 7 : i32
    %495 = arith.cmpi slt, %494, %c7_i32_270 : i32
    %c1_i32_271 = arith.constant 1 : i32
    %496 = arith.addi %c2_i32_239, %c1_i32_271 : i32
    %497 = arith.index_cast %496 : i32 to index
    %498 = memref.load %arg0[%497] : memref<8xi32, #tpu.memory_space<smem>>
    %c0_i32_272 = arith.constant 0 : i32
    %499 = arith.cmpi eq, %498, %c0_i32_272 : i32
    %500 = arith.andi %495, %499 : i1
    %501 = arith.extui %500 : i1 to i32
    %c0_i32_273 = arith.constant 0 : i32
    %502 = arith.cmpi ne, %501, %c0_i32_273 : i32
    scf.if %502 {
      %755 = tpu.iota {dimensions = array<i32: 1>} : vector<8x128xi32>
      %cst_415 = arith.constant dense<0xFF800000> : vector<8xf32>
      %756 = vector.multi_reduction <maximumf>, %488, %cst_415 [1] : vector<8x128xf32> to vector<8xf32>
      %757 = vector.shape_cast %756 : vector<8xf32> to vector<8x1xf32>
      %758 = vector.broadcast %757 : vector<8x1xf32> to vector<8x128xf32>
      %759 = arith.cmpf oeq, %488, %758 : vector<8x128xf32>
      %c128_i32 = arith.constant 128 : i32
      %760 = vector.broadcast %c128_i32 : i32 to vector<8x128xi32>
      %761 = arith.select %759, %755, %760 : vector<8x128xi1>, vector<8x128xi32>
      %cst_416 = arith.constant dense<2147483647> : vector<8xi32>
      %762 = vector.multi_reduction <minsi>, %761, %cst_416 [1] : vector<8x128xi32> to vector<8xi32>
      %763 = vector.shape_cast %762 : vector<8xi32> to vector<8x1xi32>
      %764 = vector.broadcast %763 : vector<8x1xi32> to vector<8x128xi32>
      %765 = arith.cmpi eq, %755, %764 : vector<8x128xi32>
      %766 = arith.extui %765 : vector<8x128xi1> to vector<8x128xi32>
      %767 = arith.sitofp %766 : vector<8x128xi32> to vector<8x128xf32>
      %768 = arith.truncf %767 : vector<8x128xf32> to vector<8x128xbf16>
      %c0_417 = arith.constant 0 : index
      %c0_418 = arith.constant 0 : index
      %769 = vector.load %arg3[%c0_417, %c0_418] : memref<128x128xbf16, #tpu.memory_space<vmem>>, vector<128x128xbf16>
      %cst_419 = arith.constant dense<0.000000e+00> : vector<8x128xf32>
      %770 = tpu.matmul %768, %769, %cst_419 {dimension_numbers = #tpu.dot_dimension_numbers<[1], [0], [0], [1], [0, 0, 1, 1], [], []>} : vector<8x128xbf16>, vector<128x128xbf16>, vector<8x128xf32> -> vector<8x128xf32>
      %c0_420 = arith.constant 0 : index
      %c0_421 = arith.constant 0 : index
      %771 = vector.load %arg13[%c0_420, %c0_421] : memref<8x128xf32, #tpu.memory_space<vmem>>, vector<8x128xf32>
      tpu.vector_store %arg13[%c0_420, %c0_421], %770 {strides = array<i32>} : memref<8x128xf32, #tpu.memory_space<vmem>>, vector<8x128xf32>,
    } else {
    }
    %c3_i32_274 = arith.constant 3 : i32
    %c0_i32_275 = arith.constant 0 : i32
    %503 = arith.cmpi eq, %c3_i32_274, %c0_i32_275 : i32
    %504 = arith.index_cast %c3_i32_274 : i32 to index
    %505 = memref.load %arg0[%504] : memref<8xi32, #tpu.memory_space<smem>>
    %c0_i32_276 = arith.constant 0 : i32
    %506 = arith.cmpi ne, %505, %c0_i32_276 : i32
    %507 = arith.ori %503, %506 : i1
    %508 = arith.extui %507 : i1 to i32
    %c0_i32_277 = arith.constant 0 : i32
    %509 = arith.cmpi ne, %508, %c0_i32_277 : i32
    scf.if %509 {
      %755 = arith.index_cast %c3_i32_274 : i32 to index
      %c0_415 = arith.constant 0 : index
      %c0_416 = arith.constant 0 : index
      %756 = vector.load %arg2[%755, %c0_415, %c0_416] : memref<8x8x128xf32, #tpu.memory_space<vmem>>, vector<1x8x128xf32>
      %757 = vector.shape_cast %756 : vector<1x8x128xf32> to vector<8x128xf32>
      %c0_417 = arith.constant 0 : index
      %c0_418 = arith.constant 0 : index
      %758 = vector.load %arg11[%c0_417, %c0_418] : memref<8x256xf32, #tpu.memory_space<vmem>>, vector<8x128xf32>
      tpu.vector_store %arg11[%c0_417, %c0_418], %757 {strides = array<i32>} : memref<8x256xf32, #tpu.memory_space<vmem>>, vector<8x128xf32>,
    } else {
    }
    %true_278 = arith.constant true
    %510 = arith.xori %507, %true_278 : i1
    %511 = arith.extui %510 : i1 to i32
    %c0_i32_279 = arith.constant 0 : i32
    %512 = arith.cmpi ne, %511, %c0_i32_279 : i32
    scf.if %512 {
      %c0_415 = arith.constant 0 : index
      %c0_416 = arith.constant 0 : index
      %755 = vector.load %arg13[%c0_415, %c0_416] : memref<8x128xf32, #tpu.memory_space<vmem>>, vector<8x128xf32>
      %c0_417 = arith.constant 0 : index
      %c0_418 = arith.constant 0 : index
      %756 = vector.load %arg11[%c0_417, %c0_418] : memref<8x256xf32, #tpu.memory_space<vmem>>, vector<8x128xf32>
      tpu.vector_store %arg11[%c0_417, %c0_418], %755 {strides = array<i32>} : memref<8x256xf32, #tpu.memory_space<vmem>>, vector<8x128xf32>,
    } else {
    }
    %c0_280 = arith.constant 0 : index
    %c0_281 = arith.constant 0 : index
    %513 = vector.load %arg11[%c0_280, %c0_281] : memref<8x256xf32, #tpu.memory_space<vmem>>, vector<8x256xf32>
    %514 = arith.truncf %513 : vector<8x256xf32> to vector<8x256xbf16>
    %c0_282 = arith.constant 0 : index
    %c0_283 = arith.constant 0 : index
    %515 = vector.load %arg6[%c0_282, %c0_283] : memref<256x512xbf16, #tpu.memory_space<vmem>>, vector<256x512xbf16>
    %cst_284 = arith.constant dense<0.000000e+00> : vector<8x512xf32>
    %516 = tpu.matmul %514, %515, %cst_284 {dimension_numbers = #tpu.dot_dimension_numbers<[1], [0], [0], [1], [0, 0, 1, 1], [], []>} : vector<8x256xbf16>, vector<256x512xbf16>, vector<8x512xf32> -> vector<8x512xf32>
    %c0_285 = arith.constant 0 : index
    %c0_286 = arith.constant 0 : index
    %517 = vector.load %arg7[%c0_285, %c0_286] : memref<8x512xf32, #tpu.memory_space<vmem>>, vector<8x512xf32>
    %518 = arith.addf %516, %517 : vector<8x512xf32>
    %519 = vector.extract_strided_slice %518 {offsets = [0, 0], sizes = [8, 128], strides = [1, 1]} : vector<8x512xf32> to vector<8x128xf32>
    %520 = arith.negf %519 : vector<8x128xf32>
    %521 = math.exp %520 : vector<8x128xf32>
    %cst_287 = arith.constant 1.000000e+00 : f32
    %522 = vector.broadcast %cst_287 : f32 to vector<8x128xf32>
    %523 = arith.addf %522, %521 : vector<8x128xf32>
    %524 = arith.divf %522, %523 : vector<8x128xf32>
    %525 = vector.extract_strided_slice %518 {offsets = [0, 128], sizes = [8, 128], strides = [1, 1]} : vector<8x512xf32> to vector<8x128xf32>
    %526 = arith.negf %525 : vector<8x128xf32>
    %527 = math.exp %526 : vector<8x128xf32>
    %cst_288 = arith.constant 1.000000e+00 : f32
    %528 = vector.broadcast %cst_288 : f32 to vector<8x128xf32>
    %529 = arith.addf %528, %527 : vector<8x128xf32>
    %530 = arith.divf %528, %529 : vector<8x128xf32>
    %531 = vector.extract_strided_slice %518 {offsets = [0, 256], sizes = [8, 128], strides = [1, 1]} : vector<8x512xf32> to vector<8x128xf32>
    %532 = math.tanh %531 : vector<8x128xf32>
    %533 = vector.extract_strided_slice %518 {offsets = [0, 384], sizes = [8, 128], strides = [1, 1]} : vector<8x512xf32> to vector<8x128xf32>
    %534 = arith.negf %533 : vector<8x128xf32>
    %535 = math.exp %534 : vector<8x128xf32>
    %cst_289 = arith.constant 1.000000e+00 : f32
    %536 = vector.broadcast %cst_289 : f32 to vector<8x128xf32>
    %537 = arith.addf %536, %535 : vector<8x128xf32>
    %538 = arith.divf %536, %537 : vector<8x128xf32>
    %c0_290 = arith.constant 0 : index
    %c0_291 = arith.constant 0 : index
    %539 = vector.load %arg12[%c0_290, %c0_291] : memref<8x128xf32, #tpu.memory_space<vmem>>, vector<8x128xf32>
    %540 = arith.mulf %530, %539 : vector<8x128xf32>
    %541 = arith.mulf %524, %532 : vector<8x128xf32>
    %542 = arith.addf %540, %541 : vector<8x128xf32>
    %543 = math.tanh %542 : vector<8x128xf32>
    %544 = arith.mulf %538, %543 : vector<8x128xf32>
    %c0_292 = arith.constant 0 : index
    %c128_293 = arith.constant 128 : index
    %545 = vector.load %arg11[%c0_292, %c128_293] : memref<8x256xf32, #tpu.memory_space<vmem>>, vector<8x128xf32>
    tpu.vector_store %arg11[%c0_292, %c128_293], %544 {strides = array<i32>} : memref<8x256xf32, #tpu.memory_space<vmem>>, vector<8x128xf32>,
    %c0_294 = arith.constant 0 : index
    %c0_295 = arith.constant 0 : index
    %546 = vector.load %arg12[%c0_294, %c0_295] : memref<8x128xf32, #tpu.memory_space<vmem>>, vector<8x128xf32>
    tpu.vector_store %arg12[%c0_294, %c0_295], %542 {strides = array<i32>} : memref<8x128xf32, #tpu.memory_space<vmem>>, vector<8x128xf32>,
    %547 = arith.truncf %544 : vector<8x128xf32> to vector<8x128xbf16>
    %c0_296 = arith.constant 0 : index
    %c0_297 = arith.constant 0 : index
    %548 = vector.load %arg8[%c0_296, %c0_297] : memref<128x128xbf16, #tpu.memory_space<vmem>>, vector<128x128xbf16>
    %cst_298 = arith.constant dense<0.000000e+00> : vector<8x128xf32>
    %549 = tpu.matmul %547, %548, %cst_298 {dimension_numbers = #tpu.dot_dimension_numbers<[1], [0], [0], [1], [0, 0, 1, 1], [], []>} : vector<8x128xbf16>, vector<128x128xbf16>, vector<8x128xf32> -> vector<8x128xf32>
    %c0_299 = arith.constant 0 : index
    %c0_300 = arith.constant 0 : index
    %550 = vector.load %arg9[%c0_299, %c0_300] : memref<8x128xf32, #tpu.memory_space<vmem>>, vector<8x128xf32>
    %551 = arith.addf %549, %550 : vector<8x128xf32>
    %c1_i32_301 = arith.constant 1 : i32
    %552 = arith.addi %c3_i32_274, %c1_i32_301 : i32
    %553 = arith.index_cast %552 : i32 to index
    %c0_302 = arith.constant 0 : index
    %c0_303 = arith.constant 0 : index
    %554 = vector.load %arg10[%553, %c0_302, %c0_303] : memref<8x8x128xf32, #tpu.memory_space<vmem>>, vector<1x8x128xf32>
    %555 = vector.shape_cast %554 : vector<1x8x128xf32> to vector<8x128xf32>
    %556 = vector.shape_cast %551 : vector<8x128xf32> to vector<1x8x128xf32>
    tpu.vector_store %arg10[%553, %c0_302, %c0_303], %556 {strides = array<i32>} : memref<8x8x128xf32, #tpu.memory_space<vmem>>, vector<1x8x128xf32>,
    %c1_i32_304 = arith.constant 1 : i32
    %557 = arith.addi %c3_i32_274, %c1_i32_304 : i32
    %c7_i32_305 = arith.constant 7 : i32
    %558 = arith.cmpi slt, %557, %c7_i32_305 : i32
    %c1_i32_306 = arith.constant 1 : i32
    %559 = arith.addi %c3_i32_274, %c1_i32_306 : i32
    %560 = arith.index_cast %559 : i32 to index
    %561 = memref.load %arg0[%560] : memref<8xi32, #tpu.memory_space<smem>>
    %c0_i32_307 = arith.constant 0 : i32
    %562 = arith.cmpi eq, %561, %c0_i32_307 : i32
    %563 = arith.andi %558, %562 : i1
    %564 = arith.extui %563 : i1 to i32
    %c0_i32_308 = arith.constant 0 : i32
    %565 = arith.cmpi ne, %564, %c0_i32_308 : i32
    scf.if %565 {
      %755 = tpu.iota {dimensions = array<i32: 1>} : vector<8x128xi32>
      %cst_415 = arith.constant dense<0xFF800000> : vector<8xf32>
      %756 = vector.multi_reduction <maximumf>, %551, %cst_415 [1] : vector<8x128xf32> to vector<8xf32>
      %757 = vector.shape_cast %756 : vector<8xf32> to vector<8x1xf32>
      %758 = vector.broadcast %757 : vector<8x1xf32> to vector<8x128xf32>
      %759 = arith.cmpf oeq, %551, %758 : vector<8x128xf32>
      %c128_i32 = arith.constant 128 : i32
      %760 = vector.broadcast %c128_i32 : i32 to vector<8x128xi32>
      %761 = arith.select %759, %755, %760 : vector<8x128xi1>, vector<8x128xi32>
      %cst_416 = arith.constant dense<2147483647> : vector<8xi32>
      %762 = vector.multi_reduction <minsi>, %761, %cst_416 [1] : vector<8x128xi32> to vector<8xi32>
      %763 = vector.shape_cast %762 : vector<8xi32> to vector<8x1xi32>
      %764 = vector.broadcast %763 : vector<8x1xi32> to vector<8x128xi32>
      %765 = arith.cmpi eq, %755, %764 : vector<8x128xi32>
      %766 = arith.extui %765 : vector<8x128xi1> to vector<8x128xi32>
      %767 = arith.sitofp %766 : vector<8x128xi32> to vector<8x128xf32>
      %768 = arith.truncf %767 : vector<8x128xf32> to vector<8x128xbf16>
      %c0_417 = arith.constant 0 : index
      %c0_418 = arith.constant 0 : index
      %769 = vector.load %arg3[%c0_417, %c0_418] : memref<128x128xbf16, #tpu.memory_space<vmem>>, vector<128x128xbf16>
      %cst_419 = arith.constant dense<0.000000e+00> : vector<8x128xf32>
      %770 = tpu.matmul %768, %769, %cst_419 {dimension_numbers = #tpu.dot_dimension_numbers<[1], [0], [0], [1], [0, 0, 1, 1], [], []>} : vector<8x128xbf16>, vector<128x128xbf16>, vector<8x128xf32> -> vector<8x128xf32>
      %c0_420 = arith.constant 0 : index
      %c0_421 = arith.constant 0 : index
      %771 = vector.load %arg13[%c0_420, %c0_421] : memref<8x128xf32, #tpu.memory_space<vmem>>, vector<8x128xf32>
      tpu.vector_store %arg13[%c0_420, %c0_421], %770 {strides = array<i32>} : memref<8x128xf32, #tpu.memory_space<vmem>>, vector<8x128xf32>,
    } else {
    }
    %c4_i32_309 = arith.constant 4 : i32
    %c0_i32_310 = arith.constant 0 : i32
    %566 = arith.cmpi eq, %c4_i32_309, %c0_i32_310 : i32
    %567 = arith.index_cast %c4_i32_309 : i32 to index
    %568 = memref.load %arg0[%567] : memref<8xi32, #tpu.memory_space<smem>>
    %c0_i32_311 = arith.constant 0 : i32
    %569 = arith.cmpi ne, %568, %c0_i32_311 : i32
    %570 = arith.ori %566, %569 : i1
    %571 = arith.extui %570 : i1 to i32
    %c0_i32_312 = arith.constant 0 : i32
    %572 = arith.cmpi ne, %571, %c0_i32_312 : i32
    scf.if %572 {
      %755 = arith.index_cast %c4_i32_309 : i32 to index
      %c0_415 = arith.constant 0 : index
      %c0_416 = arith.constant 0 : index
      %756 = vector.load %arg2[%755, %c0_415, %c0_416] : memref<8x8x128xf32, #tpu.memory_space<vmem>>, vector<1x8x128xf32>
      %757 = vector.shape_cast %756 : vector<1x8x128xf32> to vector<8x128xf32>
      %c0_417 = arith.constant 0 : index
      %c0_418 = arith.constant 0 : index
      %758 = vector.load %arg11[%c0_417, %c0_418] : memref<8x256xf32, #tpu.memory_space<vmem>>, vector<8x128xf32>
      tpu.vector_store %arg11[%c0_417, %c0_418], %757 {strides = array<i32>} : memref<8x256xf32, #tpu.memory_space<vmem>>, vector<8x128xf32>,
    } else {
    }
    %true_313 = arith.constant true
    %573 = arith.xori %570, %true_313 : i1
    %574 = arith.extui %573 : i1 to i32
    %c0_i32_314 = arith.constant 0 : i32
    %575 = arith.cmpi ne, %574, %c0_i32_314 : i32
    scf.if %575 {
      %c0_415 = arith.constant 0 : index
      %c0_416 = arith.constant 0 : index
      %755 = vector.load %arg13[%c0_415, %c0_416] : memref<8x128xf32, #tpu.memory_space<vmem>>, vector<8x128xf32>
      %c0_417 = arith.constant 0 : index
      %c0_418 = arith.constant 0 : index
      %756 = vector.load %arg11[%c0_417, %c0_418] : memref<8x256xf32, #tpu.memory_space<vmem>>, vector<8x128xf32>
      tpu.vector_store %arg11[%c0_417, %c0_418], %755 {strides = array<i32>} : memref<8x256xf32, #tpu.memory_space<vmem>>, vector<8x128xf32>,
    } else {
    }
    %c0_315 = arith.constant 0 : index
    %c0_316 = arith.constant 0 : index
    %576 = vector.load %arg11[%c0_315, %c0_316] : memref<8x256xf32, #tpu.memory_space<vmem>>, vector<8x256xf32>
    %577 = arith.truncf %576 : vector<8x256xf32> to vector<8x256xbf16>
    %c0_317 = arith.constant 0 : index
    %c0_318 = arith.constant 0 : index
    %578 = vector.load %arg6[%c0_317, %c0_318] : memref<256x512xbf16, #tpu.memory_space<vmem>>, vector<256x512xbf16>
    %cst_319 = arith.constant dense<0.000000e+00> : vector<8x512xf32>
    %579 = tpu.matmul %577, %578, %cst_319 {dimension_numbers = #tpu.dot_dimension_numbers<[1], [0], [0], [1], [0, 0, 1, 1], [], []>} : vector<8x256xbf16>, vector<256x512xbf16>, vector<8x512xf32> -> vector<8x512xf32>
    %c0_320 = arith.constant 0 : index
    %c0_321 = arith.constant 0 : index
    %580 = vector.load %arg7[%c0_320, %c0_321] : memref<8x512xf32, #tpu.memory_space<vmem>>, vector<8x512xf32>
    %581 = arith.addf %579, %580 : vector<8x512xf32>
    %582 = vector.extract_strided_slice %581 {offsets = [0, 0], sizes = [8, 128], strides = [1, 1]} : vector<8x512xf32> to vector<8x128xf32>
    %583 = arith.negf %582 : vector<8x128xf32>
    %584 = math.exp %583 : vector<8x128xf32>
    %cst_322 = arith.constant 1.000000e+00 : f32
    %585 = vector.broadcast %cst_322 : f32 to vector<8x128xf32>
    %586 = arith.addf %585, %584 : vector<8x128xf32>
    %587 = arith.divf %585, %586 : vector<8x128xf32>
    %588 = vector.extract_strided_slice %581 {offsets = [0, 128], sizes = [8, 128], strides = [1, 1]} : vector<8x512xf32> to vector<8x128xf32>
    %589 = arith.negf %588 : vector<8x128xf32>
    %590 = math.exp %589 : vector<8x128xf32>
    %cst_323 = arith.constant 1.000000e+00 : f32
    %591 = vector.broadcast %cst_323 : f32 to vector<8x128xf32>
    %592 = arith.addf %591, %590 : vector<8x128xf32>
    %593 = arith.divf %591, %592 : vector<8x128xf32>
    %594 = vector.extract_strided_slice %581 {offsets = [0, 256], sizes = [8, 128], strides = [1, 1]} : vector<8x512xf32> to vector<8x128xf32>
    %595 = math.tanh %594 : vector<8x128xf32>
    %596 = vector.extract_strided_slice %581 {offsets = [0, 384], sizes = [8, 128], strides = [1, 1]} : vector<8x512xf32> to vector<8x128xf32>
    %597 = arith.negf %596 : vector<8x128xf32>
    %598 = math.exp %597 : vector<8x128xf32>
    %cst_324 = arith.constant 1.000000e+00 : f32
    %599 = vector.broadcast %cst_324 : f32 to vector<8x128xf32>
    %600 = arith.addf %599, %598 : vector<8x128xf32>
    %601 = arith.divf %599, %600 : vector<8x128xf32>
    %c0_325 = arith.constant 0 : index
    %c0_326 = arith.constant 0 : index
    %602 = vector.load %arg12[%c0_325, %c0_326] : memref<8x128xf32, #tpu.memory_space<vmem>>, vector<8x128xf32>
    %603 = arith.mulf %593, %602 : vector<8x128xf32>
    %604 = arith.mulf %587, %595 : vector<8x128xf32>
    %605 = arith.addf %603, %604 : vector<8x128xf32>
    %606 = math.tanh %605 : vector<8x128xf32>
    %607 = arith.mulf %601, %606 : vector<8x128xf32>
    %c0_327 = arith.constant 0 : index
    %c128_328 = arith.constant 128 : index
    %608 = vector.load %arg11[%c0_327, %c128_328] : memref<8x256xf32, #tpu.memory_space<vmem>>, vector<8x128xf32>
    tpu.vector_store %arg11[%c0_327, %c128_328], %607 {strides = array<i32>} : memref<8x256xf32, #tpu.memory_space<vmem>>, vector<8x128xf32>,
    %c0_329 = arith.constant 0 : index
    %c0_330 = arith.constant 0 : index
    %609 = vector.load %arg12[%c0_329, %c0_330] : memref<8x128xf32, #tpu.memory_space<vmem>>, vector<8x128xf32>
    tpu.vector_store %arg12[%c0_329, %c0_330], %605 {strides = array<i32>} : memref<8x128xf32, #tpu.memory_space<vmem>>, vector<8x128xf32>,
    %610 = arith.truncf %607 : vector<8x128xf32> to vector<8x128xbf16>
    %c0_331 = arith.constant 0 : index
    %c0_332 = arith.constant 0 : index
    %611 = vector.load %arg8[%c0_331, %c0_332] : memref<128x128xbf16, #tpu.memory_space<vmem>>, vector<128x128xbf16>
    %cst_333 = arith.constant dense<0.000000e+00> : vector<8x128xf32>
    %612 = tpu.matmul %610, %611, %cst_333 {dimension_numbers = #tpu.dot_dimension_numbers<[1], [0], [0], [1], [0, 0, 1, 1], [], []>} : vector<8x128xbf16>, vector<128x128xbf16>, vector<8x128xf32> -> vector<8x128xf32>
    %c0_334 = arith.constant 0 : index
    %c0_335 = arith.constant 0 : index
    %613 = vector.load %arg9[%c0_334, %c0_335] : memref<8x128xf32, #tpu.memory_space<vmem>>, vector<8x128xf32>
    %614 = arith.addf %612, %613 : vector<8x128xf32>
    %c1_i32_336 = arith.constant 1 : i32
    %615 = arith.addi %c4_i32_309, %c1_i32_336 : i32
    %616 = arith.index_cast %615 : i32 to index
    %c0_337 = arith.constant 0 : index
    %c0_338 = arith.constant 0 : index
    %617 = vector.load %arg10[%616, %c0_337, %c0_338] : memref<8x8x128xf32, #tpu.memory_space<vmem>>, vector<1x8x128xf32>
    %618 = vector.shape_cast %617 : vector<1x8x128xf32> to vector<8x128xf32>
    %619 = vector.shape_cast %614 : vector<8x128xf32> to vector<1x8x128xf32>
    tpu.vector_store %arg10[%616, %c0_337, %c0_338], %619 {strides = array<i32>} : memref<8x8x128xf32, #tpu.memory_space<vmem>>, vector<1x8x128xf32>,
    %c1_i32_339 = arith.constant 1 : i32
    %620 = arith.addi %c4_i32_309, %c1_i32_339 : i32
    %c7_i32_340 = arith.constant 7 : i32
    %621 = arith.cmpi slt, %620, %c7_i32_340 : i32
    %c1_i32_341 = arith.constant 1 : i32
    %622 = arith.addi %c4_i32_309, %c1_i32_341 : i32
    %623 = arith.index_cast %622 : i32 to index
    %624 = memref.load %arg0[%623] : memref<8xi32, #tpu.memory_space<smem>>
    %c0_i32_342 = arith.constant 0 : i32
    %625 = arith.cmpi eq, %624, %c0_i32_342 : i32
    %626 = arith.andi %621, %625 : i1
    %627 = arith.extui %626 : i1 to i32
    %c0_i32_343 = arith.constant 0 : i32
    %628 = arith.cmpi ne, %627, %c0_i32_343 : i32
    scf.if %628 {
      %755 = tpu.iota {dimensions = array<i32: 1>} : vector<8x128xi32>
      %cst_415 = arith.constant dense<0xFF800000> : vector<8xf32>
      %756 = vector.multi_reduction <maximumf>, %614, %cst_415 [1] : vector<8x128xf32> to vector<8xf32>
      %757 = vector.shape_cast %756 : vector<8xf32> to vector<8x1xf32>
      %758 = vector.broadcast %757 : vector<8x1xf32> to vector<8x128xf32>
      %759 = arith.cmpf oeq, %614, %758 : vector<8x128xf32>
      %c128_i32 = arith.constant 128 : i32
      %760 = vector.broadcast %c128_i32 : i32 to vector<8x128xi32>
      %761 = arith.select %759, %755, %760 : vector<8x128xi1>, vector<8x128xi32>
      %cst_416 = arith.constant dense<2147483647> : vector<8xi32>
      %762 = vector.multi_reduction <minsi>, %761, %cst_416 [1] : vector<8x128xi32> to vector<8xi32>
      %763 = vector.shape_cast %762 : vector<8xi32> to vector<8x1xi32>
      %764 = vector.broadcast %763 : vector<8x1xi32> to vector<8x128xi32>
      %765 = arith.cmpi eq, %755, %764 : vector<8x128xi32>
      %766 = arith.extui %765 : vector<8x128xi1> to vector<8x128xi32>
      %767 = arith.sitofp %766 : vector<8x128xi32> to vector<8x128xf32>
      %768 = arith.truncf %767 : vector<8x128xf32> to vector<8x128xbf16>
      %c0_417 = arith.constant 0 : index
      %c0_418 = arith.constant 0 : index
      %769 = vector.load %arg3[%c0_417, %c0_418] : memref<128x128xbf16, #tpu.memory_space<vmem>>, vector<128x128xbf16>
      %cst_419 = arith.constant dense<0.000000e+00> : vector<8x128xf32>
      %770 = tpu.matmul %768, %769, %cst_419 {dimension_numbers = #tpu.dot_dimension_numbers<[1], [0], [0], [1], [0, 0, 1, 1], [], []>} : vector<8x128xbf16>, vector<128x128xbf16>, vector<8x128xf32> -> vector<8x128xf32>
      %c0_420 = arith.constant 0 : index
      %c0_421 = arith.constant 0 : index
      %771 = vector.load %arg13[%c0_420, %c0_421] : memref<8x128xf32, #tpu.memory_space<vmem>>, vector<8x128xf32>
      tpu.vector_store %arg13[%c0_420, %c0_421], %770 {strides = array<i32>} : memref<8x128xf32, #tpu.memory_space<vmem>>, vector<8x128xf32>,
    } else {
    }
    %c5_i32_344 = arith.constant 5 : i32
    %c0_i32_345 = arith.constant 0 : i32
    %629 = arith.cmpi eq, %c5_i32_344, %c0_i32_345 : i32
    %630 = arith.index_cast %c5_i32_344 : i32 to index
    %631 = memref.load %arg0[%630] : memref<8xi32, #tpu.memory_space<smem>>
    %c0_i32_346 = arith.constant 0 : i32
    %632 = arith.cmpi ne, %631, %c0_i32_346 : i32
    %633 = arith.ori %629, %632 : i1
    %634 = arith.extui %633 : i1 to i32
    %c0_i32_347 = arith.constant 0 : i32
    %635 = arith.cmpi ne, %634, %c0_i32_347 : i32
    scf.if %635 {
      %755 = arith.index_cast %c5_i32_344 : i32 to index
      %c0_415 = arith.constant 0 : index
      %c0_416 = arith.constant 0 : index
      %756 = vector.load %arg2[%755, %c0_415, %c0_416] : memref<8x8x128xf32, #tpu.memory_space<vmem>>, vector<1x8x128xf32>
      %757 = vector.shape_cast %756 : vector<1x8x128xf32> to vector<8x128xf32>
      %c0_417 = arith.constant 0 : index
      %c0_418 = arith.constant 0 : index
      %758 = vector.load %arg11[%c0_417, %c0_418] : memref<8x256xf32, #tpu.memory_space<vmem>>, vector<8x128xf32>
      tpu.vector_store %arg11[%c0_417, %c0_418], %757 {strides = array<i32>} : memref<8x256xf32, #tpu.memory_space<vmem>>, vector<8x128xf32>,
    } else {
    }
    %true_348 = arith.constant true
    %636 = arith.xori %633, %true_348 : i1
    %637 = arith.extui %636 : i1 to i32
    %c0_i32_349 = arith.constant 0 : i32
    %638 = arith.cmpi ne, %637, %c0_i32_349 : i32
    scf.if %638 {
      %c0_415 = arith.constant 0 : index
      %c0_416 = arith.constant 0 : index
      %755 = vector.load %arg13[%c0_415, %c0_416] : memref<8x128xf32, #tpu.memory_space<vmem>>, vector<8x128xf32>
      %c0_417 = arith.constant 0 : index
      %c0_418 = arith.constant 0 : index
      %756 = vector.load %arg11[%c0_417, %c0_418] : memref<8x256xf32, #tpu.memory_space<vmem>>, vector<8x128xf32>
      tpu.vector_store %arg11[%c0_417, %c0_418], %755 {strides = array<i32>} : memref<8x256xf32, #tpu.memory_space<vmem>>, vector<8x128xf32>,
    } else {
    }
    %c0_350 = arith.constant 0 : index
    %c0_351 = arith.constant 0 : index
    %639 = vector.load %arg11[%c0_350, %c0_351] : memref<8x256xf32, #tpu.memory_space<vmem>>, vector<8x256xf32>
    %640 = arith.truncf %639 : vector<8x256xf32> to vector<8x256xbf16>
    %c0_352 = arith.constant 0 : index
    %c0_353 = arith.constant 0 : index
    %641 = vector.load %arg6[%c0_352, %c0_353] : memref<256x512xbf16, #tpu.memory_space<vmem>>, vector<256x512xbf16>
    %cst_354 = arith.constant dense<0.000000e+00> : vector<8x512xf32>
    %642 = tpu.matmul %640, %641, %cst_354 {dimension_numbers = #tpu.dot_dimension_numbers<[1], [0], [0], [1], [0, 0, 1, 1], [], []>} : vector<8x256xbf16>, vector<256x512xbf16>, vector<8x512xf32> -> vector<8x512xf32>
    %c0_355 = arith.constant 0 : index
    %c0_356 = arith.constant 0 : index
    %643 = vector.load %arg7[%c0_355, %c0_356] : memref<8x512xf32, #tpu.memory_space<vmem>>, vector<8x512xf32>
    %644 = arith.addf %642, %643 : vector<8x512xf32>
    %645 = vector.extract_strided_slice %644 {offsets = [0, 0], sizes = [8, 128], strides = [1, 1]} : vector<8x512xf32> to vector<8x128xf32>
    %646 = arith.negf %645 : vector<8x128xf32>
    %647 = math.exp %646 : vector<8x128xf32>
    %cst_357 = arith.constant 1.000000e+00 : f32
    %648 = vector.broadcast %cst_357 : f32 to vector<8x128xf32>
    %649 = arith.addf %648, %647 : vector<8x128xf32>
    %650 = arith.divf %648, %649 : vector<8x128xf32>
    %651 = vector.extract_strided_slice %644 {offsets = [0, 128], sizes = [8, 128], strides = [1, 1]} : vector<8x512xf32> to vector<8x128xf32>
    %652 = arith.negf %651 : vector<8x128xf32>
    %653 = math.exp %652 : vector<8x128xf32>
    %cst_358 = arith.constant 1.000000e+00 : f32
    %654 = vector.broadcast %cst_358 : f32 to vector<8x128xf32>
    %655 = arith.addf %654, %653 : vector<8x128xf32>
    %656 = arith.divf %654, %655 : vector<8x128xf32>
    %657 = vector.extract_strided_slice %644 {offsets = [0, 256], sizes = [8, 128], strides = [1, 1]} : vector<8x512xf32> to vector<8x128xf32>
    %658 = math.tanh %657 : vector<8x128xf32>
    %659 = vector.extract_strided_slice %644 {offsets = [0, 384], sizes = [8, 128], strides = [1, 1]} : vector<8x512xf32> to vector<8x128xf32>
    %660 = arith.negf %659 : vector<8x128xf32>
    %661 = math.exp %660 : vector<8x128xf32>
    %cst_359 = arith.constant 1.000000e+00 : f32
    %662 = vector.broadcast %cst_359 : f32 to vector<8x128xf32>
    %663 = arith.addf %662, %661 : vector<8x128xf32>
    %664 = arith.divf %662, %663 : vector<8x128xf32>
    %c0_360 = arith.constant 0 : index
    %c0_361 = arith.constant 0 : index
    %665 = vector.load %arg12[%c0_360, %c0_361] : memref<8x128xf32, #tpu.memory_space<vmem>>, vector<8x128xf32>
    %666 = arith.mulf %656, %665 : vector<8x128xf32>
    %667 = arith.mulf %650, %658 : vector<8x128xf32>
    %668 = arith.addf %666, %667 : vector<8x128xf32>
    %669 = math.tanh %668 : vector<8x128xf32>
    %670 = arith.mulf %664, %669 : vector<8x128xf32>
    %c0_362 = arith.constant 0 : index
    %c128_363 = arith.constant 128 : index
    %671 = vector.load %arg11[%c0_362, %c128_363] : memref<8x256xf32, #tpu.memory_space<vmem>>, vector<8x128xf32>
    tpu.vector_store %arg11[%c0_362, %c128_363], %670 {strides = array<i32>} : memref<8x256xf32, #tpu.memory_space<vmem>>, vector<8x128xf32>,
    %c0_364 = arith.constant 0 : index
    %c0_365 = arith.constant 0 : index
    %672 = vector.load %arg12[%c0_364, %c0_365] : memref<8x128xf32, #tpu.memory_space<vmem>>, vector<8x128xf32>
    tpu.vector_store %arg12[%c0_364, %c0_365], %668 {strides = array<i32>} : memref<8x128xf32, #tpu.memory_space<vmem>>, vector<8x128xf32>,
    %673 = arith.truncf %670 : vector<8x128xf32> to vector<8x128xbf16>
    %c0_366 = arith.constant 0 : index
    %c0_367 = arith.constant 0 : index
    %674 = vector.load %arg8[%c0_366, %c0_367] : memref<128x128xbf16, #tpu.memory_space<vmem>>, vector<128x128xbf16>
    %cst_368 = arith.constant dense<0.000000e+00> : vector<8x128xf32>
    %675 = tpu.matmul %673, %674, %cst_368 {dimension_numbers = #tpu.dot_dimension_numbers<[1], [0], [0], [1], [0, 0, 1, 1], [], []>} : vector<8x128xbf16>, vector<128x128xbf16>, vector<8x128xf32> -> vector<8x128xf32>
    %c0_369 = arith.constant 0 : index
    %c0_370 = arith.constant 0 : index
    %676 = vector.load %arg9[%c0_369, %c0_370] : memref<8x128xf32, #tpu.memory_space<vmem>>, vector<8x128xf32>
    %677 = arith.addf %675, %676 : vector<8x128xf32>
    %c1_i32_371 = arith.constant 1 : i32
    %678 = arith.addi %c5_i32_344, %c1_i32_371 : i32
    %679 = arith.index_cast %678 : i32 to index
    %c0_372 = arith.constant 0 : index
    %c0_373 = arith.constant 0 : index
    %680 = vector.load %arg10[%679, %c0_372, %c0_373] : memref<8x8x128xf32, #tpu.memory_space<vmem>>, vector<1x8x128xf32>
    %681 = vector.shape_cast %680 : vector<1x8x128xf32> to vector<8x128xf32>
    %682 = vector.shape_cast %677 : vector<8x128xf32> to vector<1x8x128xf32>
    tpu.vector_store %arg10[%679, %c0_372, %c0_373], %682 {strides = array<i32>} : memref<8x8x128xf32, #tpu.memory_space<vmem>>, vector<1x8x128xf32>,
    %c1_i32_374 = arith.constant 1 : i32
    %683 = arith.addi %c5_i32_344, %c1_i32_374 : i32
    %c7_i32_375 = arith.constant 7 : i32
    %684 = arith.cmpi slt, %683, %c7_i32_375 : i32
    %c1_i32_376 = arith.constant 1 : i32
    %685 = arith.addi %c5_i32_344, %c1_i32_376 : i32
    %686 = arith.index_cast %685 : i32 to index
    %687 = memref.load %arg0[%686] : memref<8xi32, #tpu.memory_space<smem>>
    %c0_i32_377 = arith.constant 0 : i32
    %688 = arith.cmpi eq, %687, %c0_i32_377 : i32
    %689 = arith.andi %684, %688 : i1
    %690 = arith.extui %689 : i1 to i32
    %c0_i32_378 = arith.constant 0 : i32
    %691 = arith.cmpi ne, %690, %c0_i32_378 : i32
    scf.if %691 {
      %755 = tpu.iota {dimensions = array<i32: 1>} : vector<8x128xi32>
      %cst_415 = arith.constant dense<0xFF800000> : vector<8xf32>
      %756 = vector.multi_reduction <maximumf>, %677, %cst_415 [1] : vector<8x128xf32> to vector<8xf32>
      %757 = vector.shape_cast %756 : vector<8xf32> to vector<8x1xf32>
      %758 = vector.broadcast %757 : vector<8x1xf32> to vector<8x128xf32>
      %759 = arith.cmpf oeq, %677, %758 : vector<8x128xf32>
      %c128_i32 = arith.constant 128 : i32
      %760 = vector.broadcast %c128_i32 : i32 to vector<8x128xi32>
      %761 = arith.select %759, %755, %760 : vector<8x128xi1>, vector<8x128xi32>
      %cst_416 = arith.constant dense<2147483647> : vector<8xi32>
      %762 = vector.multi_reduction <minsi>, %761, %cst_416 [1] : vector<8x128xi32> to vector<8xi32>
      %763 = vector.shape_cast %762 : vector<8xi32> to vector<8x1xi32>
      %764 = vector.broadcast %763 : vector<8x1xi32> to vector<8x128xi32>
      %765 = arith.cmpi eq, %755, %764 : vector<8x128xi32>
      %766 = arith.extui %765 : vector<8x128xi1> to vector<8x128xi32>
      %767 = arith.sitofp %766 : vector<8x128xi32> to vector<8x128xf32>
      %768 = arith.truncf %767 : vector<8x128xf32> to vector<8x128xbf16>
      %c0_417 = arith.constant 0 : index
      %c0_418 = arith.constant 0 : index
      %769 = vector.load %arg3[%c0_417, %c0_418] : memref<128x128xbf16, #tpu.memory_space<vmem>>, vector<128x128xbf16>
      %cst_419 = arith.constant dense<0.000000e+00> : vector<8x128xf32>
      %770 = tpu.matmul %768, %769, %cst_419 {dimension_numbers = #tpu.dot_dimension_numbers<[1], [0], [0], [1], [0, 0, 1, 1], [], []>} : vector<8x128xbf16>, vector<128x128xbf16>, vector<8x128xf32> -> vector<8x128xf32>
      %c0_420 = arith.constant 0 : index
      %c0_421 = arith.constant 0 : index
      %771 = vector.load %arg13[%c0_420, %c0_421] : memref<8x128xf32, #tpu.memory_space<vmem>>, vector<8x128xf32>
      tpu.vector_store %arg13[%c0_420, %c0_421], %770 {strides = array<i32>} : memref<8x128xf32, #tpu.memory_space<vmem>>, vector<8x128xf32>,
    } else {
    }
    %c6_i32_379 = arith.constant 6 : i32
    %c0_i32_380 = arith.constant 0 : i32
    %692 = arith.cmpi eq, %c6_i32_379, %c0_i32_380 : i32
    %693 = arith.index_cast %c6_i32_379 : i32 to index
    %694 = memref.load %arg0[%693] : memref<8xi32, #tpu.memory_space<smem>>
    %c0_i32_381 = arith.constant 0 : i32
    %695 = arith.cmpi ne, %694, %c0_i32_381 : i32
    %696 = arith.ori %692, %695 : i1
    %697 = arith.extui %696 : i1 to i32
    %c0_i32_382 = arith.constant 0 : i32
    %698 = arith.cmpi ne, %697, %c0_i32_382 : i32
    scf.if %698 {
      %755 = arith.index_cast %c6_i32_379 : i32 to index
      %c0_415 = arith.constant 0 : index
      %c0_416 = arith.constant 0 : index
      %756 = vector.load %arg2[%755, %c0_415, %c0_416] : memref<8x8x128xf32, #tpu.memory_space<vmem>>, vector<1x8x128xf32>
      %757 = vector.shape_cast %756 : vector<1x8x128xf32> to vector<8x128xf32>
      %c0_417 = arith.constant 0 : index
      %c0_418 = arith.constant 0 : index
      %758 = vector.load %arg11[%c0_417, %c0_418] : memref<8x256xf32, #tpu.memory_space<vmem>>, vector<8x128xf32>
      tpu.vector_store %arg11[%c0_417, %c0_418], %757 {strides = array<i32>} : memref<8x256xf32, #tpu.memory_space<vmem>>, vector<8x128xf32>,
    } else {
    }
    %true_383 = arith.constant true
    %699 = arith.xori %696, %true_383 : i1
    %700 = arith.extui %699 : i1 to i32
    %c0_i32_384 = arith.constant 0 : i32
    %701 = arith.cmpi ne, %700, %c0_i32_384 : i32
    scf.if %701 {
      %c0_415 = arith.constant 0 : index
      %c0_416 = arith.constant 0 : index
      %755 = vector.load %arg13[%c0_415, %c0_416] : memref<8x128xf32, #tpu.memory_space<vmem>>, vector<8x128xf32>
      %c0_417 = arith.constant 0 : index
      %c0_418 = arith.constant 0 : index
      %756 = vector.load %arg11[%c0_417, %c0_418] : memref<8x256xf32, #tpu.memory_space<vmem>>, vector<8x128xf32>
      tpu.vector_store %arg11[%c0_417, %c0_418], %755 {strides = array<i32>} : memref<8x256xf32, #tpu.memory_space<vmem>>, vector<8x128xf32>,
    } else {
    }
    %c0_385 = arith.constant 0 : index
    %c0_386 = arith.constant 0 : index
    %702 = vector.load %arg11[%c0_385, %c0_386] : memref<8x256xf32, #tpu.memory_space<vmem>>, vector<8x256xf32>
    %703 = arith.truncf %702 : vector<8x256xf32> to vector<8x256xbf16>
    %c0_387 = arith.constant 0 : index
    %c0_388 = arith.constant 0 : index
    %704 = vector.load %arg6[%c0_387, %c0_388] : memref<256x512xbf16, #tpu.memory_space<vmem>>, vector<256x512xbf16>
    %cst_389 = arith.constant dense<0.000000e+00> : vector<8x512xf32>
    %705 = tpu.matmul %703, %704, %cst_389 {dimension_numbers = #tpu.dot_dimension_numbers<[1], [0], [0], [1], [0, 0, 1, 1], [], []>} : vector<8x256xbf16>, vector<256x512xbf16>, vector<8x512xf32> -> vector<8x512xf32>
    %c0_390 = arith.constant 0 : index
    %c0_391 = arith.constant 0 : index
    %706 = vector.load %arg7[%c0_390, %c0_391] : memref<8x512xf32, #tpu.memory_space<vmem>>, vector<8x512xf32>
    %707 = arith.addf %705, %706 : vector<8x512xf32>
    %708 = vector.extract_strided_slice %707 {offsets = [0, 0], sizes = [8, 128], strides = [1, 1]} : vector<8x512xf32> to vector<8x128xf32>
    %709 = arith.negf %708 : vector<8x128xf32>
    %710 = math.exp %709 : vector<8x128xf32>
    %cst_392 = arith.constant 1.000000e+00 : f32
    %711 = vector.broadcast %cst_392 : f32 to vector<8x128xf32>
    %712 = arith.addf %711, %710 : vector<8x128xf32>
    %713 = arith.divf %711, %712 : vector<8x128xf32>
    %714 = vector.extract_strided_slice %707 {offsets = [0, 128], sizes = [8, 128], strides = [1, 1]} : vector<8x512xf32> to vector<8x128xf32>
    %715 = arith.negf %714 : vector<8x128xf32>
    %716 = math.exp %715 : vector<8x128xf32>
    %cst_393 = arith.constant 1.000000e+00 : f32
    %717 = vector.broadcast %cst_393 : f32 to vector<8x128xf32>
    %718 = arith.addf %717, %716 : vector<8x128xf32>
    %719 = arith.divf %717, %718 : vector<8x128xf32>
    %720 = vector.extract_strided_slice %707 {offsets = [0, 256], sizes = [8, 128], strides = [1, 1]} : vector<8x512xf32> to vector<8x128xf32>
    %721 = math.tanh %720 : vector<8x128xf32>
    %722 = vector.extract_strided_slice %707 {offsets = [0, 384], sizes = [8, 128], strides = [1, 1]} : vector<8x512xf32> to vector<8x128xf32>
    %723 = arith.negf %722 : vector<8x128xf32>
    %724 = math.exp %723 : vector<8x128xf32>
    %cst_394 = arith.constant 1.000000e+00 : f32
    %725 = vector.broadcast %cst_394 : f32 to vector<8x128xf32>
    %726 = arith.addf %725, %724 : vector<8x128xf32>
    %727 = arith.divf %725, %726 : vector<8x128xf32>
    %c0_395 = arith.constant 0 : index
    %c0_396 = arith.constant 0 : index
    %728 = vector.load %arg12[%c0_395, %c0_396] : memref<8x128xf32, #tpu.memory_space<vmem>>, vector<8x128xf32>
    %729 = arith.mulf %719, %728 : vector<8x128xf32>
    %730 = arith.mulf %713, %721 : vector<8x128xf32>
    %731 = arith.addf %729, %730 : vector<8x128xf32>
    %732 = math.tanh %731 : vector<8x128xf32>
    %733 = arith.mulf %727, %732 : vector<8x128xf32>
    %c0_397 = arith.constant 0 : index
    %c128_398 = arith.constant 128 : index
    %734 = vector.load %arg11[%c0_397, %c128_398] : memref<8x256xf32, #tpu.memory_space<vmem>>, vector<8x128xf32>
    tpu.vector_store %arg11[%c0_397, %c128_398], %733 {strides = array<i32>} : memref<8x256xf32, #tpu.memory_space<vmem>>, vector<8x128xf32>,
    %c0_399 = arith.constant 0 : index
    %c0_400 = arith.constant 0 : index
    %735 = vector.load %arg12[%c0_399, %c0_400] : memref<8x128xf32, #tpu.memory_space<vmem>>, vector<8x128xf32>
    tpu.vector_store %arg12[%c0_399, %c0_400], %731 {strides = array<i32>} : memref<8x128xf32, #tpu.memory_space<vmem>>, vector<8x128xf32>,
    %736 = arith.truncf %733 : vector<8x128xf32> to vector<8x128xbf16>
    %c0_401 = arith.constant 0 : index
    %c0_402 = arith.constant 0 : index
    %737 = vector.load %arg8[%c0_401, %c0_402] : memref<128x128xbf16, #tpu.memory_space<vmem>>, vector<128x128xbf16>
    %cst_403 = arith.constant dense<0.000000e+00> : vector<8x128xf32>
    %738 = tpu.matmul %736, %737, %cst_403 {dimension_numbers = #tpu.dot_dimension_numbers<[1], [0], [0], [1], [0, 0, 1, 1], [], []>} : vector<8x128xbf16>, vector<128x128xbf16>, vector<8x128xf32> -> vector<8x128xf32>
    %c0_404 = arith.constant 0 : index
    %c0_405 = arith.constant 0 : index
    %739 = vector.load %arg9[%c0_404, %c0_405] : memref<8x128xf32, #tpu.memory_space<vmem>>, vector<8x128xf32>
    %740 = arith.addf %738, %739 : vector<8x128xf32>
    %c1_i32_406 = arith.constant 1 : i32
    %741 = arith.addi %c6_i32_379, %c1_i32_406 : i32
    %742 = arith.index_cast %741 : i32 to index
    %c0_407 = arith.constant 0 : index
    %c0_408 = arith.constant 0 : index
    %743 = vector.load %arg10[%742, %c0_407, %c0_408] : memref<8x8x128xf32, #tpu.memory_space<vmem>>, vector<1x8x128xf32>
    %744 = vector.shape_cast %743 : vector<1x8x128xf32> to vector<8x128xf32>
    %745 = vector.shape_cast %740 : vector<8x128xf32> to vector<1x8x128xf32>
    tpu.vector_store %arg10[%742, %c0_407, %c0_408], %745 {strides = array<i32>} : memref<8x8x128xf32, #tpu.memory_space<vmem>>, vector<1x8x128xf32>,
    %c1_i32_409 = arith.constant 1 : i32
    %746 = arith.addi %c6_i32_379, %c1_i32_409 : i32
    %c7_i32_410 = arith.constant 7 : i32
    %747 = arith.cmpi slt, %746, %c7_i32_410 : i32
    %c1_i32_411 = arith.constant 1 : i32
    %748 = arith.addi %c6_i32_379, %c1_i32_411 : i32
    %749 = arith.index_cast %748 : i32 to index
    %750 = memref.load %arg0[%749] : memref<8xi32, #tpu.memory_space<smem>>
    %c0_i32_412 = arith.constant 0 : i32
    %751 = arith.cmpi eq, %750, %c0_i32_412 : i32
    %752 = arith.andi %747, %751 : i1
    %753 = arith.extui %752 : i1 to i32
    %c0_i32_413 = arith.constant 0 : i32
    %754 = arith.cmpi ne, %753, %c0_i32_413 : i32
    scf.if %754 {
      %755 = tpu.iota {dimensions = array<i32: 1>} : vector<8x128xi32>
      %cst_415 = arith.constant dense<0xFF800000> : vector<8xf32>
      %756 = vector.multi_reduction <maximumf>, %740, %cst_415 [1] : vector<8x128xf32> to vector<8xf32>
      %757 = vector.shape_cast %756 : vector<8xf32> to vector<8x1xf32>
      %758 = vector.broadcast %757 : vector<8x1xf32> to vector<8x128xf32>
      %759 = arith.cmpf oeq, %740, %758 : vector<8x128xf32>
      %c128_i32 = arith.constant 128 : i32
      %760 = vector.broadcast %c128_i32 : i32 to vector<8x128xi32>
      %761 = arith.select %759, %755, %760 : vector<8x128xi1>, vector<8x128xi32>
      %cst_416 = arith.constant dense<2147483647> : vector<8xi32>
      %762 = vector.multi_reduction <minsi>, %761, %cst_416 [1] : vector<8x128xi32> to vector<8xi32>
      %763 = vector.shape_cast %762 : vector<8xi32> to vector<8x1xi32>
      %764 = vector.broadcast %763 : vector<8x1xi32> to vector<8x128xi32>
      %765 = arith.cmpi eq, %755, %764 : vector<8x128xi32>
      %766 = arith.extui %765 : vector<8x128xi1> to vector<8x128xi32>
      %767 = arith.sitofp %766 : vector<8x128xi32> to vector<8x128xf32>
      %768 = arith.truncf %767 : vector<8x128xf32> to vector<8x128xbf16>
      %c0_417 = arith.constant 0 : index
      %c0_418 = arith.constant 0 : index
      %769 = vector.load %arg3[%c0_417, %c0_418] : memref<128x128xbf16, #tpu.memory_space<vmem>>, vector<128x128xbf16>
      %cst_419 = arith.constant dense<0.000000e+00> : vector<8x128xf32>
      %770 = tpu.matmul %768, %769, %cst_419 {dimension_numbers = #tpu.dot_dimension_numbers<[1], [0], [0], [1], [0, 0, 1, 1], [], []>} : vector<8x128xbf16>, vector<128x128xbf16>, vector<8x128xf32> -> vector<8x128xf32>
      %c0_420 = arith.constant 0 : index
      %c0_421 = arith.constant 0 : index
      %771 = vector.load %arg13[%c0_420, %c0_421] : memref<8x128xf32, #tpu.memory_space<vmem>>, vector<8x128xf32>
      tpu.vector_store %arg13[%c0_420, %c0_421], %770 {strides = array<i32>} : memref<8x128xf32, #tpu.memory_space<vmem>>, vector<8x128xf32>,
    } else {
    }
    %c7_i32_414 = arith.constant 7 : i32
    return
  }
}

</mosaic_0001>

<llo_original>
// kernel: seq2seq_forward.1
$region0: #{seq2seq_forward.1}
  #allocation0 [shape = 'u32[]', space=smem, size = 0x4, offset = 0x4, fixed_abs, tag = 'smem constant byte address 0x4 - core index']
  #allocation1 [shape = 'u32[144,128]{1,0:T(1,128)}', space=vmem, size = 0x12000, scoped, tag = 'internal scratch']
  #allocation2 [shape = 'f32[8,256]{1,0:T(8,128)}', space=vmem, size = 0x2000, scoped, tag = 'scratch operand']
  #allocation3 [shape = 'f32[8,128]{1,0:T(8,128)}', space=vmem, size = 0x1000, scoped, tag = 'scratch operand']
  #allocation4 [shape = 'f32[8,128]{1,0:T(8,128)}', space=vmem, size = 0x1000, scoped, tag = 'scratch operand']
  %s0 = inlined_call_operand.vmem [shape: s32[8], index: 0, kind: input, shape index: {}]
  %s1 = inlined_call_operand.vmem [shape: f32[8,8,128], index: 1, kind: input, shape index: {}]
  %s2 = inlined_call_operand.vmem [shape: f32[8,8,128], index: 2, kind: input, shape index: {}]
  %s3 = inlined_call_operand.vmem [shape: bf16[128,128], index: 3, kind: input, shape index: {}]
  %s4 = inlined_call_operand.vmem [shape: bf16[256,512], index: 4, kind: input, shape index: {}]
  %s5 = inlined_call_operand.vmem [shape: f32[8,512], index: 5, kind: input, shape index: {}]
  %s6 = inlined_call_operand.vmem [shape: bf16[256,512], index: 6, kind: input, shape index: {}]
  %s7 = inlined_call_operand.vmem [shape: f32[8,512], index: 7, kind: input, shape index: {}]
  %s8 = inlined_call_operand.vmem [shape: bf16[128,128], index: 8, kind: input, shape index: {}]
  %s9 = inlined_call_operand.vmem [shape: f32[8,128], index: 9, kind: input, shape index: {}]
  %s10 = inlined_call_operand.hbm [shape: f32[8,8,128], index: 10, kind: output, shape index: {}]
  %s11 = sld [smem:[#allocation0]]
  $region126: #{seq2seq_forward.1} parent=0
    _
  %s13 = ssub.s32 1, %s11
  %s14 = scalar_select 0, %s13, %s11
  $region1: #{seq2seq_forward.1} parent=0
    #allocation5 [shape = 'u8[512]{0}', space=smem, size = 0x200, scoped, tag = 'input window, operand 0, single buffered']
    #allocation6 [shape = 's32[1]{0}', space=sflag, size = 0x4, scoped, tag = 'scoped memory for seq2seq_forward.1']
    #allocation7 [shape = 's32[1]{0}', space=sflag, size = 0x4, scoped, tag = 'scoped memory for seq2seq_forward.1']
    #allocation8 [shape = 'u8[32768]{0}', space=vmem, size = 0x8000, scoped, tag = 'output window, operand 0, single buffered']
    %15 = vsyncpa [#allocation7], 0
    %16 = vsyncpa [#allocation6], 0
    // Predicated region
    $region2: #{seq2seq_forward.1} parent=1 // pred_check
      _
    $region3: #{seq2seq_forward.1} parent=1 // pred_check_branch
      %18 = sbr.rel (0) target = $region5
    $region4: #{seq2seq_forward.1} parent=1 // pred_region
      %s20 = ssub.s32 16, 16
      %21 = vsyncadd [#allocation7], %s20
      %s23 = sshll.u32 %s0, 4
      %s24 = int_to_ptr.vmem [resolvable:$true] %s23
      %26 = dma.vmem_to_smem %s24, 16, [#allocation5], [#allocation7]
    $region5: #{seq2seq_forward.1} parent=1 // pred_fallthru
      _
    // Predicated region
    $region6: #{seq2seq_forward.1} parent=1 // pred_check
      _
    $region7: #{seq2seq_forward.1} parent=1 // pred_check_branch
      %28 = sbr.rel (0) target = $region9
    $region8: #{seq2seq_forward.1} parent=1 // pred_region
      _
    $region9: #{seq2seq_forward.1} parent=1 // pred_fallthru
      _
    // Predicated region
    $region10: #{seq2seq_forward.1} parent=1 // pred_check
      _
    $region11: #{seq2seq_forward.1} parent=1 // pred_check_branch
      %30 = sbr.rel (0) target = $region13
    $region12: #{seq2seq_forward.1} parent=1 // pred_region
      _
    $region13: #{seq2seq_forward.1} parent=1 // pred_fallthru
      _
    // Predicated region
    $region14: #{seq2seq_forward.1} parent=1 // pred_check
      _
    $region15: #{seq2seq_forward.1} parent=1 // pred_check_branch
      %32 = sbr.rel (0) target = $region17
    $region16: #{seq2seq_forward.1} parent=1 // pred_region
      _
    $region17: #{seq2seq_forward.1} parent=1 // pred_fallthru
      _
    // Predicated region
    $region18: #{seq2seq_forward.1} parent=1 // pred_check
      _
    $region19: #{seq2seq_forward.1} parent=1 // pred_check_branch
      %34 = sbr.rel (0) target = $region21
    $region20: #{seq2seq_forward.1} parent=1 // pred_region
      _
    $region21: #{seq2seq_forward.1} parent=1 // pred_fallthru
      _
    // Predicated region
    $region22: #{seq2seq_forward.1} parent=1 // pred_check
      _
    $region23: #{seq2seq_forward.1} parent=1 // pred_check_branch
      %36 = sbr.rel (0) target = $region25
    $region24: #{seq2seq_forward.1} parent=1 // pred_region
      _
    $region25: #{seq2seq_forward.1} parent=1 // pred_fallthru
      _
    // Predicated region
    $region26: #{seq2seq_forward.1} parent=1 // pred_check
      _
    $region27: #{seq2seq_forward.1} parent=1 // pred_check_branch
      %38 = sbr.rel (0) target = $region29
    $region28: #{seq2seq_forward.1} parent=1 // pred_region
      _
    $region29: #{seq2seq_forward.1} parent=1 // pred_fallthru
      _
    // Predicated region
    $region30: #{seq2seq_forward.1} parent=1 // pred_check
      _
    $region31: #{seq2seq_forward.1} parent=1 // pred_check_branch
      %40 = sbr.rel (0) target = $region33
    $region32: #{seq2seq_forward.1} parent=1 // pred_region
      _
    $region33: #{seq2seq_forward.1} parent=1 // pred_fallthru
      _
    // Predicated region
    $region34: #{seq2seq_forward.1} parent=1 // pred_check
      _
    $region35: #{seq2seq_forward.1} parent=1 // pred_check_branch
      %42 = sbr.rel (0) target = $region37
    $region36: #{seq2seq_forward.1} parent=1 // pred_region
      _
    $region37: #{seq2seq_forward.1} parent=1 // pred_fallthru
      _
    // Predicated region
    $region38: #{seq2seq_forward.1} parent=1 // pred_check
      _
    $region39: #{seq2seq_forward.1} parent=1 // pred_check_branch
      %44 = sbr.rel (0) target = $region41
    $region40: #{seq2seq_forward.1} parent=1 // pred_region
      _
    $region41: #{seq2seq_forward.1} parent=1 // pred_fallthru
      _
    // Predicated region
    $region42: #{seq2seq_forward.1} parent=1 // pred_check
      _
    $region43: #{seq2seq_forward.1} parent=1 // pred_check_branch
      %46 = sbr.rel (0) target = $region45
    $region44: #{seq2seq_forward.1} parent=1 // pred_region
      %47 = dma.done [#allocation7], 16
    $region45: #{seq2seq_forward.1} parent=1 // pred_fallthru
      _
    %48 = sfence
    %50 = vst [vmem:[#allocation2 + $0x8] sm:$0xff] 0.0
    %51 = vst [vmem:[#allocation3] sm:$0xff] 0.0
    %52 = vst [vmem:[#allocation4] sm:$0xff] 0.0
    %53 = vst [vmem:[#allocation8] sm:$0xff] 0.0
    %v54 = vld [vmem:[%s1] sm:$0xff]
    %55 = vst [vmem:[#allocation2] sm:$0xff] %v54
    %v56 = vld [vmem:[#allocation2] sm:$0xff]
    %v57 = vld [vmem:[#allocation2 + $0x8] sm:$0xff]
    %v58 = vpack.c.bf16 %v56, %v56
    %v59 = vpack.c.bf16 %v57, %v57
    %v60 = vld [vmem:[%s4] sm:$0xff]
    %v61 = vld [vmem:[%s4 + $0x8] sm:$0xff]
    %v62 = vld [vmem:[%s4 + $0x10] sm:$0xff]
    %v63 = vld [vmem:[%s4 + $0x18] sm:$0xff]
    %v64 = vld [vmem:[%s4 + $0x20] sm:$0xff]
    %v65 = vld [vmem:[%s4 + $0x28] sm:$0xff]
    %v66 = vld [vmem:[%s4 + $0x30] sm:$0xff]
    %v67 = vld [vmem:[%s4 + $0x38] sm:$0xff]
    %v68 = vld [vmem:[%s4 + $0x40] sm:$0xff]
    %v69 = vld [vmem:[%s4 + $0x48] sm:$0xff]
    %v70 = vld [vmem:[%s4 + $0x50] sm:$0xff]
    %v71 = vld [vmem:[%s4 + $0x58] sm:$0xff]
    %v72 = vld [vmem:[%s4 + $0x60] sm:$0xff]
    %v73 = vld [vmem:[%s4 + $0x68] sm:$0xff]
    %v74 = vld [vmem:[%s4 + $0x70] sm:$0xff]
    %v75 = vld [vmem:[%s4 + $0x78] sm:$0xff]
    %v76 = vld [vmem:[%s4 + $0x80] sm:$0xff]
    %v77 = vld [vmem:[%s4 + $0x88] sm:$0xff]
    %v78 = vld [vmem:[%s4 + $0x90] sm:$0xff]
    %v79 = vld [vmem:[%s4 + $0x98] sm:$0xff]
    %v80 = vld [vmem:[%s4 + $0xa0] sm:$0xff]
    %v81 = vld [vmem:[%s4 + $0xa8] sm:$0xff]
    %v82 = vld [vmem:[%s4 + $0xb0] sm:$0xff]
    %v83 = vld [vmem:[%s4 + $0xb8] sm:$0xff]
    %v84 = vld [vmem:[%s4 + $0xc0] sm:$0xff]
    %v85 = vld [vmem:[%s4 + $0xc8] sm:$0xff]
    %v86 = vld [vmem:[%s4 + $0xd0] sm:$0xff]
    %v87 = vld [vmem:[%s4 + $0xd8] sm:$0xff]
    %v88 = vld [vmem:[%s4 + $0xe0] sm:$0xff]
    %v89 = vld [vmem:[%s4 + $0xe8] sm:$0xff]
    %v90 = vld [vmem:[%s4 + $0xf0] sm:$0xff]
    %v91 = vld [vmem:[%s4 + $0xf8] sm:$0xff]
    %v92 = vld [vmem:[%s4 + $0x100] sm:$0xff]
    %v93 = vld [vmem:[%s4 + $0x108] sm:$0xff]
    %v94 = vld [vmem:[%s4 + $0x110] sm:$0xff]
    %v95 = vld [vmem:[%s4 + $0x118] sm:$0xff]
    %v96 = vld [vmem:[%s4 + $0x120] sm:$0xff]
    %v97 = vld [vmem:[%s4 + $0x128] sm:$0xff]
    %v98 = vld [vmem:[%s4 + $0x130] sm:$0xff]
    %v99 = vld [vmem:[%s4 + $0x138] sm:$0xff]
    %v100 = vld [vmem:[%s4 + $0x140] sm:$0xff]
    %v101 = vld [vmem:[%s4 + $0x148] sm:$0xff]
    %v102 = vld [vmem:[%s4 + $0x150] sm:$0xff]
    %v103 = vld [vmem:[%s4 + $0x158] sm:$0xff]
    %v104 = vld [vmem:[%s4 + $0x160] sm:$0xff]
    %v105 = vld [vmem:[%s4 + $0x168] sm:$0xff]
    %v106 = vld [vmem:[%s4 + $0x170] sm:$0xff]
    %v107 = vld [vmem:[%s4 + $0x178] sm:$0xff]
    %v108 = vld [vmem:[%s4 + $0x180] sm:$0xff]
    %v109 = vld [vmem:[%s4 + $0x188] sm:$0xff]
    %v110 = vld [vmem:[%s4 + $0x190] sm:$0xff]
    %v111 = vld [vmem:[%s4 + $0x198] sm:$0xff]
    %v112 = vld [vmem:[%s4 + $0x1a0] sm:$0xff]
    %v113 = vld [vmem:[%s4 + $0x1a8] sm:$0xff]
    %v114 = vld [vmem:[%s4 + $0x1b0] sm:$0xff]
    %v115 = vld [vmem:[%s4 + $0x1b8] sm:$0xff]
    %v116 = vld [vmem:[%s4 + $0x1c0] sm:$0xff]
    %v117 = vld [vmem:[%s4 + $0x1c8] sm:$0xff]
    %v118 = vld [vmem:[%s4 + $0x1d0] sm:$0xff]
    %v119 = vld [vmem:[%s4 + $0x1d8] sm:$0xff]
    %v120 = vld [vmem:[%s4 + $0x1e0] sm:$0xff]
    %v121 = vld [vmem:[%s4 + $0x1e8] sm:$0xff]
    %v122 = vld [vmem:[%s4 + $0x1f0] sm:$0xff]
    %v123 = vld [vmem:[%s4 + $0x1f8] sm:$0xff]
    %v124 = vld [vmem:[%s5] sm:$0xff]
    %v125 = vld [vmem:[%s5 + $0x8] sm:$0xff]
    %v126 = vld [vmem:[%s5 + $0x10] sm:$0xff]
    %v127 = vld [vmem:[%s5 + $0x18] sm:$0xff]
    %v192 = vunpack.c.l.b16 %v60
    %v193 = vunpack.c.h.b16 %v60
    %v194 = vunpack.c.l.b16 %v61
    %v195 = vunpack.c.h.b16 %v61
    %v196 = vunpack.c.l.b16 %v62
    %v197 = vunpack.c.h.b16 %v62
    %v198 = vunpack.c.l.b16 %v63
    %v199 = vunpack.c.h.b16 %v63
    %v200 = vunpack.c.l.b16 %v64
    %v201 = vunpack.c.h.b16 %v64
    %v202 = vunpack.c.l.b16 %v65
    %v203 = vunpack.c.h.b16 %v65
    %v204 = vunpack.c.l.b16 %v66
    %v205 = vunpack.c.h.b16 %v66
    %v206 = vunpack.c.l.b16 %v67
    %v207 = vunpack.c.h.b16 %v67
    %v208 = vunpack.c.l.b16 %v68
    %v209 = vunpack.c.h.b16 %v68
    %v210 = vunpack.c.l.b16 %v69
    %v211 = vunpack.c.h.b16 %v69
    %v212 = vunpack.c.l.b16 %v70
    %v213 = vunpack.c.h.b16 %v70
    %v214 = vunpack.c.l.b16 %v71
    %v215 = vunpack.c.h.b16 %v71
    %v216 = vunpack.c.l.b16 %v72
    %v217 = vunpack.c.h.b16 %v72
    %v218 = vunpack.c.l.b16 %v73
    %v219 = vunpack.c.h.b16 %v73
    %v220 = vunpack.c.l.b16 %v74
    %v221 = vunpack.c.h.b16 %v74
    %v222 = vunpack.c.l.b16 %v75
    %v223 = vunpack.c.h.b16 %v75
    %v224 = vunpack.c.l.b16 %v76
    %v225 = vunpack.c.h.b16 %v76
    %v226 = vunpack.c.l.b16 %v77
    %v227 = vunpack.c.h.b16 %v77
    %v228 = vunpack.c.l.b16 %v78
    %v229 = vunpack.c.h.b16 %v78
    %v230 = vunpack.c.l.b16 %v79
    %v231 = vunpack.c.h.b16 %v79
    %v232 = vunpack.c.l.b16 %v80
    %v233 = vunpack.c.h.b16 %v80
    %v234 = vunpack.c.l.b16 %v81
    %v235 = vunpack.c.h.b16 %v81
    %v236 = vunpack.c.l.b16 %v82
    %v237 = vunpack.c.h.b16 %v82
    %v238 = vunpack.c.l.b16 %v83
    %v239 = vunpack.c.h.b16 %v83
    %v240 = vunpack.c.l.b16 %v84
    %v241 = vunpack.c.h.b16 %v84
    %v242 = vunpack.c.l.b16 %v85
    %v243 = vunpack.c.h.b16 %v85
    %v244 = vunpack.c.l.b16 %v86
    %v245 = vunpack.c.h.b16 %v86
    %v246 = vunpack.c.l.b16 %v87
    %v247 = vunpack.c.h.b16 %v87
    %v248 = vunpack.c.l.b16 %v88
    %v249 = vunpack.c.h.b16 %v88
    %v250 = vunpack.c.l.b16 %v89
    %v251 = vunpack.c.h.b16 %v89
    %v252 = vunpack.c.l.b16 %v90
    %v253 = vunpack.c.h.b16 %v90
    %v254 = vunpack.c.l.b16 %v91
    %v255 = vunpack.c.h.b16 %v91
    %v256 = vunpack.c.l.b16 %v92
    %v257 = vunpack.c.h.b16 %v92
    %v258 = vunpack.c.l.b16 %v93
    %v259 = vunpack.c.h.b16 %v93
    %v260 = vunpack.c.l.b16 %v94
    %v261 = vunpack.c.h.b16 %v94
    %v262 = vunpack.c.l.b16 %v95
    %v263 = vunpack.c.h.b16 %v95
    %v264 = vunpack.c.l.b16 %v96
    %v265 = vunpack.c.h.b16 %v96
    %v266 = vunpack.c.l.b16 %v97
    %v267 = vunpack.c.h.b16 %v97
    %v268 = vunpack.c.l.b16 %v98
    %v269 = vunpack.c.h.b16 %v98
    %v270 = vunpack.c.l.b16 %v99
    %v271 = vunpack.c.h.b16 %v99
    %v272 = vunpack.c.l.b16 %v100
    %v273 = vunpack.c.h.b16 %v100
    %v274 = vunpack.c.l.b16 %v101
    %v275 = vunpack.c.h.b16 %v101
    %v276 = vunpack.c.l.b16 %v102
    %v277 = vunpack.c.h.b16 %v102
    %v278 = vunpack.c.l.b16 %v103
    %v279 = vunpack.c.h.b16 %v103
    %v280 = vunpack.c.l.b16 %v104
    %v281 = vunpack.c.h.b16 %v104
    %v282 = vunpack.c.l.b16 %v105
    %v283 = vunpack.c.h.b16 %v105
    %v284 = vunpack.c.l.b16 %v106
    %v285 = vunpack.c.h.b16 %v106
    %v286 = vunpack.c.l.b16 %v107
    %v287 = vunpack.c.h.b16 %v107
    %v288 = vunpack.c.l.b16 %v108
    %v289 = vunpack.c.h.b16 %v108
    %v290 = vunpack.c.l.b16 %v109
    %v291 = vunpack.c.h.b16 %v109
    %v292 = vunpack.c.l.b16 %v110
    %v293 = vunpack.c.h.b16 %v110
    %v294 = vunpack.c.l.b16 %v111
    %v295 = vunpack.c.h.b16 %v111
    %v296 = vunpack.c.l.b16 %v112
    %v297 = vunpack.c.h.b16 %v112
    %v298 = vunpack.c.l.b16 %v113
    %v299 = vunpack.c.h.b16 %v113
    %v300 = vunpack.c.l.b16 %v114
    %v301 = vunpack.c.h.b16 %v114
    %v302 = vunpack.c.l.b16 %v115
    %v303 = vunpack.c.h.b16 %v115
    %v304 = vunpack.c.l.b16 %v116
    %v305 = vunpack.c.h.b16 %v116
    %v306 = vunpack.c.l.b16 %v117
    %v307 = vunpack.c.h.b16 %v117
    %v308 = vunpack.c.l.b16 %v118
    %v309 = vunpack.c.h.b16 %v118
    %v310 = vunpack.c.l.b16 %v119
    %v311 = vunpack.c.h.b16 %v119
    %v312 = vunpack.c.l.b16 %v120
    %v313 = vunpack.c.h.b16 %v120
    %v314 = vunpack.c.l.b16 %v121
    %v315 = vunpack.c.h.b16 %v121
    %v316 = vunpack.c.l.b16 %v122
    %v317 = vunpack.c.h.b16 %v122
    %v318 = vunpack.c.l.b16 %v123
    %v319 = vunpack.c.h.b16 %v123
    %v320 = vpack.c.b16 %v196, %v192
    %v321 = vpack.c.b16 %v197, %v193
    %v322 = vpack.c.b16 %v198, %v194
    %v323 = vpack.c.b16 %v199, %v195
    %v324 = vpack.c.b16 %v204, %v200
    %v325 = vpack.c.b16 %v205, %v201
    %v326 = vpack.c.b16 %v206, %v202
    %v327 = vpack.c.b16 %v207, %v203
    %v328 = vpack.c.b16 %v212, %v208
    %v329 = vpack.c.b16 %v213, %v209
    %v330 = vpack.c.b16 %v214, %v210
    %v331 = vpack.c.b16 %v215, %v211
    %v332 = vpack.c.b16 %v220, %v216
    %v333 = vpack.c.b16 %v221, %v217
    %v334 = vpack.c.b16 %v222, %v218
    %v335 = vpack.c.b16 %v223, %v219
    %v336 = vpack.c.b16 %v228, %v224
    %v337 = vpack.c.b16 %v229, %v225
    %v338 = vpack.c.b16 %v230, %v226
    %v339 = vpack.c.b16 %v231, %v227
    %v340 = vpack.c.b16 %v236, %v232
    %v341 = vpack.c.b16 %v237, %v233
    %v342 = vpack.c.b16 %v238, %v234
    %v343 = vpack.c.b16 %v239, %v235
    %v344 = vpack.c.b16 %v244, %v240
    %v345 = vpack.c.b16 %v245, %v241
    %v346 = vpack.c.b16 %v246, %v242
    %v347 = vpack.c.b16 %v247, %v243
    %v348 = vpack.c.b16 %v252, %v248
    %v349 = vpack.c.b16 %v253, %v249
    %v350 = vpack.c.b16 %v254, %v250
    %v351 = vpack.c.b16 %v255, %v251
    %v352 = vpack.c.b16 %v260, %v256
    %v353 = vpack.c.b16 %v261, %v257
    %v354 = vpack.c.b16 %v262, %v258
    %v355 = vpack.c.b16 %v263, %v259
    %v356 = vpack.c.b16 %v268, %v264
    %v357 = vpack.c.b16 %v269, %v265
    %v358 = vpack.c.b16 %v270, %v266
    %v359 = vpack.c.b16 %v271, %v267
    %v360 = vpack.c.b16 %v276, %v272
    %v361 = vpack.c.b16 %v277, %v273
    %v362 = vpack.c.b16 %v278, %v274
    %v363 = vpack.c.b16 %v279, %v275
    %v364 = vpack.c.b16 %v284, %v280
    %v365 = vpack.c.b16 %v285, %v281
    %v366 = vpack.c.b16 %v286, %v282
    %v367 = vpack.c.b16 %v287, %v283
    %v368 = vpack.c.b16 %v292, %v288
    %v369 = vpack.c.b16 %v293, %v289
    %v370 = vpack.c.b16 %v294, %v290
    %v371 = vpack.c.b16 %v295, %v291
    %v372 = vpack.c.b16 %v300, %v296
    %v373 = vpack.c.b16 %v301, %v297
    %v374 = vpack.c.b16 %v302, %v298
    %v375 = vpack.c.b16 %v303, %v299
    %v376 = vpack.c.b16 %v308, %v304
    %v377 = vpack.c.b16 %v309, %v305
    %v378 = vpack.c.b16 %v310, %v306
    %v379 = vpack.c.b16 %v311, %v307
    %v380 = vpack.c.b16 %v316, %v312
    %v381 = vpack.c.b16 %v317, %v313
    %v382 = vpack.c.b16 %v318, %v314
    %v383 = vpack.c.b16 %v319, %v315
    %448 = vmatprep.subr.bf16.mxu0 %v321
    %449 = vmatpush1.bf16.msra.mxu0 %v320
    %450 = vmatprep.subr.bf16.mxu0 %v325
    %451 = vmatpush1.bf16.msra.mxu0 %v324
    %452 = vmatprep.subr.bf16.mxu0 %v329
    %453 = vmatpush1.bf16.msra.mxu0 %v328
    %454 = vmatprep.subr.bf16.mxu0 %v333
    %455 = vmatpush1.bf16.msra.mxu0 %v332
    %456 = vmatprep.subr.bf16.mxu0 %v337
    %457 = vmatpush1.bf16.msra.mxu0 %v336
    %458 = vmatprep.subr.bf16.mxu0 %v341
    %459 = vmatpush1.bf16.msra.mxu0 %v340
    %460 = vmatprep.subr.bf16.mxu0 %v345
    %461 = vmatpush1.bf16.msra.mxu0 %v344
    %462 = vmatprep.subr.bf16.mxu0 %v349
    %463 = vmatpush1.bf16.msra.mxu0 %v348
    %464 = vmatprep.subr.bf16.mxu0 %v353
    %465 = vmatpush1.bf16.msra.mxu0 %v352
    %466 = vmatprep.subr.bf16.mxu0 %v357
    %467 = vmatpush1.bf16.msra.mxu0 %v356
    %468 = vmatprep.subr.bf16.mxu0 %v361
    %469 = vmatpush1.bf16.msra.mxu0 %v360
    %470 = vmatprep.subr.bf16.mxu0 %v365
    %471 = vmatpush1.bf16.msra.mxu0 %v364
    %472 = vmatprep.subr.bf16.mxu0 %v369
    %473 = vmatpush1.bf16.msra.mxu0 %v368
    %474 = vmatprep.subr.bf16.mxu0 %v373
    %475 = vmatpush1.bf16.msra.mxu0 %v372
    %476 = vmatprep.subr.bf16.mxu0 %v377
    %477 = vmatpush1.bf16.msra.mxu0 %v376
    %478 = vmatprep.subr.bf16.mxu0 %v381
    %479 = vmatpush1.bf16.msra.mxu0 %v380
    %480 = vmatprep.mubr.bf16.mxu0 %v59
    %481 = vmatmul.mubr.bf16.gmra.mrb[0].mxu0 %v58
    %v482 = vpop.f32.mrb[0].mxu0
    %v483 = vadd.f32 %v124, %v482
    %v484 = vpop.f32.mrb[0].mxu0
    %v485 = vadd.f32 %v125, %v484
    %v486 = vpop.f32.mrb[0].mxu0
    %v487 = vpop.f32.mrb[0].mxu0
    %488 = vdwg.mxu0
    %489 = vmatprep.subr.bf16.mxu0 %v323
    %490 = vmatpush1.bf16.msra.mxu0 %v322
    %491 = vmatprep.subr.bf16.mxu0 %v327
    %492 = vmatpush1.bf16.msra.mxu0 %v326
    %493 = vmatprep.subr.bf16.mxu0 %v331
    %494 = vmatpush1.bf16.msra.mxu0 %v330
    %495 = vmatprep.subr.bf16.mxu0 %v335
    %496 = vmatpush1.bf16.msra.mxu0 %v334
    %497 = vmatprep.subr.bf16.mxu0 %v339
    %498 = vmatpush1.bf16.msra.mxu0 %v338
    %499 = vmatprep.subr.bf16.mxu0 %v343
    %500 = vmatpush1.bf16.msra.mxu0 %v342
    %501 = vmatprep.subr.bf16.mxu0 %v347
    %502 = vmatpush1.bf16.msra.mxu0 %v346
    %503 = vmatprep.subr.bf16.mxu0 %v351
    %504 = vmatpush1.bf16.msra.mxu0 %v350
    %505 = vmatprep.subr.bf16.mxu0 %v355
    %506 = vmatpush1.bf16.msra.mxu0 %v354
    %507 = vmatprep.subr.bf16.mxu0 %v359
    %508 = vmatpush1.bf16.msra.mxu0 %v358
    %509 = vmatprep.subr.bf16.mxu0 %v363
    %510 = vmatpush1.bf16.msra.mxu0 %v362
    %511 = vmatprep.subr.bf16.mxu0 %v367
    %512 = vmatpush1.bf16.msra.mxu0 %v366
    %513 = vmatprep.subr.bf16.mxu0 %v371
    %514 = vmatpush1.bf16.msra.mxu0 %v370
    %515 = vmatprep.subr.bf16.mxu0 %v375
    %516 = vmatpush1.bf16.msra.mxu0 %v374
    %517 = vmatprep.subr.bf16.mxu0 %v379
    %518 = vmatpush1.bf16.msra.mxu0 %v378
    %519 = vmatprep.subr.bf16.mxu0 %v383
    %520 = vmatpush1.bf16.msra.mxu0 %v382
    %521 = vmatprep.mubr.bf16.mxu0 %v59
    %522 = vmatmul.mubr.bf16.gmra.mrb[0].mxu0 %v58
    %v523 = vpop.f32.mrb[0].mxu0
    %v524 = vadd.f32 %v126, %v523
    %v525 = vpop.f32.mrb[0].mxu0
    %v526 = vadd.f32 %v127, %v525
    %v527 = vpop.f32.mrb[0].mxu0
    %v528 = vpop.f32.mrb[0].mxu0
    %529 = vdwg.mxu0
    %v530 = vxor.u32 %v483, 2147483648
    %v531 = vmul.f32 %v530, 1.442695
    %v532 = vpow.pop %v531
    %v533 = vadd.f32 %v532, 1.0
    %v534 = vrcp.pop %v533
    %v535 = vmul.f32 1.0, %v534
    %v536 = vxor.u32 %v485, 2147483648
    %v537 = vmul.f32 %v536, 1.442695
    %v538 = vpow.pop %v537
    %v539 = vadd.f32 %v538, 1.0
    %v540 = vrcp.pop %v539
    %v541 = vmul.f32 1.0, %v540
    %v542 = vtanh.pop %v524
    %v543 = vxor.u32 %v526, 2147483648
    %v544 = vmul.f32 %v543, 1.442695
    %v545 = vpow.pop %v544
    %v546 = vadd.f32 %v545, 1.0
    %v547 = vrcp.pop %v546
    %v548 = vmul.f32 1.0, %v547
    %v549 = vld [vmem:[#allocation3] sm:$0xff]
    %v550 = vmul.f32 %v541, %v549
    %v551 = vmul.f32 %v535, %v542
    %v552 = vadd.f32 %v550, %v551
    %v553 = vtanh.pop %v552
    %v554 = vmul.f32 %v548, %v553
    %555 = vst [vmem:[#allocation2 + $0x8] sm:$0xff] %v554
    %556 = vst [vmem:[#allocation3] sm:$0xff] %v552
    %s557 = scalar_lea.vmem %s1, 8
    %v558 = vld [vmem:[%s557] sm:$0xff]
    %559 = vst [vmem:[#allocation2] sm:$0xff] %v558
    %v560 = vld [vmem:[#allocation2] sm:$0xff]
    %v561 = vld [vmem:[#allocation2 + $0x8] sm:$0xff]
    %v562 = vpack.c.bf16 %v560, %v560
    %v563 = vpack.c.bf16 %v561, %v561
    %v564 = vld [vmem:[%s4] sm:$0xff]
    %v565 = vld [vmem:[%s4 + $0x8] sm:$0xff]
    %v566 = vld [vmem:[%s4 + $0x10] sm:$0xff]
    %v567 = vld [vmem:[%s4 + $0x18] sm:$0xff]
    %v568 = vld [vmem:[%s4 + $0x20] sm:$0xff]
    %v569 = vld [vmem:[%s4 + $0x28] sm:$0xff]
    %v570 = vld [vmem:[%s4 + $0x30] sm:$0xff]
    %v571 = vld [vmem:[%s4 + $0x38] sm:$0xff]
    %v572 = vld [vmem:[%s4 + $0x40] sm:$0xff]
    %v573 = vld [vmem:[%s4 + $0x48] sm:$0xff]
    %v574 = vld [vmem:[%s4 + $0x50] sm:$0xff]
    %v575 = vld [vmem:[%s4 + $0x58] sm:$0xff]
    %v576 = vld [vmem:[%s4 + $0x60] sm:$0xff]
    %v577 = vld [vmem:[%s4 + $0x68] sm:$0xff]
    %v578 = vld [vmem:[%s4 + $0x70] sm:$0xff]
    %v579 = vld [vmem:[%s4 + $0x78] sm:$0xff]
    %v580 = vld [vmem:[%s4 + $0x80] sm:$0xff]
    %v581 = vld [vmem:[%s4 + $0x88] sm:$0xff]
    %v582 = vld [vmem:[%s4 + $0x90] sm:$0xff]
    %v583 = vld [vmem:[%s4 + $0x98] sm:$0xff]
    %v584 = vld [vmem:[%s4 + $0xa0] sm:$0xff]
    %v585 = vld [vmem:[%s4 + $0xa8] sm:$0xff]
    %v586 = vld [vmem:[%s4 + $0xb0] sm:$0xff]
    %v587 = vld [vmem:[%s4 + $0xb8] sm:$0xff]
    %v588 = vld [vmem:[%s4 + $0xc0] sm:$0xff]
    %v589 = vld [vmem:[%s4 + $0xc8] sm:$0xff]
    %v590 = vld [vmem:[%s4 + $0xd0] sm:$0xff]
    %v591 = vld [vmem:[%s4 + $0xd8] sm:$0xff]
    %v592 = vld [vmem:[%s4 + $0xe0] sm:$0xff]
    %v593 = vld [vmem:[%s4 + $0xe8] sm:$0xff]
    %v594 = vld [vmem:[%s4 + $0xf0] sm:$0xff]
    %v595 = vld [vmem:[%s4 + $0xf8] sm:$0xff]
    %v596 = vld [vmem:[%s4 + $0x100] sm:$0xff]
    %v597 = vld [vmem:[%s4 + $0x108] sm:$0xff]
    %v598 = vld [vmem:[%s4 + $0x110] sm:$0xff]
    %v599 = vld [vmem:[%s4 + $0x118] sm:$0xff]
    %v600 = vld [vmem:[%s4 + $0x120] sm:$0xff]
    %v601 = vld [vmem:[%s4 + $0x128] sm:$0xff]
    %v602 = vld [vmem:[%s4 + $0x130] sm:$0xff]
    %v603 = vld [vmem:[%s4 + $0x138] sm:$0xff]
    %v604 = vld [vmem:[%s4 + $0x140] sm:$0xff]
    %v605 = vld [vmem:[%s4 + $0x148] sm:$0xff]
    %v606 = vld [vmem:[%s4 + $0x150] sm:$0xff]
    %v607 = vld [vmem:[%s4 + $0x158] sm:$0xff]
    %v608 = vld [vmem:[%s4 + $0x160] sm:$0xff]
    %v609 = vld [vmem:[%s4 + $0x168] sm:$0xff]
    %v610 = vld [vmem:[%s4 + $0x170] sm:$0xff]
    %v611 = vld [vmem:[%s4 + $0x178] sm:$0xff]
    %v612 = vld [vmem:[%s4 + $0x180] sm:$0xff]
    %v613 = vld [vmem:[%s4 + $0x188] sm:$0xff]
    %v614 = vld [vmem:[%s4 + $0x190] sm:$0xff]
    %v615 = vld [vmem:[%s4 + $0x198] sm:$0xff]
    %v616 = vld [vmem:[%s4 + $0x1a0] sm:$0xff]
    %v617 = vld [vmem:[%s4 + $0x1a8] sm:$0xff]
    %v618 = vld [vmem:[%s4 + $0x1b0] sm:$0xff]
    %v619 = vld [vmem:[%s4 + $0x1b8] sm:$0xff]
    %v620 = vld [vmem:[%s4 + $0x1c0] sm:$0xff]
    %v621 = vld [vmem:[%s4 + $0x1c8] sm:$0xff]
    %v622 = vld [vmem:[%s4 + $0x1d0] sm:$0xff]
    %v623 = vld [vmem:[%s4 + $0x1d8] sm:$0xff]
    %v624 = vld [vmem:[%s4 + $0x1e0] sm:$0xff]
    %v625 = vld [vmem:[%s4 + $0x1e8] sm:$0xff]
    %v626 = vld [vmem:[%s4 + $0x1f0] sm:$0xff]
    %v627 = vld [vmem:[%s4 + $0x1f8] sm:$0xff]
    %v628 = vld [vmem:[%s5] sm:$0xff]
    %v629 = vld [vmem:[%s5 + $0x8] sm:$0xff]
    %v630 = vld [vmem:[%s5 + $0x10] sm:$0xff]
    %v631 = vld [vmem:[%s5 + $0x18] sm:$0xff]
    %v696 = vunpack.c.l.b16 %v564
    %v697 = vunpack.c.h.b16 %v564
    %v698 = vunpack.c.l.b16 %v565
    %v699 = vunpack.c.h.b16 %v565
    %v700 = vunpack.c.l.b16 %v566
    %v701 = vunpack.c.h.b16 %v566
    %v702 = vunpack.c.l.b16 %v567
    %v703 = vunpack.c.h.b16 %v567
    %v704 = vunpack.c.l.b16 %v568
    %v705 = vunpack.c.h.b16 %v568
    %v706 = vunpack.c.l.b16 %v569
    %v707 = vunpack.c.h.b16 %v569
    %v708 = vunpack.c.l.b16 %v570
    %v709 = vunpack.c.h.b16 %v570
    %v710 = vunpack.c.l.b16 %v571
    %v711 = vunpack.c.h.b16 %v571
    %v712 = vunpack.c.l.b16 %v572
    %v713 = vunpack.c.h.b16 %v572
    %v714 = vunpack.c.l.b16 %v573
    %v715 = vunpack.c.h.b16 %v573
    %v716 = vunpack.c.l.b16 %v574
    %v717 = vunpack.c.h.b16 %v574
    %v718 = vunpack.c.l.b16 %v575
    %v719 = vunpack.c.h.b16 %v575
    %v720 = vunpack.c.l.b16 %v576
    %v721 = vunpack.c.h.b16 %v576
    %v722 = vunpack.c.l.b16 %v577
    %v723 = vunpack.c.h.b16 %v577
    %v724 = vunpack.c.l.b16 %v578
    %v725 = vunpack.c.h.b16 %v578
    %v726 = vunpack.c.l.b16 %v579
    %v727 = vunpack.c.h.b16 %v579
    %v728 = vunpack.c.l.b16 %v580
    %v729 = vunpack.c.h.b16 %v580
    %v730 = vunpack.c.l.b16 %v581
    %v731 = vunpack.c.h.b16 %v581
    %v732 = vunpack.c.l.b16 %v582
    %v733 = vunpack.c.h.b16 %v582
    %v734 = vunpack.c.l.b16 %v583
    %v735 = vunpack.c.h.b16 %v583
    %v736 = vunpack.c.l.b16 %v584
    %v737 = vunpack.c.h.b16 %v584
    %v738 = vunpack.c.l.b16 %v585
    %v739 = vunpack.c.h.b16 %v585
    %v740 = vunpack.c.l.b16 %v586
    %v741 = vunpack.c.h.b16 %v586
    %v742 = vunpack.c.l.b16 %v587
    %v743 = vunpack.c.h.b16 %v587
    %v744 = vunpack.c.l.b16 %v588
    %v745 = vunpack.c.h.b16 %v588
    %v746 = vunpack.c.l.b16 %v589
    %v747 = vunpack.c.h.b16 %v589
    %v748 = vunpack.c.l.b16 %v590
    %v749 = vunpack.c.h.b16 %v590
    %v750 = vunpack.c.l.b16 %v591
    %v751 = vunpack.c.h.b16 %v591
    %v752 = vunpack.c.l.b16 %v592
    %v753 = vunpack.c.h.b16 %v592
    %v754 = vunpack.c.l.b16 %v593
    %v755 = vunpack.c.h.b16 %v593
    %v756 = vunpack.c.l.b16 %v594
    %v757 = vunpack.c.h.b16 %v594
    %v758 = vunpack.c.l.b16 %v595
    %v759 = vunpack.c.h.b16 %v595
    %v760 = vunpack.c.l.b16 %v596
    %v761 = vunpack.c.h.b16 %v596
    %v762 = vunpack.c.l.b16 %v597
    %v763 = vunpack.c.h.b16 %v597
    %v764 = vunpack.c.l.b16 %v598
    %v765 = vunpack.c.h.b16 %v598
    %v766 = vunpack.c.l.b16 %v599
    %v767 = vunpack.c.h.b16 %v599
    %v768 = vunpack.c.l.b16 %v600
    %v769 = vunpack.c.h.b16 %v600
    %v770 = vunpack.c.l.b16 %v601
    %v771 = vunpack.c.h.b16 %v601
    %v772 = vunpack.c.l.b16 %v602
    %v773 = vunpack.c.h.b16 %v602
    %v774 = vunpack.c.l.b16 %v603
    %v775 = vunpack.c.h.b16 %v603
    %v776 = vunpack.c.l.b16 %v604
    %v777 = vunpack.c.h.b16 %v604
    %v778 = vunpack.c.l.b16 %v605
    %v779 = vunpack.c.h.b16 %v605
    %v780 = vunpack.c.l.b16 %v606
    %v781 = vunpack.c.h.b16 %v606
    %v782 = vunpack.c.l.b16 %v607
    %v783 = vunpack.c.h.b16 %v607
    %v784 = vunpack.c.l.b16 %v608
    %v785 = vunpack.c.h.b16 %v608
    %v786 = vunpack.c.l.b16 %v609
    %v787 = vunpack.c.h.b16 %v609
    %v788 = vunpack.c.l.b16 %v610
    %v789 = vunpack.c.h.b16 %v610
    %v790 = vunpack.c.l.b16 %v611
    %v791 = vunpack.c.h.b16 %v611
    %v792 = vunpack.c.l.b16 %v612
    %v793 = vunpack.c.h.b16 %v612
    %v794 = vunpack.c.l.b16 %v613
    %v795 = vunpack.c.h.b16 %v613
    %v796 = vunpack.c.l.b16 %v614
    %v797 = vunpack.c.h.b16 %v614
    %v798 = vunpack.c.l.b16 %v615
    %v799 = vunpack.c.h.b16 %v615
    %v800 = vunpack.c.l.b16 %v616
    %v801 = vunpack.c.h.b16 %v616
    %v802 = vunpack.c.l.b16 %v617
    %v803 = vunpack.c.h.b16 %v617
    %v804 = vunpack.c.l.b16 %v618
    %v805 = vunpack.c.h.b16 %v618
    %v806 = vunpack.c.l.b16 %v619
    %v807 = vunpack.c.h.b16 %v619
    %v808 = vunpack.c.l.b16 %v620
    %v809 = vunpack.c.h.b16 %v620
    %v810 = vunpack.c.l.b16 %v621
    %v811 = vunpack.c.h.b16 %v621
    %v812 = vunpack.c.l.b16 %v622
    %v813 = vunpack.c.h.b16 %v622
    %v814 = vunpack.c.l.b16 %v623
    %v815 = vunpack.c.h.b16 %v623
    %v816 = vunpack.c.l.b16 %v624
    %v817 = vunpack.c.h.b16 %v624
    %v818 = vunpack.c.l.b16 %v625
    %v819 = vunpack.c.h.b16 %v625
    %v820 = vunpack.c.l.b16 %v626
    %v821 = vunpack.c.h.b16 %v626
    %v822 = vunpack.c.l.b16 %v627
    %v823 = vunpack.c.h.b16 %v627
    %v824 = vpack.c.b16 %v700, %v696
    %v825 = vpack.c.b16 %v701, %v697
    %v826 = vpack.c.b16 %v702, %v698
    %v827 = vpack.c.b16 %v703, %v699
    %v828 = vpack.c.b16 %v708, %v704
    %v829 = vpack.c.b16 %v709, %v705
    %v830 = vpack.c.b16 %v710, %v706
    %v831 = vpack.c.b16 %v711, %v707
    %v832 = vpack.c.b16 %v716, %v712
    %v833 = vpack.c.b16 %v717, %v713
    %v834 = vpack.c.b16 %v718, %v714
    %v835 = vpack.c.b16 %v719, %v715
    %v836 = vpack.c.b16 %v724, %v720
    %v837 = vpack.c.b16 %v725, %v721
    %v838 = vpack.c.b16 %v726, %v722
    %v839 = vpack.c.b16 %v727, %v723
    %v840 = vpack.c.b16 %v732, %v728
    %v841 = vpack.c.b16 %v733, %v729
    %v842 = vpack.c.b16 %v734, %v730
    %v843 = vpack.c.b16 %v735, %v731
    %v844 = vpack.c.b16 %v740, %v736
    %v845 = vpack.c.b16 %v741, %v737
    %v846 = vpack.c.b16 %v742, %v738
    %v847 = vpack.c.b16 %v743, %v739
    %v848 = vpack.c.b16 %v748, %v744
    %v849 = vpack.c.b16 %v749, %v745
    %v850 = vpack.c.b16 %v750, %v746
    %v851 = vpack.c.b16 %v751, %v747
    %v852 = vpack.c.b16 %v756, %v752
    %v853 = vpack.c.b16 %v757, %v753
    %v854 = vpack.c.b16 %v758, %v754
    %v855 = vpack.c.b16 %v759, %v755
    %v856 = vpack.c.b16 %v764, %v760
    %v857 = vpack.c.b16 %v765, %v761
    %v858 = vpack.c.b16 %v766, %v762
    %v859 = vpack.c.b16 %v767, %v763
    %v860 = vpack.c.b16 %v772, %v768
    %v861 = vpack.c.b16 %v773, %v769
    %v862 = vpack.c.b16 %v774, %v770
    %v863 = vpack.c.b16 %v775, %v771
    %v864 = vpack.c.b16 %v780, %v776
    %v865 = vpack.c.b16 %v781, %v777
    %v866 = vpack.c.b16 %v782, %v778
    %v867 = vpack.c.b16 %v783, %v779
    %v868 = vpack.c.b16 %v788, %v784
    %v869 = vpack.c.b16 %v789, %v785
    %v870 = vpack.c.b16 %v790, %v786
    %v871 = vpack.c.b16 %v791, %v787
    %v872 = vpack.c.b16 %v796, %v792
    %v873 = vpack.c.b16 %v797, %v793
    %v874 = vpack.c.b16 %v798, %v794
    %v875 = vpack.c.b16 %v799, %v795
    %v876 = vpack.c.b16 %v804, %v800
    %v877 = vpack.c.b16 %v805, %v801
    %v878 = vpack.c.b16 %v806, %v802
    %v879 = vpack.c.b16 %v807, %v803
    %v880 = vpack.c.b16 %v812, %v808
    %v881 = vpack.c.b16 %v813, %v809
    %v882 = vpack.c.b16 %v814, %v810
    %v883 = vpack.c.b16 %v815, %v811
    %v884 = vpack.c.b16 %v820, %v816
    %v885 = vpack.c.b16 %v821, %v817
    %v886 = vpack.c.b16 %v822, %v818
    %v887 = vpack.c.b16 %v823, %v819
    %952 = vmatprep.subr.bf16.mxu0 %v825
    %953 = vmatpush1.bf16.msra.mxu0 %v824
    %954 = vmatprep.subr.bf16.mxu0 %v829
    %955 = vmatpush1.bf16.msra.mxu0 %v828
    %956 = vmatprep.subr.bf16.mxu0 %v833
    %957 = vmatpush1.bf16.msra.mxu0 %v832
    %958 = vmatprep.subr.bf16.mxu0 %v837
    %959 = vmatpush1.bf16.msra.mxu0 %v836
    %960 = vmatprep.subr.bf16.mxu0 %v841
    %961 = vmatpush1.bf16.msra.mxu0 %v840
    %962 = vmatprep.subr.bf16.mxu0 %v845
    %963 = vmatpush1.bf16.msra.mxu0 %v844
    %964 = vmatprep.subr.bf16.mxu0 %v849
    %965 = vmatpush1.bf16.msra.mxu0 %v848
    %966 = vmatprep.subr.bf16.mxu0 %v853
    %967 = vmatpush1.bf16.msra.mxu0 %v852
    %968 = vmatprep.subr.bf16.mxu0 %v857
    %969 = vmatpush1.bf16.msra.mxu0 %v856
    %970 = vmatprep.subr.bf16.mxu0 %v861
    %971 = vmatpush1.bf16.msra.mxu0 %v860
    %972 = vmatprep.subr.bf16.mxu0 %v865
    %973 = vmatpush1.bf16.msra.mxu0 %v864
    %974 = vmatprep.subr.bf16.mxu0 %v869
    %975 = vmatpush1.bf16.msra.mxu0 %v868
    %976 = vmatprep.subr.bf16.mxu0 %v873
    %977 = vmatpush1.bf16.msra.mxu0 %v872
    %978 = vmatprep.subr.bf16.mxu0 %v877
    %979 = vmatpush1.bf16.msra.mxu0 %v876
    %980 = vmatprep.subr.bf16.mxu0 %v881
    %981 = vmatpush1.bf16.msra.mxu0 %v880
    %982 = vmatprep.subr.bf16.mxu0 %v885
    %983 = vmatpush1.bf16.msra.mxu0 %v884
    %984 = vmatprep.mubr.bf16.mxu0 %v563
    %985 = vmatmul.mubr.bf16.gmra.mrb[0].mxu0 %v562
    %v986 = vpop.f32.mrb[0].mxu0
    %v987 = vadd.f32 %v628, %v986
    %v988 = vpop.f32.mrb[0].mxu0
    %v989 = vadd.f32 %v629, %v988
    %v990 = vpop.f32.mrb[0].mxu0
    %v991 = vpop.f32.mrb[0].mxu0
    %992 = vdwg.mxu0
    %993 = vmatprep.subr.bf16.mxu0 %v827
    %994 = vmatpush1.bf16.msra.mxu0 %v826
    %995 = vmatprep.subr.bf16.mxu0 %v831
    %996 = vmatpush1.bf16.msra.mxu0 %v830
    %997 = vmatprep.subr.bf16.mxu0 %v835
    %998 = vmatpush1.bf16.msra.mxu0 %v834
    %999 = vmatprep.subr.bf16.mxu0 %v839
    %1000 = vmatpush1.bf16.msra.mxu0 %v838
    %1001 = vmatprep.subr.bf16.mxu0 %v843
    %1002 = vmatpush1.bf16.msra.mxu0 %v842
    %1003 = vmatprep.subr.bf16.mxu0 %v847
    %1004 = vmatpush1.bf16.msra.mxu0 %v846
    %1005 = vmatprep.subr.bf16.mxu0 %v851
    %1006 = vmatpush1.bf16.msra.mxu0 %v850
    %1007 = vmatprep.subr.bf16.mxu0 %v855
    %1008 = vmatpush1.bf16.msra.mxu0 %v854
    %1009 = vmatprep.subr.bf16.mxu0 %v859
    %1010 = vmatpush1.bf16.msra.mxu0 %v858
    %1011 = vmatprep.subr.bf16.mxu0 %v863
    %1012 = vmatpush1.bf16.msra.mxu0 %v862
    %1013 = vmatprep.subr.bf16.mxu0 %v867
    %1014 = vmatpush1.bf16.msra.mxu0 %v866
    %1015 = vmatprep.subr.bf16.mxu0 %v871
    %1016 = vmatpush1.bf16.msra.mxu0 %v870
    %1017 = vmatprep.subr.bf16.mxu0 %v875
    %1018 = vmatpush1.bf16.msra.mxu0 %v874
    %1019 = vmatprep.subr.bf16.mxu0 %v879
    %1020 = vmatpush1.bf16.msra.mxu0 %v878
    %1021 = vmatprep.subr.bf16.mxu0 %v883
    %1022 = vmatpush1.bf16.msra.mxu0 %v882
    %1023 = vmatprep.subr.bf16.mxu0 %v887
    %1024 = vmatpush1.bf16.msra.mxu0 %v886
    %1025 = vmatprep.mubr.bf16.mxu0 %v563
    %1026 = vmatmul.mubr.bf16.gmra.mrb[0].mxu0 %v562
    %v1027 = vpop.f32.mrb[0].mxu0
    %v1028 = vadd.f32 %v630, %v1027
    %v1029 = vpop.f32.mrb[0].mxu0
    %v1030 = vadd.f32 %v631, %v1029
    %v1031 = vpop.f32.mrb[0].mxu0
    %v1032 = vpop.f32.mrb[0].mxu0
    %1033 = vdwg.mxu0
    %v1034 = vxor.u32 %v987, 2147483648
    %v1035 = vmul.f32 %v1034, 1.442695
    %v1036 = vpow.pop %v1035
    %v1037 = vadd.f32 %v1036, 1.0
    %v1038 = vrcp.pop %v1037
    %v1039 = vmul.f32 1.0, %v1038
    %v1040 = vxor.u32 %v989, 2147483648
    %v1041 = vmul.f32 %v1040, 1.442695
    %v1042 = vpow.pop %v1041
    %v1043 = vadd.f32 %v1042, 1.0
    %v1044 = vrcp.pop %v1043
    %v1045 = vmul.f32 1.0, %v1044
    %v1046 = vtanh.pop %v1028
    %v1047 = vxor.u32 %v1030, 2147483648
    %v1048 = vmul.f32 %v1047, 1.442695
    %v1049 = vpow.pop %v1048
    %v1050 = vadd.f32 %v1049, 1.0
    %v1051 = vrcp.pop %v1050
    %v1052 = vmul.f32 1.0, %v1051
    %v1053 = vld [vmem:[#allocation3] sm:$0xff]
    %v1054 = vmul.f32 %v1045, %v1053
    %v1055 = vmul.f32 %v1039, %v1046
    %v1056 = vadd.f32 %v1054, %v1055
    %v1057 = vtanh.pop %v1056
    %v1058 = vmul.f32 %v1052, %v1057
    %1059 = vst [vmem:[#allocation2 + $0x8] sm:$0xff] %v1058
    %1060 = vst [vmem:[#allocation3] sm:$0xff] %v1056
    %s1061 = scalar_lea.vmem %s1, 16
    %v1062 = vld [vmem:[%s1061] sm:$0xff]
    %1063 = vst [vmem:[#allocation2] sm:$0xff] %v1062
    %v1064 = vld [vmem:[#allocation2] sm:$0xff]
    %v1065 = vld [vmem:[#allocation2 + $0x8] sm:$0xff]
    %v1066 = vpack.c.bf16 %v1064, %v1064
    %v1067 = vpack.c.bf16 %v1065, %v1065
    %v1068 = vld [vmem:[%s4] sm:$0xff]
    %v1069 = vld [vmem:[%s4 + $0x8] sm:$0xff]
    %v1070 = vld [vmem:[%s4 + $0x10] sm:$0xff]
    %v1071 = vld [vmem:[%s4 + $0x18] sm:$0xff]
    %v1072 = vld [vmem:[%s4 + $0x20] sm:$0xff]
    %v1073 = vld [vmem:[%s4 + $0x28] sm:$0xff]
    %v1074 = vld [vmem:[%s4 + $0x30] sm:$0xff]
    %v1075 = vld [vmem:[%s4 + $0x38] sm:$0xff]
    %v1076 = vld [vmem:[%s4 + $0x40] sm:$0xff]
    %v1077 = vld [vmem:[%s4 + $0x48] sm:$0xff]
    %v1078 = vld [vmem:[%s4 + $0x50] sm:$0xff]
    %v1079 = vld [vmem:[%s4 + $0x58] sm:$0xff]
    %v1080 = vld [vmem:[%s4 + $0x60] sm:$0xff]
    %v1081 = vld [vmem:[%s4 + $0x68] sm:$0xff]
    %v1082 = vld [vmem:[%s4 + $0x70] sm:$0xff]
    %v1083 = vld [vmem:[%s4 + $0x78] sm:$0xff]
    %v1084 = vld [vmem:[%s4 + $0x80] sm:$0xff]
    %v1085 = vld [vmem:[%s4 + $0x88] sm:$0xff]
    %v1086 = vld [vmem:[%s4 + $0x90] sm:$0xff]
    %v1087 = vld [vmem:[%s4 + $0x98] sm:$0xff]
    %v1088 = vld [vmem:[%s4 + $0xa0] sm:$0xff]
    %v1089 = vld [vmem:[%s4 + $0xa8] sm:$0xff]
    %v1090 = vld [vmem:[%s4 + $0xb0] sm:$0xff]
    %v1091 = vld [vmem:[%s4 + $0xb8] sm:$0xff]
    %v1092 = vld [vmem:[%s4 + $0xc0] sm:$0xff]
    %v1093 = vld [vmem:[%s4 + $0xc8] sm:$0xff]
    %v1094 = vld [vmem:[%s4 + $0xd0] sm:$0xff]
    %v1095 = vld [vmem:[%s4 + $0xd8] sm:$0xff]
    %v1096 = vld [vmem:[%s4 + $0xe0] sm:$0xff]
    %v1097 = vld [vmem:[%s4 + $0xe8] sm:$0xff]
    %v1098 = vld [vmem:[%s4 + $0xf0] sm:$0xff]
    %v1099 = vld [vmem:[%s4 + $0xf8] sm:$0xff]
    %v1100 = vld [vmem:[%s4 + $0x100] sm:$0xff]
    %v1101 = vld [vmem:[%s4 + $0x108] sm:$0xff]
    %v1102 = vld [vmem:[%s4 + $0x110] sm:$0xff]
    %v1103 = vld [vmem:[%s4 + $0x118] sm:$0xff]
    %v1104 = vld [vmem:[%s4 + $0x120] sm:$0xff]
    %v1105 = vld [vmem:[%s4 + $0x128] sm:$0xff]
    %v1106 = vld [vmem:[%s4 + $0x130] sm:$0xff]
    %v1107 = vld [vmem:[%s4 + $0x138] sm:$0xff]
    %v1108 = vld [vmem:[%s4 + $0x140] sm:$0xff]
    %v1109 = vld [vmem:[%s4 + $0x148] sm:$0xff]
    %v1110 = vld [vmem:[%s4 + $0x150] sm:$0xff]
    %v1111 = vld [vmem:[%s4 + $0x158] sm:$0xff]
    %v1112 = vld [vmem:[%s4 + $0x160] sm:$0xff]
    %v1113 = vld [vmem:[%s4 + $0x168] sm:$0xff]
    %v1114 = vld [vmem:[%s4 + $0x170] sm:$0xff]
    %v1115 = vld [vmem:[%s4 + $0x178] sm:$0xff]
    %v1116 = vld [vmem:[%s4 + $0x180] sm:$0xff]
    %v1117 = vld [vmem:[%s4 + $0x188] sm:$0xff]
    %v1118 = vld [vmem:[%s4 + $0x190] sm:$0xff]
    %v1119 = vld [vmem:[%s4 + $0x198] sm:$0xff]
    %v1120 = vld [vmem:[%s4 + $0x1a0] sm:$0xff]
    %v1121 = vld [vmem:[%s4 + $0x1a8] sm:$0xff]
    %v1122 = vld [vmem:[%s4 + $0x1b0] sm:$0xff]
    %v1123 = vld [vmem:[%s4 + $0x1b8] sm:$0xff]
    %v1124 = vld [vmem:[%s4 + $0x1c0] sm:$0xff]
    %v1125 = vld [vmem:[%s4 + $0x1c8] sm:$0xff]
    %v1126 = vld [vmem:[%s4 + $0x1d0] sm:$0xff]
    %v1127 = vld [vmem:[%s4 + $0x1d8] sm:$0xff]
    %v1128 = vld [vmem:[%s4 + $0x1e0] sm:$0xff]
    %v1129 = vld [vmem:[%s4 + $0x1e8] sm:$0xff]
    %v1130 = vld [vmem:[%s4 + $0x1f0] sm:$0xff]
    %v1131 = vld [vmem:[%s4 + $0x1f8] sm:$0xff]
    %v1132 = vld [vmem:[%s5] sm:$0xff]
    %v1133 = vld [vmem:[%s5 + $0x8] sm:$0xff]
    %v1134 = vld [vmem:[%s5 + $0x10] sm:$0xff]
    %v1135 = vld [vmem:[%s5 + $0x18] sm:$0xff]
    %v1200 = vunpack.c.l.b16 %v1068
    %v1201 = vunpack.c.h.b16 %v1068
    %v1202 = vunpack.c.l.b16 %v1069
    %v1203 = vunpack.c.h.b16 %v1069
    %v1204 = vunpack.c.l.b16 %v1070
    %v1205 = vunpack.c.h.b16 %v1070
    %v1206 = vunpack.c.l.b16 %v1071
    %v1207 = vunpack.c.h.b16 %v1071
    %v1208 = vunpack.c.l.b16 %v1072
    %v1209 = vunpack.c.h.b16 %v1072
    %v1210 = vunpack.c.l.b16 %v1073
    %v1211 = vunpack.c.h.b16 %v1073
    %v1212 = vunpack.c.l.b16 %v1074
    %v1213 = vunpack.c.h.b16 %v1074
    %v1214 = vunpack.c.l.b16 %v1075
    %v1215 = vunpack.c.h.b16 %v1075
    %v1216 = vunpack.c.l.b16 %v1076
    %v1217 = vunpack.c.h.b16 %v1076
    %v1218 = vunpack.c.l.b16 %v1077
    %v1219 = vunpack.c.h.b16 %v1077
    %v1220 = vunpack.c.l.b16 %v1078
    %v1221 = vunpack.c.h.b16 %v1078
    %v1222 = vunpack.c.l.b16 %v1079
    %v1223 = vunpack.c.h.b16 %v1079
    %v1224 = vunpack.c.l.b16 %v1080
    %v1225 = vunpack.c.h.b16 %v1080
    %v1226 = vunpack.c.l.b16 %v1081
    %v1227 = vunpack.c.h.b16 %v1081
    %v1228 = vunpack.c.l.b16 %v1082
    %v1229 = vunpack.c.h.b16 %v1082
    %v1230 = vunpack.c.l.b16 %v1083
    %v1231 = vunpack.c.h.b16 %v1083
    %v1232 = vunpack.c.l.b16 %v1084
    %v1233 = vunpack.c.h.b16 %v1084
    %v1234 = vunpack.c.l.b16 %v1085
    %v1235 = vunpack.c.h.b16 %v1085
    %v1236 = vunpack.c.l.b16 %v1086
    %v1237 = vunpack.c.h.b16 %v1086
    %v1238 = vunpack.c.l.b16 %v1087
    %v1239 = vunpack.c.h.b16 %v1087
    %v1240 = vunpack.c.l.b16 %v1088
    %v1241 = vunpack.c.h.b16 %v1088
    %v1242 = vunpack.c.l.b16 %v1089
    %v1243 = vunpack.c.h.b16 %v1089
    %v1244 = vunpack.c.l.b16 %v1090
    %v1245 = vunpack.c.h.b16 %v1090
    %v1246 = vunpack.c.l.b16 %v1091
    %v1247 = vunpack.c.h.b16 %v1091
    %v1248 = vunpack.c.l.b16 %v1092
    %v1249 = vunpack.c.h.b16 %v1092
    %v1250 = vunpack.c.l.b16 %v1093
    %v1251 = vunpack.c.h.b16 %v1093
    %v1252 = vunpack.c.l.b16 %v1094
    %v1253 = vunpack.c.h.b16 %v1094
    %v1254 = vunpack.c.l.b16 %v1095
    %v1255 = vunpack.c.h.b16 %v1095
    %v1256 = vunpack.c.l.b16 %v1096
    %v1257 = vunpack.c.h.b16 %v1096
    %v1258 = vunpack.c.l.b16 %v1097
    %v1259 = vunpack.c.h.b16 %v1097
    %v1260 = vunpack.c.l.b16 %v1098
    %v1261 = vunpack.c.h.b16 %v1098
    %v1262 = vunpack.c.l.b16 %v1099
    %v1263 = vunpack.c.h.b16 %v1099
    %v1264 = vunpack.c.l.b16 %v1100
    %v1265 = vunpack.c.h.b16 %v1100
    %v1266 = vunpack.c.l.b16 %v1101
    %v1267 = vunpack.c.h.b16 %v1101
    %v1268 = vunpack.c.l.b16 %v1102
    %v1269 = vunpack.c.h.b16 %v1102
    %v1270 = vunpack.c.l.b16 %v1103
    %v1271 = vunpack.c.h.b16 %v1103
    %v1272 = vunpack.c.l.b16 %v1104
    %v1273 = vunpack.c.h.b16 %v1104
    %v1274 = vunpack.c.l.b16 %v1105
    %v1275 = vunpack.c.h.b16 %v1105
    %v1276 = vunpack.c.l.b16 %v1106
    %v1277 = vunpack.c.h.b16 %v1106
    %v1278 = vunpack.c.l.b16 %v1107
    %v1279 = vunpack.c.h.b16 %v1107
    %v1280 = vunpack.c.l.b16 %v1108
    %v1281 = vunpack.c.h.b16 %v1108
    %v1282 = vunpack.c.l.b16 %v1109
    %v1283 = vunpack.c.h.b16 %v1109
    %v1284 = vunpack.c.l.b16 %v1110
    %v1285 = vunpack.c.h.b16 %v1110
    %v1286 = vunpack.c.l.b16 %v1111
    %v1287 = vunpack.c.h.b16 %v1111
    %v1288 = vunpack.c.l.b16 %v1112
    %v1289 = vunpack.c.h.b16 %v1112
    %v1290 = vunpack.c.l.b16 %v1113
    %v1291 = vunpack.c.h.b16 %v1113
    %v1292 = vunpack.c.l.b16 %v1114
    %v1293 = vunpack.c.h.b16 %v1114
    %v1294 = vunpack.c.l.b16 %v1115
    %v1295 = vunpack.c.h.b16 %v1115
    %v1296 = vunpack.c.l.b16 %v1116
    %v1297 = vunpack.c.h.b16 %v1116
    %v1298 = vunpack.c.l.b16 %v1117
    %v1299 = vunpack.c.h.b16 %v1117
    %v1300 = vunpack.c.l.b16 %v1118
    %v1301 = vunpack.c.h.b16 %v1118
    %v1302 = vunpack.c.l.b16 %v1119
    %v1303 = vunpack.c.h.b16 %v1119
    %v1304 = vunpack.c.l.b16 %v1120
    %v1305 = vunpack.c.h.b16 %v1120
    %v1306 = vunpack.c.l.b16 %v1121
    %v1307 = vunpack.c.h.b16 %v1121
    %v1308 = vunpack.c.l.b16 %v1122
    %v1309 = vunpack.c.h.b16 %v1122
    %v1310 = vunpack.c.l.b16 %v1123
    %v1311 = vunpack.c.h.b16 %v1123
    %v1312 = vunpack.c.l.b16 %v1124
    %v1313 = vunpack.c.h.b16 %v1124
    %v1314 = vunpack.c.l.b16 %v1125
    %v1315 = vunpack.c.h.b16 %v1125
    %v1316 = vunpack.c.l.b16 %v1126
    %v1317 = vunpack.c.h.b16 %v1126
    %v1318 = vunpack.c.l.b16 %v1127
    %v1319 = vunpack.c.h.b16 %v1127
    %v1320 = vunpack.c.l.b16 %v1128
    %v1321 = vunpack.c.h.b16 %v1128
    %v1322 = vunpack.c.l.b16 %v1129
    %v1323 = vunpack.c.h.b16 %v1129
    %v1324 = vunpack.c.l.b16 %v1130
    %v1325 = vunpack.c.h.b16 %v1130
    %v1326 = vunpack.c.l.b16 %v1131
    %v1327 = vunpack.c.h.b16 %v1131
    %v1328 = vpack.c.b16 %v1204, %v1200
    %v1329 = vpack.c.b16 %v1205, %v1201
    %v1330 = vpack.c.b16 %v1206, %v1202
    %v1331 = vpack.c.b16 %v1207, %v1203
    %v1332 = vpack.c.b16 %v1212, %v1208
    %v1333 = vpack.c.b16 %v1213, %v1209
    %v1334 = vpack.c.b16 %v1214, %v1210
    %v1335 = vpack.c.b16 %v1215, %v1211
    %v1336 = vpack.c.b16 %v1220, %v1216
    %v1337 = vpack.c.b16 %v1221, %v1217
    %v1338 = vpack.c.b16 %v1222, %v1218
    %v1339 = vpack.c.b16 %v1223, %v1219
    %v1340 = vpack.c.b16 %v1228, %v1224
    %v1341 = vpack.c.b16 %v1229, %v1225
    %v1342 = vpack.c.b16 %v1230, %v1226
    %v1343 = vpack.c.b16 %v1231, %v1227
    %v1344 = vpack.c.b16 %v1236, %v1232
    %v1345 = vpack.c.b16 %v1237, %v1233
    %v1346 = vpack.c.b16 %v1238, %v1234
    %v1347 = vpack.c.b16 %v1239, %v1235
    %v1348 = vpack.c.b16 %v1244, %v1240
    %v1349 = vpack.c.b16 %v1245, %v1241
    %v1350 = vpack.c.b16 %v1246, %v1242
    %v1351 = vpack.c.b16 %v1247, %v1243
    %v1352 = vpack.c.b16 %v1252, %v1248
    %v1353 = vpack.c.b16 %v1253, %v1249
    %v1354 = vpack.c.b16 %v1254, %v1250
    %v1355 = vpack.c.b16 %v1255, %v1251
    %v1356 = vpack.c.b16 %v1260, %v1256
    %v1357 = vpack.c.b16 %v1261, %v1257
    %v1358 = vpack.c.b16 %v1262, %v1258
    %v1359 = vpack.c.b16 %v1263, %v1259
    %v1360 = vpack.c.b16 %v1268, %v1264
    %v1361 = vpack.c.b16 %v1269, %v1265
    %v1362 = vpack.c.b16 %v1270, %v1266
    %v1363 = vpack.c.b16 %v1271, %v1267
    %v1364 = vpack.c.b16 %v1276, %v1272
    %v1365 = vpack.c.b16 %v1277, %v1273
    %v1366 = vpack.c.b16 %v1278, %v1274
    %v1367 = vpack.c.b16 %v1279, %v1275
    %v1368 = vpack.c.b16 %v1284, %v1280
    %v1369 = vpack.c.b16 %v1285, %v1281
    %v1370 = vpack.c.b16 %v1286, %v1282
    %v1371 = vpack.c.b16 %v1287, %v1283
    %v1372 = vpack.c.b16 %v1292, %v1288
    %v1373 = vpack.c.b16 %v1293, %v1289
    %v1374 = vpack.c.b16 %v1294, %v1290
    %v1375 = vpack.c.b16 %v1295, %v1291
    %v1376 = vpack.c.b16 %v1300, %v1296
    %v1377 = vpack.c.b16 %v1301, %v1297
    %v1378 = vpack.c.b16 %v1302, %v1298
    %v1379 = vpack.c.b16 %v1303, %v1299
    %v1380 = vpack.c.b16 %v1308, %v1304
    %v1381 = vpack.c.b16 %v1309, %v1305
    %v1382 = vpack.c.b16 %v1310, %v1306
    %v1383 = vpack.c.b16 %v1311, %v1307
    %v1384 = vpack.c.b16 %v1316, %v1312
    %v1385 = vpack.c.b16 %v1317, %v1313
    %v1386 = vpack.c.b16 %v1318, %v1314
    %v1387 = vpack.c.b16 %v1319, %v1315
    %v1388 = vpack.c.b16 %v1324, %v1320
    %v1389 = vpack.c.b16 %v1325, %v1321
    %v1390 = vpack.c.b16 %v1326, %v1322
    %v1391 = vpack.c.b16 %v1327, %v1323
    %1456 = vmatprep.subr.bf16.mxu0 %v1329
    %1457 = vmatpush1.bf16.msra.mxu0 %v1328
    %1458 = vmatprep.subr.bf16.mxu0 %v1333
    %1459 = vmatpush1.bf16.msra.mxu0 %v1332
    %1460 = vmatprep.subr.bf16.mxu0 %v1337
    %1461 = vmatpush1.bf16.msra.mxu0 %v1336
    %1462 = vmatprep.subr.bf16.mxu0 %v1341
    %1463 = vmatpush1.bf16.msra.mxu0 %v1340
    %1464 = vmatprep.subr.bf16.mxu0 %v1345
    %1465 = vmatpush1.bf16.msra.mxu0 %v1344
    %1466 = vmatprep.subr.bf16.mxu0 %v1349
    %1467 = vmatpush1.bf16.msra.mxu0 %v1348
    %1468 = vmatprep.subr.bf16.mxu0 %v1353
    %1469 = vmatpush1.bf16.msra.mxu0 %v1352
    %1470 = vmatprep.subr.bf16.mxu0 %v1357
    %1471 = vmatpush1.bf16.msra.mxu0 %v1356
    %1472 = vmatprep.subr.bf16.mxu0 %v1361
    %1473 = vmatpush1.bf16.msra.mxu0 %v1360
    %1474 = vmatprep.subr.bf16.mxu0 %v1365
    %1475 = vmatpush1.bf16.msra.mxu0 %v1364
    %1476 = vmatprep.subr.bf16.mxu0 %v1369
    %1477 = vmatpush1.bf16.msra.mxu0 %v1368
    %1478 = vmatprep.subr.bf16.mxu0 %v1373
    %1479 = vmatpush1.bf16.msra.mxu0 %v1372
    %1480 = vmatprep.subr.bf16.mxu0 %v1377
    %1481 = vmatpush1.bf16.msra.mxu0 %v1376
    %1482 = vmatprep.subr.bf16.mxu0 %v1381
    %1483 = vmatpush1.bf16.msra.mxu0 %v1380
    %1484 = vmatprep.subr.bf16.mxu0 %v1385
    %1485 = vmatpush1.bf16.msra.mxu0 %v1384
    %1486 = vmatprep.subr.bf16.mxu0 %v1389
    %1487 = vmatpush1.bf16.msra.mxu0 %v1388
    %1488 = vmatprep.mubr.bf16.mxu0 %v1067
    %1489 = vmatmul.mubr.bf16.gmra.mrb[0].mxu0 %v1066
    %v1490 = vpop.f32.mrb[0].mxu0
    %v1491 = vadd.f32 %v1132, %v1490
    %v1492 = vpop.f32.mrb[0].mxu0
    %v1493 = vadd.f32 %v1133, %v1492
    %v1494 = vpop.f32.mrb[0].mxu0
    %v1495 = vpop.f32.mrb[0].mxu0
    %1496 = vdwg.mxu0
    %1497 = vmatprep.subr.bf16.mxu0 %v1331
    %1498 = vmatpush1.bf16.msra.mxu0 %v1330
    %1499 = vmatprep.subr.bf16.mxu0 %v1335
    %1500 = vmatpush1.bf16.msra.mxu0 %v1334
    %1501 = vmatprep.subr.bf16.mxu0 %v1339
    %1502 = vmatpush1.bf16.msra.mxu0 %v1338
    %1503 = vmatprep.subr.bf16.mxu0 %v1343
    %1504 = vmatpush1.bf16.msra.mxu0 %v1342
    %1505 = vmatprep.subr.bf16.mxu0 %v1347
    %1506 = vmatpush1.bf16.msra.mxu0 %v1346
    %1507 = vmatprep.subr.bf16.mxu0 %v1351
    %1508 = vmatpush1.bf16.msra.mxu0 %v1350
    %1509 = vmatprep.subr.bf16.mxu0 %v1355
    %1510 = vmatpush1.bf16.msra.mxu0 %v1354
    %1511 = vmatprep.subr.bf16.mxu0 %v1359
    %1512 = vmatpush1.bf16.msra.mxu0 %v1358
    %1513 = vmatprep.subr.bf16.mxu0 %v1363
    %1514 = vmatpush1.bf16.msra.mxu0 %v1362
    %1515 = vmatprep.subr.bf16.mxu0 %v1367
    %1516 = vmatpush1.bf16.msra.mxu0 %v1366
    %1517 = vmatprep.subr.bf16.mxu0 %v1371
    %1518 = vmatpush1.bf16.msra.mxu0 %v1370
    %1519 = vmatprep.subr.bf16.mxu0 %v1375
    %1520 = vmatpush1.bf16.msra.mxu0 %v1374
    %1521 = vmatprep.subr.bf16.mxu0 %v1379
    %1522 = vmatpush1.bf16.msra.mxu0 %v1378
    %1523 = vmatprep.subr.bf16.mxu0 %v1383
    %1524 = vmatpush1.bf16.msra.mxu0 %v1382
    %1525 = vmatprep.subr.bf16.mxu0 %v1387
    %1526 = vmatpush1.bf16.msra.mxu0 %v1386
    %1527 = vmatprep.subr.bf16.mxu0 %v1391
    %1528 = vmatpush1.bf16.msra.mxu0 %v1390
    %1529 = vmatprep.mubr.bf16.mxu0 %v1067
    %1530 = vmatmul.mubr.bf16.gmra.mrb[0].mxu0 %v1066
    %v1531 = vpop.f32.mrb[0].mxu0
    %v1532 = vadd.f32 %v1134, %v1531
    %v1533 = vpop.f32.mrb[0].mxu0
    %v1534 = vadd.f32 %v1135, %v1533
    %v1535 = vpop.f32.mrb[0].mxu0
    %v1536 = vpop.f32.mrb[0].mxu0
    %1537 = vdwg.mxu0
    %v1538 = vxor.u32 %v1491, 2147483648
    %v1539 = vmul.f32 %v1538, 1.442695
    %v1540 = vpow.pop %v1539
    %v1541 = vadd.f32 %v1540, 1.0
    %v1542 = vrcp.pop %v1541
    %v1543 = vmul.f32 1.0, %v1542
    %v1544 = vxor.u32 %v1493, 2147483648
    %v1545 = vmul.f32 %v1544, 1.442695
    %v1546 = vpow.pop %v1545
    %v1547 = vadd.f32 %v1546, 1.0
    %v1548 = vrcp.pop %v1547
    %v1549 = vmul.f32 1.0, %v1548
    %v1550 = vtanh.pop %v1532
    %v1551 = vxor.u32 %v1534, 2147483648
    %v1552 = vmul.f32 %v1551, 1.442695
    %v1553 = vpow.pop %v1552
    %v1554 = vadd.f32 %v1553, 1.0
    %v1555 = vrcp.pop %v1554
    %v1556 = vmul.f32 1.0, %v1555
    %v1557 = vld [vmem:[#allocation3] sm:$0xff]
    %v1558 = vmul.f32 %v1549, %v1557
    %v1559 = vmul.f32 %v1543, %v1550
    %v1560 = vadd.f32 %v1558, %v1559
    %v1561 = vtanh.pop %v1560
    %v1562 = vmul.f32 %v1556, %v1561
    %1563 = vst [vmem:[#allocation2 + $0x8] sm:$0xff] %v1562
    %1564 = vst [vmem:[#allocation3] sm:$0xff] %v1560
    %s1565 = scalar_lea.vmem %s1, 24
    %v1566 = vld [vmem:[%s1565] sm:$0xff]
    %1567 = vst [vmem:[#allocation2] sm:$0xff] %v1566
    %v1568 = vld [vmem:[#allocation2] sm:$0xff]
    %v1569 = vld [vmem:[#allocation2 + $0x8] sm:$0xff]
    %v1570 = vpack.c.bf16 %v1568, %v1568
    %v1571 = vpack.c.bf16 %v1569, %v1569
    %v1572 = vld [vmem:[%s4] sm:$0xff]
    %v1573 = vld [vmem:[%s4 + $0x8] sm:$0xff]
    %v1574 = vld [vmem:[%s4 + $0x10] sm:$0xff]
    %v1575 = vld [vmem:[%s4 + $0x18] sm:$0xff]
    %v1576 = vld [vmem:[%s4 + $0x20] sm:$0xff]
    %v1577 = vld [vmem:[%s4 + $0x28] sm:$0xff]
    %v1578 = vld [vmem:[%s4 + $0x30] sm:$0xff]
    %v1579 = vld [vmem:[%s4 + $0x38] sm:$0xff]
    %v1580 = vld [vmem:[%s4 + $0x40] sm:$0xff]
    %v1581 = vld [vmem:[%s4 + $0x48] sm:$0xff]
    %v1582 = vld [vmem:[%s4 + $0x50] sm:$0xff]
    %v1583 = vld [vmem:[%s4 + $0x58] sm:$0xff]
    %v1584 = vld [vmem:[%s4 + $0x60] sm:$0xff]
    %v1585 = vld [vmem:[%s4 + $0x68] sm:$0xff]
    %v1586 = vld [vmem:[%s4 + $0x70] sm:$0xff]
    %v1587 = vld [vmem:[%s4 + $0x78] sm:$0xff]
    %v1588 = vld [vmem:[%s4 + $0x80] sm:$0xff]
    %v1589 = vld [vmem:[%s4 + $0x88] sm:$0xff]
    %v1590 = vld [vmem:[%s4 + $0x90] sm:$0xff]
    %v1591 = vld [vmem:[%s4 + $0x98] sm:$0xff]
    %v1592 = vld [vmem:[%s4 + $0xa0] sm:$0xff]
    %v1593 = vld [vmem:[%s4 + $0xa8] sm:$0xff]
    %v1594 = vld [vmem:[%s4 + $0xb0] sm:$0xff]
    %v1595 = vld [vmem:[%s4 + $0xb8] sm:$0xff]
    %v1596 = vld [vmem:[%s4 + $0xc0] sm:$0xff]
    %v1597 = vld [vmem:[%s4 + $0xc8] sm:$0xff]
    %v1598 = vld [vmem:[%s4 + $0xd0] sm:$0xff]
    %v1599 = vld [vmem:[%s4 + $0xd8] sm:$0xff]
    %v1600 = vld [vmem:[%s4 + $0xe0] sm:$0xff]
    %v1601 = vld [vmem:[%s4 + $0xe8] sm:$0xff]
    %v1602 = vld [vmem:[%s4 + $0xf0] sm:$0xff]
    %v1603 = vld [vmem:[%s4 + $0xf8] sm:$0xff]
    %v1604 = vld [vmem:[%s4 + $0x100] sm:$0xff]
    %v1605 = vld [vmem:[%s4 + $0x108] sm:$0xff]
    %v1606 = vld [vmem:[%s4 + $0x110] sm:$0xff]
    %v1607 = vld [vmem:[%s4 + $0x118] sm:$0xff]
    %v1608 = vld [vmem:[%s4 + $0x120] sm:$0xff]
    %v1609 = vld [vmem:[%s4 + $0x128] sm:$0xff]
    %v1610 = vld [vmem:[%s4 + $0x130] sm:$0xff]
    %v1611 = vld [vmem:[%s4 + $0x138] sm:$0xff]
    %v1612 = vld [vmem:[%s4 + $0x140] sm:$0xff]
    %v1613 = vld [vmem:[%s4 + $0x148] sm:$0xff]
    %v1614 = vld [vmem:[%s4 + $0x150] sm:$0xff]
    %v1615 = vld [vmem:[%s4 + $0x158] sm:$0xff]
    %v1616 = vld [vmem:[%s4 + $0x160] sm:$0xff]
    %v1617 = vld [vmem:[%s4 + $0x168] sm:$0xff]
    %v1618 = vld [vmem:[%s4 + $0x170] sm:$0xff]
    %v1619 = vld [vmem:[%s4 + $0x178] sm:$0xff]
    %v1620 = vld [vmem:[%s4 + $0x180] sm:$0xff]
    %v1621 = vld [vmem:[%s4 + $0x188] sm:$0xff]
    %v1622 = vld [vmem:[%s4 + $0x190] sm:$0xff]
    %v1623 = vld [vmem:[%s4 + $0x198] sm:$0xff]
    %v1624 = vld [vmem:[%s4 + $0x1a0] sm:$0xff]
    %v1625 = vld [vmem:[%s4 + $0x1a8] sm:$0xff]
    %v1626 = vld [vmem:[%s4 + $0x1b0] sm:$0xff]
    %v1627 = vld [vmem:[%s4 + $0x1b8] sm:$0xff]
    %v1628 = vld [vmem:[%s4 + $0x1c0] sm:$0xff]
    %v1629 = vld [vmem:[%s4 + $0x1c8] sm:$0xff]
    %v1630 = vld [vmem:[%s4 + $0x1d0] sm:$0xff]
    %v1631 = vld [vmem:[%s4 + $0x1d8] sm:$0xff]
    %v1632 = vld [vmem:[%s4 + $0x1e0] sm:$0xff]
    %v1633 = vld [vmem:[%s4 + $0x1e8] sm:$0xff]
    %v1634 = vld [vmem:[%s4 + $0x1f0] sm:$0xff]
    %v1635 = vld [vmem:[%s4 + $0x1f8] sm:$0xff]
    %v1636 = vld [vmem:[%s5] sm:$0xff]
    %v1637 = vld [vmem:[%s5 + $0x8] sm:$0xff]
    %v1638 = vld [vmem:[%s5 + $0x10] sm:$0xff]
    %v1639 = vld [vmem:[%s5 + $0x18] sm:$0xff]
    %v1704 = vunpack.c.l.b16 %v1572
    %v1705 = vunpack.c.h.b16 %v1572
    %v1706 = vunpack.c.l.b16 %v1573
    %v1707 = vunpack.c.h.b16 %v1573
    %v1708 = vunpack.c.l.b16 %v1574
    %v1709 = vunpack.c.h.b16 %v1574
    %v1710 = vunpack.c.l.b16 %v1575
    %v1711 = vunpack.c.h.b16 %v1575
    %v1712 = vunpack.c.l.b16 %v1576
    %v1713 = vunpack.c.h.b16 %v1576
    %v1714 = vunpack.c.l.b16 %v1577
    %v1715 = vunpack.c.h.b16 %v1577
    %v1716 = vunpack.c.l.b16 %v1578
    %v1717 = vunpack.c.h.b16 %v1578
    %v1718 = vunpack.c.l.b16 %v1579
    %v1719 = vunpack.c.h.b16 %v1579
    %v1720 = vunpack.c.l.b16 %v1580
    %v1721 = vunpack.c.h.b16 %v1580
    %v1722 = vunpack.c.l.b16 %v1581
    %v1723 = vunpack.c.h.b16 %v1581
    %v1724 = vunpack.c.l.b16 %v1582
    %v1725 = vunpack.c.h.b16 %v1582
    %v1726 = vunpack.c.l.b16 %v1583
    %v1727 = vunpack.c.h.b16 %v1583
    %v1728 = vunpack.c.l.b16 %v1584
    %v1729 = vunpack.c.h.b16 %v1584
    %v1730 = vunpack.c.l.b16 %v1585
    %v1731 = vunpack.c.h.b16 %v1585
    %v1732 = vunpack.c.l.b16 %v1586
    %v1733 = vunpack.c.h.b16 %v1586
    %v1734 = vunpack.c.l.b16 %v1587
    %v1735 = vunpack.c.h.b16 %v1587
    %v1736 = vunpack.c.l.b16 %v1588
    %v1737 = vunpack.c.h.b16 %v1588
    %v1738 = vunpack.c.l.b16 %v1589
    %v1739 = vunpack.c.h.b16 %v1589
    %v1740 = vunpack.c.l.b16 %v1590
    %v1741 = vunpack.c.h.b16 %v1590
    %v1742 = vunpack.c.l.b16 %v1591
    %v1743 = vunpack.c.h.b16 %v1591
    %v1744 = vunpack.c.l.b16 %v1592
    %v1745 = vunpack.c.h.b16 %v1592
    %v1746 = vunpack.c.l.b16 %v1593
    %v1747 = vunpack.c.h.b16 %v1593
    %v1748 = vunpack.c.l.b16 %v1594
    %v1749 = vunpack.c.h.b16 %v1594
    %v1750 = vunpack.c.l.b16 %v1595
    %v1751 = vunpack.c.h.b16 %v1595
    %v1752 = vunpack.c.l.b16 %v1596
    %v1753 = vunpack.c.h.b16 %v1596
    %v1754 = vunpack.c.l.b16 %v1597
    %v1755 = vunpack.c.h.b16 %v1597
    %v1756 = vunpack.c.l.b16 %v1598
    %v1757 = vunpack.c.h.b16 %v1598
    %v1758 = vunpack.c.l.b16 %v1599
    %v1759 = vunpack.c.h.b16 %v1599
    %v1760 = vunpack.c.l.b16 %v1600
    %v1761 = vunpack.c.h.b16 %v1600
    %v1762 = vunpack.c.l.b16 %v1601
    %v1763 = vunpack.c.h.b16 %v1601
    %v1764 = vunpack.c.l.b16 %v1602
    %v1765 = vunpack.c.h.b16 %v1602
    %v1766 = vunpack.c.l.b16 %v1603
    %v1767 = vunpack.c.h.b16 %v1603
    %v1768 = vunpack.c.l.b16 %v1604
    %v1769 = vunpack.c.h.b16 %v1604
    %v1770 = vunpack.c.l.b16 %v1605
    %v1771 = vunpack.c.h.b16 %v1605
    %v1772 = vunpack.c.l.b16 %v1606
    %v1773 = vunpack.c.h.b16 %v1606
    %v1774 = vunpack.c.l.b16 %v1607
    %v1775 = vunpack.c.h.b16 %v1607
    %v1776 = vunpack.c.l.b16 %v1608
    %v1777 = vunpack.c.h.b16 %v1608
    %v1778 = vunpack.c.l.b16 %v1609
    %v1779 = vunpack.c.h.b16 %v1609
    %v1780 = vunpack.c.l.b16 %v1610
    %v1781 = vunpack.c.h.b16 %v1610
    %v1782 = vunpack.c.l.b16 %v1611
    %v1783 = vunpack.c.h.b16 %v1611
    %v1784 = vunpack.c.l.b16 %v1612
    %v1785 = vunpack.c.h.b16 %v1612
    %v1786 = vunpack.c.l.b16 %v1613
    %v1787 = vunpack.c.h.b16 %v1613
    %v1788 = vunpack.c.l.b16 %v1614
    %v1789 = vunpack.c.h.b16 %v1614
    %v1790 = vunpack.c.l.b16 %v1615
    %v1791 = vunpack.c.h.b16 %v1615
    %v1792 = vunpack.c.l.b16 %v1616
    %v1793 = vunpack.c.h.b16 %v1616
    %v1794 = vunpack.c.l.b16 %v1617
    %v1795 = vunpack.c.h.b16 %v1617
    %v1796 = vunpack.c.l.b16 %v1618
    %v1797 = vunpack.c.h.b16 %v1618
    %v1798 = vunpack.c.l.b16 %v1619
    %v1799 = vunpack.c.h.b16 %v1619
    %v1800 = vunpack.c.l.b16 %v1620
    %v1801 = vunpack.c.h.b16 %v1620
    %v1802 = vunpack.c.l.b16 %v1621
    %v1803 = vunpack.c.h.b16 %v1621
    %v1804 = vunpack.c.l.b16 %v1622
    %v1805 = vunpack.c.h.b16 %v1622
    %v1806 = vunpack.c.l.b16 %v1623
    %v1807 = vunpack.c.h.b16 %v1623
    %v1808 = vunpack.c.l.b16 %v1624
    %v1809 = vunpack.c.h.b16 %v1624
    %v1810 = vunpack.c.l.b16 %v1625
    %v1811 = vunpack.c.h.b16 %v1625
    %v1812 = vunpack.c.l.b16 %v1626
    %v1813 = vunpack.c.h.b16 %v1626
    %v1814 = vunpack.c.l.b16 %v1627
    %v1815 = vunpack.c.h.b16 %v1627
    %v1816 = vunpack.c.l.b16 %v1628
    %v1817 = vunpack.c.h.b16 %v1628
    %v1818 = vunpack.c.l.b16 %v1629
    %v1819 = vunpack.c.h.b16 %v1629
    %v1820 = vunpack.c.l.b16 %v1630
    %v1821 = vunpack.c.h.b16 %v1630
    %v1822 = vunpack.c.l.b16 %v1631
    %v1823 = vunpack.c.h.b16 %v1631
    %v1824 = vunpack.c.l.b16 %v1632
    %v1825 = vunpack.c.h.b16 %v1632
    %v1826 = vunpack.c.l.b16 %v1633
    %v1827 = vunpack.c.h.b16 %v1633
    %v1828 = vunpack.c.l.b16 %v1634
    %v1829 = vunpack.c.h.b16 %v1634
    %v1830 = vunpack.c.l.b16 %v1635
    %v1831 = vunpack.c.h.b16 %v1635
    %v1832 = vpack.c.b16 %v1708, %v1704
    %v1833 = vpack.c.b16 %v1709, %v1705
    %v1834 = vpack.c.b16 %v1710, %v1706
    %v1835 = vpack.c.b16 %v1711, %v1707
    %v1836 = vpack.c.b16 %v1716, %v1712
    %v1837 = vpack.c.b16 %v1717, %v1713
    %v1838 = vpack.c.b16 %v1718, %v1714
    %v1839 = vpack.c.b16 %v1719, %v1715
    %v1840 = vpack.c.b16 %v1724, %v1720
    %v1841 = vpack.c.b16 %v1725, %v1721
    %v1842 = vpack.c.b16 %v1726, %v1722
    %v1843 = vpack.c.b16 %v1727, %v1723
    %v1844 = vpack.c.b16 %v1732, %v1728
    %v1845 = vpack.c.b16 %v1733, %v1729
    %v1846 = vpack.c.b16 %v1734, %v1730
    %v1847 = vpack.c.b16 %v1735, %v1731
    %v1848 = vpack.c.b16 %v1740, %v1736
    %v1849 = vpack.c.b16 %v1741, %v1737
    %v1850 = vpack.c.b16 %v1742, %v1738
    %v1851 = vpack.c.b16 %v1743, %v1739
    %v1852 = vpack.c.b16 %v1748, %v1744
    %v1853 = vpack.c.b16 %v1749, %v1745
    %v1854 = vpack.c.b16 %v1750, %v1746
    %v1855 = vpack.c.b16 %v1751, %v1747
    %v1856 = vpack.c.b16 %v1756, %v1752
    %v1857 = vpack.c.b16 %v1757, %v1753
    %v1858 = vpack.c.b16 %v1758, %v1754
    %v1859 = vpack.c.b16 %v1759, %v1755
    %v1860 = vpack.c.b16 %v1764, %v1760
    %v1861 = vpack.c.b16 %v1765, %v1761
    %v1862 = vpack.c.b16 %v1766, %v1762
    %v1863 = vpack.c.b16 %v1767, %v1763
    %v1864 = vpack.c.b16 %v1772, %v1768
    %v1865 = vpack.c.b16 %v1773, %v1769
    %v1866 = vpack.c.b16 %v1774, %v1770
    %v1867 = vpack.c.b16 %v1775, %v1771
    %v1868 = vpack.c.b16 %v1780, %v1776
    %v1869 = vpack.c.b16 %v1781, %v1777
    %v1870 = vpack.c.b16 %v1782, %v1778
    %v1871 = vpack.c.b16 %v1783, %v1779
    %v1872 = vpack.c.b16 %v1788, %v1784
    %v1873 = vpack.c.b16 %v1789, %v1785
    %v1874 = vpack.c.b16 %v1790, %v1786
    %v1875 = vpack.c.b16 %v1791, %v1787
    %v1876 = vpack.c.b16 %v1796, %v1792
    %v1877 = vpack.c.b16 %v1797, %v1793
    %v1878 = vpack.c.b16 %v1798, %v1794
    %v1879 = vpack.c.b16 %v1799, %v1795
    %v1880 = vpack.c.b16 %v1804, %v1800
    %v1881 = vpack.c.b16 %v1805, %v1801
    %v1882 = vpack.c.b16 %v1806, %v1802
    %v1883 = vpack.c.b16 %v1807, %v1803
    %v1884 = vpack.c.b16 %v1812, %v1808
    %v1885 = vpack.c.b16 %v1813, %v1809
    %v1886 = vpack.c.b16 %v1814, %v1810
    %v1887 = vpack.c.b16 %v1815, %v1811
    %v1888 = vpack.c.b16 %v1820, %v1816
    %v1889 = vpack.c.b16 %v1821, %v1817
    %v1890 = vpack.c.b16 %v1822, %v1818
    %v1891 = vpack.c.b16 %v1823, %v1819
    %v1892 = vpack.c.b16 %v1828, %v1824
    %v1893 = vpack.c.b16 %v1829, %v1825
    %v1894 = vpack.c.b16 %v1830, %v1826
    %v1895 = vpack.c.b16 %v1831, %v1827
    %1960 = vmatprep.subr.bf16.mxu0 %v1833
    %1961 = vmatpush1.bf16.msra.mxu0 %v1832
    %1962 = vmatprep.subr.bf16.mxu0 %v1837
    %1963 = vmatpush1.bf16.msra.mxu0 %v1836
    %1964 = vmatprep.subr.bf16.mxu0 %v1841
    %1965 = vmatpush1.bf16.msra.mxu0 %v1840
    %1966 = vmatprep.subr.bf16.mxu0 %v1845
    %1967 = vmatpush1.bf16.msra.mxu0 %v1844
    %1968 = vmatprep.subr.bf16.mxu0 %v1849
    %1969 = vmatpush1.bf16.msra.mxu0 %v1848
    %1970 = vmatprep.subr.bf16.mxu0 %v1853
    %1971 = vmatpush1.bf16.msra.mxu0 %v1852
    %1972 = vmatprep.subr.bf16.mxu0 %v1857
    %1973 = vmatpush1.bf16.msra.mxu0 %v1856
    %1974 = vmatprep.subr.bf16.mxu0 %v1861
    %1975 = vmatpush1.bf16.msra.mxu0 %v1860
    %1976 = vmatprep.subr.bf16.mxu0 %v1865
    %1977 = vmatpush1.bf16.msra.mxu0 %v1864
    %1978 = vmatprep.subr.bf16.mxu0 %v1869
    %1979 = vmatpush1.bf16.msra.mxu0 %v1868
    %1980 = vmatprep.subr.bf16.mxu0 %v1873
    %1981 = vmatpush1.bf16.msra.mxu0 %v1872
    %1982 = vmatprep.subr.bf16.mxu0 %v1877
    %1983 = vmatpush1.bf16.msra.mxu0 %v1876
    %1984 = vmatprep.subr.bf16.mxu0 %v1881
    %1985 = vmatpush1.bf16.msra.mxu0 %v1880
    %1986 = vmatprep.subr.bf16.mxu0 %v1885
    %1987 = vmatpush1.bf16.msra.mxu0 %v1884
    %1988 = vmatprep.subr.bf16.mxu0 %v1889
    %1989 = vmatpush1.bf16.msra.mxu0 %v1888
    %1990 = vmatprep.subr.bf16.mxu0 %v1893
    %1991 = vmatpush1.bf16.msra.mxu0 %v1892
    %1992 = vmatprep.mubr.bf16.mxu0 %v1571
    %1993 = vmatmul.mubr.bf16.gmra.mrb[0].mxu0 %v1570
    %v1994 = vpop.f32.mrb[0].mxu0
    %v1995 = vadd.f32 %v1636, %v1994
    %v1996 = vpop.f32.mrb[0].mxu0
    %v1997 = vadd.f32 %v1637, %v1996
    %v1998 = vpop.f32.mrb[0].mxu0
    %v1999 = vpop.f32.mrb[0].mxu0
    %2000 = vdwg.mxu0
    %2001 = vmatprep.subr.bf16.mxu0 %v1835
    %2002 = vmatpush1.bf16.msra.mxu0 %v1834
    %2003 = vmatprep.subr.bf16.mxu0 %v1839
    %2004 = vmatpush1.bf16.msra.mxu0 %v1838
    %2005 = vmatprep.subr.bf16.mxu0 %v1843
    %2006 = vmatpush1.bf16.msra.mxu0 %v1842
    %2007 = vmatprep.subr.bf16.mxu0 %v1847
    %2008 = vmatpush1.bf16.msra.mxu0 %v1846
    %2009 = vmatprep.subr.bf16.mxu0 %v1851
    %2010 = vmatpush1.bf16.msra.mxu0 %v1850
    %2011 = vmatprep.subr.bf16.mxu0 %v1855
    %2012 = vmatpush1.bf16.msra.mxu0 %v1854
    %2013 = vmatprep.subr.bf16.mxu0 %v1859
    %2014 = vmatpush1.bf16.msra.mxu0 %v1858
    %2015 = vmatprep.subr.bf16.mxu0 %v1863
    %2016 = vmatpush1.bf16.msra.mxu0 %v1862
    %2017 = vmatprep.subr.bf16.mxu0 %v1867
    %2018 = vmatpush1.bf16.msra.mxu0 %v1866
    %2019 = vmatprep.subr.bf16.mxu0 %v1871
    %2020 = vmatpush1.bf16.msra.mxu0 %v1870
    %2021 = vmatprep.subr.bf16.mxu0 %v1875
    %2022 = vmatpush1.bf16.msra.mxu0 %v1874
    %2023 = vmatprep.subr.bf16.mxu0 %v1879
    %2024 = vmatpush1.bf16.msra.mxu0 %v1878
    %2025 = vmatprep.subr.bf16.mxu0 %v1883
    %2026 = vmatpush1.bf16.msra.mxu0 %v1882
    %2027 = vmatprep.subr.bf16.mxu0 %v1887
    %2028 = vmatpush1.bf16.msra.mxu0 %v1886
    %2029 = vmatprep.subr.bf16.mxu0 %v1891
    %2030 = vmatpush1.bf16.msra.mxu0 %v1890
    %2031 = vmatprep.subr.bf16.mxu0 %v1895
    %2032 = vmatpush1.bf16.msra.mxu0 %v1894
    %2033 = vmatprep.mubr.bf16.mxu0 %v1571
    %2034 = vmatmul.mubr.bf16.gmra.mrb[0].mxu0 %v1570
    %v2035 = vpop.f32.mrb[0].mxu0
    %v2036 = vadd.f32 %v1638, %v2035
    %v2037 = vpop.f32.mrb[0].mxu0
    %v2038 = vadd.f32 %v1639, %v2037
    %v2039 = vpop.f32.mrb[0].mxu0
    %v2040 = vpop.f32.mrb[0].mxu0
    %2041 = vdwg.mxu0
    %v2042 = vxor.u32 %v1995, 2147483648
    %v2043 = vmul.f32 %v2042, 1.442695
    %v2044 = vpow.pop %v2043
    %v2045 = vadd.f32 %v2044, 1.0
    %v2046 = vrcp.pop %v2045
    %v2047 = vmul.f32 1.0, %v2046
    %v2048 = vxor.u32 %v1997, 2147483648
    %v2049 = vmul.f32 %v2048, 1.442695
    %v2050 = vpow.pop %v2049
    %v2051 = vadd.f32 %v2050, 1.0
    %v2052 = vrcp.pop %v2051
    %v2053 = vmul.f32 1.0, %v2052
    %v2054 = vtanh.pop %v2036
    %v2055 = vxor.u32 %v2038, 2147483648
    %v2056 = vmul.f32 %v2055, 1.442695
    %v2057 = vpow.pop %v2056
    %v2058 = vadd.f32 %v2057, 1.0
    %v2059 = vrcp.pop %v2058
    %v2060 = vmul.f32 1.0, %v2059
    %v2061 = vld [vmem:[#allocation3] sm:$0xff]
    %v2062 = vmul.f32 %v2053, %v2061
    %v2063 = vmul.f32 %v2047, %v2054
    %v2064 = vadd.f32 %v2062, %v2063
    %v2065 = vtanh.pop %v2064
    %v2066 = vmul.f32 %v2060, %v2065
    %2067 = vst [vmem:[#allocation2 + $0x8] sm:$0xff] %v2066
    %2068 = vst [vmem:[#allocation3] sm:$0xff] %v2064
    %s2069 = scalar_lea.vmem %s1, 32
    %v2070 = vld [vmem:[%s2069] sm:$0xff]
    %2071 = vst [vmem:[#allocation2] sm:$0xff] %v2070
    %v2072 = vld [vmem:[#allocation2] sm:$0xff]
    %v2073 = vld [vmem:[#allocation2 + $0x8] sm:$0xff]
    %v2074 = vpack.c.bf16 %v2072, %v2072
    %v2075 = vpack.c.bf16 %v2073, %v2073
    %v2076 = vld [vmem:[%s4] sm:$0xff]
    %v2077 = vld [vmem:[%s4 + $0x8] sm:$0xff]
    %v2078 = vld [vmem:[%s4 + $0x10] sm:$0xff]
    %v2079 = vld [vmem:[%s4 + $0x18] sm:$0xff]
    %v2080 = vld [vmem:[%s4 + $0x20] sm:$0xff]
    %v2081 = vld [vmem:[%s4 + $0x28] sm:$0xff]
    %v2082 = vld [vmem:[%s4 + $0x30] sm:$0xff]
    %v2083 = vld [vmem:[%s4 + $0x38] sm:$0xff]
    %v2084 = vld [vmem:[%s4 + $0x40] sm:$0xff]
    %v2085 = vld [vmem:[%s4 + $0x48] sm:$0xff]
    %v2086 = vld [vmem:[%s4 + $0x50] sm:$0xff]
    %v2087 = vld [vmem:[%s4 + $0x58] sm:$0xff]
    %v2088 = vld [vmem:[%s4 + $0x60] sm:$0xff]
    %v2089 = vld [vmem:[%s4 + $0x68] sm:$0xff]
    %v2090 = vld [vmem:[%s4 + $0x70] sm:$0xff]
    %v2091 = vld [vmem:[%s4 + $0x78] sm:$0xff]
    %v2092 = vld [vmem:[%s4 + $0x80] sm:$0xff]
    %v2093 = vld [vmem:[%s4 + $0x88] sm:$0xff]
    %v2094 = vld [vmem:[%s4 + $0x90] sm:$0xff]
    %v2095 = vld [vmem:[%s4 + $0x98] sm:$0xff]
    %v2096 = vld [vmem:[%s4 + $0xa0] sm:$0xff]
    %v2097 = vld [vmem:[%s4 + $0xa8] sm:$0xff]
    %v2098 = vld [vmem:[%s4 + $0xb0] sm:$0xff]
    %v2099 = vld [vmem:[%s4 + $0xb8] sm:$0xff]
    %v2100 = vld [vmem:[%s4 + $0xc0] sm:$0xff]
    %v2101 = vld [vmem:[%s4 + $0xc8] sm:$0xff]
    %v2102 = vld [vmem:[%s4 + $0xd0] sm:$0xff]
    %v2103 = vld [vmem:[%s4 + $0xd8] sm:$0xff]
    %v2104 = vld [vmem:[%s4 + $0xe0] sm:$0xff]
    %v2105 = vld [vmem:[%s4 + $0xe8] sm:$0xff]
    %v2106 = vld [vmem:[%s4 + $0xf0] sm:$0xff]
    %v2107 = vld [vmem:[%s4 + $0xf8] sm:$0xff]
    %v2108 = vld [vmem:[%s4 + $0x100] sm:$0xff]
    %v2109 = vld [vmem:[%s4 + $0x108] sm:$0xff]
    %v2110 = vld [vmem:[%s4 + $0x110] sm:$0xff]
    %v2111 = vld [vmem:[%s4 + $0x118] sm:$0xff]
    %v2112 = vld [vmem:[%s4 + $0x120] sm:$0xff]
    %v2113 = vld [vmem:[%s4 + $0x128] sm:$0xff]
    %v2114 = vld [vmem:[%s4 + $0x130] sm:$0xff]
    %v2115 = vld [vmem:[%s4 + $0x138] sm:$0xff]
    %v2116 = vld [vmem:[%s4 + $0x140] sm:$0xff]
    %v2117 = vld [vmem:[%s4 + $0x148] sm:$0xff]
    %v2118 = vld [vmem:[%s4 + $0x150] sm:$0xff]
    %v2119 = vld [vmem:[%s4 + $0x158] sm:$0xff]
    %v2120 = vld [vmem:[%s4 + $0x160] sm:$0xff]
    %v2121 = vld [vmem:[%s4 + $0x168] sm:$0xff]
    %v2122 = vld [vmem:[%s4 + $0x170] sm:$0xff]
    %v2123 = vld [vmem:[%s4 + $0x178] sm:$0xff]
    %v2124 = vld [vmem:[%s4 + $0x180] sm:$0xff]
    %v2125 = vld [vmem:[%s4 + $0x188] sm:$0xff]
    %v2126 = vld [vmem:[%s4 + $0x190] sm:$0xff]
    %v2127 = vld [vmem:[%s4 + $0x198] sm:$0xff]
    %v2128 = vld [vmem:[%s4 + $0x1a0] sm:$0xff]
    %v2129 = vld [vmem:[%s4 + $0x1a8] sm:$0xff]
    %v2130 = vld [vmem:[%s4 + $0x1b0] sm:$0xff]
    %v2131 = vld [vmem:[%s4 + $0x1b8] sm:$0xff]
    %v2132 = vld [vmem:[%s4 + $0x1c0] sm:$0xff]
    %v2133 = vld [vmem:[%s4 + $0x1c8] sm:$0xff]
    %v2134 = vld [vmem:[%s4 + $0x1d0] sm:$0xff]
    %v2135 = vld [vmem:[%s4 + $0x1d8] sm:$0xff]
    %v2136 = vld [vmem:[%s4 + $0x1e0] sm:$0xff]
    %v2137 = vld [vmem:[%s4 + $0x1e8] sm:$0xff]
    %v2138 = vld [vmem:[%s4 + $0x1f0] sm:$0xff]
    %v2139 = vld [vmem:[%s4 + $0x1f8] sm:$0xff]
    %v2140 = vld [vmem:[%s5] sm:$0xff]
    %v2141 = vld [vmem:[%s5 + $0x8] sm:$0xff]
    %v2142 = vld [vmem:[%s5 + $0x10] sm:$0xff]
    %v2143 = vld [vmem:[%s5 + $0x18] sm:$0xff]
    %v2208 = vunpack.c.l.b16 %v2076
    %v2209 = vunpack.c.h.b16 %v2076
    %v2210 = vunpack.c.l.b16 %v2077
    %v2211 = vunpack.c.h.b16 %v2077
    %v2212 = vunpack.c.l.b16 %v2078
    %v2213 = vunpack.c.h.b16 %v2078
    %v2214 = vunpack.c.l.b16 %v2079
    %v2215 = vunpack.c.h.b16 %v2079
    %v2216 = vunpack.c.l.b16 %v2080
    %v2217 = vunpack.c.h.b16 %v2080
    %v2218 = vunpack.c.l.b16 %v2081
    %v2219 = vunpack.c.h.b16 %v2081
    %v2220 = vunpack.c.l.b16 %v2082
    %v2221 = vunpack.c.h.b16 %v2082
    %v2222 = vunpack.c.l.b16 %v2083
    %v2223 = vunpack.c.h.b16 %v2083
    %v2224 = vunpack.c.l.b16 %v2084
    %v2225 = vunpack.c.h.b16 %v2084
    %v2226 = vunpack.c.l.b16 %v2085
    %v2227 = vunpack.c.h.b16 %v2085
    %v2228 = vunpack.c.l.b16 %v2086
    %v2229 = vunpack.c.h.b16 %v2086
    %v2230 = vunpack.c.l.b16 %v2087
    %v2231 = vunpack.c.h.b16 %v2087
    %v2232 = vunpack.c.l.b16 %v2088
    %v2233 = vunpack.c.h.b16 %v2088
    %v2234 = vunpack.c.l.b16 %v2089
    %v2235 = vunpack.c.h.b16 %v2089
    %v2236 = vunpack.c.l.b16 %v2090
    %v2237 = vunpack.c.h.b16 %v2090
    %v2238 = vunpack.c.l.b16 %v2091
    %v2239 = vunpack.c.h.b16 %v2091
    %v2240 = vunpack.c.l.b16 %v2092
    %v2241 = vunpack.c.h.b16 %v2092
    %v2242 = vunpack.c.l.b16 %v2093
    %v2243 = vunpack.c.h.b16 %v2093
    %v2244 = vunpack.c.l.b16 %v2094
    %v2245 = vunpack.c.h.b16 %v2094
    %v2246 = vunpack.c.l.b16 %v2095
    %v2247 = vunpack.c.h.b16 %v2095
    %v2248 = vunpack.c.l.b16 %v2096
    %v2249 = vunpack.c.h.b16 %v2096
    %v2250 = vunpack.c.l.b16 %v2097
    %v2251 = vunpack.c.h.b16 %v2097
    %v2252 = vunpack.c.l.b16 %v2098
    %v2253 = vunpack.c.h.b16 %v2098
    %v2254 = vunpack.c.l.b16 %v2099
    %v2255 = vunpack.c.h.b16 %v2099
    %v2256 = vunpack.c.l.b16 %v2100
    %v2257 = vunpack.c.h.b16 %v2100
    %v2258 = vunpack.c.l.b16 %v2101
    %v2259 = vunpack.c.h.b16 %v2101
    %v2260 = vunpack.c.l.b16 %v2102
    %v2261 = vunpack.c.h.b16 %v2102
    %v2262 = vunpack.c.l.b16 %v2103
    %v2263 = vunpack.c.h.b16 %v2103
    %v2264 = vunpack.c.l.b16 %v2104
    %v2265 = vunpack.c.h.b16 %v2104
    %v2266 = vunpack.c.l.b16 %v2105
    %v2267 = vunpack.c.h.b16 %v2105
    %v2268 = vunpack.c.l.b16 %v2106
    %v2269 = vunpack.c.h.b16 %v2106
    %v2270 = vunpack.c.l.b16 %v2107
    %v2271 = vunpack.c.h.b16 %v2107
    %v2272 = vunpack.c.l.b16 %v2108
    %v2273 = vunpack.c.h.b16 %v2108
    %v2274 = vunpack.c.l.b16 %v2109
    %v2275 = vunpack.c.h.b16 %v2109
    %v2276 = vunpack.c.l.b16 %v2110
    %v2277 = vunpack.c.h.b16 %v2110
    %v2278 = vunpack.c.l.b16 %v2111
    %v2279 = vunpack.c.h.b16 %v2111
    %v2280 = vunpack.c.l.b16 %v2112
    %v2281 = vunpack.c.h.b16 %v2112
    %v2282 = vunpack.c.l.b16 %v2113
    %v2283 = vunpack.c.h.b16 %v2113
    %v2284 = vunpack.c.l.b16 %v2114
    %v2285 = vunpack.c.h.b16 %v2114
    %v2286 = vunpack.c.l.b16 %v2115
    %v2287 = vunpack.c.h.b16 %v2115
    %v2288 = vunpack.c.l.b16 %v2116
    %v2289 = vunpack.c.h.b16 %v2116
    %v2290 = vunpack.c.l.b16 %v2117
    %v2291 = vunpack.c.h.b16 %v2117
    %v2292 = vunpack.c.l.b16 %v2118
    %v2293 = vunpack.c.h.b16 %v2118
    %v2294 = vunpack.c.l.b16 %v2119
    %v2295 = vunpack.c.h.b16 %v2119
    %v2296 = vunpack.c.l.b16 %v2120
    %v2297 = vunpack.c.h.b16 %v2120
    %v2298 = vunpack.c.l.b16 %v2121
    %v2299 = vunpack.c.h.b16 %v2121
    %v2300 = vunpack.c.l.b16 %v2122
    %v2301 = vunpack.c.h.b16 %v2122
    %v2302 = vunpack.c.l.b16 %v2123
    %v2303 = vunpack.c.h.b16 %v2123
    %v2304 = vunpack.c.l.b16 %v2124
    %v2305 = vunpack.c.h.b16 %v2124
    %v2306 = vunpack.c.l.b16 %v2125
    %v2307 = vunpack.c.h.b16 %v2125
    %v2308 = vunpack.c.l.b16 %v2126
    %v2309 = vunpack.c.h.b16 %v2126
    %v2310 = vunpack.c.l.b16 %v2127
    %v2311 = vunpack.c.h.b16 %v2127
    %v2312 = vunpack.c.l.b16 %v2128
    %v2313 = vunpack.c.h.b16 %v2128
    %v2314 = vunpack.c.l.b16 %v2129
    %v2315 = vunpack.c.h.b16 %v2129
    %v2316 = vunpack.c.l.b16 %v2130
    %v2317 = vunpack.c.h.b16 %v2130
    %v2318 = vunpack.c.l.b16 %v2131
    %v2319 = vunpack.c.h.b16 %v2131
    %v2320 = vunpack.c.l.b16 %v2132
    %v2321 = vunpack.c.h.b16 %v2132
    %v2322 = vunpack.c.l.b16 %v2133
    %v2323 = vunpack.c.h.b16 %v2133
    %v2324 = vunpack.c.l.b16 %v2134
    %v2325 = vunpack.c.h.b16 %v2134
    %v2326 = vunpack.c.l.b16 %v2135
    %v2327 = vunpack.c.h.b16 %v2135
    %v2328 = vunpack.c.l.b16 %v2136
    %v2329 = vunpack.c.h.b16 %v2136
    %v2330 = vunpack.c.l.b16 %v2137
    %v2331 = vunpack.c.h.b16 %v2137
    %v2332 = vunpack.c.l.b16 %v2138
    %v2333 = vunpack.c.h.b16 %v2138
    %v2334 = vunpack.c.l.b16 %v2139
    %v2335 = vunpack.c.h.b16 %v2139
    %v2336 = vpack.c.b16 %v2212, %v2208
    %v2337 = vpack.c.b16 %v2213, %v2209
    %v2338 = vpack.c.b16 %v2214, %v2210
    %v2339 = vpack.c.b16 %v2215, %v2211
    %v2340 = vpack.c.b16 %v2220, %v2216
    %v2341 = vpack.c.b16 %v2221, %v2217
    %v2342 = vpack.c.b16 %v2222, %v2218
    %v2343 = vpack.c.b16 %v2223, %v2219
    %v2344 = vpack.c.b16 %v2228, %v2224
    %v2345 = vpack.c.b16 %v2229, %v2225
    %v2346 = vpack.c.b16 %v2230, %v2226
    %v2347 = vpack.c.b16 %v2231, %v2227
    %v2348 = vpack.c.b16 %v2236, %v2232
    %v2349 = vpack.c.b16 %v2237, %v2233
    %v2350 = vpack.c.b16 %v2238, %v2234
    %v2351 = vpack.c.b16 %v2239, %v2235
    %v2352 = vpack.c.b16 %v2244, %v2240
    %v2353 = vpack.c.b16 %v2245, %v2241
    %v2354 = vpack.c.b16 %v2246, %v2242
    %v2355 = vpack.c.b16 %v2247, %v2243
    %v2356 = vpack.c.b16 %v2252, %v2248
    %v2357 = vpack.c.b16 %v2253, %v2249
    %v2358 = vpack.c.b16 %v2254, %v2250
    %v2359 = vpack.c.b16 %v2255, %v2251
    %v2360 = vpack.c.b16 %v2260, %v2256
    %v2361 = vpack.c.b16 %v2261, %v2257
    %v2362 = vpack.c.b16 %v2262, %v2258
    %v2363 = vpack.c.b16 %v2263, %v2259
    %v2364 = vpack.c.b16 %v2268, %v2264
    %v2365 = vpack.c.b16 %v2269, %v2265
    %v2366 = vpack.c.b16 %v2270, %v2266
    %v2367 = vpack.c.b16 %v2271, %v2267
    %v2368 = vpack.c.b16 %v2276, %v2272
    %v2369 = vpack.c.b16 %v2277, %v2273
    %v2370 = vpack.c.b16 %v2278, %v2274
    %v2371 = vpack.c.b16 %v2279, %v2275
    %v2372 = vpack.c.b16 %v2284, %v2280
    %v2373 = vpack.c.b16 %v2285, %v2281
    %v2374 = vpack.c.b16 %v2286, %v2282
    %v2375 = vpack.c.b16 %v2287, %v2283
    %v2376 = vpack.c.b16 %v2292, %v2288
    %v2377 = vpack.c.b16 %v2293, %v2289
    %v2378 = vpack.c.b16 %v2294, %v2290
    %v2379 = vpack.c.b16 %v2295, %v2291
    %v2380 = vpack.c.b16 %v2300, %v2296
    %v2381 = vpack.c.b16 %v2301, %v2297
    %v2382 = vpack.c.b16 %v2302, %v2298
    %v2383 = vpack.c.b16 %v2303, %v2299
    %v2384 = vpack.c.b16 %v2308, %v2304
    %v2385 = vpack.c.b16 %v2309, %v2305
    %v2386 = vpack.c.b16 %v2310, %v2306
    %v2387 = vpack.c.b16 %v2311, %v2307
    %v2388 = vpack.c.b16 %v2316, %v2312
    %v2389 = vpack.c.b16 %v2317, %v2313
    %v2390 = vpack.c.b16 %v2318, %v2314
    %v2391 = vpack.c.b16 %v2319, %v2315
    %v2392 = vpack.c.b16 %v2324, %v2320
    %v2393 = vpack.c.b16 %v2325, %v2321
    %v2394 = vpack.c.b16 %v2326, %v2322
    %v2395 = vpack.c.b16 %v2327, %v2323
    %v2396 = vpack.c.b16 %v2332, %v2328
    %v2397 = vpack.c.b16 %v2333, %v2329
    %v2398 = vpack.c.b16 %v2334, %v2330
    %v2399 = vpack.c.b16 %v2335, %v2331
    %2464 = vmatprep.subr.bf16.mxu0 %v2337
    %2465 = vmatpush1.bf16.msra.mxu0 %v2336
    %2466 = vmatprep.subr.bf16.mxu0 %v2341
    %2467 = vmatpush1.bf16.msra.mxu0 %v2340
    %2468 = vmatprep.subr.bf16.mxu0 %v2345
    %2469 = vmatpush1.bf16.msra.mxu0 %v2344
    %2470 = vmatprep.subr.bf16.mxu0 %v2349
    %2471 = vmatpush1.bf16.msra.mxu0 %v2348
    %2472 = vmatprep.subr.bf16.mxu0 %v2353
    %2473 = vmatpush1.bf16.msra.mxu0 %v2352
    %2474 = vmatprep.subr.bf16.mxu0 %v2357
    %2475 = vmatpush1.bf16.msra.mxu0 %v2356
    %2476 = vmatprep.subr.bf16.mxu0 %v2361
    %2477 = vmatpush1.bf16.msra.mxu0 %v2360
    %2478 = vmatprep.subr.bf16.mxu0 %v2365
    %2479 = vmatpush1.bf16.msra.mxu0 %v2364
    %2480 = vmatprep.subr.bf16.mxu0 %v2369
    %2481 = vmatpush1.bf16.msra.mxu0 %v2368
    %2482 = vmatprep.subr.bf16.mxu0 %v2373
    %2483 = vmatpush1.bf16.msra.mxu0 %v2372
    %2484 = vmatprep.subr.bf16.mxu0 %v2377
    %2485 = vmatpush1.bf16.msra.mxu0 %v2376
    %2486 = vmatprep.subr.bf16.mxu0 %v2381
    %2487 = vmatpush1.bf16.msra.mxu0 %v2380
    %2488 = vmatprep.subr.bf16.mxu0 %v2385
    %2489 = vmatpush1.bf16.msra.mxu0 %v2384
    %2490 = vmatprep.subr.bf16.mxu0 %v2389
    %2491 = vmatpush1.bf16.msra.mxu0 %v2388
    %2492 = vmatprep.subr.bf16.mxu0 %v2393
    %2493 = vmatpush1.bf16.msra.mxu0 %v2392
    %2494 = vmatprep.subr.bf16.mxu0 %v2397
    %2495 = vmatpush1.bf16.msra.mxu0 %v2396
    %2496 = vmatprep.mubr.bf16.mxu0 %v2075
    %2497 = vmatmul.mubr.bf16.gmra.mrb[0].mxu0 %v2074
    %v2498 = vpop.f32.mrb[0].mxu0
    %v2499 = vadd.f32 %v2140, %v2498
    %v2500 = vpop.f32.mrb[0].mxu0
    %v2501 = vadd.f32 %v2141, %v2500
    %v2502 = vpop.f32.mrb[0].mxu0
    %v2503 = vpop.f32.mrb[0].mxu0
    %2504 = vdwg.mxu0
    %2505 = vmatprep.subr.bf16.mxu0 %v2339
    %2506 = vmatpush1.bf16.msra.mxu0 %v2338
    %2507 = vmatprep.subr.bf16.mxu0 %v2343
    %2508 = vmatpush1.bf16.msra.mxu0 %v2342
    %2509 = vmatprep.subr.bf16.mxu0 %v2347
    %2510 = vmatpush1.bf16.msra.mxu0 %v2346
    %2511 = vmatprep.subr.bf16.mxu0 %v2351
    %2512 = vmatpush1.bf16.msra.mxu0 %v2350
    %2513 = vmatprep.subr.bf16.mxu0 %v2355
    %2514 = vmatpush1.bf16.msra.mxu0 %v2354
    %2515 = vmatprep.subr.bf16.mxu0 %v2359
    %2516 = vmatpush1.bf16.msra.mxu0 %v2358
    %2517 = vmatprep.subr.bf16.mxu0 %v2363
    %2518 = vmatpush1.bf16.msra.mxu0 %v2362
    %2519 = vmatprep.subr.bf16.mxu0 %v2367
    %2520 = vmatpush1.bf16.msra.mxu0 %v2366
    %2521 = vmatprep.subr.bf16.mxu0 %v2371
    %2522 = vmatpush1.bf16.msra.mxu0 %v2370
    %2523 = vmatprep.subr.bf16.mxu0 %v2375
    %2524 = vmatpush1.bf16.msra.mxu0 %v2374
    %2525 = vmatprep.subr.bf16.mxu0 %v2379
    %2526 = vmatpush1.bf16.msra.mxu0 %v2378
    %2527 = vmatprep.subr.bf16.mxu0 %v2383
    %2528 = vmatpush1.bf16.msra.mxu0 %v2382
    %2529 = vmatprep.subr.bf16.mxu0 %v2387
    %2530 = vmatpush1.bf16.msra.mxu0 %v2386
    %2531 = vmatprep.subr.bf16.mxu0 %v2391
    %2532 = vmatpush1.bf16.msra.mxu0 %v2390
    %2533 = vmatprep.subr.bf16.mxu0 %v2395
    %2534 = vmatpush1.bf16.msra.mxu0 %v2394
    %2535 = vmatprep.subr.bf16.mxu0 %v2399
    %2536 = vmatpush1.bf16.msra.mxu0 %v2398
    %2537 = vmatprep.mubr.bf16.mxu0 %v2075
    %2538 = vmatmul.mubr.bf16.gmra.mrb[0].mxu0 %v2074
    %v2539 = vpop.f32.mrb[0].mxu0
    %v2540 = vadd.f32 %v2142, %v2539
    %v2541 = vpop.f32.mrb[0].mxu0
    %v2542 = vadd.f32 %v2143, %v2541
    %v2543 = vpop.f32.mrb[0].mxu0
    %v2544 = vpop.f32.mrb[0].mxu0
    %2545 = vdwg.mxu0
    %v2546 = vxor.u32 %v2499, 2147483648
    %v2547 = vmul.f32 %v2546, 1.442695
    %v2548 = vpow.pop %v2547
    %v2549 = vadd.f32 %v2548, 1.0
    %v2550 = vrcp.pop %v2549
    %v2551 = vmul.f32 1.0, %v2550
    %v2552 = vxor.u32 %v2501, 2147483648
    %v2553 = vmul.f32 %v2552, 1.442695
    %v2554 = vpow.pop %v2553
    %v2555 = vadd.f32 %v2554, 1.0
    %v2556 = vrcp.pop %v2555
    %v2557 = vmul.f32 1.0, %v2556
    %v2558 = vtanh.pop %v2540
    %v2559 = vxor.u32 %v2542, 2147483648
    %v2560 = vmul.f32 %v2559, 1.442695
    %v2561 = vpow.pop %v2560
    %v2562 = vadd.f32 %v2561, 1.0
    %v2563 = vrcp.pop %v2562
    %v2564 = vmul.f32 1.0, %v2563
    %v2565 = vld [vmem:[#allocation3] sm:$0xff]
    %v2566 = vmul.f32 %v2557, %v2565
    %v2567 = vmul.f32 %v2551, %v2558
    %v2568 = vadd.f32 %v2566, %v2567
    %v2569 = vtanh.pop %v2568
    %v2570 = vmul.f32 %v2564, %v2569
    %2571 = vst [vmem:[#allocation2 + $0x8] sm:$0xff] %v2570
    %2572 = vst [vmem:[#allocation3] sm:$0xff] %v2568
    %s2573 = scalar_lea.vmem %s1, 40
    %v2574 = vld [vmem:[%s2573] sm:$0xff]
    %2575 = vst [vmem:[#allocation2] sm:$0xff] %v2574
    %v2576 = vld [vmem:[#allocation2] sm:$0xff]
    %v2577 = vld [vmem:[#allocation2 + $0x8] sm:$0xff]
    %v2578 = vpack.c.bf16 %v2576, %v2576
    %v2579 = vpack.c.bf16 %v2577, %v2577
    %v2580 = vld [vmem:[%s4] sm:$0xff]
    %v2581 = vld [vmem:[%s4 + $0x8] sm:$0xff]
    %v2582 = vld [vmem:[%s4 + $0x10] sm:$0xff]
    %v2583 = vld [vmem:[%s4 + $0x18] sm:$0xff]
    %v2584 = vld [vmem:[%s4 + $0x20] sm:$0xff]
    %v2585 = vld [vmem:[%s4 + $0x28] sm:$0xff]
    %v2586 = vld [vmem:[%s4 + $0x30] sm:$0xff]
    %v2587 = vld [vmem:[%s4 + $0x38] sm:$0xff]
    %v2588 = vld [vmem:[%s4 + $0x40] sm:$0xff]
    %v2589 = vld [vmem:[%s4 + $0x48] sm:$0xff]
    %v2590 = vld [vmem:[%s4 + $0x50] sm:$0xff]
    %v2591 = vld [vmem:[%s4 + $0x58] sm:$0xff]
    %v2592 = vld [vmem:[%s4 + $0x60] sm:$0xff]
    %v2593 = vld [vmem:[%s4 + $0x68] sm:$0xff]
    %v2594 = vld [vmem:[%s4 + $0x70] sm:$0xff]
    %v2595 = vld [vmem:[%s4 + $0x78] sm:$0xff]
    %v2596 = vld [vmem:[%s4 + $0x80] sm:$0xff]
    %v2597 = vld [vmem:[%s4 + $0x88] sm:$0xff]
    %v2598 = vld [vmem:[%s4 + $0x90] sm:$0xff]
    %v2599 = vld [vmem:[%s4 + $0x98] sm:$0xff]
    %v2600 = vld [vmem:[%s4 + $0xa0] sm:$0xff]
    %v2601 = vld [vmem:[%s4 + $0xa8] sm:$0xff]
    %v2602 = vld [vmem:[%s4 + $0xb0] sm:$0xff]
    %v2603 = vld [vmem:[%s4 + $0xb8] sm:$0xff]
    %v2604 = vld [vmem:[%s4 + $0xc0] sm:$0xff]
    %v2605 = vld [vmem:[%s4 + $0xc8] sm:$0xff]
    %v2606 = vld [vmem:[%s4 + $0xd0] sm:$0xff]
    %v2607 = vld [vmem:[%s4 + $0xd8] sm:$0xff]
    %v2608 = vld [vmem:[%s4 + $0xe0] sm:$0xff]
    %v2609 = vld [vmem:[%s4 + $0xe8] sm:$0xff]
    %v2610 = vld [vmem:[%s4 + $0xf0] sm:$0xff]
    %v2611 = vld [vmem:[%s4 + $0xf8] sm:$0xff]
    %v2612 = vld [vmem:[%s4 + $0x100] sm:$0xff]
    %v2613 = vld [vmem:[%s4 + $0x108] sm:$0xff]
    %v2614 = vld [vmem:[%s4 + $0x110] sm:$0xff]
    %v2615 = vld [vmem:[%s4 + $0x118] sm:$0xff]
    %v2616 = vld [vmem:[%s4 + $0x120] sm:$0xff]
    %v2617 = vld [vmem:[%s4 + $0x128] sm:$0xff]
    %v2618 = vld [vmem:[%s4 + $0x130] sm:$0xff]
    %v2619 = vld [vmem:[%s4 + $0x138] sm:$0xff]
    %v2620 = vld [vmem:[%s4 + $0x140] sm:$0xff]
    %v2621 = vld [vmem:[%s4 + $0x148] sm:$0xff]
    %v2622 = vld [vmem:[%s4 + $0x150] sm:$0xff]
    %v2623 = vld [vmem:[%s4 + $0x158] sm:$0xff]
    %v2624 = vld [vmem:[%s4 + $0x160] sm:$0xff]
    %v2625 = vld [vmem:[%s4 + $0x168] sm:$0xff]
    %v2626 = vld [vmem:[%s4 + $0x170] sm:$0xff]
    %v2627 = vld [vmem:[%s4 + $0x178] sm:$0xff]
    %v2628 = vld [vmem:[%s4 + $0x180] sm:$0xff]
    %v2629 = vld [vmem:[%s4 + $0x188] sm:$0xff]
    %v2630 = vld [vmem:[%s4 + $0x190] sm:$0xff]
    %v2631 = vld [vmem:[%s4 + $0x198] sm:$0xff]
    %v2632 = vld [vmem:[%s4 + $0x1a0] sm:$0xff]
    %v2633 = vld [vmem:[%s4 + $0x1a8] sm:$0xff]
    %v2634 = vld [vmem:[%s4 + $0x1b0] sm:$0xff]
    %v2635 = vld [vmem:[%s4 + $0x1b8] sm:$0xff]
    %v2636 = vld [vmem:[%s4 + $0x1c0] sm:$0xff]
    %v2637 = vld [vmem:[%s4 + $0x1c8] sm:$0xff]
    %v2638 = vld [vmem:[%s4 + $0x1d0] sm:$0xff]
    %v2639 = vld [vmem:[%s4 + $0x1d8] sm:$0xff]
    %v2640 = vld [vmem:[%s4 + $0x1e0] sm:$0xff]
    %v2641 = vld [vmem:[%s4 + $0x1e8] sm:$0xff]
    %v2642 = vld [vmem:[%s4 + $0x1f0] sm:$0xff]
    %v2643 = vld [vmem:[%s4 + $0x1f8] sm:$0xff]
    %v2644 = vld [vmem:[%s5] sm:$0xff]
    %v2645 = vld [vmem:[%s5 + $0x8] sm:$0xff]
    %v2646 = vld [vmem:[%s5 + $0x10] sm:$0xff]
    %v2647 = vld [vmem:[%s5 + $0x18] sm:$0xff]
    %v2712 = vunpack.c.l.b16 %v2580
    %v2713 = vunpack.c.h.b16 %v2580
    %v2714 = vunpack.c.l.b16 %v2581
    %v2715 = vunpack.c.h.b16 %v2581
    %v2716 = vunpack.c.l.b16 %v2582
    %v2717 = vunpack.c.h.b16 %v2582
    %v2718 = vunpack.c.l.b16 %v2583
    %v2719 = vunpack.c.h.b16 %v2583
    %v2720 = vunpack.c.l.b16 %v2584
    %v2721 = vunpack.c.h.b16 %v2584
    %v2722 = vunpack.c.l.b16 %v2585
    %v2723 = vunpack.c.h.b16 %v2585
    %v2724 = vunpack.c.l.b16 %v2586
    %v2725 = vunpack.c.h.b16 %v2586
    %v2726 = vunpack.c.l.b16 %v2587
    %v2727 = vunpack.c.h.b16 %v2587
    %v2728 = vunpack.c.l.b16 %v2588
    %v2729 = vunpack.c.h.b16 %v2588
    %v2730 = vunpack.c.l.b16 %v2589
    %v2731 = vunpack.c.h.b16 %v2589
    %v2732 = vunpack.c.l.b16 %v2590
    %v2733 = vunpack.c.h.b16 %v2590
    %v2734 = vunpack.c.l.b16 %v2591
    %v2735 = vunpack.c.h.b16 %v2591
    %v2736 = vunpack.c.l.b16 %v2592
    %v2737 = vunpack.c.h.b16 %v2592
    %v2738 = vunpack.c.l.b16 %v2593
    %v2739 = vunpack.c.h.b16 %v2593
    %v2740 = vunpack.c.l.b16 %v2594
    %v2741 = vunpack.c.h.b16 %v2594
    %v2742 = vunpack.c.l.b16 %v2595
    %v2743 = vunpack.c.h.b16 %v2595
    %v2744 = vunpack.c.l.b16 %v2596
    %v2745 = vunpack.c.h.b16 %v2596
    %v2746 = vunpack.c.l.b16 %v2597
    %v2747 = vunpack.c.h.b16 %v2597
    %v2748 = vunpack.c.l.b16 %v2598
    %v2749 = vunpack.c.h.b16 %v2598
    %v2750 = vunpack.c.l.b16 %v2599
    %v2751 = vunpack.c.h.b16 %v2599
    %v2752 = vunpack.c.l.b16 %v2600
    %v2753 = vunpack.c.h.b16 %v2600
    %v2754 = vunpack.c.l.b16 %v2601
    %v2755 = vunpack.c.h.b16 %v2601
    %v2756 = vunpack.c.l.b16 %v2602
    %v2757 = vunpack.c.h.b16 %v2602
    %v2758 = vunpack.c.l.b16 %v2603
    %v2759 = vunpack.c.h.b16 %v2603
    %v2760 = vunpack.c.l.b16 %v2604
    %v2761 = vunpack.c.h.b16 %v2604
    %v2762 = vunpack.c.l.b16 %v2605
    %v2763 = vunpack.c.h.b16 %v2605
    %v2764 = vunpack.c.l.b16 %v2606
    %v2765 = vunpack.c.h.b16 %v2606
    %v2766 = vunpack.c.l.b16 %v2607
    %v2767 = vunpack.c.h.b16 %v2607
    %v2768 = vunpack.c.l.b16 %v2608
    %v2769 = vunpack.c.h.b16 %v2608
    %v2770 = vunpack.c.l.b16 %v2609
    %v2771 = vunpack.c.h.b16 %v2609
    %v2772 = vunpack.c.l.b16 %v2610
    %v2773 = vunpack.c.h.b16 %v2610
    %v2774 = vunpack.c.l.b16 %v2611
    %v2775 = vunpack.c.h.b16 %v2611
    %v2776 = vunpack.c.l.b16 %v2612
    %v2777 = vunpack.c.h.b16 %v2612
    %v2778 = vunpack.c.l.b16 %v2613
    %v2779 = vunpack.c.h.b16 %v2613
    %v2780 = vunpack.c.l.b16 %v2614
    %v2781 = vunpack.c.h.b16 %v2614
    %v2782 = vunpack.c.l.b16 %v2615
    %v2783 = vunpack.c.h.b16 %v2615
    %v2784 = vunpack.c.l.b16 %v2616
    %v2785 = vunpack.c.h.b16 %v2616
    %v2786 = vunpack.c.l.b16 %v2617
    %v2787 = vunpack.c.h.b16 %v2617
    %v2788 = vunpack.c.l.b16 %v2618
    %v2789 = vunpack.c.h.b16 %v2618
    %v2790 = vunpack.c.l.b16 %v2619
    %v2791 = vunpack.c.h.b16 %v2619
    %v2792 = vunpack.c.l.b16 %v2620
    %v2793 = vunpack.c.h.b16 %v2620
    %v2794 = vunpack.c.l.b16 %v2621
    %v2795 = vunpack.c.h.b16 %v2621
    %v2796 = vunpack.c.l.b16 %v2622
    %v2797 = vunpack.c.h.b16 %v2622
    %v2798 = vunpack.c.l.b16 %v2623
    %v2799 = vunpack.c.h.b16 %v2623
    %v2800 = vunpack.c.l.b16 %v2624
    %v2801 = vunpack.c.h.b16 %v2624
    %v2802 = vunpack.c.l.b16 %v2625
    %v2803 = vunpack.c.h.b16 %v2625
    %v2804 = vunpack.c.l.b16 %v2626
    %v2805 = vunpack.c.h.b16 %v2626
    %v2806 = vunpack.c.l.b16 %v2627
    %v2807 = vunpack.c.h.b16 %v2627
    %v2808 = vunpack.c.l.b16 %v2628
    %v2809 = vunpack.c.h.b16 %v2628
    %v2810 = vunpack.c.l.b16 %v2629
    %v2811 = vunpack.c.h.b16 %v2629
    %v2812 = vunpack.c.l.b16 %v2630
    %v2813 = vunpack.c.h.b16 %v2630
    %v2814 = vunpack.c.l.b16 %v2631
    %v2815 = vunpack.c.h.b16 %v2631
    %v2816 = vunpack.c.l.b16 %v2632
    %v2817 = vunpack.c.h.b16 %v2632
    %v2818 = vunpack.c.l.b16 %v2633
    %v2819 = vunpack.c.h.b16 %v2633
    %v2820 = vunpack.c.l.b16 %v2634
    %v2821 = vunpack.c.h.b16 %v2634
    %v2822 = vunpack.c.l.b16 %v2635
    %v2823 = vunpack.c.h.b16 %v2635
    %v2824 = vunpack.c.l.b16 %v2636
    %v2825 = vunpack.c.h.b16 %v2636
    %v2826 = vunpack.c.l.b16 %v2637
    %v2827 = vunpack.c.h.b16 %v2637
    %v2828 = vunpack.c.l.b16 %v2638
    %v2829 = vunpack.c.h.b16 %v2638
    %v2830 = vunpack.c.l.b16 %v2639
    %v2831 = vunpack.c.h.b16 %v2639
    %v2832 = vunpack.c.l.b16 %v2640
    %v2833 = vunpack.c.h.b16 %v2640
    %v2834 = vunpack.c.l.b16 %v2641
    %v2835 = vunpack.c.h.b16 %v2641
    %v2836 = vunpack.c.l.b16 %v2642
    %v2837 = vunpack.c.h.b16 %v2642
    %v2838 = vunpack.c.l.b16 %v2643
    %v2839 = vunpack.c.h.b16 %v2643
    %v2840 = vpack.c.b16 %v2716, %v2712
    %v2841 = vpack.c.b16 %v2717, %v2713
    %v2842 = vpack.c.b16 %v2718, %v2714
    %v2843 = vpack.c.b16 %v2719, %v2715
    %v2844 = vpack.c.b16 %v2724, %v2720
    %v2845 = vpack.c.b16 %v2725, %v2721
    %v2846 = vpack.c.b16 %v2726, %v2722
    %v2847 = vpack.c.b16 %v2727, %v2723
    %v2848 = vpack.c.b16 %v2732, %v2728
    %v2849 = vpack.c.b16 %v2733, %v2729
    %v2850 = vpack.c.b16 %v2734, %v2730
    %v2851 = vpack.c.b16 %v2735, %v2731
    %v2852 = vpack.c.b16 %v2740, %v2736
    %v2853 = vpack.c.b16 %v2741, %v2737
    %v2854 = vpack.c.b16 %v2742, %v2738
    %v2855 = vpack.c.b16 %v2743, %v2739
    %v2856 = vpack.c.b16 %v2748, %v2744
    %v2857 = vpack.c.b16 %v2749, %v2745
    %v2858 = vpack.c.b16 %v2750, %v2746
    %v2859 = vpack.c.b16 %v2751, %v2747
    %v2860 = vpack.c.b16 %v2756, %v2752
    %v2861 = vpack.c.b16 %v2757, %v2753
    %v2862 = vpack.c.b16 %v2758, %v2754
    %v2863 = vpack.c.b16 %v2759, %v2755
    %v2864 = vpack.c.b16 %v2764, %v2760
    %v2865 = vpack.c.b16 %v2765, %v2761
    %v2866 = vpack.c.b16 %v2766, %v2762
    %v2867 = vpack.c.b16 %v2767, %v2763
    %v2868 = vpack.c.b16 %v2772, %v2768
    %v2869 = vpack.c.b16 %v2773, %v2769
    %v2870 = vpack.c.b16 %v2774, %v2770
    %v2871 = vpack.c.b16 %v2775, %v2771
    %v2872 = vpack.c.b16 %v2780, %v2776
    %v2873 = vpack.c.b16 %v2781, %v2777
    %v2874 = vpack.c.b16 %v2782, %v2778
    %v2875 = vpack.c.b16 %v2783, %v2779
    %v2876 = vpack.c.b16 %v2788, %v2784
    %v2877 = vpack.c.b16 %v2789, %v2785
    %v2878 = vpack.c.b16 %v2790, %v2786
    %v2879 = vpack.c.b16 %v2791, %v2787
    %v2880 = vpack.c.b16 %v2796, %v2792
    %v2881 = vpack.c.b16 %v2797, %v2793
    %v2882 = vpack.c.b16 %v2798, %v2794
    %v2883 = vpack.c.b16 %v2799, %v2795
    %v2884 = vpack.c.b16 %v2804, %v2800
    %v2885 = vpack.c.b16 %v2805, %v2801
    %v2886 = vpack.c.b16 %v2806, %v2802
    %v2887 = vpack.c.b16 %v2807, %v2803
    %v2888 = vpack.c.b16 %v2812, %v2808
    %v2889 = vpack.c.b16 %v2813, %v2809
    %v2890 = vpack.c.b16 %v2814, %v2810
    %v2891 = vpack.c.b16 %v2815, %v2811
    %v2892 = vpack.c.b16 %v2820, %v2816
    %v2893 = vpack.c.b16 %v2821, %v2817
    %v2894 = vpack.c.b16 %v2822, %v2818
    %v2895 = vpack.c.b16 %v2823, %v2819
    %v2896 = vpack.c.b16 %v2828, %v2824
    %v2897 = vpack.c.b16 %v2829, %v2825
    %v2898 = vpack.c.b16 %v2830, %v2826
    %v2899 = vpack.c.b16 %v2831, %v2827
    %v2900 = vpack.c.b16 %v2836, %v2832
    %v2901 = vpack.c.b16 %v2837, %v2833
    %v2902 = vpack.c.b16 %v2838, %v2834
    %v2903 = vpack.c.b16 %v2839, %v2835
    %2968 = vmatprep.subr.bf16.mxu0 %v2841
    %2969 = vmatpush1.bf16.msra.mxu0 %v2840
    %2970 = vmatprep.subr.bf16.mxu0 %v2845
    %2971 = vmatpush1.bf16.msra.mxu0 %v2844
    %2972 = vmatprep.subr.bf16.mxu0 %v2849
    %2973 = vmatpush1.bf16.msra.mxu0 %v2848
    %2974 = vmatprep.subr.bf16.mxu0 %v2853
    %2975 = vmatpush1.bf16.msra.mxu0 %v2852
    %2976 = vmatprep.subr.bf16.mxu0 %v2857
    %2977 = vmatpush1.bf16.msra.mxu0 %v2856
    %2978 = vmatprep.subr.bf16.mxu0 %v2861
    %2979 = vmatpush1.bf16.msra.mxu0 %v2860
    %2980 = vmatprep.subr.bf16.mxu0 %v2865
    %2981 = vmatpush1.bf16.msra.mxu0 %v2864
    %2982 = vmatprep.subr.bf16.mxu0 %v2869
    %2983 = vmatpush1.bf16.msra.mxu0 %v2868
    %2984 = vmatprep.subr.bf16.mxu0 %v2873
    %2985 = vmatpush1.bf16.msra.mxu0 %v2872
    %2986 = vmatprep.subr.bf16.mxu0 %v2877
    %2987 = vmatpush1.bf16.msra.mxu0 %v2876
    %2988 = vmatprep.subr.bf16.mxu0 %v2881
    %2989 = vmatpush1.bf16.msra.mxu0 %v2880
    %2990 = vmatprep.subr.bf16.mxu0 %v2885
    %2991 = vmatpush1.bf16.msra.mxu0 %v2884
    %2992 = vmatprep.subr.bf16.mxu0 %v2889
    %2993 = vmatpush1.bf16.msra.mxu0 %v2888
    %2994 = vmatprep.subr.bf16.mxu0 %v2893
    %2995 = vmatpush1.bf16.msra.mxu0 %v2892
    %2996 = vmatprep.subr.bf16.mxu0 %v2897
    %2997 = vmatpush1.bf16.msra.mxu0 %v2896
    %2998 = vmatprep.subr.bf16.mxu0 %v2901
    %2999 = vmatpush1.bf16.msra.mxu0 %v2900
    %3000 = vmatprep.mubr.bf16.mxu0 %v2579
    %3001 = vmatmul.mubr.bf16.gmra.mrb[0].mxu0 %v2578
    %v3002 = vpop.f32.mrb[0].mxu0
    %v3003 = vadd.f32 %v2644, %v3002
    %v3004 = vpop.f32.mrb[0].mxu0
    %v3005 = vadd.f32 %v2645, %v3004
    %v3006 = vpop.f32.mrb[0].mxu0
    %v3007 = vpop.f32.mrb[0].mxu0
    %3008 = vdwg.mxu0
    %3009 = vmatprep.subr.bf16.mxu0 %v2843
    %3010 = vmatpush1.bf16.msra.mxu0 %v2842
    %3011 = vmatprep.subr.bf16.mxu0 %v2847
    %3012 = vmatpush1.bf16.msra.mxu0 %v2846
    %3013 = vmatprep.subr.bf16.mxu0 %v2851
    %3014 = vmatpush1.bf16.msra.mxu0 %v2850
    %3015 = vmatprep.subr.bf16.mxu0 %v2855
    %3016 = vmatpush1.bf16.msra.mxu0 %v2854
    %3017 = vmatprep.subr.bf16.mxu0 %v2859
    %3018 = vmatpush1.bf16.msra.mxu0 %v2858
    %3019 = vmatprep.subr.bf16.mxu0 %v2863
    %3020 = vmatpush1.bf16.msra.mxu0 %v2862
    %3021 = vmatprep.subr.bf16.mxu0 %v2867
    %3022 = vmatpush1.bf16.msra.mxu0 %v2866
    %3023 = vmatprep.subr.bf16.mxu0 %v2871
    %3024 = vmatpush1.bf16.msra.mxu0 %v2870
    %3025 = vmatprep.subr.bf16.mxu0 %v2875
    %3026 = vmatpush1.bf16.msra.mxu0 %v2874
    %3027 = vmatprep.subr.bf16.mxu0 %v2879
    %3028 = vmatpush1.bf16.msra.mxu0 %v2878
    %3029 = vmatprep.subr.bf16.mxu0 %v2883
    %3030 = vmatpush1.bf16.msra.mxu0 %v2882
    %3031 = vmatprep.subr.bf16.mxu0 %v2887
    %3032 = vmatpush1.bf16.msra.mxu0 %v2886
    %3033 = vmatprep.subr.bf16.mxu0 %v2891
    %3034 = vmatpush1.bf16.msra.mxu0 %v2890
    %3035 = vmatprep.subr.bf16.mxu0 %v2895
    %3036 = vmatpush1.bf16.msra.mxu0 %v2894
    %3037 = vmatprep.subr.bf16.mxu0 %v2899
    %3038 = vmatpush1.bf16.msra.mxu0 %v2898
    %3039 = vmatprep.subr.bf16.mxu0 %v2903
    %3040 = vmatpush1.bf16.msra.mxu0 %v2902
    %3041 = vmatprep.mubr.bf16.mxu0 %v2579
    %3042 = vmatmul.mubr.bf16.gmra.mrb[0].mxu0 %v2578
    %v3043 = vpop.f32.mrb[0].mxu0
    %v3044 = vadd.f32 %v2646, %v3043
    %v3045 = vpop.f32.mrb[0].mxu0
    %v3046 = vadd.f32 %v2647, %v3045
    %v3047 = vpop.f32.mrb[0].mxu0
    %v3048 = vpop.f32.mrb[0].mxu0
    %3049 = vdwg.mxu0
    %v3050 = vxor.u32 %v3003, 2147483648
    %v3051 = vmul.f32 %v3050, 1.442695
    %v3052 = vpow.pop %v3051
    %v3053 = vadd.f32 %v3052, 1.0
    %v3054 = vrcp.pop %v3053
    %v3055 = vmul.f32 1.0, %v3054
    %v3056 = vxor.u32 %v3005, 2147483648
    %v3057 = vmul.f32 %v3056, 1.442695
    %v3058 = vpow.pop %v3057
    %v3059 = vadd.f32 %v3058, 1.0
    %v3060 = vrcp.pop %v3059
    %v3061 = vmul.f32 1.0, %v3060
    %v3062 = vtanh.pop %v3044
    %v3063 = vxor.u32 %v3046, 2147483648
    %v3064 = vmul.f32 %v3063, 1.442695
    %v3065 = vpow.pop %v3064
    %v3066 = vadd.f32 %v3065, 1.0
    %v3067 = vrcp.pop %v3066
    %v3068 = vmul.f32 1.0, %v3067
    %v3069 = vld [vmem:[#allocation3] sm:$0xff]
    %v3070 = vmul.f32 %v3061, %v3069
    %v3071 = vmul.f32 %v3055, %v3062
    %v3072 = vadd.f32 %v3070, %v3071
    %v3073 = vtanh.pop %v3072
    %v3074 = vmul.f32 %v3068, %v3073
    %3075 = vst [vmem:[#allocation2 + $0x8] sm:$0xff] %v3074
    %3076 = vst [vmem:[#allocation3] sm:$0xff] %v3072
    %s3077 = scalar_lea.vmem %s1, 48
    %v3078 = vld [vmem:[%s3077] sm:$0xff]
    %3079 = vst [vmem:[#allocation2] sm:$0xff] %v3078
    %v3080 = vld [vmem:[#allocation2] sm:$0xff]
    %v3081 = vld [vmem:[#allocation2 + $0x8] sm:$0xff]
    %v3082 = vpack.c.bf16 %v3080, %v3080
    %v3083 = vpack.c.bf16 %v3081, %v3081
    %v3084 = vld [vmem:[%s4] sm:$0xff]
    %v3085 = vld [vmem:[%s4 + $0x8] sm:$0xff]
    %v3086 = vld [vmem:[%s4 + $0x10] sm:$0xff]
    %v3087 = vld [vmem:[%s4 + $0x18] sm:$0xff]
    %v3088 = vld [vmem:[%s4 + $0x20] sm:$0xff]
    %v3089 = vld [vmem:[%s4 + $0x28] sm:$0xff]
    %v3090 = vld [vmem:[%s4 + $0x30] sm:$0xff]
    %v3091 = vld [vmem:[%s4 + $0x38] sm:$0xff]
    %v3092 = vld [vmem:[%s4 + $0x40] sm:$0xff]
    %v3093 = vld [vmem:[%s4 + $0x48] sm:$0xff]
    %v3094 = vld [vmem:[%s4 + $0x50] sm:$0xff]
    %v3095 = vld [vmem:[%s4 + $0x58] sm:$0xff]
    %v3096 = vld [vmem:[%s4 + $0x60] sm:$0xff]
    %v3097 = vld [vmem:[%s4 + $0x68] sm:$0xff]
    %v3098 = vld [vmem:[%s4 + $0x70] sm:$0xff]
    %v3099 = vld [vmem:[%s4 + $0x78] sm:$0xff]
    %v3100 = vld [vmem:[%s4 + $0x80] sm:$0xff]
    %v3101 = vld [vmem:[%s4 + $0x88] sm:$0xff]
    %v3102 = vld [vmem:[%s4 + $0x90] sm:$0xff]
    %v3103 = vld [vmem:[%s4 + $0x98] sm:$0xff]
    %v3104 = vld [vmem:[%s4 + $0xa0] sm:$0xff]
    %v3105 = vld [vmem:[%s4 + $0xa8] sm:$0xff]
    %v3106 = vld [vmem:[%s4 + $0xb0] sm:$0xff]
    %v3107 = vld [vmem:[%s4 + $0xb8] sm:$0xff]
    %v3108 = vld [vmem:[%s4 + $0xc0] sm:$0xff]
    %v3109 = vld [vmem:[%s4 + $0xc8] sm:$0xff]
    %v3110 = vld [vmem:[%s4 + $0xd0] sm:$0xff]
    %v3111 = vld [vmem:[%s4 + $0xd8] sm:$0xff]
    %v3112 = vld [vmem:[%s4 + $0xe0] sm:$0xff]
    %v3113 = vld [vmem:[%s4 + $0xe8] sm:$0xff]
    %v3114 = vld [vmem:[%s4 + $0xf0] sm:$0xff]
    %v3115 = vld [vmem:[%s4 + $0xf8] sm:$0xff]
    %v3116 = vld [vmem:[%s4 + $0x100] sm:$0xff]
    %v3117 = vld [vmem:[%s4 + $0x108] sm:$0xff]
    %v3118 = vld [vmem:[%s4 + $0x110] sm:$0xff]
    %v3119 = vld [vmem:[%s4 + $0x118] sm:$0xff]
    %v3120 = vld [vmem:[%s4 + $0x120] sm:$0xff]
    %v3121 = vld [vmem:[%s4 + $0x128] sm:$0xff]
    %v3122 = vld [vmem:[%s4 + $0x130] sm:$0xff]
    %v3123 = vld [vmem:[%s4 + $0x138] sm:$0xff]
    %v3124 = vld [vmem:[%s4 + $0x140] sm:$0xff]
    %v3125 = vld [vmem:[%s4 + $0x148] sm:$0xff]
    %v3126 = vld [vmem:[%s4 + $0x150] sm:$0xff]
    %v3127 = vld [vmem:[%s4 + $0x158] sm:$0xff]
    %v3128 = vld [vmem:[%s4 + $0x160] sm:$0xff]
    %v3129 = vld [vmem:[%s4 + $0x168] sm:$0xff]
    %v3130 = vld [vmem:[%s4 + $0x170] sm:$0xff]
    %v3131 = vld [vmem:[%s4 + $0x178] sm:$0xff]
    %v3132 = vld [vmem:[%s4 + $0x180] sm:$0xff]
    %v3133 = vld [vmem:[%s4 + $0x188] sm:$0xff]
    %v3134 = vld [vmem:[%s4 + $0x190] sm:$0xff]
    %v3135 = vld [vmem:[%s4 + $0x198] sm:$0xff]
    %v3136 = vld [vmem:[%s4 + $0x1a0] sm:$0xff]
    %v3137 = vld [vmem:[%s4 + $0x1a8] sm:$0xff]
    %v3138 = vld [vmem:[%s4 + $0x1b0] sm:$0xff]
    %v3139 = vld [vmem:[%s4 + $0x1b8] sm:$0xff]
    %v3140 = vld [vmem:[%s4 + $0x1c0] sm:$0xff]
    %v3141 = vld [vmem:[%s4 + $0x1c8] sm:$0xff]
    %v3142 = vld [vmem:[%s4 + $0x1d0] sm:$0xff]
    %v3143 = vld [vmem:[%s4 + $0x1d8] sm:$0xff]
    %v3144 = vld [vmem:[%s4 + $0x1e0] sm:$0xff]
    %v3145 = vld [vmem:[%s4 + $0x1e8] sm:$0xff]
    %v3146 = vld [vmem:[%s4 + $0x1f0] sm:$0xff]
    %v3147 = vld [vmem:[%s4 + $0x1f8] sm:$0xff]
    %v3148 = vld [vmem:[%s5] sm:$0xff]
    %v3149 = vld [vmem:[%s5 + $0x8] sm:$0xff]
    %v3150 = vld [vmem:[%s5 + $0x10] sm:$0xff]
    %v3151 = vld [vmem:[%s5 + $0x18] sm:$0xff]
    %v3216 = vunpack.c.l.b16 %v3084
    %v3217 = vunpack.c.h.b16 %v3084
    %v3218 = vunpack.c.l.b16 %v3085
    %v3219 = vunpack.c.h.b16 %v3085
    %v3220 = vunpack.c.l.b16 %v3086
    %v3221 = vunpack.c.h.b16 %v3086
    %v3222 = vunpack.c.l.b16 %v3087
    %v3223 = vunpack.c.h.b16 %v3087
    %v3224 = vunpack.c.l.b16 %v3088
    %v3225 = vunpack.c.h.b16 %v3088
    %v3226 = vunpack.c.l.b16 %v3089
    %v3227 = vunpack.c.h.b16 %v3089
    %v3228 = vunpack.c.l.b16 %v3090
    %v3229 = vunpack.c.h.b16 %v3090
    %v3230 = vunpack.c.l.b16 %v3091
    %v3231 = vunpack.c.h.b16 %v3091
    %v3232 = vunpack.c.l.b16 %v3092
    %v3233 = vunpack.c.h.b16 %v3092
    %v3234 = vunpack.c.l.b16 %v3093
    %v3235 = vunpack.c.h.b16 %v3093
    %v3236 = vunpack.c.l.b16 %v3094
    %v3237 = vunpack.c.h.b16 %v3094
    %v3238 = vunpack.c.l.b16 %v3095
    %v3239 = vunpack.c.h.b16 %v3095
    %v3240 = vunpack.c.l.b16 %v3096
    %v3241 = vunpack.c.h.b16 %v3096
    %v3242 = vunpack.c.l.b16 %v3097
    %v3243 = vunpack.c.h.b16 %v3097
    %v3244 = vunpack.c.l.b16 %v3098
    %v3245 = vunpack.c.h.b16 %v3098
    %v3246 = vunpack.c.l.b16 %v3099
    %v3247 = vunpack.c.h.b16 %v3099
    %v3248 = vunpack.c.l.b16 %v3100
    %v3249 = vunpack.c.h.b16 %v3100
    %v3250 = vunpack.c.l.b16 %v3101
    %v3251 = vunpack.c.h.b16 %v3101
    %v3252 = vunpack.c.l.b16 %v3102
    %v3253 = vunpack.c.h.b16 %v3102
    %v3254 = vunpack.c.l.b16 %v3103
    %v3255 = vunpack.c.h.b16 %v3103
    %v3256 = vunpack.c.l.b16 %v3104
    %v3257 = vunpack.c.h.b16 %v3104
    %v3258 = vunpack.c.l.b16 %v3105
    %v3259 = vunpack.c.h.b16 %v3105
    %v3260 = vunpack.c.l.b16 %v3106
    %v3261 = vunpack.c.h.b16 %v3106
    %v3262 = vunpack.c.l.b16 %v3107
    %v3263 = vunpack.c.h.b16 %v3107
    %v3264 = vunpack.c.l.b16 %v3108
    %v3265 = vunpack.c.h.b16 %v3108
    %v3266 = vunpack.c.l.b16 %v3109
    %v3267 = vunpack.c.h.b16 %v3109
    %v3268 = vunpack.c.l.b16 %v3110
    %v3269 = vunpack.c.h.b16 %v3110
    %v3270 = vunpack.c.l.b16 %v3111
    %v3271 = vunpack.c.h.b16 %v3111
    %v3272 = vunpack.c.l.b16 %v3112
    %v3273 = vunpack.c.h.b16 %v3112
    %v3274 = vunpack.c.l.b16 %v3113
    %v3275 = vunpack.c.h.b16 %v3113
    %v3276 = vunpack.c.l.b16 %v3114
    %v3277 = vunpack.c.h.b16 %v3114
    %v3278 = vunpack.c.l.b16 %v3115
    %v3279 = vunpack.c.h.b16 %v3115
    %v3280 = vunpack.c.l.b16 %v3116
    %v3281 = vunpack.c.h.b16 %v3116
    %v3282 = vunpack.c.l.b16 %v3117
    %v3283 = vunpack.c.h.b16 %v3117
    %v3284 = vunpack.c.l.b16 %v3118
    %v3285 = vunpack.c.h.b16 %v3118
    %v3286 = vunpack.c.l.b16 %v3119
    %v3287 = vunpack.c.h.b16 %v3119
    %v3288 = vunpack.c.l.b16 %v3120
    %v3289 = vunpack.c.h.b16 %v3120
    %v3290 = vunpack.c.l.b16 %v3121
    %v3291 = vunpack.c.h.b16 %v3121
    %v3292 = vunpack.c.l.b16 %v3122
    %v3293 = vunpack.c.h.b16 %v3122
    %v3294 = vunpack.c.l.b16 %v3123
    %v3295 = vunpack.c.h.b16 %v3123
    %v3296 = vunpack.c.l.b16 %v3124
    %v3297 = vunpack.c.h.b16 %v3124
    %v3298 = vunpack.c.l.b16 %v3125
    %v3299 = vunpack.c.h.b16 %v3125
    %v3300 = vunpack.c.l.b16 %v3126
    %v3301 = vunpack.c.h.b16 %v3126
    %v3302 = vunpack.c.l.b16 %v3127
    %v3303 = vunpack.c.h.b16 %v3127
    %v3304 = vunpack.c.l.b16 %v3128
    %v3305 = vunpack.c.h.b16 %v3128
    %v3306 = vunpack.c.l.b16 %v3129
    %v3307 = vunpack.c.h.b16 %v3129
    %v3308 = vunpack.c.l.b16 %v3130
    %v3309 = vunpack.c.h.b16 %v3130
    %v3310 = vunpack.c.l.b16 %v3131
    %v3311 = vunpack.c.h.b16 %v3131
    %v3312 = vunpack.c.l.b16 %v3132
    %v3313 = vunpack.c.h.b16 %v3132
    %v3314 = vunpack.c.l.b16 %v3133
    %v3315 = vunpack.c.h.b16 %v3133
    %v3316 = vunpack.c.l.b16 %v3134
    %v3317 = vunpack.c.h.b16 %v3134
    %v3318 = vunpack.c.l.b16 %v3135
    %v3319 = vunpack.c.h.b16 %v3135
    %v3320 = vunpack.c.l.b16 %v3136
    %v3321 = vunpack.c.h.b16 %v3136
    %v3322 = vunpack.c.l.b16 %v3137
    %v3323 = vunpack.c.h.b16 %v3137
    %v3324 = vunpack.c.l.b16 %v3138
    %v3325 = vunpack.c.h.b16 %v3138
    %v3326 = vunpack.c.l.b16 %v3139
    %v3327 = vunpack.c.h.b16 %v3139
    %v3328 = vunpack.c.l.b16 %v3140
    %v3329 = vunpack.c.h.b16 %v3140
    %v3330 = vunpack.c.l.b16 %v3141
    %v3331 = vunpack.c.h.b16 %v3141
    %v3332 = vunpack.c.l.b16 %v3142
    %v3333 = vunpack.c.h.b16 %v3142
    %v3334 = vunpack.c.l.b16 %v3143
    %v3335 = vunpack.c.h.b16 %v3143
    %v3336 = vunpack.c.l.b16 %v3144
    %v3337 = vunpack.c.h.b16 %v3144
    %v3338 = vunpack.c.l.b16 %v3145
    %v3339 = vunpack.c.h.b16 %v3145
    %v3340 = vunpack.c.l.b16 %v3146
    %v3341 = vunpack.c.h.b16 %v3146
    %v3342 = vunpack.c.l.b16 %v3147
    %v3343 = vunpack.c.h.b16 %v3147
    %v3344 = vpack.c.b16 %v3220, %v3216
    %v3345 = vpack.c.b16 %v3221, %v3217
    %v3346 = vpack.c.b16 %v3222, %v3218
    %v3347 = vpack.c.b16 %v3223, %v3219
    %v3348 = vpack.c.b16 %v3228, %v3224
    %v3349 = vpack.c.b16 %v3229, %v3225
    %v3350 = vpack.c.b16 %v3230, %v3226
    %v3351 = vpack.c.b16 %v3231, %v3227
    %v3352 = vpack.c.b16 %v3236, %v3232
    %v3353 = vpack.c.b16 %v3237, %v3233
    %v3354 = vpack.c.b16 %v3238, %v3234
    %v3355 = vpack.c.b16 %v3239, %v3235
    %v3356 = vpack.c.b16 %v3244, %v3240
    %v3357 = vpack.c.b16 %v3245, %v3241
    %v3358 = vpack.c.b16 %v3246, %v3242
    %v3359 = vpack.c.b16 %v3247, %v3243
    %v3360 = vpack.c.b16 %v3252, %v3248
    %v3361 = vpack.c.b16 %v3253, %v3249
    %v3362 = vpack.c.b16 %v3254, %v3250
    %v3363 = vpack.c.b16 %v3255, %v3251
    %v3364 = vpack.c.b16 %v3260, %v3256
    %v3365 = vpack.c.b16 %v3261, %v3257
    %v3366 = vpack.c.b16 %v3262, %v3258
    %v3367 = vpack.c.b16 %v3263, %v3259
    %v3368 = vpack.c.b16 %v3268, %v3264
    %v3369 = vpack.c.b16 %v3269, %v3265
    %v3370 = vpack.c.b16 %v3270, %v3266
    %v3371 = vpack.c.b16 %v3271, %v3267
    %v3372 = vpack.c.b16 %v3276, %v3272
    %v3373 = vpack.c.b16 %v3277, %v3273
    %v3374 = vpack.c.b16 %v3278, %v3274
    %v3375 = vpack.c.b16 %v3279, %v3275
    %v3376 = vpack.c.b16 %v3284, %v3280
    %v3377 = vpack.c.b16 %v3285, %v3281
    %v3378 = vpack.c.b16 %v3286, %v3282
    %v3379 = vpack.c.b16 %v3287, %v3283
    %v3380 = vpack.c.b16 %v3292, %v3288
    %v3381 = vpack.c.b16 %v3293, %v3289
    %v3382 = vpack.c.b16 %v3294, %v3290
    %v3383 = vpack.c.b16 %v3295, %v3291
    %v3384 = vpack.c.b16 %v3300, %v3296
    %v3385 = vpack.c.b16 %v3301, %v3297
    %v3386 = vpack.c.b16 %v3302, %v3298
    %v3387 = vpack.c.b16 %v3303, %v3299
    %v3388 = vpack.c.b16 %v3308, %v3304
    %v3389 = vpack.c.b16 %v3309, %v3305
    %v3390 = vpack.c.b16 %v3310, %v3306
    %v3391 = vpack.c.b16 %v3311, %v3307
    %v3392 = vpack.c.b16 %v3316, %v3312
    %v3393 = vpack.c.b16 %v3317, %v3313
    %v3394 = vpack.c.b16 %v3318, %v3314
    %v3395 = vpack.c.b16 %v3319, %v3315
    %v3396 = vpack.c.b16 %v3324, %v3320
    %v3397 = vpack.c.b16 %v3325, %v3321
    %v3398 = vpack.c.b16 %v3326, %v3322
    %v3399 = vpack.c.b16 %v3327, %v3323
    %v3400 = vpack.c.b16 %v3332, %v3328
    %v3401 = vpack.c.b16 %v3333, %v3329
    %v3402 = vpack.c.b16 %v3334, %v3330
    %v3403 = vpack.c.b16 %v3335, %v3331
    %v3404 = vpack.c.b16 %v3340, %v3336
    %v3405 = vpack.c.b16 %v3341, %v3337
    %v3406 = vpack.c.b16 %v3342, %v3338
    %v3407 = vpack.c.b16 %v3343, %v3339
    %3472 = vmatprep.subr.bf16.mxu0 %v3345
    %3473 = vmatpush1.bf16.msra.mxu0 %v3344
    %3474 = vmatprep.subr.bf16.mxu0 %v3349
    %3475 = vmatpush1.bf16.msra.mxu0 %v3348
    %3476 = vmatprep.subr.bf16.mxu0 %v3353
    %3477 = vmatpush1.bf16.msra.mxu0 %v3352
    %3478 = vmatprep.subr.bf16.mxu0 %v3357
    %3479 = vmatpush1.bf16.msra.mxu0 %v3356
    %3480 = vmatprep.subr.bf16.mxu0 %v3361
    %3481 = vmatpush1.bf16.msra.mxu0 %v3360
    %3482 = vmatprep.subr.bf16.mxu0 %v3365
    %3483 = vmatpush1.bf16.msra.mxu0 %v3364
    %3484 = vmatprep.subr.bf16.mxu0 %v3369
    %3485 = vmatpush1.bf16.msra.mxu0 %v3368
    %3486 = vmatprep.subr.bf16.mxu0 %v3373
    %3487 = vmatpush1.bf16.msra.mxu0 %v3372
    %3488 = vmatprep.subr.bf16.mxu0 %v3377
    %3489 = vmatpush1.bf16.msra.mxu0 %v3376
    %3490 = vmatprep.subr.bf16.mxu0 %v3381
    %3491 = vmatpush1.bf16.msra.mxu0 %v3380
    %3492 = vmatprep.subr.bf16.mxu0 %v3385
    %3493 = vmatpush1.bf16.msra.mxu0 %v3384
    %3494 = vmatprep.subr.bf16.mxu0 %v3389
    %3495 = vmatpush1.bf16.msra.mxu0 %v3388
    %3496 = vmatprep.subr.bf16.mxu0 %v3393
    %3497 = vmatpush1.bf16.msra.mxu0 %v3392
    %3498 = vmatprep.subr.bf16.mxu0 %v3397
    %3499 = vmatpush1.bf16.msra.mxu0 %v3396
    %3500 = vmatprep.subr.bf16.mxu0 %v3401
    %3501 = vmatpush1.bf16.msra.mxu0 %v3400
    %3502 = vmatprep.subr.bf16.mxu0 %v3405
    %3503 = vmatpush1.bf16.msra.mxu0 %v3404
    %3504 = vmatprep.mubr.bf16.mxu0 %v3083
    %3505 = vmatmul.mubr.bf16.gmra.mrb[0].mxu0 %v3082
    %v3506 = vpop.f32.mrb[0].mxu0
    %v3507 = vadd.f32 %v3148, %v3506
    %v3508 = vpop.f32.mrb[0].mxu0
    %v3509 = vadd.f32 %v3149, %v3508
    %v3510 = vpop.f32.mrb[0].mxu0
    %v3511 = vpop.f32.mrb[0].mxu0
    %3512 = vdwg.mxu0
    %3513 = vmatprep.subr.bf16.mxu0 %v3347
    %3514 = vmatpush1.bf16.msra.mxu0 %v3346
    %3515 = vmatprep.subr.bf16.mxu0 %v3351
    %3516 = vmatpush1.bf16.msra.mxu0 %v3350
    %3517 = vmatprep.subr.bf16.mxu0 %v3355
    %3518 = vmatpush1.bf16.msra.mxu0 %v3354
    %3519 = vmatprep.subr.bf16.mxu0 %v3359
    %3520 = vmatpush1.bf16.msra.mxu0 %v3358
    %3521 = vmatprep.subr.bf16.mxu0 %v3363
    %3522 = vmatpush1.bf16.msra.mxu0 %v3362
    %3523 = vmatprep.subr.bf16.mxu0 %v3367
    %3524 = vmatpush1.bf16.msra.mxu0 %v3366
    %3525 = vmatprep.subr.bf16.mxu0 %v3371
    %3526 = vmatpush1.bf16.msra.mxu0 %v3370
    %3527 = vmatprep.subr.bf16.mxu0 %v3375
    %3528 = vmatpush1.bf16.msra.mxu0 %v3374
    %3529 = vmatprep.subr.bf16.mxu0 %v3379
    %3530 = vmatpush1.bf16.msra.mxu0 %v3378
    %3531 = vmatprep.subr.bf16.mxu0 %v3383
    %3532 = vmatpush1.bf16.msra.mxu0 %v3382
    %3533 = vmatprep.subr.bf16.mxu0 %v3387
    %3534 = vmatpush1.bf16.msra.mxu0 %v3386
    %3535 = vmatprep.subr.bf16.mxu0 %v3391
    %3536 = vmatpush1.bf16.msra.mxu0 %v3390
    %3537 = vmatprep.subr.bf16.mxu0 %v3395
    %3538 = vmatpush1.bf16.msra.mxu0 %v3394
    %3539 = vmatprep.subr.bf16.mxu0 %v3399
    %3540 = vmatpush1.bf16.msra.mxu0 %v3398
    %3541 = vmatprep.subr.bf16.mxu0 %v3403
    %3542 = vmatpush1.bf16.msra.mxu0 %v3402
    %3543 = vmatprep.subr.bf16.mxu0 %v3407
    %3544 = vmatpush1.bf16.msra.mxu0 %v3406
    %3545 = vmatprep.mubr.bf16.mxu0 %v3083
    %3546 = vmatmul.mubr.bf16.gmra.mrb[0].mxu0 %v3082
    %v3547 = vpop.f32.mrb[0].mxu0
    %v3548 = vadd.f32 %v3150, %v3547
    %v3549 = vpop.f32.mrb[0].mxu0
    %v3550 = vadd.f32 %v3151, %v3549
    %v3551 = vpop.f32.mrb[0].mxu0
    %v3552 = vpop.f32.mrb[0].mxu0
    %3553 = vdwg.mxu0
    %v3554 = vxor.u32 %v3507, 2147483648
    %v3555 = vmul.f32 %v3554, 1.442695
    %v3556 = vpow.pop %v3555
    %v3557 = vadd.f32 %v3556, 1.0
    %v3558 = vrcp.pop %v3557
    %v3559 = vmul.f32 1.0, %v3558
    %v3560 = vxor.u32 %v3509, 2147483648
    %v3561 = vmul.f32 %v3560, 1.442695
    %v3562 = vpow.pop %v3561
    %v3563 = vadd.f32 %v3562, 1.0
    %v3564 = vrcp.pop %v3563
    %v3565 = vmul.f32 1.0, %v3564
    %v3566 = vtanh.pop %v3548
    %v3567 = vxor.u32 %v3550, 2147483648
    %v3568 = vmul.f32 %v3567, 1.442695
    %v3569 = vpow.pop %v3568
    %v3570 = vadd.f32 %v3569, 1.0
    %v3571 = vrcp.pop %v3570
    %v3572 = vmul.f32 1.0, %v3571
    %v3573 = vld [vmem:[#allocation3] sm:$0xff]
    %v3574 = vmul.f32 %v3565, %v3573
    %v3575 = vmul.f32 %v3559, %v3566
    %v3576 = vadd.f32 %v3574, %v3575
    %v3577 = vtanh.pop %v3576
    %v3578 = vmul.f32 %v3572, %v3577
    %3579 = vst [vmem:[#allocation2 + $0x8] sm:$0xff] %v3578
    %3580 = vst [vmem:[#allocation3] sm:$0xff] %v3576
    %s3581 = scalar_lea.vmem %s1, 56
    %v3582 = vld [vmem:[%s3581] sm:$0xff]
    %3583 = vst [vmem:[#allocation2] sm:$0xff] %v3582
    %v3584 = vld [vmem:[#allocation2] sm:$0xff]
    %v3585 = vld [vmem:[#allocation2 + $0x8] sm:$0xff]
    %v3586 = vpack.c.bf16 %v3584, %v3584
    %v3587 = vpack.c.bf16 %v3585, %v3585
    %v3588 = vld [vmem:[%s4] sm:$0xff]
    %v3589 = vld [vmem:[%s4 + $0x8] sm:$0xff]
    %v3590 = vld [vmem:[%s4 + $0x10] sm:$0xff]
    %v3591 = vld [vmem:[%s4 + $0x18] sm:$0xff]
    %v3592 = vld [vmem:[%s4 + $0x20] sm:$0xff]
    %v3593 = vld [vmem:[%s4 + $0x28] sm:$0xff]
    %v3594 = vld [vmem:[%s4 + $0x30] sm:$0xff]
    %v3595 = vld [vmem:[%s4 + $0x38] sm:$0xff]
    %v3596 = vld [vmem:[%s4 + $0x40] sm:$0xff]
    %v3597 = vld [vmem:[%s4 + $0x48] sm:$0xff]
    %v3598 = vld [vmem:[%s4 + $0x50] sm:$0xff]
    %v3599 = vld [vmem:[%s4 + $0x58] sm:$0xff]
    %v3600 = vld [vmem:[%s4 + $0x60] sm:$0xff]
    %v3601 = vld [vmem:[%s4 + $0x68] sm:$0xff]
    %v3602 = vld [vmem:[%s4 + $0x70] sm:$0xff]
    %v3603 = vld [vmem:[%s4 + $0x78] sm:$0xff]
    %v3604 = vld [vmem:[%s4 + $0x80] sm:$0xff]
    %v3605 = vld [vmem:[%s4 + $0x88] sm:$0xff]
    %v3606 = vld [vmem:[%s4 + $0x90] sm:$0xff]
    %v3607 = vld [vmem:[%s4 + $0x98] sm:$0xff]
    %v3608 = vld [vmem:[%s4 + $0xa0] sm:$0xff]
    %v3609 = vld [vmem:[%s4 + $0xa8] sm:$0xff]
    %v3610 = vld [vmem:[%s4 + $0xb0] sm:$0xff]
    %v3611 = vld [vmem:[%s4 + $0xb8] sm:$0xff]
    %v3612 = vld [vmem:[%s4 + $0xc0] sm:$0xff]
    %v3613 = vld [vmem:[%s4 + $0xc8] sm:$0xff]
    %v3614 = vld [vmem:[%s4 + $0xd0] sm:$0xff]
    %v3615 = vld [vmem:[%s4 + $0xd8] sm:$0xff]
    %v3616 = vld [vmem:[%s4 + $0xe0] sm:$0xff]
    %v3617 = vld [vmem:[%s4 + $0xe8] sm:$0xff]
    %v3618 = vld [vmem:[%s4 + $0xf0] sm:$0xff]
    %v3619 = vld [vmem:[%s4 + $0xf8] sm:$0xff]
    %v3620 = vld [vmem:[%s4 + $0x100] sm:$0xff]
    %v3621 = vld [vmem:[%s4 + $0x108] sm:$0xff]
    %v3622 = vld [vmem:[%s4 + $0x110] sm:$0xff]
    %v3623 = vld [vmem:[%s4 + $0x118] sm:$0xff]
    %v3624 = vld [vmem:[%s4 + $0x120] sm:$0xff]
    %v3625 = vld [vmem:[%s4 + $0x128] sm:$0xff]
    %v3626 = vld [vmem:[%s4 + $0x130] sm:$0xff]
    %v3627 = vld [vmem:[%s4 + $0x138] sm:$0xff]
    %v3628 = vld [vmem:[%s4 + $0x140] sm:$0xff]
    %v3629 = vld [vmem:[%s4 + $0x148] sm:$0xff]
    %v3630 = vld [vmem:[%s4 + $0x150] sm:$0xff]
    %v3631 = vld [vmem:[%s4 + $0x158] sm:$0xff]
    %v3632 = vld [vmem:[%s4 + $0x160] sm:$0xff]
    %v3633 = vld [vmem:[%s4 + $0x168] sm:$0xff]
    %v3634 = vld [vmem:[%s4 + $0x170] sm:$0xff]
    %v3635 = vld [vmem:[%s4 + $0x178] sm:$0xff]
    %v3636 = vld [vmem:[%s4 + $0x180] sm:$0xff]
    %v3637 = vld [vmem:[%s4 + $0x188] sm:$0xff]
    %v3638 = vld [vmem:[%s4 + $0x190] sm:$0xff]
    %v3639 = vld [vmem:[%s4 + $0x198] sm:$0xff]
    %v3640 = vld [vmem:[%s4 + $0x1a0] sm:$0xff]
    %v3641 = vld [vmem:[%s4 + $0x1a8] sm:$0xff]
    %v3642 = vld [vmem:[%s4 + $0x1b0] sm:$0xff]
    %v3643 = vld [vmem:[%s4 + $0x1b8] sm:$0xff]
    %v3644 = vld [vmem:[%s4 + $0x1c0] sm:$0xff]
    %v3645 = vld [vmem:[%s4 + $0x1c8] sm:$0xff]
    %v3646 = vld [vmem:[%s4 + $0x1d0] sm:$0xff]
    %v3647 = vld [vmem:[%s4 + $0x1d8] sm:$0xff]
    %v3648 = vld [vmem:[%s4 + $0x1e0] sm:$0xff]
    %v3649 = vld [vmem:[%s4 + $0x1e8] sm:$0xff]
    %v3650 = vld [vmem:[%s4 + $0x1f0] sm:$0xff]
    %v3651 = vld [vmem:[%s4 + $0x1f8] sm:$0xff]
    %v3652 = vld [vmem:[%s5] sm:$0xff]
    %v3653 = vld [vmem:[%s5 + $0x8] sm:$0xff]
    %v3654 = vld [vmem:[%s5 + $0x10] sm:$0xff]
    %v3655 = vld [vmem:[%s5 + $0x18] sm:$0xff]
    %v3720 = vunpack.c.l.b16 %v3588
    %v3721 = vunpack.c.h.b16 %v3588
    %v3722 = vunpack.c.l.b16 %v3589
    %v3723 = vunpack.c.h.b16 %v3589
    %v3724 = vunpack.c.l.b16 %v3590
    %v3725 = vunpack.c.h.b16 %v3590
    %v3726 = vunpack.c.l.b16 %v3591
    %v3727 = vunpack.c.h.b16 %v3591
    %v3728 = vunpack.c.l.b16 %v3592
    %v3729 = vunpack.c.h.b16 %v3592
    %v3730 = vunpack.c.l.b16 %v3593
    %v3731 = vunpack.c.h.b16 %v3593
    %v3732 = vunpack.c.l.b16 %v3594
    %v3733 = vunpack.c.h.b16 %v3594
    %v3734 = vunpack.c.l.b16 %v3595
    %v3735 = vunpack.c.h.b16 %v3595
    %v3736 = vunpack.c.l.b16 %v3596
    %v3737 = vunpack.c.h.b16 %v3596
    %v3738 = vunpack.c.l.b16 %v3597
    %v3739 = vunpack.c.h.b16 %v3597
    %v3740 = vunpack.c.l.b16 %v3598
    %v3741 = vunpack.c.h.b16 %v3598
    %v3742 = vunpack.c.l.b16 %v3599
    %v3743 = vunpack.c.h.b16 %v3599
    %v3744 = vunpack.c.l.b16 %v3600
    %v3745 = vunpack.c.h.b16 %v3600
    %v3746 = vunpack.c.l.b16 %v3601
    %v3747 = vunpack.c.h.b16 %v3601
    %v3748 = vunpack.c.l.b16 %v3602
    %v3749 = vunpack.c.h.b16 %v3602
    %v3750 = vunpack.c.l.b16 %v3603
    %v3751 = vunpack.c.h.b16 %v3603
    %v3752 = vunpack.c.l.b16 %v3604
    %v3753 = vunpack.c.h.b16 %v3604
    %v3754 = vunpack.c.l.b16 %v3605
    %v3755 = vunpack.c.h.b16 %v3605
    %v3756 = vunpack.c.l.b16 %v3606
    %v3757 = vunpack.c.h.b16 %v3606
    %v3758 = vunpack.c.l.b16 %v3607
    %v3759 = vunpack.c.h.b16 %v3607
    %v3760 = vunpack.c.l.b16 %v3608
    %v3761 = vunpack.c.h.b16 %v3608
    %v3762 = vunpack.c.l.b16 %v3609
    %v3763 = vunpack.c.h.b16 %v3609
    %v3764 = vunpack.c.l.b16 %v3610
    %v3765 = vunpack.c.h.b16 %v3610
    %v3766 = vunpack.c.l.b16 %v3611
    %v3767 = vunpack.c.h.b16 %v3611
    %v3768 = vunpack.c.l.b16 %v3612
    %v3769 = vunpack.c.h.b16 %v3612
    %v3770 = vunpack.c.l.b16 %v3613
    %v3771 = vunpack.c.h.b16 %v3613
    %v3772 = vunpack.c.l.b16 %v3614
    %v3773 = vunpack.c.h.b16 %v3614
    %v3774 = vunpack.c.l.b16 %v3615
    %v3775 = vunpack.c.h.b16 %v3615
    %v3776 = vunpack.c.l.b16 %v3616
    %v3777 = vunpack.c.h.b16 %v3616
    %v3778 = vunpack.c.l.b16 %v3617
    %v3779 = vunpack.c.h.b16 %v3617
    %v3780 = vunpack.c.l.b16 %v3618
    %v3781 = vunpack.c.h.b16 %v3618
    %v3782 = vunpack.c.l.b16 %v3619
    %v3783 = vunpack.c.h.b16 %v3619
    %v3784 = vunpack.c.l.b16 %v3620
    %v3785 = vunpack.c.h.b16 %v3620
    %v3786 = vunpack.c.l.b16 %v3621
    %v3787 = vunpack.c.h.b16 %v3621
    %v3788 = vunpack.c.l.b16 %v3622
    %v3789 = vunpack.c.h.b16 %v3622
    %v3790 = vunpack.c.l.b16 %v3623
    %v3791 = vunpack.c.h.b16 %v3623
    %v3792 = vunpack.c.l.b16 %v3624
    %v3793 = vunpack.c.h.b16 %v3624
    %v3794 = vunpack.c.l.b16 %v3625
    %v3795 = vunpack.c.h.b16 %v3625
    %v3796 = vunpack.c.l.b16 %v3626
    %v3797 = vunpack.c.h.b16 %v3626
    %v3798 = vunpack.c.l.b16 %v3627
    %v3799 = vunpack.c.h.b16 %v3627
    %v3800 = vunpack.c.l.b16 %v3628
    %v3801 = vunpack.c.h.b16 %v3628
    %v3802 = vunpack.c.l.b16 %v3629
    %v3803 = vunpack.c.h.b16 %v3629
    %v3804 = vunpack.c.l.b16 %v3630
    %v3805 = vunpack.c.h.b16 %v3630
    %v3806 = vunpack.c.l.b16 %v3631
    %v3807 = vunpack.c.h.b16 %v3631
    %v3808 = vunpack.c.l.b16 %v3632
    %v3809 = vunpack.c.h.b16 %v3632
    %v3810 = vunpack.c.l.b16 %v3633
    %v3811 = vunpack.c.h.b16 %v3633
    %v3812 = vunpack.c.l.b16 %v3634
    %v3813 = vunpack.c.h.b16 %v3634
    %v3814 = vunpack.c.l.b16 %v3635
    %v3815 = vunpack.c.h.b16 %v3635
    %v3816 = vunpack.c.l.b16 %v3636
    %v3817 = vunpack.c.h.b16 %v3636
    %v3818 = vunpack.c.l.b16 %v3637
    %v3819 = vunpack.c.h.b16 %v3637
    %v3820 = vunpack.c.l.b16 %v3638
    %v3821 = vunpack.c.h.b16 %v3638
    %v3822 = vunpack.c.l.b16 %v3639
    %v3823 = vunpack.c.h.b16 %v3639
    %v3824 = vunpack.c.l.b16 %v3640
    %v3825 = vunpack.c.h.b16 %v3640
    %v3826 = vunpack.c.l.b16 %v3641
    %v3827 = vunpack.c.h.b16 %v3641
    %v3828 = vunpack.c.l.b16 %v3642
    %v3829 = vunpack.c.h.b16 %v3642
    %v3830 = vunpack.c.l.b16 %v3643
    %v3831 = vunpack.c.h.b16 %v3643
    %v3832 = vunpack.c.l.b16 %v3644
    %v3833 = vunpack.c.h.b16 %v3644
    %v3834 = vunpack.c.l.b16 %v3645
    %v3835 = vunpack.c.h.b16 %v3645
    %v3836 = vunpack.c.l.b16 %v3646
    %v3837 = vunpack.c.h.b16 %v3646
    %v3838 = vunpack.c.l.b16 %v3647
    %v3839 = vunpack.c.h.b16 %v3647
    %v3840 = vunpack.c.l.b16 %v3648
    %v3841 = vunpack.c.h.b16 %v3648
    %v3842 = vunpack.c.l.b16 %v3649
    %v3843 = vunpack.c.h.b16 %v3649
    %v3844 = vunpack.c.l.b16 %v3650
    %v3845 = vunpack.c.h.b16 %v3650
    %v3846 = vunpack.c.l.b16 %v3651
    %v3847 = vunpack.c.h.b16 %v3651
    %v3848 = vpack.c.b16 %v3724, %v3720
    %v3849 = vpack.c.b16 %v3725, %v3721
    %v3850 = vpack.c.b16 %v3726, %v3722
    %v3851 = vpack.c.b16 %v3727, %v3723
    %v3852 = vpack.c.b16 %v3732, %v3728
    %v3853 = vpack.c.b16 %v3733, %v3729
    %v3854 = vpack.c.b16 %v3734, %v3730
    %v3855 = vpack.c.b16 %v3735, %v3731
    %v3856 = vpack.c.b16 %v3740, %v3736
    %v3857 = vpack.c.b16 %v3741, %v3737
    %v3858 = vpack.c.b16 %v3742, %v3738
    %v3859 = vpack.c.b16 %v3743, %v3739
    %v3860 = vpack.c.b16 %v3748, %v3744
    %v3861 = vpack.c.b16 %v3749, %v3745
    %v3862 = vpack.c.b16 %v3750, %v3746
    %v3863 = vpack.c.b16 %v3751, %v3747
    %v3864 = vpack.c.b16 %v3756, %v3752
    %v3865 = vpack.c.b16 %v3757, %v3753
    %v3866 = vpack.c.b16 %v3758, %v3754
    %v3867 = vpack.c.b16 %v3759, %v3755
    %v3868 = vpack.c.b16 %v3764, %v3760
    %v3869 = vpack.c.b16 %v3765, %v3761
    %v3870 = vpack.c.b16 %v3766, %v3762
    %v3871 = vpack.c.b16 %v3767, %v3763
    %v3872 = vpack.c.b16 %v3772, %v3768
    %v3873 = vpack.c.b16 %v3773, %v3769
    %v3874 = vpack.c.b16 %v3774, %v3770
    %v3875 = vpack.c.b16 %v3775, %v3771
    %v3876 = vpack.c.b16 %v3780, %v3776
    %v3877 = vpack.c.b16 %v3781, %v3777
    %v3878 = vpack.c.b16 %v3782, %v3778
    %v3879 = vpack.c.b16 %v3783, %v3779
    %v3880 = vpack.c.b16 %v3788, %v3784
    %v3881 = vpack.c.b16 %v3789, %v3785
    %v3882 = vpack.c.b16 %v3790, %v3786
    %v3883 = vpack.c.b16 %v3791, %v3787
    %v3884 = vpack.c.b16 %v3796, %v3792
    %v3885 = vpack.c.b16 %v3797, %v3793
    %v3886 = vpack.c.b16 %v3798, %v3794
    %v3887 = vpack.c.b16 %v3799, %v3795
    %v3888 = vpack.c.b16 %v3804, %v3800
    %v3889 = vpack.c.b16 %v3805, %v3801
    %v3890 = vpack.c.b16 %v3806, %v3802
    %v3891 = vpack.c.b16 %v3807, %v3803
    %v3892 = vpack.c.b16 %v3812, %v3808
    %v3893 = vpack.c.b16 %v3813, %v3809
    %v3894 = vpack.c.b16 %v3814, %v3810
    %v3895 = vpack.c.b16 %v3815, %v3811
    %v3896 = vpack.c.b16 %v3820, %v3816
    %v3897 = vpack.c.b16 %v3821, %v3817
    %v3898 = vpack.c.b16 %v3822, %v3818
    %v3899 = vpack.c.b16 %v3823, %v3819
    %v3900 = vpack.c.b16 %v3828, %v3824
    %v3901 = vpack.c.b16 %v3829, %v3825
    %v3902 = vpack.c.b16 %v3830, %v3826
    %v3903 = vpack.c.b16 %v3831, %v3827
    %v3904 = vpack.c.b16 %v3836, %v3832
    %v3905 = vpack.c.b16 %v3837, %v3833
    %v3906 = vpack.c.b16 %v3838, %v3834
    %v3907 = vpack.c.b16 %v3839, %v3835
    %v3908 = vpack.c.b16 %v3844, %v3840
    %v3909 = vpack.c.b16 %v3845, %v3841
    %v3910 = vpack.c.b16 %v3846, %v3842
    %v3911 = vpack.c.b16 %v3847, %v3843
    %3976 = vmatprep.subr.bf16.mxu0 %v3849
    %3977 = vmatpush1.bf16.msra.mxu0 %v3848
    %3978 = vmatprep.subr.bf16.mxu0 %v3853
    %3979 = vmatpush1.bf16.msra.mxu0 %v3852
    %3980 = vmatprep.subr.bf16.mxu0 %v3857
    %3981 = vmatpush1.bf16.msra.mxu0 %v3856
    %3982 = vmatprep.subr.bf16.mxu0 %v3861
    %3983 = vmatpush1.bf16.msra.mxu0 %v3860
    %3984 = vmatprep.subr.bf16.mxu0 %v3865
    %3985 = vmatpush1.bf16.msra.mxu0 %v3864
    %3986 = vmatprep.subr.bf16.mxu0 %v3869
    %3987 = vmatpush1.bf16.msra.mxu0 %v3868
    %3988 = vmatprep.subr.bf16.mxu0 %v3873
    %3989 = vmatpush1.bf16.msra.mxu0 %v3872
    %3990 = vmatprep.subr.bf16.mxu0 %v3877
    %3991 = vmatpush1.bf16.msra.mxu0 %v3876
    %3992 = vmatprep.subr.bf16.mxu0 %v3881
    %3993 = vmatpush1.bf16.msra.mxu0 %v3880
    %3994 = vmatprep.subr.bf16.mxu0 %v3885
    %3995 = vmatpush1.bf16.msra.mxu0 %v3884
    %3996 = vmatprep.subr.bf16.mxu0 %v3889
    %3997 = vmatpush1.bf16.msra.mxu0 %v3888
    %3998 = vmatprep.subr.bf16.mxu0 %v3893
    %3999 = vmatpush1.bf16.msra.mxu0 %v3892
    %4000 = vmatprep.subr.bf16.mxu0 %v3897
    %4001 = vmatpush1.bf16.msra.mxu0 %v3896
    %4002 = vmatprep.subr.bf16.mxu0 %v3901
    %4003 = vmatpush1.bf16.msra.mxu0 %v3900
    %4004 = vmatprep.subr.bf16.mxu0 %v3905
    %4005 = vmatpush1.bf16.msra.mxu0 %v3904
    %4006 = vmatprep.subr.bf16.mxu0 %v3909
    %4007 = vmatpush1.bf16.msra.mxu0 %v3908
    %4008 = vmatprep.mubr.bf16.mxu0 %v3587
    %4009 = vmatmul.mubr.bf16.gmra.mrb[0].mxu0 %v3586
    %v4010 = vpop.f32.mrb[0].mxu0
    %v4011 = vadd.f32 %v3652, %v4010
    %v4012 = vpop.f32.mrb[0].mxu0
    %v4013 = vadd.f32 %v3653, %v4012
    %v4014 = vpop.f32.mrb[0].mxu0
    %v4015 = vpop.f32.mrb[0].mxu0
    %4016 = vdwg.mxu0
    %4017 = vmatprep.subr.bf16.mxu0 %v3851
    %4018 = vmatpush1.bf16.msra.mxu0 %v3850
    %4019 = vmatprep.subr.bf16.mxu0 %v3855
    %4020 = vmatpush1.bf16.msra.mxu0 %v3854
    %4021 = vmatprep.subr.bf16.mxu0 %v3859
    %4022 = vmatpush1.bf16.msra.mxu0 %v3858
    %4023 = vmatprep.subr.bf16.mxu0 %v3863
    %4024 = vmatpush1.bf16.msra.mxu0 %v3862
    %4025 = vmatprep.subr.bf16.mxu0 %v3867
    %4026 = vmatpush1.bf16.msra.mxu0 %v3866
    %4027 = vmatprep.subr.bf16.mxu0 %v3871
    %4028 = vmatpush1.bf16.msra.mxu0 %v3870
    %4029 = vmatprep.subr.bf16.mxu0 %v3875
    %4030 = vmatpush1.bf16.msra.mxu0 %v3874
    %4031 = vmatprep.subr.bf16.mxu0 %v3879
    %4032 = vmatpush1.bf16.msra.mxu0 %v3878
    %4033 = vmatprep.subr.bf16.mxu0 %v3883
    %4034 = vmatpush1.bf16.msra.mxu0 %v3882
    %4035 = vmatprep.subr.bf16.mxu0 %v3887
    %4036 = vmatpush1.bf16.msra.mxu0 %v3886
    %4037 = vmatprep.subr.bf16.mxu0 %v3891
    %4038 = vmatpush1.bf16.msra.mxu0 %v3890
    %4039 = vmatprep.subr.bf16.mxu0 %v3895
    %4040 = vmatpush1.bf16.msra.mxu0 %v3894
    %4041 = vmatprep.subr.bf16.mxu0 %v3899
    %4042 = vmatpush1.bf16.msra.mxu0 %v3898
    %4043 = vmatprep.subr.bf16.mxu0 %v3903
    %4044 = vmatpush1.bf16.msra.mxu0 %v3902
    %4045 = vmatprep.subr.bf16.mxu0 %v3907
    %4046 = vmatpush1.bf16.msra.mxu0 %v3906
    %4047 = vmatprep.subr.bf16.mxu0 %v3911
    %4048 = vmatpush1.bf16.msra.mxu0 %v3910
    %4049 = vmatprep.mubr.bf16.mxu0 %v3587
    %4050 = vmatmul.mubr.bf16.gmra.mrb[0].mxu0 %v3586
    %v4051 = vpop.f32.mrb[0].mxu0
    %v4052 = vadd.f32 %v3654, %v4051
    %v4053 = vpop.f32.mrb[0].mxu0
    %v4054 = vadd.f32 %v3655, %v4053
    %v4055 = vpop.f32.mrb[0].mxu0
    %v4056 = vpop.f32.mrb[0].mxu0
    %4057 = vdwg.mxu0
    %v4058 = vxor.u32 %v4011, 2147483648
    %v4059 = vmul.f32 %v4058, 1.442695
    %v4060 = vpow.pop %v4059
    %v4061 = vadd.f32 %v4060, 1.0
    %v4062 = vrcp.pop %v4061
    %v4063 = vmul.f32 1.0, %v4062
    %v4064 = vxor.u32 %v4013, 2147483648
    %v4065 = vmul.f32 %v4064, 1.442695
    %v4066 = vpow.pop %v4065
    %v4067 = vadd.f32 %v4066, 1.0
    %v4068 = vrcp.pop %v4067
    %v4069 = vmul.f32 1.0, %v4068
    %v4070 = vtanh.pop %v4052
    %v4071 = vxor.u32 %v4054, 2147483648
    %v4072 = vmul.f32 %v4071, 1.442695
    %v4073 = vpow.pop %v4072
    %v4074 = vadd.f32 %v4073, 1.0
    %v4075 = vrcp.pop %v4074
    %v4076 = vmul.f32 1.0, %v4075
    %v4077 = vld [vmem:[#allocation3] sm:$0xff]
    %v4078 = vmul.f32 %v4069, %v4077
    %v4079 = vmul.f32 %v4063, %v4070
    %v4080 = vadd.f32 %v4078, %v4079
    %v4081 = vtanh.pop %v4080
    %v4082 = vmul.f32 %v4076, %v4081
    %4083 = vst [vmem:[#allocation2 + $0x8] sm:$0xff] %v4082
    %4084 = vst [vmem:[#allocation3] sm:$0xff] %v4080
    %v4085 = vld [vmem:[%s2] sm:$0xff]
    %4086 = vst [vmem:[#allocation2] sm:$0xff] %v4085
    %v4087 = vld [vmem:[#allocation2] sm:$0xff]
    %v4088 = vld [vmem:[#allocation2 + $0x8] sm:$0xff]
    %v4089 = vpack.c.bf16 %v4087, %v4087
    %v4090 = vpack.c.bf16 %v4088, %v4088
    %v4091 = vld [vmem:[%s6] sm:$0xff]
    %v4092 = vld [vmem:[%s6 + $0x8] sm:$0xff]
    %v4093 = vld [vmem:[%s6 + $0x10] sm:$0xff]
    %v4094 = vld [vmem:[%s6 + $0x18] sm:$0xff]
    %v4095 = vld [vmem:[%s6 + $0x20] sm:$0xff]
    %v4096 = vld [vmem:[%s6 + $0x28] sm:$0xff]
    %v4097 = vld [vmem:[%s6 + $0x30] sm:$0xff]
    %v4098 = vld [vmem:[%s6 + $0x38] sm:$0xff]
    %v4099 = vld [vmem:[%s6 + $0x40] sm:$0xff]
    %v4100 = vld [vmem:[%s6 + $0x48] sm:$0xff]
    %v4101 = vld [vmem:[%s6 + $0x50] sm:$0xff]
    %v4102 = vld [vmem:[%s6 + $0x58] sm:$0xff]
    %v4103 = vld [vmem:[%s6 + $0x60] sm:$0xff]
    %v4104 = vld [vmem:[%s6 + $0x68] sm:$0xff]
    %v4105 = vld [vmem:[%s6 + $0x70] sm:$0xff]
    %v4106 = vld [vmem:[%s6 + $0x78] sm:$0xff]
    %v4107 = vld [vmem:[%s6 + $0x80] sm:$0xff]
    %v4108 = vld [vmem:[%s6 + $0x88] sm:$0xff]
    %v4109 = vld [vmem:[%s6 + $0x90] sm:$0xff]
    %v4110 = vld [vmem:[%s6 + $0x98] sm:$0xff]
    %v4111 = vld [vmem:[%s6 + $0xa0] sm:$0xff]
    %v4112 = vld [vmem:[%s6 + $0xa8] sm:$0xff]
    %v4113 = vld [vmem:[%s6 + $0xb0] sm:$0xff]
    %v4114 = vld [vmem:[%s6 + $0xb8] sm:$0xff]
    %v4115 = vld [vmem:[%s6 + $0xc0] sm:$0xff]
    %v4116 = vld [vmem:[%s6 + $0xc8] sm:$0xff]
    %v4117 = vld [vmem:[%s6 + $0xd0] sm:$0xff]
    %v4118 = vld [vmem:[%s6 + $0xd8] sm:$0xff]
    %v4119 = vld [vmem:[%s6 + $0xe0] sm:$0xff]
    %v4120 = vld [vmem:[%s6 + $0xe8] sm:$0xff]
    %v4121 = vld [vmem:[%s6 + $0xf0] sm:$0xff]
    %v4122 = vld [vmem:[%s6 + $0xf8] sm:$0xff]
    %v4123 = vld [vmem:[%s6 + $0x100] sm:$0xff]
    %v4124 = vld [vmem:[%s6 + $0x108] sm:$0xff]
    %v4125 = vld [vmem:[%s6 + $0x110] sm:$0xff]
    %v4126 = vld [vmem:[%s6 + $0x118] sm:$0xff]
    %v4127 = vld [vmem:[%s6 + $0x120] sm:$0xff]
    %v4128 = vld [vmem:[%s6 + $0x128] sm:$0xff]
    %v4129 = vld [vmem:[%s6 + $0x130] sm:$0xff]
    %v4130 = vld [vmem:[%s6 + $0x138] sm:$0xff]
    %v4131 = vld [vmem:[%s6 + $0x140] sm:$0xff]
    %v4132 = vld [vmem:[%s6 + $0x148] sm:$0xff]
    %v4133 = vld [vmem:[%s6 + $0x150] sm:$0xff]
    %v4134 = vld [vmem:[%s6 + $0x158] sm:$0xff]
    %v4135 = vld [vmem:[%s6 + $0x160] sm:$0xff]
    %v4136 = vld [vmem:[%s6 + $0x168] sm:$0xff]
    %v4137 = vld [vmem:[%s6 + $0x170] sm:$0xff]
    %v4138 = vld [vmem:[%s6 + $0x178] sm:$0xff]
    %v4139 = vld [vmem:[%s6 + $0x180] sm:$0xff]
    %v4140 = vld [vmem:[%s6 + $0x188] sm:$0xff]
    %v4141 = vld [vmem:[%s6 + $0x190] sm:$0xff]
    %v4142 = vld [vmem:[%s6 + $0x198] sm:$0xff]
    %v4143 = vld [vmem:[%s6 + $0x1a0] sm:$0xff]
    %v4144 = vld [vmem:[%s6 + $0x1a8] sm:$0xff]
    %v4145 = vld [vmem:[%s6 + $0x1b0] sm:$0xff]
    %v4146 = vld [vmem:[%s6 + $0x1b8] sm:$0xff]
    %v4147 = vld [vmem:[%s6 + $0x1c0] sm:$0xff]
    %v4148 = vld [vmem:[%s6 + $0x1c8] sm:$0xff]
    %v4149 = vld [vmem:[%s6 + $0x1d0] sm:$0xff]
    %v4150 = vld [vmem:[%s6 + $0x1d8] sm:$0xff]
    %v4151 = vld [vmem:[%s6 + $0x1e0] sm:$0xff]
    %v4152 = vld [vmem:[%s6 + $0x1e8] sm:$0xff]
    %v4153 = vld [vmem:[%s6 + $0x1f0] sm:$0xff]
    %v4154 = vld [vmem:[%s6 + $0x1f8] sm:$0xff]
    %v4155 = vld [vmem:[%s7] sm:$0xff]
    %v4156 = vld [vmem:[%s7 + $0x8] sm:$0xff]
    %v4157 = vld [vmem:[%s7 + $0x10] sm:$0xff]
    %v4158 = vld [vmem:[%s7 + $0x18] sm:$0xff]
    %v4223 = vunpack.c.l.b16 %v4091
    %v4224 = vunpack.c.h.b16 %v4091
    %v4225 = vunpack.c.l.b16 %v4092
    %v4226 = vunpack.c.h.b16 %v4092
    %v4227 = vunpack.c.l.b16 %v4093
    %v4228 = vunpack.c.h.b16 %v4093
    %v4229 = vunpack.c.l.b16 %v4094
    %v4230 = vunpack.c.h.b16 %v4094
    %v4231 = vunpack.c.l.b16 %v4095
    %v4232 = vunpack.c.h.b16 %v4095
    %v4233 = vunpack.c.l.b16 %v4096
    %v4234 = vunpack.c.h.b16 %v4096
    %v4235 = vunpack.c.l.b16 %v4097
    %v4236 = vunpack.c.h.b16 %v4097
    %v4237 = vunpack.c.l.b16 %v4098
    %v4238 = vunpack.c.h.b16 %v4098
    %v4239 = vunpack.c.l.b16 %v4099
    %v4240 = vunpack.c.h.b16 %v4099
    %v4241 = vunpack.c.l.b16 %v4100
    %v4242 = vunpack.c.h.b16 %v4100
    %v4243 = vunpack.c.l.b16 %v4101
    %v4244 = vunpack.c.h.b16 %v4101
    %v4245 = vunpack.c.l.b16 %v4102
    %v4246 = vunpack.c.h.b16 %v4102
    %v4247 = vunpack.c.l.b16 %v4103
    %v4248 = vunpack.c.h.b16 %v4103
    %v4249 = vunpack.c.l.b16 %v4104
    %v4250 = vunpack.c.h.b16 %v4104
    %v4251 = vunpack.c.l.b16 %v4105
    %v4252 = vunpack.c.h.b16 %v4105
    %v4253 = vunpack.c.l.b16 %v4106
    %v4254 = vunpack.c.h.b16 %v4106
    %v4255 = vunpack.c.l.b16 %v4107
    %v4256 = vunpack.c.h.b16 %v4107
    %v4257 = vunpack.c.l.b16 %v4108
    %v4258 = vunpack.c.h.b16 %v4108
    %v4259 = vunpack.c.l.b16 %v4109
    %v4260 = vunpack.c.h.b16 %v4109
    %v4261 = vunpack.c.l.b16 %v4110
    %v4262 = vunpack.c.h.b16 %v4110
    %v4263 = vunpack.c.l.b16 %v4111
    %v4264 = vunpack.c.h.b16 %v4111
    %v4265 = vunpack.c.l.b16 %v4112
    %v4266 = vunpack.c.h.b16 %v4112
    %v4267 = vunpack.c.l.b16 %v4113
    %v4268 = vunpack.c.h.b16 %v4113
    %v4269 = vunpack.c.l.b16 %v4114
    %v4270 = vunpack.c.h.b16 %v4114
    %v4271 = vunpack.c.l.b16 %v4115
    %v4272 = vunpack.c.h.b16 %v4115
    %v4273 = vunpack.c.l.b16 %v4116
    %v4274 = vunpack.c.h.b16 %v4116
    %v4275 = vunpack.c.l.b16 %v4117
    %v4276 = vunpack.c.h.b16 %v4117
    %v4277 = vunpack.c.l.b16 %v4118
    %v4278 = vunpack.c.h.b16 %v4118
    %v4279 = vunpack.c.l.b16 %v4119
    %v4280 = vunpack.c.h.b16 %v4119
    %v4281 = vunpack.c.l.b16 %v4120
    %v4282 = vunpack.c.h.b16 %v4120
    %v4283 = vunpack.c.l.b16 %v4121
    %v4284 = vunpack.c.h.b16 %v4121
    %v4285 = vunpack.c.l.b16 %v4122
    %v4286 = vunpack.c.h.b16 %v4122
    %v4287 = vunpack.c.l.b16 %v4123
    %v4288 = vunpack.c.h.b16 %v4123
    %v4289 = vunpack.c.l.b16 %v4124
    %v4290 = vunpack.c.h.b16 %v4124
    %v4291 = vunpack.c.l.b16 %v4125
    %v4292 = vunpack.c.h.b16 %v4125
    %v4293 = vunpack.c.l.b16 %v4126
    %v4294 = vunpack.c.h.b16 %v4126
    %v4295 = vunpack.c.l.b16 %v4127
    %v4296 = vunpack.c.h.b16 %v4127
    %v4297 = vunpack.c.l.b16 %v4128
    %v4298 = vunpack.c.h.b16 %v4128
    %v4299 = vunpack.c.l.b16 %v4129
    %v4300 = vunpack.c.h.b16 %v4129
    %v4301 = vunpack.c.l.b16 %v4130
    %v4302 = vunpack.c.h.b16 %v4130
    %v4303 = vunpack.c.l.b16 %v4131
    %v4304 = vunpack.c.h.b16 %v4131
    %v4305 = vunpack.c.l.b16 %v4132
    %v4306 = vunpack.c.h.b16 %v4132
    %v4307 = vunpack.c.l.b16 %v4133
    %v4308 = vunpack.c.h.b16 %v4133
    %v4309 = vunpack.c.l.b16 %v4134
    %v4310 = vunpack.c.h.b16 %v4134
    %v4311 = vunpack.c.l.b16 %v4135
    %v4312 = vunpack.c.h.b16 %v4135
    %v4313 = vunpack.c.l.b16 %v4136
    %v4314 = vunpack.c.h.b16 %v4136
    %v4315 = vunpack.c.l.b16 %v4137
    %v4316 = vunpack.c.h.b16 %v4137
    %v4317 = vunpack.c.l.b16 %v4138
    %v4318 = vunpack.c.h.b16 %v4138
    %v4319 = vunpack.c.l.b16 %v4139
    %v4320 = vunpack.c.h.b16 %v4139
    %v4321 = vunpack.c.l.b16 %v4140
    %v4322 = vunpack.c.h.b16 %v4140
    %v4323 = vunpack.c.l.b16 %v4141
    %v4324 = vunpack.c.h.b16 %v4141
    %v4325 = vunpack.c.l.b16 %v4142
    %v4326 = vunpack.c.h.b16 %v4142
    %v4327 = vunpack.c.l.b16 %v4143
    %v4328 = vunpack.c.h.b16 %v4143
    %v4329 = vunpack.c.l.b16 %v4144
    %v4330 = vunpack.c.h.b16 %v4144
    %v4331 = vunpack.c.l.b16 %v4145
    %v4332 = vunpack.c.h.b16 %v4145
    %v4333 = vunpack.c.l.b16 %v4146
    %v4334 = vunpack.c.h.b16 %v4146
    %v4335 = vunpack.c.l.b16 %v4147
    %v4336 = vunpack.c.h.b16 %v4147
    %v4337 = vunpack.c.l.b16 %v4148
    %v4338 = vunpack.c.h.b16 %v4148
    %v4339 = vunpack.c.l.b16 %v4149
    %v4340 = vunpack.c.h.b16 %v4149
    %v4341 = vunpack.c.l.b16 %v4150
    %v4342 = vunpack.c.h.b16 %v4150
    %v4343 = vunpack.c.l.b16 %v4151
    %v4344 = vunpack.c.h.b16 %v4151
    %v4345 = vunpack.c.l.b16 %v4152
    %v4346 = vunpack.c.h.b16 %v4152
    %v4347 = vunpack.c.l.b16 %v4153
    %v4348 = vunpack.c.h.b16 %v4153
    %v4349 = vunpack.c.l.b16 %v4154
    %v4350 = vunpack.c.h.b16 %v4154
    %v4351 = vpack.c.b16 %v4227, %v4223
    %v4352 = vpack.c.b16 %v4228, %v4224
    %v4353 = vpack.c.b16 %v4229, %v4225
    %v4354 = vpack.c.b16 %v4230, %v4226
    %v4355 = vpack.c.b16 %v4235, %v4231
    %v4356 = vpack.c.b16 %v4236, %v4232
    %v4357 = vpack.c.b16 %v4237, %v4233
    %v4358 = vpack.c.b16 %v4238, %v4234
    %v4359 = vpack.c.b16 %v4243, %v4239
    %v4360 = vpack.c.b16 %v4244, %v4240
    %v4361 = vpack.c.b16 %v4245, %v4241
    %v4362 = vpack.c.b16 %v4246, %v4242
    %v4363 = vpack.c.b16 %v4251, %v4247
    %v4364 = vpack.c.b16 %v4252, %v4248
    %v4365 = vpack.c.b16 %v4253, %v4249
    %v4366 = vpack.c.b16 %v4254, %v4250
    %v4367 = vpack.c.b16 %v4259, %v4255
    %v4368 = vpack.c.b16 %v4260, %v4256
    %v4369 = vpack.c.b16 %v4261, %v4257
    %v4370 = vpack.c.b16 %v4262, %v4258
    %v4371 = vpack.c.b16 %v4267, %v4263
    %v4372 = vpack.c.b16 %v4268, %v4264
    %v4373 = vpack.c.b16 %v4269, %v4265
    %v4374 = vpack.c.b16 %v4270, %v4266
    %v4375 = vpack.c.b16 %v4275, %v4271
    %v4376 = vpack.c.b16 %v4276, %v4272
    %v4377 = vpack.c.b16 %v4277, %v4273
    %v4378 = vpack.c.b16 %v4278, %v4274
    %v4379 = vpack.c.b16 %v4283, %v4279
    %v4380 = vpack.c.b16 %v4284, %v4280
    %v4381 = vpack.c.b16 %v4285, %v4281
    %v4382 = vpack.c.b16 %v4286, %v4282
    %v4383 = vpack.c.b16 %v4291, %v4287
    %v4384 = vpack.c.b16 %v4292, %v4288
    %v4385 = vpack.c.b16 %v4293, %v4289
    %v4386 = vpack.c.b16 %v4294, %v4290
    %v4387 = vpack.c.b16 %v4299, %v4295
    %v4388 = vpack.c.b16 %v4300, %v4296
    %v4389 = vpack.c.b16 %v4301, %v4297
    %v4390 = vpack.c.b16 %v4302, %v4298
    %v4391 = vpack.c.b16 %v4307, %v4303
    %v4392 = vpack.c.b16 %v4308, %v4304
    %v4393 = vpack.c.b16 %v4309, %v4305
    %v4394 = vpack.c.b16 %v4310, %v4306
    %v4395 = vpack.c.b16 %v4315, %v4311
    %v4396 = vpack.c.b16 %v4316, %v4312
    %v4397 = vpack.c.b16 %v4317, %v4313
    %v4398 = vpack.c.b16 %v4318, %v4314
    %v4399 = vpack.c.b16 %v4323, %v4319
    %v4400 = vpack.c.b16 %v4324, %v4320
    %v4401 = vpack.c.b16 %v4325, %v4321
    %v4402 = vpack.c.b16 %v4326, %v4322
    %v4403 = vpack.c.b16 %v4331, %v4327
    %v4404 = vpack.c.b16 %v4332, %v4328
    %v4405 = vpack.c.b16 %v4333, %v4329
    %v4406 = vpack.c.b16 %v4334, %v4330
    %v4407 = vpack.c.b16 %v4339, %v4335
    %v4408 = vpack.c.b16 %v4340, %v4336
    %v4409 = vpack.c.b16 %v4341, %v4337
    %v4410 = vpack.c.b16 %v4342, %v4338
    %v4411 = vpack.c.b16 %v4347, %v4343
    %v4412 = vpack.c.b16 %v4348, %v4344
    %v4413 = vpack.c.b16 %v4349, %v4345
    %v4414 = vpack.c.b16 %v4350, %v4346
    %4479 = vmatprep.subr.bf16.mxu0 %v4352
    %4480 = vmatpush1.bf16.msra.mxu0 %v4351
    %4481 = vmatprep.subr.bf16.mxu0 %v4356
    %4482 = vmatpush1.bf16.msra.mxu0 %v4355
    %4483 = vmatprep.subr.bf16.mxu0 %v4360
    %4484 = vmatpush1.bf16.msra.mxu0 %v4359
    %4485 = vmatprep.subr.bf16.mxu0 %v4364
    %4486 = vmatpush1.bf16.msra.mxu0 %v4363
    %4487 = vmatprep.subr.bf16.mxu0 %v4368
    %4488 = vmatpush1.bf16.msra.mxu0 %v4367
    %4489 = vmatprep.subr.bf16.mxu0 %v4372
    %4490 = vmatpush1.bf16.msra.mxu0 %v4371
    %4491 = vmatprep.subr.bf16.mxu0 %v4376
    %4492 = vmatpush1.bf16.msra.mxu0 %v4375
    %4493 = vmatprep.subr.bf16.mxu0 %v4380
    %4494 = vmatpush1.bf16.msra.mxu0 %v4379
    %4495 = vmatprep.subr.bf16.mxu0 %v4384
    %4496 = vmatpush1.bf16.msra.mxu0 %v4383
    %4497 = vmatprep.subr.bf16.mxu0 %v4388
    %4498 = vmatpush1.bf16.msra.mxu0 %v4387
    %4499 = vmatprep.subr.bf16.mxu0 %v4392
    %4500 = vmatpush1.bf16.msra.mxu0 %v4391
    %4501 = vmatprep.subr.bf16.mxu0 %v4396
    %4502 = vmatpush1.bf16.msra.mxu0 %v4395
    %4503 = vmatprep.subr.bf16.mxu0 %v4400
    %4504 = vmatpush1.bf16.msra.mxu0 %v4399
    %4505 = vmatprep.subr.bf16.mxu0 %v4404
    %4506 = vmatpush1.bf16.msra.mxu0 %v4403
    %4507 = vmatprep.subr.bf16.mxu0 %v4408
    %4508 = vmatpush1.bf16.msra.mxu0 %v4407
    %4509 = vmatprep.subr.bf16.mxu0 %v4412
    %4510 = vmatpush1.bf16.msra.mxu0 %v4411
    %4511 = vmatprep.mubr.bf16.mxu0 %v4090
    %4512 = vmatmul.mubr.bf16.gmra.mrb[0].mxu0 %v4089
    %v4513 = vpop.f32.mrb[0].mxu0
    %v4514 = vadd.f32 %v4155, %v4513
    %v4515 = vpop.f32.mrb[0].mxu0
    %v4516 = vadd.f32 %v4156, %v4515
    %v4517 = vpop.f32.mrb[0].mxu0
    %v4518 = vpop.f32.mrb[0].mxu0
    %4519 = vdwg.mxu0
    %4520 = vmatprep.subr.bf16.mxu0 %v4354
    %4521 = vmatpush1.bf16.msra.mxu0 %v4353
    %4522 = vmatprep.subr.bf16.mxu0 %v4358
    %4523 = vmatpush1.bf16.msra.mxu0 %v4357
    %4524 = vmatprep.subr.bf16.mxu0 %v4362
    %4525 = vmatpush1.bf16.msra.mxu0 %v4361
    %4526 = vmatprep.subr.bf16.mxu0 %v4366
    %4527 = vmatpush1.bf16.msra.mxu0 %v4365
    %4528 = vmatprep.subr.bf16.mxu0 %v4370
    %4529 = vmatpush1.bf16.msra.mxu0 %v4369
    %4530 = vmatprep.subr.bf16.mxu0 %v4374
    %4531 = vmatpush1.bf16.msra.mxu0 %v4373
    %4532 = vmatprep.subr.bf16.mxu0 %v4378
    %4533 = vmatpush1.bf16.msra.mxu0 %v4377
    %4534 = vmatprep.subr.bf16.mxu0 %v4382
    %4535 = vmatpush1.bf16.msra.mxu0 %v4381
    %4536 = vmatprep.subr.bf16.mxu0 %v4386
    %4537 = vmatpush1.bf16.msra.mxu0 %v4385
    %4538 = vmatprep.subr.bf16.mxu0 %v4390
    %4539 = vmatpush1.bf16.msra.mxu0 %v4389
    %4540 = vmatprep.subr.bf16.mxu0 %v4394
    %4541 = vmatpush1.bf16.msra.mxu0 %v4393
    %4542 = vmatprep.subr.bf16.mxu0 %v4398
    %4543 = vmatpush1.bf16.msra.mxu0 %v4397
    %4544 = vmatprep.subr.bf16.mxu0 %v4402
    %4545 = vmatpush1.bf16.msra.mxu0 %v4401
    %4546 = vmatprep.subr.bf16.mxu0 %v4406
    %4547 = vmatpush1.bf16.msra.mxu0 %v4405
    %4548 = vmatprep.subr.bf16.mxu0 %v4410
    %4549 = vmatpush1.bf16.msra.mxu0 %v4409
    %4550 = vmatprep.subr.bf16.mxu0 %v4414
    %4551 = vmatpush1.bf16.msra.mxu0 %v4413
    %4552 = vmatprep.mubr.bf16.mxu0 %v4090
    %4553 = vmatmul.mubr.bf16.gmra.mrb[0].mxu0 %v4089
    %v4554 = vpop.f32.mrb[0].mxu0
    %v4555 = vadd.f32 %v4157, %v4554
    %v4556 = vpop.f32.mrb[0].mxu0
    %v4557 = vadd.f32 %v4158, %v4556
    %v4558 = vpop.f32.mrb[0].mxu0
    %v4559 = vpop.f32.mrb[0].mxu0
    %4560 = vdwg.mxu0
    %v4561 = vxor.u32 %v4514, 2147483648
    %v4562 = vmul.f32 %v4561, 1.442695
    %v4563 = vpow.pop %v4562
    %v4564 = vadd.f32 %v4563, 1.0
    %v4565 = vrcp.pop %v4564
    %v4566 = vmul.f32 1.0, %v4565
    %v4567 = vxor.u32 %v4516, 2147483648
    %v4568 = vmul.f32 %v4567, 1.442695
    %v4569 = vpow.pop %v4568
    %v4570 = vadd.f32 %v4569, 1.0
    %v4571 = vrcp.pop %v4570
    %v4572 = vmul.f32 1.0, %v4571
    %v4573 = vtanh.pop %v4555
    %v4574 = vxor.u32 %v4557, 2147483648
    %v4575 = vmul.f32 %v4574, 1.442695
    %v4576 = vpow.pop %v4575
    %v4577 = vadd.f32 %v4576, 1.0
    %v4578 = vrcp.pop %v4577
    %v4579 = vmul.f32 1.0, %v4578
    %v4580 = vld [vmem:[#allocation3] sm:$0xff]
    %v4581 = vmul.f32 %v4572, %v4580
    %v4582 = vmul.f32 %v4566, %v4573
    %v4583 = vadd.f32 %v4581, %v4582
    %v4584 = vtanh.pop %v4583
    %v4585 = vmul.f32 %v4579, %v4584
    %4586 = vst [vmem:[#allocation2 + $0x8] sm:$0xff] %v4585
    %4587 = vst [vmem:[#allocation3] sm:$0xff] %v4583
    %v4588 = vpack.c.bf16 %v4585, %v4585
    %v4589 = vld [vmem:[%s8] sm:$0xf]
    %v4590 = vld [vmem:[%s8 + $0x4] sm:$0xf]
    %v4591 = vld [vmem:[%s8 + $0x8] sm:$0xf]
    %v4592 = vld [vmem:[%s8 + $0xc] sm:$0xf]
    %v4593 = vld [vmem:[%s8 + $0x10] sm:$0xf]
    %v4594 = vld [vmem:[%s8 + $0x14] sm:$0xf]
    %v4595 = vld [vmem:[%s8 + $0x18] sm:$0xf]
    %v4596 = vld [vmem:[%s8 + $0x1c] sm:$0xf]
    %v4597 = vld [vmem:[%s8 + $0x20] sm:$0xf]
    %v4598 = vld [vmem:[%s8 + $0x24] sm:$0xf]
    %v4599 = vld [vmem:[%s8 + $0x28] sm:$0xf]
    %v4600 = vld [vmem:[%s8 + $0x2c] sm:$0xf]
    %v4601 = vld [vmem:[%s8 + $0x30] sm:$0xf]
    %v4602 = vld [vmem:[%s8 + $0x34] sm:$0xf]
    %v4603 = vld [vmem:[%s8 + $0x38] sm:$0xf]
    %v4604 = vld [vmem:[%s8 + $0x3c] sm:$0xf]
    %v4605 = vld [vmem:[%s9] sm:$0xff]
    %v4622 = vunpack.c.l.b16 %v4589
    %v4623 = vunpack.c.l.b16 %v4590
    %v4624 = vunpack.c.l.b16 %v4591
    %v4625 = vunpack.c.l.b16 %v4592
    %v4626 = vunpack.c.l.b16 %v4593
    %v4627 = vunpack.c.l.b16 %v4594
    %v4628 = vunpack.c.l.b16 %v4595
    %v4629 = vunpack.c.l.b16 %v4596
    %v4630 = vunpack.c.l.b16 %v4597
    %v4631 = vunpack.c.l.b16 %v4598
    %v4632 = vunpack.c.l.b16 %v4599
    %v4633 = vunpack.c.l.b16 %v4600
    %v4634 = vunpack.c.l.b16 %v4601
    %v4635 = vunpack.c.l.b16 %v4602
    %v4636 = vunpack.c.l.b16 %v4603
    %v4637 = vunpack.c.l.b16 %v4604
    %v4638 = vpack.c.b16 %v4623, %v4622
    %v4639 = vpack.c.b16 %v4625, %v4624
    %v4640 = vpack.c.b16 %v4627, %v4626
    %v4641 = vpack.c.b16 %v4629, %v4628
    %v4642 = vpack.c.b16 %v4631, %v4630
    %v4643 = vpack.c.b16 %v4633, %v4632
    %v4644 = vpack.c.b16 %v4635, %v4634
    %v4645 = vpack.c.b16 %v4637, %v4636
    %4654 = vmatprep.subr.bf16.mxu0 0
    %4655 = vmatpush1.bf16.msra.mxu0 %v4638
    %4656 = vmatprep.subr.bf16.mxu0 0
    %4657 = vmatpush1.bf16.msra.mxu0 %v4639
    %4658 = vmatprep.subr.bf16.mxu0 0
    %4659 = vmatpush1.bf16.msra.mxu0 %v4640
    %4660 = vmatprep.subr.bf16.mxu0 0
    %4661 = vmatpush1.bf16.msra.mxu0 %v4641
    %4662 = vmatprep.subr.bf16.mxu0 0
    %4663 = vmatpush1.bf16.msra.mxu0 %v4642
    %4664 = vmatprep.subr.bf16.mxu0 0
    %4665 = vmatpush1.bf16.msra.mxu0 %v4643
    %4666 = vmatprep.subr.bf16.mxu0 0
    %4667 = vmatpush1.bf16.msra.mxu0 %v4644
    %4668 = vmatprep.subr.bf16.mxu0 0
    %4669 = vmatpush1.bf16.msra.mxu0 %v4645
    %4670 = vmatprep.subr.bf16.mxu0 0
    %4671 = vmatpush1.bf16.msra.mxu0 0
    %4672 = vmatprep.subr.bf16.mxu0 0
    %4673 = vmatpush1.bf16.msra.mxu0 0
    %4674 = vmatprep.subr.bf16.mxu0 0
    %4675 = vmatpush1.bf16.msra.mxu0 0
    %4676 = vmatprep.subr.bf16.mxu0 0
    %4677 = vmatpush1.bf16.msra.mxu0 0
    %4678 = vmatprep.subr.bf16.mxu0 0
    %4679 = vmatpush1.bf16.msra.mxu0 0
    %4680 = vmatprep.subr.bf16.mxu0 0
    %4681 = vmatpush1.bf16.msra.mxu0 0
    %4682 = vmatprep.subr.bf16.mxu0 0
    %4683 = vmatpush1.bf16.msra.mxu0 0
    %4684 = vmatprep.subr.bf16.mxu0 0
    %4685 = vmatpush1.bf16.msra.mxu0 0
    %4686 = vmatprep.mubr.bf16.mxu0 0
    %4687 = vmatmul.mubr.bf16.gmra.mrb[0].mxu0 %v4588
    %v4688 = vpop.f32.mrb[0].mxu0
    %v4689 = vadd.f32 %v4605, %v4688
    %v4690 = vpop.f32.mrb[0].mxu0
    %v4691 = vpop.f32.mrb[0].mxu0
    %v4692 = vpop.f32.mrb[0].mxu0
    %4693 = vdwg.mxu0
    %s4694 = scalar_lea.vmem [#allocation8], 8
    %4695 = vst [vmem:[%s4694] sm:$0xff] %v4689
    %s4696 = sld [smem:[#allocation5 + $0x1]]
    %p4697 = scmp.eq.s32.totalorder %s4696, 0
    // Predicated region
    $region46: #{seq2seq_forward.1} parent=1 // pred_check
      %p4698 = pneg %p4697
    $region47: #{seq2seq_forward.1} parent=1 // pred_check_branch
      %4700 = sbr.rel (%p4698) target = $region49
    $region48: #{seq2seq_forward.1} parent=1 // pred_region
      %v4701 = vlaneseq
      %v4702 = vand.u32 %v4701, 127
      %4703 = vmax.xlane.f32.xlu0 %v4689
      %v4704 = vpop.xlane.xlu0 %4703
      %vm4705 = vcmp.eq.f32.partialorder %v4689, %v4704
      %v4706 = vsel %vm4705, %v4702, 128
      %v4707 = vand.u32 %v4706, 65535
      %v4708 = vshra.s32 %v4706, 16
      %v4709 = vcvt.s32.f32 %v4707
      %v4710 = vcvt.s32.f32 %v4708
      %4711 = vmin.xlane.f32.xlu0 %v4710
      %v4712 = vpop.xlane.xlu0 %4711
      %vm4713 = vcmp.eq.f32.partialorder %v4710, %v4712
      %v4714 = vsel %vm4713, %v4709, inf
      %4715 = vmin.xlane.f32.xlu0 %v4714
      %v4716 = vpop.xlane.xlu0 %4715
      %v4717 = vcvt.f32.s32 %v4716
      %v4718 = vcvt.f32.s32 %v4712
      %v4719 = vshll.u32 %v4718, 16
      %v4720 = vadd.s32 %v4719, %v4717
      %vm4721 = vcmp.eq.s32.totalorder %v4702, %v4720
      %v4722 = vsel %vm4721, 1, 0
      %v4723 = vcvt.s32.f32 %v4722
      %v4724 = vpack.c.bf16 %v4723, %v4723
      %v4725 = vld [vmem:[%s3] sm:$0xf]
      %v4726 = vld [vmem:[%s3 + $0x4] sm:$0xf]
      %v4727 = vld [vmem:[%s3 + $0x8] sm:$0xf]
      %v4728 = vld [vmem:[%s3 + $0xc] sm:$0xf]
      %v4729 = vld [vmem:[%s3 + $0x10] sm:$0xf]
      %v4730 = vld [vmem:[%s3 + $0x14] sm:$0xf]
      %v4731 = vld [vmem:[%s3 + $0x18] sm:$0xf]
      %v4732 = vld [vmem:[%s3 + $0x1c] sm:$0xf]
      %v4733 = vld [vmem:[%s3 + $0x20] sm:$0xf]
      %v4734 = vld [vmem:[%s3 + $0x24] sm:$0xf]
      %v4735 = vld [vmem:[%s3 + $0x28] sm:$0xf]
      %v4736 = vld [vmem:[%s3 + $0x2c] sm:$0xf]
      %v4737 = vld [vmem:[%s3 + $0x30] sm:$0xf]
      %v4738 = vld [vmem:[%s3 + $0x34] sm:$0xf]
      %v4739 = vld [vmem:[%s3 + $0x38] sm:$0xf]
      %v4740 = vld [vmem:[%s3 + $0x3c] sm:$0xf]
      %v4757 = vunpack.c.l.b16 %v4725
      %v4758 = vunpack.c.l.b16 %v4726
      %v4759 = vunpack.c.l.b16 %v4727
      %v4760 = vunpack.c.l.b16 %v4728
      %v4761 = vunpack.c.l.b16 %v4729
      %v4762 = vunpack.c.l.b16 %v4730
      %v4763 = vunpack.c.l.b16 %v4731
      %v4764 = vunpack.c.l.b16 %v4732
      %v4765 = vunpack.c.l.b16 %v4733
      %v4766 = vunpack.c.l.b16 %v4734
      %v4767 = vunpack.c.l.b16 %v4735
      %v4768 = vunpack.c.l.b16 %v4736
      %v4769 = vunpack.c.l.b16 %v4737
      %v4770 = vunpack.c.l.b16 %v4738
      %v4771 = vunpack.c.l.b16 %v4739
      %v4772 = vunpack.c.l.b16 %v4740
      %v4773 = vpack.c.b16 %v4758, %v4757
      %v4774 = vpack.c.b16 %v4760, %v4759
      %v4775 = vpack.c.b16 %v4762, %v4761
      %v4776 = vpack.c.b16 %v4764, %v4763
      %v4777 = vpack.c.b16 %v4766, %v4765
      %v4778 = vpack.c.b16 %v4768, %v4767
      %v4779 = vpack.c.b16 %v4770, %v4769
      %v4780 = vpack.c.b16 %v4772, %v4771
      %4789 = vmatprep.subr.bf16.mxu0 0
      %4790 = vmatpush1.bf16.msra.mxu0 %v4773
      %4791 = vmatprep.subr.bf16.mxu0 0
      %4792 = vmatpush1.bf16.msra.mxu0 %v4774
      %4793 = vmatprep.subr.bf16.mxu0 0
      %4794 = vmatpush1.bf16.msra.mxu0 %v4775
      %4795 = vmatprep.subr.bf16.mxu0 0
      %4796 = vmatpush1.bf16.msra.mxu0 %v4776
      %4797 = vmatprep.subr.bf16.mxu0 0
      %4798 = vmatpush1.bf16.msra.mxu0 %v4777
      %4799 = vmatprep.subr.bf16.mxu0 0
      %4800 = vmatpush1.bf16.msra.mxu0 %v4778
      %4801 = vmatprep.subr.bf16.mxu0 0
      %4802 = vmatpush1.bf16.msra.mxu0 %v4779
      %4803 = vmatprep.subr.bf16.mxu0 0
      %4804 = vmatpush1.bf16.msra.mxu0 %v4780
      %4805 = vmatprep.subr.bf16.mxu0 0
      %4806 = vmatpush1.bf16.msra.mxu0 0
      %4807 = vmatprep.subr.bf16.mxu0 0
      %4808 = vmatpush1.bf16.msra.mxu0 0
      %4809 = vmatprep.subr.bf16.mxu0 0
      %4810 = vmatpush1.bf16.msra.mxu0 0
      %4811 = vmatprep.subr.bf16.mxu0 0
      %4812 = vmatpush1.bf16.msra.mxu0 0
      %4813 = vmatprep.subr.bf16.mxu0 0
      %4814 = vmatpush1.bf16.msra.mxu0 0
      %4815 = vmatprep.subr.bf16.mxu0 0
      %4816 = vmatpush1.bf16.msra.mxu0 0
      %4817 = vmatprep.subr.bf16.mxu0 0
      %4818 = vmatpush1.bf16.msra.mxu0 0
      %4819 = vmatprep.subr.bf16.mxu0 0
      %4820 = vmatpush1.bf16.msra.mxu0 0
      %4821 = vmatprep.mubr.bf16.mxu0 0
      %4822 = vmatmul.mubr.bf16.gmra.mrb[0].mxu0 %v4724
      %v4823 = vpop.f32.mrb[0].mxu0
      %v4824 = vadd.f32 0.0, %v4823
      %v4825 = vpop.f32.mrb[0].mxu0
      %v4826 = vpop.f32.mrb[0].mxu0
      %v4827 = vpop.f32.mrb[0].mxu0
      %4828 = vdwg.mxu0
      %4829 = vst [vmem:[#allocation4] sm:$0xff] %v4824
    $region49: #{seq2seq_forward.1} parent=1 // pred_fallthru
      _
    %s4830 = sld [smem:[#allocation5 + $0x1]]
    %p4831 = scmp.ne.s32.totalorder %s4830, 0
    // Predicated region
    $region50: #{seq2seq_forward.1} parent=1 // pred_check
      %p4832 = pneg %p4831
    $region51: #{seq2seq_forward.1} parent=1 // pred_check_branch
      %4834 = sbr.rel (%p4832) target = $region53
    $region52: #{seq2seq_forward.1} parent=1 // pred_region
      %s4835 = scalar_lea.vmem %s2, 8
      %v4836 = vld [vmem:[%s4835] sm:$0xff]
      %4837 = vst [vmem:[#allocation2] sm:$0xff] %v4836
    $region53: #{seq2seq_forward.1} parent=1 // pred_fallthru
      _
    %p4838 = scmp.eq.s32.totalorder %s4830, 0
    // Predicated region
    $region54: #{seq2seq_forward.1} parent=1 // pred_check
      %p4839 = pneg %p4838
    $region55: #{seq2seq_forward.1} parent=1 // pred_check_branch
      %4841 = sbr.rel (%p4839) target = $region57
    $region56: #{seq2seq_forward.1} parent=1 // pred_region
      %v4842 = vld [vmem:[#allocation4] sm:$0xff]
      %4843 = vst [vmem:[#allocation2] sm:$0xff] %v4842
    $region57: #{seq2seq_forward.1} parent=1 // pred_fallthru
      _
    %v4844 = vld [vmem:[#allocation2] sm:$0xff]
    %v4845 = vld [vmem:[#allocation2 + $0x8] sm:$0xff]
    %v4846 = vpack.c.bf16 %v4844, %v4844
    %v4847 = vpack.c.bf16 %v4845, %v4845
    %v4848 = vld [vmem:[%s6] sm:$0xff]
    %v4849 = vld [vmem:[%s6 + $0x8] sm:$0xff]
    %v4850 = vld [vmem:[%s6 + $0x10] sm:$0xff]
    %v4851 = vld [vmem:[%s6 + $0x18] sm:$0xff]
    %v4852 = vld [vmem:[%s6 + $0x20] sm:$0xff]
    %v4853 = vld [vmem:[%s6 + $0x28] sm:$0xff]
    %v4854 = vld [vmem:[%s6 + $0x30] sm:$0xff]
    %v4855 = vld [vmem:[%s6 + $0x38] sm:$0xff]
    %v4856 = vld [vmem:[%s6 + $0x40] sm:$0xff]
    %v4857 = vld [vmem:[%s6 + $0x48] sm:$0xff]
    %v4858 = vld [vmem:[%s6 + $0x50] sm:$0xff]
    %v4859 = vld [vmem:[%s6 + $0x58] sm:$0xff]
    %v4860 = vld [vmem:[%s6 + $0x60] sm:$0xff]
    %v4861 = vld [vmem:[%s6 + $0x68] sm:$0xff]
    %v4862 = vld [vmem:[%s6 + $0x70] sm:$0xff]
    %v4863 = vld [vmem:[%s6 + $0x78] sm:$0xff]
    %v4864 = vld [vmem:[%s6 + $0x80] sm:$0xff]
    %v4865 = vld [vmem:[%s6 + $0x88] sm:$0xff]
    %v4866 = vld [vmem:[%s6 + $0x90] sm:$0xff]
    %v4867 = vld [vmem:[%s6 + $0x98] sm:$0xff]
    %v4868 = vld [vmem:[%s6 + $0xa0] sm:$0xff]
    %v4869 = vld [vmem:[%s6 + $0xa8] sm:$0xff]
    %v4870 = vld [vmem:[%s6 + $0xb0] sm:$0xff]
    %v4871 = vld [vmem:[%s6 + $0xb8] sm:$0xff]
    %v4872 = vld [vmem:[%s6 + $0xc0] sm:$0xff]
    %v4873 = vld [vmem:[%s6 + $0xc8] sm:$0xff]
    %v4874 = vld [vmem:[%s6 + $0xd0] sm:$0xff]
    %v4875 = vld [vmem:[%s6 + $0xd8] sm:$0xff]
    %v4876 = vld [vmem:[%s6 + $0xe0] sm:$0xff]
    %v4877 = vld [vmem:[%s6 + $0xe8] sm:$0xff]
    %v4878 = vld [vmem:[%s6 + $0xf0] sm:$0xff]
    %v4879 = vld [vmem:[%s6 + $0xf8] sm:$0xff]
    %v4880 = vld [vmem:[%s6 + $0x100] sm:$0xff]
    %v4881 = vld [vmem:[%s6 + $0x108] sm:$0xff]
    %v4882 = vld [vmem:[%s6 + $0x110] sm:$0xff]
    %v4883 = vld [vmem:[%s6 + $0x118] sm:$0xff]
    %v4884 = vld [vmem:[%s6 + $0x120] sm:$0xff]
    %v4885 = vld [vmem:[%s6 + $0x128] sm:$0xff]
    %v4886 = vld [vmem:[%s6 + $0x130] sm:$0xff]
    %v4887 = vld [vmem:[%s6 + $0x138] sm:$0xff]
    %v4888 = vld [vmem:[%s6 + $0x140] sm:$0xff]
    %v4889 = vld [vmem:[%s6 + $0x148] sm:$0xff]
    %v4890 = vld [vmem:[%s6 + $0x150] sm:$0xff]
    %v4891 = vld [vmem:[%s6 + $0x158] sm:$0xff]
    %v4892 = vld [vmem:[%s6 + $0x160] sm:$0xff]
    %v4893 = vld [vmem:[%s6 + $0x168] sm:$0xff]
    %v4894 = vld [vmem:[%s6 + $0x170] sm:$0xff]
    %v4895 = vld [vmem:[%s6 + $0x178] sm:$0xff]
    %v4896 = vld [vmem:[%s6 + $0x180] sm:$0xff]
    %v4897 = vld [vmem:[%s6 + $0x188] sm:$0xff]
    %v4898 = vld [vmem:[%s6 + $0x190] sm:$0xff]
    %v4899 = vld [vmem:[%s6 + $0x198] sm:$0xff]
    %v4900 = vld [vmem:[%s6 + $0x1a0] sm:$0xff]
    %v4901 = vld [vmem:[%s6 + $0x1a8] sm:$0xff]
    %v4902 = vld [vmem:[%s6 + $0x1b0] sm:$0xff]
    %v4903 = vld [vmem:[%s6 + $0x1b8] sm:$0xff]
    %v4904 = vld [vmem:[%s6 + $0x1c0] sm:$0xff]
    %v4905 = vld [vmem:[%s6 + $0x1c8] sm:$0xff]
    %v4906 = vld [vmem:[%s6 + $0x1d0] sm:$0xff]
    %v4907 = vld [vmem:[%s6 + $0x1d8] sm:$0xff]
    %v4908 = vld [vmem:[%s6 + $0x1e0] sm:$0xff]
    %v4909 = vld [vmem:[%s6 + $0x1e8] sm:$0xff]
    %v4910 = vld [vmem:[%s6 + $0x1f0] sm:$0xff]
    %v4911 = vld [vmem:[%s6 + $0x1f8] sm:$0xff]
    %v4912 = vld [vmem:[%s7] sm:$0xff]
    %v4913 = vld [vmem:[%s7 + $0x8] sm:$0xff]
    %v4914 = vld [vmem:[%s7 + $0x10] sm:$0xff]
    %v4915 = vld [vmem:[%s7 + $0x18] sm:$0xff]
    %v4980 = vunpack.c.l.b16 %v4848
    %v4981 = vunpack.c.h.b16 %v4848
    %v4982 = vunpack.c.l.b16 %v4849
    %v4983 = vunpack.c.h.b16 %v4849
    %v4984 = vunpack.c.l.b16 %v4850
    %v4985 = vunpack.c.h.b16 %v4850
    %v4986 = vunpack.c.l.b16 %v4851
    %v4987 = vunpack.c.h.b16 %v4851
    %v4988 = vunpack.c.l.b16 %v4852
    %v4989 = vunpack.c.h.b16 %v4852
    %v4990 = vunpack.c.l.b16 %v4853
    %v4991 = vunpack.c.h.b16 %v4853
    %v4992 = vunpack.c.l.b16 %v4854
    %v4993 = vunpack.c.h.b16 %v4854
    %v4994 = vunpack.c.l.b16 %v4855
    %v4995 = vunpack.c.h.b16 %v4855
    %v4996 = vunpack.c.l.b16 %v4856
    %v4997 = vunpack.c.h.b16 %v4856
    %v4998 = vunpack.c.l.b16 %v4857
    %v4999 = vunpack.c.h.b16 %v4857
    %v5000 = vunpack.c.l.b16 %v4858
    %v5001 = vunpack.c.h.b16 %v4858
    %v5002 = vunpack.c.l.b16 %v4859
    %v5003 = vunpack.c.h.b16 %v4859
    %v5004 = vunpack.c.l.b16 %v4860
    %v5005 = vunpack.c.h.b16 %v4860
    %v5006 = vunpack.c.l.b16 %v4861
    %v5007 = vunpack.c.h.b16 %v4861
    %v5008 = vunpack.c.l.b16 %v4862
    %v5009 = vunpack.c.h.b16 %v4862
    %v5010 = vunpack.c.l.b16 %v4863
    %v5011 = vunpack.c.h.b16 %v4863
    %v5012 = vunpack.c.l.b16 %v4864
    %v5013 = vunpack.c.h.b16 %v4864
    %v5014 = vunpack.c.l.b16 %v4865
    %v5015 = vunpack.c.h.b16 %v4865
    %v5016 = vunpack.c.l.b16 %v4866
    %v5017 = vunpack.c.h.b16 %v4866
    %v5018 = vunpack.c.l.b16 %v4867
    %v5019 = vunpack.c.h.b16 %v4867
    %v5020 = vunpack.c.l.b16 %v4868
    %v5021 = vunpack.c.h.b16 %v4868
    %v5022 = vunpack.c.l.b16 %v4869
    %v5023 = vunpack.c.h.b16 %v4869
    %v5024 = vunpack.c.l.b16 %v4870
    %v5025 = vunpack.c.h.b16 %v4870
    %v5026 = vunpack.c.l.b16 %v4871
    %v5027 = vunpack.c.h.b16 %v4871
    %v5028 = vunpack.c.l.b16 %v4872
    %v5029 = vunpack.c.h.b16 %v4872
    %v5030 = vunpack.c.l.b16 %v4873
    %v5031 = vunpack.c.h.b16 %v4873
    %v5032 = vunpack.c.l.b16 %v4874
    %v5033 = vunpack.c.h.b16 %v4874
    %v5034 = vunpack.c.l.b16 %v4875
    %v5035 = vunpack.c.h.b16 %v4875
    %v5036 = vunpack.c.l.b16 %v4876
    %v5037 = vunpack.c.h.b16 %v4876
    %v5038 = vunpack.c.l.b16 %v4877
    %v5039 = vunpack.c.h.b16 %v4877
    %v5040 = vunpack.c.l.b16 %v4878
    %v5041 = vunpack.c.h.b16 %v4878
    %v5042 = vunpack.c.l.b16 %v4879
    %v5043 = vunpack.c.h.b16 %v4879
    %v5044 = vunpack.c.l.b16 %v4880
    %v5045 = vunpack.c.h.b16 %v4880
    %v5046 = vunpack.c.l.b16 %v4881
    %v5047 = vunpack.c.h.b16 %v4881
    %v5048 = vunpack.c.l.b16 %v4882
    %v5049 = vunpack.c.h.b16 %v4882
    %v5050 = vunpack.c.l.b16 %v4883
    %v5051 = vunpack.c.h.b16 %v4883
    %v5052 = vunpack.c.l.b16 %v4884
    %v5053 = vunpack.c.h.b16 %v4884
    %v5054 = vunpack.c.l.b16 %v4885
    %v5055 = vunpack.c.h.b16 %v4885
    %v5056 = vunpack.c.l.b16 %v4886
    %v5057 = vunpack.c.h.b16 %v4886
    %v5058 = vunpack.c.l.b16 %v4887
    %v5059 = vunpack.c.h.b16 %v4887
    %v5060 = vunpack.c.l.b16 %v4888
    %v5061 = vunpack.c.h.b16 %v4888
    %v5062 = vunpack.c.l.b16 %v4889
    %v5063 = vunpack.c.h.b16 %v4889
    %v5064 = vunpack.c.l.b16 %v4890
    %v5065 = vunpack.c.h.b16 %v4890
    %v5066 = vunpack.c.l.b16 %v4891
    %v5067 = vunpack.c.h.b16 %v4891
    %v5068 = vunpack.c.l.b16 %v4892
    %v5069 = vunpack.c.h.b16 %v4892
    %v5070 = vunpack.c.l.b16 %v4893
    %v5071 = vunpack.c.h.b16 %v4893
    %v5072 = vunpack.c.l.b16 %v4894
    %v5073 = vunpack.c.h.b16 %v4894
    %v5074 = vunpack.c.l.b16 %v4895
    %v5075 = vunpack.c.h.b16 %v4895
    %v5076 = vunpack.c.l.b16 %v4896
    %v5077 = vunpack.c.h.b16 %v4896
    %v5078 = vunpack.c.l.b16 %v4897
    %v5079 = vunpack.c.h.b16 %v4897
    %v5080 = vunpack.c.l.b16 %v4898
    %v5081 = vunpack.c.h.b16 %v4898
    %v5082 = vunpack.c.l.b16 %v4899
    %v5083 = vunpack.c.h.b16 %v4899
    %v5084 = vunpack.c.l.b16 %v4900
    %v5085 = vunpack.c.h.b16 %v4900
    %v5086 = vunpack.c.l.b16 %v4901
    %v5087 = vunpack.c.h.b16 %v4901
    %v5088 = vunpack.c.l.b16 %v4902
    %v5089 = vunpack.c.h.b16 %v4902
    %v5090 = vunpack.c.l.b16 %v4903
    %v5091 = vunpack.c.h.b16 %v4903
    %v5092 = vunpack.c.l.b16 %v4904
    %v5093 = vunpack.c.h.b16 %v4904
    %v5094 = vunpack.c.l.b16 %v4905
    %v5095 = vunpack.c.h.b16 %v4905
    %v5096 = vunpack.c.l.b16 %v4906
    %v5097 = vunpack.c.h.b16 %v4906
    %v5098 = vunpack.c.l.b16 %v4907
    %v5099 = vunpack.c.h.b16 %v4907
    %v5100 = vunpack.c.l.b16 %v4908
    %v5101 = vunpack.c.h.b16 %v4908
    %v5102 = vunpack.c.l.b16 %v4909
    %v5103 = vunpack.c.h.b16 %v4909
    %v5104 = vunpack.c.l.b16 %v4910
    %v5105 = vunpack.c.h.b16 %v4910
    %v5106 = vunpack.c.l.b16 %v4911
    %v5107 = vunpack.c.h.b16 %v4911
    %v5108 = vpack.c.b16 %v4984, %v4980
    %v5109 = vpack.c.b16 %v4985, %v4981
    %v5110 = vpack.c.b16 %v4986, %v4982
    %v5111 = vpack.c.b16 %v4987, %v4983
    %v5112 = vpack.c.b16 %v4992, %v4988
    %v5113 = vpack.c.b16 %v4993, %v4989
    %v5114 = vpack.c.b16 %v4994, %v4990
    %v5115 = vpack.c.b16 %v4995, %v4991
    %v5116 = vpack.c.b16 %v5000, %v4996
    %v5117 = vpack.c.b16 %v5001, %v4997
    %v5118 = vpack.c.b16 %v5002, %v4998
    %v5119 = vpack.c.b16 %v5003, %v4999
    %v5120 = vpack.c.b16 %v5008, %v5004
    %v5121 = vpack.c.b16 %v5009, %v5005
    %v5122 = vpack.c.b16 %v5010, %v5006
    %v5123 = vpack.c.b16 %v5011, %v5007
    %v5124 = vpack.c.b16 %v5016, %v5012
    %v5125 = vpack.c.b16 %v5017, %v5013
    %v5126 = vpack.c.b16 %v5018, %v5014
    %v5127 = vpack.c.b16 %v5019, %v5015
    %v5128 = vpack.c.b16 %v5024, %v5020
    %v5129 = vpack.c.b16 %v5025, %v5021
    %v5130 = vpack.c.b16 %v5026, %v5022
    %v5131 = vpack.c.b16 %v5027, %v5023
    %v5132 = vpack.c.b16 %v5032, %v5028
    %v5133 = vpack.c.b16 %v5033, %v5029
    %v5134 = vpack.c.b16 %v5034, %v5030
    %v5135 = vpack.c.b16 %v5035, %v5031
    %v5136 = vpack.c.b16 %v5040, %v5036
    %v5137 = vpack.c.b16 %v5041, %v5037
    %v5138 = vpack.c.b16 %v5042, %v5038
    %v5139 = vpack.c.b16 %v5043, %v5039
    %v5140 = vpack.c.b16 %v5048, %v5044
    %v5141 = vpack.c.b16 %v5049, %v5045
    %v5142 = vpack.c.b16 %v5050, %v5046
    %v5143 = vpack.c.b16 %v5051, %v5047
    %v5144 = vpack.c.b16 %v5056, %v5052
    %v5145 = vpack.c.b16 %v5057, %v5053
    %v5146 = vpack.c.b16 %v5058, %v5054
    %v5147 = vpack.c.b16 %v5059, %v5055
    %v5148 = vpack.c.b16 %v5064, %v5060
    %v5149 = vpack.c.b16 %v5065, %v5061
    %v5150 = vpack.c.b16 %v5066, %v5062
    %v5151 = vpack.c.b16 %v5067, %v5063
    %v5152 = vpack.c.b16 %v5072, %v5068
    %v5153 = vpack.c.b16 %v5073, %v5069
    %v5154 = vpack.c.b16 %v5074, %v5070
    %v5155 = vpack.c.b16 %v5075, %v5071
    %v5156 = vpack.c.b16 %v5080, %v5076
    %v5157 = vpack.c.b16 %v5081, %v5077
    %v5158 = vpack.c.b16 %v5082, %v5078
    %v5159 = vpack.c.b16 %v5083, %v5079
    %v5160 = vpack.c.b16 %v5088, %v5084
    %v5161 = vpack.c.b16 %v5089, %v5085
    %v5162 = vpack.c.b16 %v5090, %v5086
    %v5163 = vpack.c.b16 %v5091, %v5087
    %v5164 = vpack.c.b16 %v5096, %v5092
    %v5165 = vpack.c.b16 %v5097, %v5093
    %v5166 = vpack.c.b16 %v5098, %v5094
    %v5167 = vpack.c.b16 %v5099, %v5095
    %v5168 = vpack.c.b16 %v5104, %v5100
    %v5169 = vpack.c.b16 %v5105, %v5101
    %v5170 = vpack.c.b16 %v5106, %v5102
    %v5171 = vpack.c.b16 %v5107, %v5103
    %5236 = vmatprep.subr.bf16.mxu0 %v5109
    %5237 = vmatpush1.bf16.msra.mxu0 %v5108
    %5238 = vmatprep.subr.bf16.mxu0 %v5113
    %5239 = vmatpush1.bf16.msra.mxu0 %v5112
    %5240 = vmatprep.subr.bf16.mxu0 %v5117
    %5241 = vmatpush1.bf16.msra.mxu0 %v5116
    %5242 = vmatprep.subr.bf16.mxu0 %v5121
    %5243 = vmatpush1.bf16.msra.mxu0 %v5120
    %5244 = vmatprep.subr.bf16.mxu0 %v5125
    %5245 = vmatpush1.bf16.msra.mxu0 %v5124
    %5246 = vmatprep.subr.bf16.mxu0 %v5129
    %5247 = vmatpush1.bf16.msra.mxu0 %v5128
    %5248 = vmatprep.subr.bf16.mxu0 %v5133
    %5249 = vmatpush1.bf16.msra.mxu0 %v5132
    %5250 = vmatprep.subr.bf16.mxu0 %v5137
    %5251 = vmatpush1.bf16.msra.mxu0 %v5136
    %5252 = vmatprep.subr.bf16.mxu0 %v5141
    %5253 = vmatpush1.bf16.msra.mxu0 %v5140
    %5254 = vmatprep.subr.bf16.mxu0 %v5145
    %5255 = vmatpush1.bf16.msra.mxu0 %v5144
    %5256 = vmatprep.subr.bf16.mxu0 %v5149
    %5257 = vmatpush1.bf16.msra.mxu0 %v5148
    %5258 = vmatprep.subr.bf16.mxu0 %v5153
    %5259 = vmatpush1.bf16.msra.mxu0 %v5152
    %5260 = vmatprep.subr.bf16.mxu0 %v5157
    %5261 = vmatpush1.bf16.msra.mxu0 %v5156
    %5262 = vmatprep.subr.bf16.mxu0 %v5161
    %5263 = vmatpush1.bf16.msra.mxu0 %v5160
    %5264 = vmatprep.subr.bf16.mxu0 %v5165
    %5265 = vmatpush1.bf16.msra.mxu0 %v5164
    %5266 = vmatprep.subr.bf16.mxu0 %v5169
    %5267 = vmatpush1.bf16.msra.mxu0 %v5168
    %5268 = vmatprep.mubr.bf16.mxu0 %v4847
    %5269 = vmatmul.mubr.bf16.gmra.mrb[0].mxu0 %v4846
    %v5270 = vpop.f32.mrb[0].mxu0
    %v5271 = vadd.f32 %v4912, %v5270
    %v5272 = vpop.f32.mrb[0].mxu0
    %v5273 = vadd.f32 %v4913, %v5272
    %v5274 = vpop.f32.mrb[0].mxu0
    %v5275 = vpop.f32.mrb[0].mxu0
    %5276 = vdwg.mxu0
    %5277 = vmatprep.subr.bf16.mxu0 %v5111
    %5278 = vmatpush1.bf16.msra.mxu0 %v5110
    %5279 = vmatprep.subr.bf16.mxu0 %v5115
    %5280 = vmatpush1.bf16.msra.mxu0 %v5114
    %5281 = vmatprep.subr.bf16.mxu0 %v5119
    %5282 = vmatpush1.bf16.msra.mxu0 %v5118
    %5283 = vmatprep.subr.bf16.mxu0 %v5123
    %5284 = vmatpush1.bf16.msra.mxu0 %v5122
    %5285 = vmatprep.subr.bf16.mxu0 %v5127
    %5286 = vmatpush1.bf16.msra.mxu0 %v5126
    %5287 = vmatprep.subr.bf16.mxu0 %v5131
    %5288 = vmatpush1.bf16.msra.mxu0 %v5130
    %5289 = vmatprep.subr.bf16.mxu0 %v5135
    %5290 = vmatpush1.bf16.msra.mxu0 %v5134
    %5291 = vmatprep.subr.bf16.mxu0 %v5139
    %5292 = vmatpush1.bf16.msra.mxu0 %v5138
    %5293 = vmatprep.subr.bf16.mxu0 %v5143
    %5294 = vmatpush1.bf16.msra.mxu0 %v5142
    %5295 = vmatprep.subr.bf16.mxu0 %v5147
    %5296 = vmatpush1.bf16.msra.mxu0 %v5146
    %5297 = vmatprep.subr.bf16.mxu0 %v5151
    %5298 = vmatpush1.bf16.msra.mxu0 %v5150
    %5299 = vmatprep.subr.bf16.mxu0 %v5155
    %5300 = vmatpush1.bf16.msra.mxu0 %v5154
    %5301 = vmatprep.subr.bf16.mxu0 %v5159
    %5302 = vmatpush1.bf16.msra.mxu0 %v5158
    %5303 = vmatprep.subr.bf16.mxu0 %v5163
    %5304 = vmatpush1.bf16.msra.mxu0 %v5162
    %5305 = vmatprep.subr.bf16.mxu0 %v5167
    %5306 = vmatpush1.bf16.msra.mxu0 %v5166
    %5307 = vmatprep.subr.bf16.mxu0 %v5171
    %5308 = vmatpush1.bf16.msra.mxu0 %v5170
    %5309 = vmatprep.mubr.bf16.mxu0 %v4847
    %5310 = vmatmul.mubr.bf16.gmra.mrb[0].mxu0 %v4846
    %v5311 = vpop.f32.mrb[0].mxu0
    %v5312 = vadd.f32 %v4914, %v5311
    %v5313 = vpop.f32.mrb[0].mxu0
    %v5314 = vadd.f32 %v4915, %v5313
    %v5315 = vpop.f32.mrb[0].mxu0
    %v5316 = vpop.f32.mrb[0].mxu0
    %5317 = vdwg.mxu0
    %v5318 = vxor.u32 %v5271, 2147483648
    %v5319 = vmul.f32 %v5318, 1.442695
    %v5320 = vpow.pop %v5319
    %v5321 = vadd.f32 %v5320, 1.0
    %v5322 = vrcp.pop %v5321
    %v5323 = vmul.f32 1.0, %v5322
    %v5324 = vxor.u32 %v5273, 2147483648
    %v5325 = vmul.f32 %v5324, 1.442695
    %v5326 = vpow.pop %v5325
    %v5327 = vadd.f32 %v5326, 1.0
    %v5328 = vrcp.pop %v5327
    %v5329 = vmul.f32 1.0, %v5328
    %v5330 = vtanh.pop %v5312
    %v5331 = vxor.u32 %v5314, 2147483648
    %v5332 = vmul.f32 %v5331, 1.442695
    %v5333 = vpow.pop %v5332
    %v5334 = vadd.f32 %v5333, 1.0
    %v5335 = vrcp.pop %v5334
    %v5336 = vmul.f32 1.0, %v5335
    %v5337 = vld [vmem:[#allocation3] sm:$0xff]
    %v5338 = vmul.f32 %v5329, %v5337
    %v5339 = vmul.f32 %v5323, %v5330
    %v5340 = vadd.f32 %v5338, %v5339
    %v5341 = vtanh.pop %v5340
    %v5342 = vmul.f32 %v5336, %v5341
    %5343 = vst [vmem:[#allocation2 + $0x8] sm:$0xff] %v5342
    %5344 = vst [vmem:[#allocation3] sm:$0xff] %v5340
    %v5345 = vpack.c.bf16 %v5342, %v5342
    %v5346 = vld [vmem:[%s8] sm:$0xf]
    %v5347 = vld [vmem:[%s8 + $0x4] sm:$0xf]
    %v5348 = vld [vmem:[%s8 + $0x8] sm:$0xf]
    %v5349 = vld [vmem:[%s8 + $0xc] sm:$0xf]
    %v5350 = vld [vmem:[%s8 + $0x10] sm:$0xf]
    %v5351 = vld [vmem:[%s8 + $0x14] sm:$0xf]
    %v5352 = vld [vmem:[%s8 + $0x18] sm:$0xf]
    %v5353 = vld [vmem:[%s8 + $0x1c] sm:$0xf]
    %v5354 = vld [vmem:[%s8 + $0x20] sm:$0xf]
    %v5355 = vld [vmem:[%s8 + $0x24] sm:$0xf]
    %v5356 = vld [vmem:[%s8 + $0x28] sm:$0xf]
    %v5357 = vld [vmem:[%s8 + $0x2c] sm:$0xf]
    %v5358 = vld [vmem:[%s8 + $0x30] sm:$0xf]
    %v5359 = vld [vmem:[%s8 + $0x34] sm:$0xf]
    %v5360 = vld [vmem:[%s8 + $0x38] sm:$0xf]
    %v5361 = vld [vmem:[%s8 + $0x3c] sm:$0xf]
    %v5362 = vld [vmem:[%s9] sm:$0xff]
    %v5379 = vunpack.c.l.b16 %v5346
    %v5380 = vunpack.c.l.b16 %v5347
    %v5381 = vunpack.c.l.b16 %v5348
    %v5382 = vunpack.c.l.b16 %v5349
    %v5383 = vunpack.c.l.b16 %v5350
    %v5384 = vunpack.c.l.b16 %v5351
    %v5385 = vunpack.c.l.b16 %v5352
    %v5386 = vunpack.c.l.b16 %v5353
    %v5387 = vunpack.c.l.b16 %v5354
    %v5388 = vunpack.c.l.b16 %v5355
    %v5389 = vunpack.c.l.b16 %v5356
    %v5390 = vunpack.c.l.b16 %v5357
    %v5391 = vunpack.c.l.b16 %v5358
    %v5392 = vunpack.c.l.b16 %v5359
    %v5393 = vunpack.c.l.b16 %v5360
    %v5394 = vunpack.c.l.b16 %v5361
    %v5395 = vpack.c.b16 %v5380, %v5379
    %v5396 = vpack.c.b16 %v5382, %v5381
    %v5397 = vpack.c.b16 %v5384, %v5383
    %v5398 = vpack.c.b16 %v5386, %v5385
    %v5399 = vpack.c.b16 %v5388, %v5387
    %v5400 = vpack.c.b16 %v5390, %v5389
    %v5401 = vpack.c.b16 %v5392, %v5391
    %v5402 = vpack.c.b16 %v5394, %v5393
    %5411 = vmatprep.subr.bf16.mxu0 0
    %5412 = vmatpush1.bf16.msra.mxu0 %v5395
    %5413 = vmatprep.subr.bf16.mxu0 0
    %5414 = vmatpush1.bf16.msra.mxu0 %v5396
    %5415 = vmatprep.subr.bf16.mxu0 0
    %5416 = vmatpush1.bf16.msra.mxu0 %v5397
    %5417 = vmatprep.subr.bf16.mxu0 0
    %5418 = vmatpush1.bf16.msra.mxu0 %v5398
    %5419 = vmatprep.subr.bf16.mxu0 0
    %5420 = vmatpush1.bf16.msra.mxu0 %v5399
    %5421 = vmatprep.subr.bf16.mxu0 0
    %5422 = vmatpush1.bf16.msra.mxu0 %v5400
    %5423 = vmatprep.subr.bf16.mxu0 0
    %5424 = vmatpush1.bf16.msra.mxu0 %v5401
    %5425 = vmatprep.subr.bf16.mxu0 0
    %5426 = vmatpush1.bf16.msra.mxu0 %v5402
    %5427 = vmatprep.subr.bf16.mxu0 0
    %5428 = vmatpush1.bf16.msra.mxu0 0
    %5429 = vmatprep.subr.bf16.mxu0 0
    %5430 = vmatpush1.bf16.msra.mxu0 0
    %5431 = vmatprep.subr.bf16.mxu0 0
    %5432 = vmatpush1.bf16.msra.mxu0 0
    %5433 = vmatprep.subr.bf16.mxu0 0
    %5434 = vmatpush1.bf16.msra.mxu0 0
    %5435 = vmatprep.subr.bf16.mxu0 0
    %5436 = vmatpush1.bf16.msra.mxu0 0
    %5437 = vmatprep.subr.bf16.mxu0 0
    %5438 = vmatpush1.bf16.msra.mxu0 0
    %5439 = vmatprep.subr.bf16.mxu0 0
    %5440 = vmatpush1.bf16.msra.mxu0 0
    %5441 = vmatprep.subr.bf16.mxu0 0
    %5442 = vmatpush1.bf16.msra.mxu0 0
    %5443 = vmatprep.mubr.bf16.mxu0 0
    %5444 = vmatmul.mubr.bf16.gmra.mrb[0].mxu0 %v5345
    %v5445 = vpop.f32.mrb[0].mxu0
    %v5446 = vadd.f32 %v5362, %v5445
    %v5447 = vpop.f32.mrb[0].mxu0
    %v5448 = vpop.f32.mrb[0].mxu0
    %v5449 = vpop.f32.mrb[0].mxu0
    %5450 = vdwg.mxu0
    %s5451 = scalar_lea.vmem [#allocation8], 16
    %5452 = vst [vmem:[%s5451] sm:$0xff] %v5446
    %s5453 = sld [smem:[#allocation5 + $0x2]]
    %p5454 = scmp.eq.s32.totalorder %s5453, 0
    // Predicated region
    $region58: #{seq2seq_forward.1} parent=1 // pred_check
      %p5455 = pneg %p5454
    $region59: #{seq2seq_forward.1} parent=1 // pred_check_branch
      %5457 = sbr.rel (%p5455) target = $region61
    $region60: #{seq2seq_forward.1} parent=1 // pred_region
      %v5458 = vlaneseq
      %v5459 = vand.u32 %v5458, 127
      %5460 = vmax.xlane.f32.xlu0 %v5446
      %v5461 = vpop.xlane.xlu0 %5460
      %vm5462 = vcmp.eq.f32.partialorder %v5446, %v5461
      %v5463 = vsel %vm5462, %v5459, 128
      %v5464 = vand.u32 %v5463, 65535
      %v5465 = vshra.s32 %v5463, 16
      %v5466 = vcvt.s32.f32 %v5464
      %v5467 = vcvt.s32.f32 %v5465
      %5468 = vmin.xlane.f32.xlu0 %v5467
      %v5469 = vpop.xlane.xlu0 %5468
      %vm5470 = vcmp.eq.f32.partialorder %v5467, %v5469
      %v5471 = vsel %vm5470, %v5466, inf
      %5472 = vmin.xlane.f32.xlu0 %v5471
      %v5473 = vpop.xlane.xlu0 %5472
      %v5474 = vcvt.f32.s32 %v5473
      %v5475 = vcvt.f32.s32 %v5469
      %v5476 = vshll.u32 %v5475, 16
      %v5477 = vadd.s32 %v5476, %v5474
      %vm5478 = vcmp.eq.s32.totalorder %v5459, %v5477
      %v5479 = vsel %vm5478, 1, 0
      %v5480 = vcvt.s32.f32 %v5479
      %v5481 = vpack.c.bf16 %v5480, %v5480
      %v5482 = vld [vmem:[%s3] sm:$0xf]
      %v5483 = vld [vmem:[%s3 + $0x4] sm:$0xf]
      %v5484 = vld [vmem:[%s3 + $0x8] sm:$0xf]
      %v5485 = vld [vmem:[%s3 + $0xc] sm:$0xf]
      %v5486 = vld [vmem:[%s3 + $0x10] sm:$0xf]
      %v5487 = vld [vmem:[%s3 + $0x14] sm:$0xf]
      %v5488 = vld [vmem:[%s3 + $0x18] sm:$0xf]
      %v5489 = vld [vmem:[%s3 + $0x1c] sm:$0xf]
      %v5490 = vld [vmem:[%s3 + $0x20] sm:$0xf]
      %v5491 = vld [vmem:[%s3 + $0x24] sm:$0xf]
      %v5492 = vld [vmem:[%s3 + $0x28] sm:$0xf]
      %v5493 = vld [vmem:[%s3 + $0x2c] sm:$0xf]
      %v5494 = vld [vmem:[%s3 + $0x30] sm:$0xf]
      %v5495 = vld [vmem:[%s3 + $0x34] sm:$0xf]
      %v5496 = vld [vmem:[%s3 + $0x38] sm:$0xf]
      %v5497 = vld [vmem:[%s3 + $0x3c] sm:$0xf]
      %v5514 = vunpack.c.l.b16 %v5482
      %v5515 = vunpack.c.l.b16 %v5483
      %v5516 = vunpack.c.l.b16 %v5484
      %v5517 = vunpack.c.l.b16 %v5485
      %v5518 = vunpack.c.l.b16 %v5486
      %v5519 = vunpack.c.l.b16 %v5487
      %v5520 = vunpack.c.l.b16 %v5488
      %v5521 = vunpack.c.l.b16 %v5489
      %v5522 = vunpack.c.l.b16 %v5490
      %v5523 = vunpack.c.l.b16 %v5491
      %v5524 = vunpack.c.l.b16 %v5492
      %v5525 = vunpack.c.l.b16 %v5493
      %v5526 = vunpack.c.l.b16 %v5494
      %v5527 = vunpack.c.l.b16 %v5495
      %v5528 = vunpack.c.l.b16 %v5496
      %v5529 = vunpack.c.l.b16 %v5497
      %v5530 = vpack.c.b16 %v5515, %v5514
      %v5531 = vpack.c.b16 %v5517, %v5516
      %v5532 = vpack.c.b16 %v5519, %v5518
      %v5533 = vpack.c.b16 %v5521, %v5520
      %v5534 = vpack.c.b16 %v5523, %v5522
      %v5535 = vpack.c.b16 %v5525, %v5524
      %v5536 = vpack.c.b16 %v5527, %v5526
      %v5537 = vpack.c.b16 %v5529, %v5528
      %5546 = vmatprep.subr.bf16.mxu0 0
      %5547 = vmatpush1.bf16.msra.mxu0 %v5530
      %5548 = vmatprep.subr.bf16.mxu0 0
      %5549 = vmatpush1.bf16.msra.mxu0 %v5531
      %5550 = vmatprep.subr.bf16.mxu0 0
      %5551 = vmatpush1.bf16.msra.mxu0 %v5532
      %5552 = vmatprep.subr.bf16.mxu0 0
      %5553 = vmatpush1.bf16.msra.mxu0 %v5533
      %5554 = vmatprep.subr.bf16.mxu0 0
      %5555 = vmatpush1.bf16.msra.mxu0 %v5534
      %5556 = vmatprep.subr.bf16.mxu0 0
      %5557 = vmatpush1.bf16.msra.mxu0 %v5535
      %5558 = vmatprep.subr.bf16.mxu0 0
      %5559 = vmatpush1.bf16.msra.mxu0 %v5536
      %5560 = vmatprep.subr.bf16.mxu0 0
      %5561 = vmatpush1.bf16.msra.mxu0 %v5537
      %5562 = vmatprep.subr.bf16.mxu0 0
      %5563 = vmatpush1.bf16.msra.mxu0 0
      %5564 = vmatprep.subr.bf16.mxu0 0
      %5565 = vmatpush1.bf16.msra.mxu0 0
      %5566 = vmatprep.subr.bf16.mxu0 0
      %5567 = vmatpush1.bf16.msra.mxu0 0
      %5568 = vmatprep.subr.bf16.mxu0 0
      %5569 = vmatpush1.bf16.msra.mxu0 0
      %5570 = vmatprep.subr.bf16.mxu0 0
      %5571 = vmatpush1.bf16.msra.mxu0 0
      %5572 = vmatprep.subr.bf16.mxu0 0
      %5573 = vmatpush1.bf16.msra.mxu0 0
      %5574 = vmatprep.subr.bf16.mxu0 0
      %5575 = vmatpush1.bf16.msra.mxu0 0
      %5576 = vmatprep.subr.bf16.mxu0 0
      %5577 = vmatpush1.bf16.msra.mxu0 0
      %5578 = vmatprep.mubr.bf16.mxu0 0
      %5579 = vmatmul.mubr.bf16.gmra.mrb[0].mxu0 %v5481
      %v5580 = vpop.f32.mrb[0].mxu0
      %v5581 = vadd.f32 0.0, %v5580
      %v5582 = vpop.f32.mrb[0].mxu0
      %v5583 = vpop.f32.mrb[0].mxu0
      %v5584 = vpop.f32.mrb[0].mxu0
      %5585 = vdwg.mxu0
      %5586 = vst [vmem:[#allocation4] sm:$0xff] %v5581
    $region61: #{seq2seq_forward.1} parent=1 // pred_fallthru
      _
    %s5587 = sld [smem:[#allocation5 + $0x2]]
    %p5588 = scmp.ne.s32.totalorder %s5587, 0
    // Predicated region
    $region62: #{seq2seq_forward.1} parent=1 // pred_check
      %p5589 = pneg %p5588
    $region63: #{seq2seq_forward.1} parent=1 // pred_check_branch
      %5591 = sbr.rel (%p5589) target = $region65
    $region64: #{seq2seq_forward.1} parent=1 // pred_region
      %s5592 = scalar_lea.vmem %s2, 16
      %v5593 = vld [vmem:[%s5592] sm:$0xff]
      %5594 = vst [vmem:[#allocation2] sm:$0xff] %v5593
    $region65: #{seq2seq_forward.1} parent=1 // pred_fallthru
      _
    %p5595 = scmp.eq.s32.totalorder %s5587, 0
    // Predicated region
    $region66: #{seq2seq_forward.1} parent=1 // pred_check
      %p5596 = pneg %p5595
    $region67: #{seq2seq_forward.1} parent=1 // pred_check_branch
      %5598 = sbr.rel (%p5596) target = $region69
    $region68: #{seq2seq_forward.1} parent=1 // pred_region
      %v5599 = vld [vmem:[#allocation4] sm:$0xff]
      %5600 = vst [vmem:[#allocation2] sm:$0xff] %v5599
    $region69: #{seq2seq_forward.1} parent=1 // pred_fallthru
      _
    %v5601 = vld [vmem:[#allocation2] sm:$0xff]
    %v5602 = vld [vmem:[#allocation2 + $0x8] sm:$0xff]
    %v5603 = vpack.c.bf16 %v5601, %v5601
    %v5604 = vpack.c.bf16 %v5602, %v5602
    %v5605 = vld [vmem:[%s6] sm:$0xff]
    %v5606 = vld [vmem:[%s6 + $0x8] sm:$0xff]
    %v5607 = vld [vmem:[%s6 + $0x10] sm:$0xff]
    %v5608 = vld [vmem:[%s6 + $0x18] sm:$0xff]
    %v5609 = vld [vmem:[%s6 + $0x20] sm:$0xff]
    %v5610 = vld [vmem:[%s6 + $0x28] sm:$0xff]
    %v5611 = vld [vmem:[%s6 + $0x30] sm:$0xff]
    %v5612 = vld [vmem:[%s6 + $0x38] sm:$0xff]
    %v5613 = vld [vmem:[%s6 + $0x40] sm:$0xff]
    %v5614 = vld [vmem:[%s6 + $0x48] sm:$0xff]
    %v5615 = vld [vmem:[%s6 + $0x50] sm:$0xff]
    %v5616 = vld [vmem:[%s6 + $0x58] sm:$0xff]
    %v5617 = vld [vmem:[%s6 + $0x60] sm:$0xff]
    %v5618 = vld [vmem:[%s6 + $0x68] sm:$0xff]
    %v5619 = vld [vmem:[%s6 + $0x70] sm:$0xff]
    %v5620 = vld [vmem:[%s6 + $0x78] sm:$0xff]
    %v5621 = vld [vmem:[%s6 + $0x80] sm:$0xff]
    %v5622 = vld [vmem:[%s6 + $0x88] sm:$0xff]
    %v5623 = vld [vmem:[%s6 + $0x90] sm:$0xff]
    %v5624 = vld [vmem:[%s6 + $0x98] sm:$0xff]
    %v5625 = vld [vmem:[%s6 + $0xa0] sm:$0xff]
    %v5626 = vld [vmem:[%s6 + $0xa8] sm:$0xff]
    %v5627 = vld [vmem:[%s6 + $0xb0] sm:$0xff]
    %v5628 = vld [vmem:[%s6 + $0xb8] sm:$0xff]
    %v5629 = vld [vmem:[%s6 + $0xc0] sm:$0xff]
    %v5630 = vld [vmem:[%s6 + $0xc8] sm:$0xff]
    %v5631 = vld [vmem:[%s6 + $0xd0] sm:$0xff]
    %v5632 = vld [vmem:[%s6 + $0xd8] sm:$0xff]
    %v5633 = vld [vmem:[%s6 + $0xe0] sm:$0xff]
    %v5634 = vld [vmem:[%s6 + $0xe8] sm:$0xff]
    %v5635 = vld [vmem:[%s6 + $0xf0] sm:$0xff]
    %v5636 = vld [vmem:[%s6 + $0xf8] sm:$0xff]
    %v5637 = vld [vmem:[%s6 + $0x100] sm:$0xff]
    %v5638 = vld [vmem:[%s6 + $0x108] sm:$0xff]
    %v5639 = vld [vmem:[%s6 + $0x110] sm:$0xff]
    %v5640 = vld [vmem:[%s6 + $0x118] sm:$0xff]
    %v5641 = vld [vmem:[%s6 + $0x120] sm:$0xff]
    %v5642 = vld [vmem:[%s6 + $0x128] sm:$0xff]
    %v5643 = vld [vmem:[%s6 + $0x130] sm:$0xff]
    %v5644 = vld [vmem:[%s6 + $0x138] sm:$0xff]
    %v5645 = vld [vmem:[%s6 + $0x140] sm:$0xff]
    %v5646 = vld [vmem:[%s6 + $0x148] sm:$0xff]
    %v5647 = vld [vmem:[%s6 + $0x150] sm:$0xff]
    %v5648 = vld [vmem:[%s6 + $0x158] sm:$0xff]
    %v5649 = vld [vmem:[%s6 + $0x160] sm:$0xff]
    %v5650 = vld [vmem:[%s6 + $0x168] sm:$0xff]
    %v5651 = vld [vmem:[%s6 + $0x170] sm:$0xff]
    %v5652 = vld [vmem:[%s6 + $0x178] sm:$0xff]
    %v5653 = vld [vmem:[%s6 + $0x180] sm:$0xff]
    %v5654 = vld [vmem:[%s6 + $0x188] sm:$0xff]
    %v5655 = vld [vmem:[%s6 + $0x190] sm:$0xff]
    %v5656 = vld [vmem:[%s6 + $0x198] sm:$0xff]
    %v5657 = vld [vmem:[%s6 + $0x1a0] sm:$0xff]
    %v5658 = vld [vmem:[%s6 + $0x1a8] sm:$0xff]
    %v5659 = vld [vmem:[%s6 + $0x1b0] sm:$0xff]
    %v5660 = vld [vmem:[%s6 + $0x1b8] sm:$0xff]
    %v5661 = vld [vmem:[%s6 + $0x1c0] sm:$0xff]
    %v5662 = vld [vmem:[%s6 + $0x1c8] sm:$0xff]
    %v5663 = vld [vmem:[%s6 + $0x1d0] sm:$0xff]
    %v5664 = vld [vmem:[%s6 + $0x1d8] sm:$0xff]
    %v5665 = vld [vmem:[%s6 + $0x1e0] sm:$0xff]
    %v5666 = vld [vmem:[%s6 + $0x1e8] sm:$0xff]
    %v5667 = vld [vmem:[%s6 + $0x1f0] sm:$0xff]
    %v5668 = vld [vmem:[%s6 + $0x1f8] sm:$0xff]
    %v5669 = vld [vmem:[%s7] sm:$0xff]
    %v5670 = vld [vmem:[%s7 + $0x8] sm:$0xff]
    %v5671 = vld [vmem:[%s7 + $0x10] sm:$0xff]
    %v5672 = vld [vmem:[%s7 + $0x18] sm:$0xff]
    %v5737 = vunpack.c.l.b16 %v5605
    %v5738 = vunpack.c.h.b16 %v5605
    %v5739 = vunpack.c.l.b16 %v5606
    %v5740 = vunpack.c.h.b16 %v5606
    %v5741 = vunpack.c.l.b16 %v5607
    %v5742 = vunpack.c.h.b16 %v5607
    %v5743 = vunpack.c.l.b16 %v5608
    %v5744 = vunpack.c.h.b16 %v5608
    %v5745 = vunpack.c.l.b16 %v5609
    %v5746 = vunpack.c.h.b16 %v5609
    %v5747 = vunpack.c.l.b16 %v5610
    %v5748 = vunpack.c.h.b16 %v5610
    %v5749 = vunpack.c.l.b16 %v5611
    %v5750 = vunpack.c.h.b16 %v5611
    %v5751 = vunpack.c.l.b16 %v5612
    %v5752 = vunpack.c.h.b16 %v5612
    %v5753 = vunpack.c.l.b16 %v5613
    %v5754 = vunpack.c.h.b16 %v5613
    %v5755 = vunpack.c.l.b16 %v5614
    %v5756 = vunpack.c.h.b16 %v5614
    %v5757 = vunpack.c.l.b16 %v5615
    %v5758 = vunpack.c.h.b16 %v5615
    %v5759 = vunpack.c.l.b16 %v5616
    %v5760 = vunpack.c.h.b16 %v5616
    %v5761 = vunpack.c.l.b16 %v5617
    %v5762 = vunpack.c.h.b16 %v5617
    %v5763 = vunpack.c.l.b16 %v5618
    %v5764 = vunpack.c.h.b16 %v5618
    %v5765 = vunpack.c.l.b16 %v5619
    %v5766 = vunpack.c.h.b16 %v5619
    %v5767 = vunpack.c.l.b16 %v5620
    %v5768 = vunpack.c.h.b16 %v5620
    %v5769 = vunpack.c.l.b16 %v5621
    %v5770 = vunpack.c.h.b16 %v5621
    %v5771 = vunpack.c.l.b16 %v5622
    %v5772 = vunpack.c.h.b16 %v5622
    %v5773 = vunpack.c.l.b16 %v5623
    %v5774 = vunpack.c.h.b16 %v5623
    %v5775 = vunpack.c.l.b16 %v5624
    %v5776 = vunpack.c.h.b16 %v5624
    %v5777 = vunpack.c.l.b16 %v5625
    %v5778 = vunpack.c.h.b16 %v5625
    %v5779 = vunpack.c.l.b16 %v5626
    %v5780 = vunpack.c.h.b16 %v5626
    %v5781 = vunpack.c.l.b16 %v5627
    %v5782 = vunpack.c.h.b16 %v5627
    %v5783 = vunpack.c.l.b16 %v5628
    %v5784 = vunpack.c.h.b16 %v5628
    %v5785 = vunpack.c.l.b16 %v5629
    %v5786 = vunpack.c.h.b16 %v5629
    %v5787 = vunpack.c.l.b16 %v5630
    %v5788 = vunpack.c.h.b16 %v5630
    %v5789 = vunpack.c.l.b16 %v5631
    %v5790 = vunpack.c.h.b16 %v5631
    %v5791 = vunpack.c.l.b16 %v5632
    %v5792 = vunpack.c.h.b16 %v5632
    %v5793 = vunpack.c.l.b16 %v5633
    %v5794 = vunpack.c.h.b16 %v5633
    %v5795 = vunpack.c.l.b16 %v5634
    %v5796 = vunpack.c.h.b16 %v5634
    %v5797 = vunpack.c.l.b16 %v5635
    %v5798 = vunpack.c.h.b16 %v5635
    %v5799 = vunpack.c.l.b16 %v5636
    %v5800 = vunpack.c.h.b16 %v5636
    %v5801 = vunpack.c.l.b16 %v5637
    %v5802 = vunpack.c.h.b16 %v5637
    %v5803 = vunpack.c.l.b16 %v5638
    %v5804 = vunpack.c.h.b16 %v5638
    %v5805 = vunpack.c.l.b16 %v5639
    %v5806 = vunpack.c.h.b16 %v5639
    %v5807 = vunpack.c.l.b16 %v5640
    %v5808 = vunpack.c.h.b16 %v5640
    %v5809 = vunpack.c.l.b16 %v5641
    %v5810 = vunpack.c.h.b16 %v5641
    %v5811 = vunpack.c.l.b16 %v5642
    %v5812 = vunpack.c.h.b16 %v5642
    %v5813 = vunpack.c.l.b16 %v5643
    %v5814 = vunpack.c.h.b16 %v5643
    %v5815 = vunpack.c.l.b16 %v5644
    %v5816 = vunpack.c.h.b16 %v5644
    %v5817 = vunpack.c.l.b16 %v5645
    %v5818 = vunpack.c.h.b16 %v5645
    %v5819 = vunpack.c.l.b16 %v5646
    %v5820 = vunpack.c.h.b16 %v5646
    %v5821 = vunpack.c.l.b16 %v5647
    %v5822 = vunpack.c.h.b16 %v5647
    %v5823 = vunpack.c.l.b16 %v5648
    %v5824 = vunpack.c.h.b16 %v5648
    %v5825 = vunpack.c.l.b16 %v5649
    %v5826 = vunpack.c.h.b16 %v5649
    %v5827 = vunpack.c.l.b16 %v5650
    %v5828 = vunpack.c.h.b16 %v5650
    %v5829 = vunpack.c.l.b16 %v5651
    %v5830 = vunpack.c.h.b16 %v5651
    %v5831 = vunpack.c.l.b16 %v5652
    %v5832 = vunpack.c.h.b16 %v5652
    %v5833 = vunpack.c.l.b16 %v5653
    %v5834 = vunpack.c.h.b16 %v5653
    %v5835 = vunpack.c.l.b16 %v5654
    %v5836 = vunpack.c.h.b16 %v5654
    %v5837 = vunpack.c.l.b16 %v5655
    %v5838 = vunpack.c.h.b16 %v5655
    %v5839 = vunpack.c.l.b16 %v5656
    %v5840 = vunpack.c.h.b16 %v5656
    %v5841 = vunpack.c.l.b16 %v5657
    %v5842 = vunpack.c.h.b16 %v5657
    %v5843 = vunpack.c.l.b16 %v5658
    %v5844 = vunpack.c.h.b16 %v5658
    %v5845 = vunpack.c.l.b16 %v5659
    %v5846 = vunpack.c.h.b16 %v5659
    %v5847 = vunpack.c.l.b16 %v5660
    %v5848 = vunpack.c.h.b16 %v5660
    %v5849 = vunpack.c.l.b16 %v5661
    %v5850 = vunpack.c.h.b16 %v5661
    %v5851 = vunpack.c.l.b16 %v5662
    %v5852 = vunpack.c.h.b16 %v5662
    %v5853 = vunpack.c.l.b16 %v5663
    %v5854 = vunpack.c.h.b16 %v5663
    %v5855 = vunpack.c.l.b16 %v5664
    %v5856 = vunpack.c.h.b16 %v5664
    %v5857 = vunpack.c.l.b16 %v5665
    %v5858 = vunpack.c.h.b16 %v5665
    %v5859 = vunpack.c.l.b16 %v5666
    %v5860 = vunpack.c.h.b16 %v5666
    %v5861 = vunpack.c.l.b16 %v5667
    %v5862 = vunpack.c.h.b16 %v5667
    %v5863 = vunpack.c.l.b16 %v5668
    %v5864 = vunpack.c.h.b16 %v5668
    %v5865 = vpack.c.b16 %v5741, %v5737
    %v5866 = vpack.c.b16 %v5742, %v5738
    %v5867 = vpack.c.b16 %v5743, %v5739
    %v5868 = vpack.c.b16 %v5744, %v5740
    %v5869 = vpack.c.b16 %v5749, %v5745
    %v5870 = vpack.c.b16 %v5750, %v5746
    %v5871 = vpack.c.b16 %v5751, %v5747
    %v5872 = vpack.c.b16 %v5752, %v5748
    %v5873 = vpack.c.b16 %v5757, %v5753
    %v5874 = vpack.c.b16 %v5758, %v5754
    %v5875 = vpack.c.b16 %v5759, %v5755
    %v5876 = vpack.c.b16 %v5760, %v5756
    %v5877 = vpack.c.b16 %v5765, %v5761
    %v5878 = vpack.c.b16 %v5766, %v5762
    %v5879 = vpack.c.b16 %v5767, %v5763
    %v5880 = vpack.c.b16 %v5768, %v5764
    %v5881 = vpack.c.b16 %v5773, %v5769
    %v5882 = vpack.c.b16 %v5774, %v5770
    %v5883 = vpack.c.b16 %v5775, %v5771
    %v5884 = vpack.c.b16 %v5776, %v5772
    %v5885 = vpack.c.b16 %v5781, %v5777
    %v5886 = vpack.c.b16 %v5782, %v5778
    %v5887 = vpack.c.b16 %v5783, %v5779
    %v5888 = vpack.c.b16 %v5784, %v5780
    %v5889 = vpack.c.b16 %v5789, %v5785
    %v5890 = vpack.c.b16 %v5790, %v5786
    %v5891 = vpack.c.b16 %v5791, %v5787
    %v5892 = vpack.c.b16 %v5792, %v5788
    %v5893 = vpack.c.b16 %v5797, %v5793
    %v5894 = vpack.c.b16 %v5798, %v5794
    %v5895 = vpack.c.b16 %v5799, %v5795
    %v5896 = vpack.c.b16 %v5800, %v5796
    %v5897 = vpack.c.b16 %v5805, %v5801
    %v5898 = vpack.c.b16 %v5806, %v5802
    %v5899 = vpack.c.b16 %v5807, %v5803
    %v5900 = vpack.c.b16 %v5808, %v5804
    %v5901 = vpack.c.b16 %v5813, %v5809
    %v5902 = vpack.c.b16 %v5814, %v5810
    %v5903 = vpack.c.b16 %v5815, %v5811
    %v5904 = vpack.c.b16 %v5816, %v5812
    %v5905 = vpack.c.b16 %v5821, %v5817
    %v5906 = vpack.c.b16 %v5822, %v5818
    %v5907 = vpack.c.b16 %v5823, %v5819
    %v5908 = vpack.c.b16 %v5824, %v5820
    %v5909 = vpack.c.b16 %v5829, %v5825
    %v5910 = vpack.c.b16 %v5830, %v5826
    %v5911 = vpack.c.b16 %v5831, %v5827
    %v5912 = vpack.c.b16 %v5832, %v5828
    %v5913 = vpack.c.b16 %v5837, %v5833
    %v5914 = vpack.c.b16 %v5838, %v5834
    %v5915 = vpack.c.b16 %v5839, %v5835
    %v5916 = vpack.c.b16 %v5840, %v5836
    %v5917 = vpack.c.b16 %v5845, %v5841
    %v5918 = vpack.c.b16 %v5846, %v5842
    %v5919 = vpack.c.b16 %v5847, %v5843
    %v5920 = vpack.c.b16 %v5848, %v5844
    %v5921 = vpack.c.b16 %v5853, %v5849
    %v5922 = vpack.c.b16 %v5854, %v5850
    %v5923 = vpack.c.b16 %v5855, %v5851
    %v5924 = vpack.c.b16 %v5856, %v5852
    %v5925 = vpack.c.b16 %v5861, %v5857
    %v5926 = vpack.c.b16 %v5862, %v5858
    %v5927 = vpack.c.b16 %v5863, %v5859
    %v5928 = vpack.c.b16 %v5864, %v5860
    %5993 = vmatprep.subr.bf16.mxu0 %v5866
    %5994 = vmatpush1.bf16.msra.mxu0 %v5865
    %5995 = vmatprep.subr.bf16.mxu0 %v5870
    %5996 = vmatpush1.bf16.msra.mxu0 %v5869
    %5997 = vmatprep.subr.bf16.mxu0 %v5874
    %5998 = vmatpush1.bf16.msra.mxu0 %v5873
    %5999 = vmatprep.subr.bf16.mxu0 %v5878
    %6000 = vmatpush1.bf16.msra.mxu0 %v5877
    %6001 = vmatprep.subr.bf16.mxu0 %v5882
    %6002 = vmatpush1.bf16.msra.mxu0 %v5881
    %6003 = vmatprep.subr.bf16.mxu0 %v5886
    %6004 = vmatpush1.bf16.msra.mxu0 %v5885
    %6005 = vmatprep.subr.bf16.mxu0 %v5890
    %6006 = vmatpush1.bf16.msra.mxu0 %v5889
    %6007 = vmatprep.subr.bf16.mxu0 %v5894
    %6008 = vmatpush1.bf16.msra.mxu0 %v5893
    %6009 = vmatprep.subr.bf16.mxu0 %v5898
    %6010 = vmatpush1.bf16.msra.mxu0 %v5897
    %6011 = vmatprep.subr.bf16.mxu0 %v5902
    %6012 = vmatpush1.bf16.msra.mxu0 %v5901
    %6013 = vmatprep.subr.bf16.mxu0 %v5906
    %6014 = vmatpush1.bf16.msra.mxu0 %v5905
    %6015 = vmatprep.subr.bf16.mxu0 %v5910
    %6016 = vmatpush1.bf16.msra.mxu0 %v5909
    %6017 = vmatprep.subr.bf16.mxu0 %v5914
    %6018 = vmatpush1.bf16.msra.mxu0 %v5913
    %6019 = vmatprep.subr.bf16.mxu0 %v5918
    %6020 = vmatpush1.bf16.msra.mxu0 %v5917
    %6021 = vmatprep.subr.bf16.mxu0 %v5922
    %6022 = vmatpush1.bf16.msra.mxu0 %v5921
    %6023 = vmatprep.subr.bf16.mxu0 %v5926
    %6024 = vmatpush1.bf16.msra.mxu0 %v5925
    %6025 = vmatprep.mubr.bf16.mxu0 %v5604
    %6026 = vmatmul.mubr.bf16.gmra.mrb[0].mxu0 %v5603
    %v6027 = vpop.f32.mrb[0].mxu0
    %v6028 = vadd.f32 %v5669, %v6027
    %v6029 = vpop.f32.mrb[0].mxu0
    %v6030 = vadd.f32 %v5670, %v6029
    %v6031 = vpop.f32.mrb[0].mxu0
    %v6032 = vpop.f32.mrb[0].mxu0
    %6033 = vdwg.mxu0
    %6034 = vmatprep.subr.bf16.mxu0 %v5868
    %6035 = vmatpush1.bf16.msra.mxu0 %v5867
    %6036 = vmatprep.subr.bf16.mxu0 %v5872
    %6037 = vmatpush1.bf16.msra.mxu0 %v5871
    %6038 = vmatprep.subr.bf16.mxu0 %v5876
    %6039 = vmatpush1.bf16.msra.mxu0 %v5875
    %6040 = vmatprep.subr.bf16.mxu0 %v5880
    %6041 = vmatpush1.bf16.msra.mxu0 %v5879
    %6042 = vmatprep.subr.bf16.mxu0 %v5884
    %6043 = vmatpush1.bf16.msra.mxu0 %v5883
    %6044 = vmatprep.subr.bf16.mxu0 %v5888
    %6045 = vmatpush1.bf16.msra.mxu0 %v5887
    %6046 = vmatprep.subr.bf16.mxu0 %v5892
    %6047 = vmatpush1.bf16.msra.mxu0 %v5891
    %6048 = vmatprep.subr.bf16.mxu0 %v5896
    %6049 = vmatpush1.bf16.msra.mxu0 %v5895
    %6050 = vmatprep.subr.bf16.mxu0 %v5900
    %6051 = vmatpush1.bf16.msra.mxu0 %v5899
    %6052 = vmatprep.subr.bf16.mxu0 %v5904
    %6053 = vmatpush1.bf16.msra.mxu0 %v5903
    %6054 = vmatprep.subr.bf16.mxu0 %v5908
    %6055 = vmatpush1.bf16.msra.mxu0 %v5907
    %6056 = vmatprep.subr.bf16.mxu0 %v5912
    %6057 = vmatpush1.bf16.msra.mxu0 %v5911
    %6058 = vmatprep.subr.bf16.mxu0 %v5916
    %6059 = vmatpush1.bf16.msra.mxu0 %v5915
    %6060 = vmatprep.subr.bf16.mxu0 %v5920
    %6061 = vmatpush1.bf16.msra.mxu0 %v5919
    %6062 = vmatprep.subr.bf16.mxu0 %v5924
    %6063 = vmatpush1.bf16.msra.mxu0 %v5923
    %6064 = vmatprep.subr.bf16.mxu0 %v5928
    %6065 = vmatpush1.bf16.msra.mxu0 %v5927
    %6066 = vmatprep.mubr.bf16.mxu0 %v5604
    %6067 = vmatmul.mubr.bf16.gmra.mrb[0].mxu0 %v5603
    %v6068 = vpop.f32.mrb[0].mxu0
    %v6069 = vadd.f32 %v5671, %v6068
    %v6070 = vpop.f32.mrb[0].mxu0
    %v6071 = vadd.f32 %v5672, %v6070
    %v6072 = vpop.f32.mrb[0].mxu0
    %v6073 = vpop.f32.mrb[0].mxu0
    %6074 = vdwg.mxu0
    %v6075 = vxor.u32 %v6028, 2147483648
    %v6076 = vmul.f32 %v6075, 1.442695
    %v6077 = vpow.pop %v6076
    %v6078 = vadd.f32 %v6077, 1.0
    %v6079 = vrcp.pop %v6078
    %v6080 = vmul.f32 1.0, %v6079
    %v6081 = vxor.u32 %v6030, 2147483648
    %v6082 = vmul.f32 %v6081, 1.442695
    %v6083 = vpow.pop %v6082
    %v6084 = vadd.f32 %v6083, 1.0
    %v6085 = vrcp.pop %v6084
    %v6086 = vmul.f32 1.0, %v6085
    %v6087 = vtanh.pop %v6069
    %v6088 = vxor.u32 %v6071, 2147483648
    %v6089 = vmul.f32 %v6088, 1.442695
    %v6090 = vpow.pop %v6089
    %v6091 = vadd.f32 %v6090, 1.0
    %v6092 = vrcp.pop %v6091
    %v6093 = vmul.f32 1.0, %v6092
    %v6094 = vld [vmem:[#allocation3] sm:$0xff]
    %v6095 = vmul.f32 %v6086, %v6094
    %v6096 = vmul.f32 %v6080, %v6087
    %v6097 = vadd.f32 %v6095, %v6096
    %v6098 = vtanh.pop %v6097
    %v6099 = vmul.f32 %v6093, %v6098
    %6100 = vst [vmem:[#allocation2 + $0x8] sm:$0xff] %v6099
    %6101 = vst [vmem:[#allocation3] sm:$0xff] %v6097
    %v6102 = vpack.c.bf16 %v6099, %v6099
    %v6103 = vld [vmem:[%s8] sm:$0xf]
    %v6104 = vld [vmem:[%s8 + $0x4] sm:$0xf]
    %v6105 = vld [vmem:[%s8 + $0x8] sm:$0xf]
    %v6106 = vld [vmem:[%s8 + $0xc] sm:$0xf]
    %v6107 = vld [vmem:[%s8 + $0x10] sm:$0xf]
    %v6108 = vld [vmem:[%s8 + $0x14] sm:$0xf]
    %v6109 = vld [vmem:[%s8 + $0x18] sm:$0xf]
    %v6110 = vld [vmem:[%s8 + $0x1c] sm:$0xf]
    %v6111 = vld [vmem:[%s8 + $0x20] sm:$0xf]
    %v6112 = vld [vmem:[%s8 + $0x24] sm:$0xf]
    %v6113 = vld [vmem:[%s8 + $0x28] sm:$0xf]
    %v6114 = vld [vmem:[%s8 + $0x2c] sm:$0xf]
    %v6115 = vld [vmem:[%s8 + $0x30] sm:$0xf]
    %v6116 = vld [vmem:[%s8 + $0x34] sm:$0xf]
    %v6117 = vld [vmem:[%s8 + $0x38] sm:$0xf]
    %v6118 = vld [vmem:[%s8 + $0x3c] sm:$0xf]
    %v6119 = vld [vmem:[%s9] sm:$0xff]
    %v6136 = vunpack.c.l.b16 %v6103
    %v6137 = vunpack.c.l.b16 %v6104
    %v6138 = vunpack.c.l.b16 %v6105
    %v6139 = vunpack.c.l.b16 %v6106
    %v6140 = vunpack.c.l.b16 %v6107
    %v6141 = vunpack.c.l.b16 %v6108
    %v6142 = vunpack.c.l.b16 %v6109
    %v6143 = vunpack.c.l.b16 %v6110
    %v6144 = vunpack.c.l.b16 %v6111
    %v6145 = vunpack.c.l.b16 %v6112
    %v6146 = vunpack.c.l.b16 %v6113
    %v6147 = vunpack.c.l.b16 %v6114
    %v6148 = vunpack.c.l.b16 %v6115
    %v6149 = vunpack.c.l.b16 %v6116
    %v6150 = vunpack.c.l.b16 %v6117
    %v6151 = vunpack.c.l.b16 %v6118
    %v6152 = vpack.c.b16 %v6137, %v6136
    %v6153 = vpack.c.b16 %v6139, %v6138
    %v6154 = vpack.c.b16 %v6141, %v6140
    %v6155 = vpack.c.b16 %v6143, %v6142
    %v6156 = vpack.c.b16 %v6145, %v6144
    %v6157 = vpack.c.b16 %v6147, %v6146
    %v6158 = vpack.c.b16 %v6149, %v6148
    %v6159 = vpack.c.b16 %v6151, %v6150
    %6168 = vmatprep.subr.bf16.mxu0 0
    %6169 = vmatpush1.bf16.msra.mxu0 %v6152
    %6170 = vmatprep.subr.bf16.mxu0 0
    %6171 = vmatpush1.bf16.msra.mxu0 %v6153
    %6172 = vmatprep.subr.bf16.mxu0 0
    %6173 = vmatpush1.bf16.msra.mxu0 %v6154
    %6174 = vmatprep.subr.bf16.mxu0 0
    %6175 = vmatpush1.bf16.msra.mxu0 %v6155
    %6176 = vmatprep.subr.bf16.mxu0 0
    %6177 = vmatpush1.bf16.msra.mxu0 %v6156
    %6178 = vmatprep.subr.bf16.mxu0 0
    %6179 = vmatpush1.bf16.msra.mxu0 %v6157
    %6180 = vmatprep.subr.bf16.mxu0 0
    %6181 = vmatpush1.bf16.msra.mxu0 %v6158
    %6182 = vmatprep.subr.bf16.mxu0 0
    %6183 = vmatpush1.bf16.msra.mxu0 %v6159
    %6184 = vmatprep.subr.bf16.mxu0 0
    %6185 = vmatpush1.bf16.msra.mxu0 0
    %6186 = vmatprep.subr.bf16.mxu0 0
    %6187 = vmatpush1.bf16.msra.mxu0 0
    %6188 = vmatprep.subr.bf16.mxu0 0
    %6189 = vmatpush1.bf16.msra.mxu0 0
    %6190 = vmatprep.subr.bf16.mxu0 0
    %6191 = vmatpush1.bf16.msra.mxu0 0
    %6192 = vmatprep.subr.bf16.mxu0 0
    %6193 = vmatpush1.bf16.msra.mxu0 0
    %6194 = vmatprep.subr.bf16.mxu0 0
    %6195 = vmatpush1.bf16.msra.mxu0 0
    %6196 = vmatprep.subr.bf16.mxu0 0
    %6197 = vmatpush1.bf16.msra.mxu0 0
    %6198 = vmatprep.subr.bf16.mxu0 0
    %6199 = vmatpush1.bf16.msra.mxu0 0
    %6200 = vmatprep.mubr.bf16.mxu0 0
    %6201 = vmatmul.mubr.bf16.gmra.mrb[0].mxu0 %v6102
    %v6202 = vpop.f32.mrb[0].mxu0
    %v6203 = vadd.f32 %v6119, %v6202
    %v6204 = vpop.f32.mrb[0].mxu0
    %v6205 = vpop.f32.mrb[0].mxu0
    %v6206 = vpop.f32.mrb[0].mxu0
    %6207 = vdwg.mxu0
    %s6208 = scalar_lea.vmem [#allocation8], 24
    %6209 = vst [vmem:[%s6208] sm:$0xff] %v6203
    %s6210 = sld [smem:[#allocation5 + $0x3]]
    %p6211 = scmp.eq.s32.totalorder %s6210, 0
    // Predicated region
    $region70: #{seq2seq_forward.1} parent=1 // pred_check
      %p6212 = pneg %p6211
    $region71: #{seq2seq_forward.1} parent=1 // pred_check_branch
      %6214 = sbr.rel (%p6212) target = $region73
    $region72: #{seq2seq_forward.1} parent=1 // pred_region
      %v6215 = vlaneseq
      %v6216 = vand.u32 %v6215, 127
      %6217 = vmax.xlane.f32.xlu0 %v6203
      %v6218 = vpop.xlane.xlu0 %6217
      %vm6219 = vcmp.eq.f32.partialorder %v6203, %v6218
      %v6220 = vsel %vm6219, %v6216, 128
      %v6221 = vand.u32 %v6220, 65535
      %v6222 = vshra.s32 %v6220, 16
      %v6223 = vcvt.s32.f32 %v6221
      %v6224 = vcvt.s32.f32 %v6222
      %6225 = vmin.xlane.f32.xlu0 %v6224
      %v6226 = vpop.xlane.xlu0 %6225
      %vm6227 = vcmp.eq.f32.partialorder %v6224, %v6226
      %v6228 = vsel %vm6227, %v6223, inf
      %6229 = vmin.xlane.f32.xlu0 %v6228
      %v6230 = vpop.xlane.xlu0 %6229
      %v6231 = vcvt.f32.s32 %v6230
      %v6232 = vcvt.f32.s32 %v6226
      %v6233 = vshll.u32 %v6232, 16
      %v6234 = vadd.s32 %v6233, %v6231
      %vm6235 = vcmp.eq.s32.totalorder %v6216, %v6234
      %v6236 = vsel %vm6235, 1, 0
      %v6237 = vcvt.s32.f32 %v6236
      %v6238 = vpack.c.bf16 %v6237, %v6237
      %v6239 = vld [vmem:[%s3] sm:$0xf]
      %v6240 = vld [vmem:[%s3 + $0x4] sm:$0xf]
      %v6241 = vld [vmem:[%s3 + $0x8] sm:$0xf]
      %v6242 = vld [vmem:[%s3 + $0xc] sm:$0xf]
      %v6243 = vld [vmem:[%s3 + $0x10] sm:$0xf]
      %v6244 = vld [vmem:[%s3 + $0x14] sm:$0xf]
      %v6245 = vld [vmem:[%s3 + $0x18] sm:$0xf]
      %v6246 = vld [vmem:[%s3 + $0x1c] sm:$0xf]
      %v6247 = vld [vmem:[%s3 + $0x20] sm:$0xf]
      %v6248 = vld [vmem:[%s3 + $0x24] sm:$0xf]
      %v6249 = vld [vmem:[%s3 + $0x28] sm:$0xf]
      %v6250 = vld [vmem:[%s3 + $0x2c] sm:$0xf]
      %v6251 = vld [vmem:[%s3 + $0x30] sm:$0xf]
      %v6252 = vld [vmem:[%s3 + $0x34] sm:$0xf]
      %v6253 = vld [vmem:[%s3 + $0x38] sm:$0xf]
      %v6254 = vld [vmem:[%s3 + $0x3c] sm:$0xf]
      %v6271 = vunpack.c.l.b16 %v6239
      %v6272 = vunpack.c.l.b16 %v6240
      %v6273 = vunpack.c.l.b16 %v6241
      %v6274 = vunpack.c.l.b16 %v6242
      %v6275 = vunpack.c.l.b16 %v6243
      %v6276 = vunpack.c.l.b16 %v6244
      %v6277 = vunpack.c.l.b16 %v6245
      %v6278 = vunpack.c.l.b16 %v6246
      %v6279 = vunpack.c.l.b16 %v6247
      %v6280 = vunpack.c.l.b16 %v6248
      %v6281 = vunpack.c.l.b16 %v6249
      %v6282 = vunpack.c.l.b16 %v6250
      %v6283 = vunpack.c.l.b16 %v6251
      %v6284 = vunpack.c.l.b16 %v6252
      %v6285 = vunpack.c.l.b16 %v6253
      %v6286 = vunpack.c.l.b16 %v6254
      %v6287 = vpack.c.b16 %v6272, %v6271
      %v6288 = vpack.c.b16 %v6274, %v6273
      %v6289 = vpack.c.b16 %v6276, %v6275
      %v6290 = vpack.c.b16 %v6278, %v6277
      %v6291 = vpack.c.b16 %v6280, %v6279
      %v6292 = vpack.c.b16 %v6282, %v6281
      %v6293 = vpack.c.b16 %v6284, %v6283
      %v6294 = vpack.c.b16 %v6286, %v6285
      %6303 = vmatprep.subr.bf16.mxu0 0
      %6304 = vmatpush1.bf16.msra.mxu0 %v6287
      %6305 = vmatprep.subr.bf16.mxu0 0
      %6306 = vmatpush1.bf16.msra.mxu0 %v6288
      %6307 = vmatprep.subr.bf16.mxu0 0
      %6308 = vmatpush1.bf16.msra.mxu0 %v6289
      %6309 = vmatprep.subr.bf16.mxu0 0
      %6310 = vmatpush1.bf16.msra.mxu0 %v6290
      %6311 = vmatprep.subr.bf16.mxu0 0
      %6312 = vmatpush1.bf16.msra.mxu0 %v6291
      %6313 = vmatprep.subr.bf16.mxu0 0
      %6314 = vmatpush1.bf16.msra.mxu0 %v6292
      %6315 = vmatprep.subr.bf16.mxu0 0
      %6316 = vmatpush1.bf16.msra.mxu0 %v6293
      %6317 = vmatprep.subr.bf16.mxu0 0
      %6318 = vmatpush1.bf16.msra.mxu0 %v6294
      %6319 = vmatprep.subr.bf16.mxu0 0
      %6320 = vmatpush1.bf16.msra.mxu0 0
      %6321 = vmatprep.subr.bf16.mxu0 0
      %6322 = vmatpush1.bf16.msra.mxu0 0
      %6323 = vmatprep.subr.bf16.mxu0 0
      %6324 = vmatpush1.bf16.msra.mxu0 0
      %6325 = vmatprep.subr.bf16.mxu0 0
      %6326 = vmatpush1.bf16.msra.mxu0 0
      %6327 = vmatprep.subr.bf16.mxu0 0
      %6328 = vmatpush1.bf16.msra.mxu0 0
      %6329 = vmatprep.subr.bf16.mxu0 0
      %6330 = vmatpush1.bf16.msra.mxu0 0
      %6331 = vmatprep.subr.bf16.mxu0 0
      %6332 = vmatpush1.bf16.msra.mxu0 0
      %6333 = vmatprep.subr.bf16.mxu0 0
      %6334 = vmatpush1.bf16.msra.mxu0 0
      %6335 = vmatprep.mubr.bf16.mxu0 0
      %6336 = vmatmul.mubr.bf16.gmra.mrb[0].mxu0 %v6238
      %v6337 = vpop.f32.mrb[0].mxu0
      %v6338 = vadd.f32 0.0, %v6337
      %v6339 = vpop.f32.mrb[0].mxu0
      %v6340 = vpop.f32.mrb[0].mxu0
      %v6341 = vpop.f32.mrb[0].mxu0
      %6342 = vdwg.mxu0
      %6343 = vst [vmem:[#allocation4] sm:$0xff] %v6338
    $region73: #{seq2seq_forward.1} parent=1 // pred_fallthru
      _
    %s6344 = sld [smem:[#allocation5 + $0x3]]
    %p6345 = scmp.ne.s32.totalorder %s6344, 0
    // Predicated region
    $region74: #{seq2seq_forward.1} parent=1 // pred_check
      %p6346 = pneg %p6345
    $region75: #{seq2seq_forward.1} parent=1 // pred_check_branch
      %6348 = sbr.rel (%p6346) target = $region77
    $region76: #{seq2seq_forward.1} parent=1 // pred_region
      %s6349 = scalar_lea.vmem %s2, 24
      %v6350 = vld [vmem:[%s6349] sm:$0xff]
      %6351 = vst [vmem:[#allocation2] sm:$0xff] %v6350
    $region77: #{seq2seq_forward.1} parent=1 // pred_fallthru
      _
    %p6352 = scmp.eq.s32.totalorder %s6344, 0
    // Predicated region
    $region78: #{seq2seq_forward.1} parent=1 // pred_check
      %p6353 = pneg %p6352
    $region79: #{seq2seq_forward.1} parent=1 // pred_check_branch
      %6355 = sbr.rel (%p6353) target = $region81
    $region80: #{seq2seq_forward.1} parent=1 // pred_region
      %v6356 = vld [vmem:[#allocation4] sm:$0xff]
      %6357 = vst [vmem:[#allocation2] sm:$0xff] %v6356
    $region81: #{seq2seq_forward.1} parent=1 // pred_fallthru
      _
    %v6358 = vld [vmem:[#allocation2] sm:$0xff]
    %v6359 = vld [vmem:[#allocation2 + $0x8] sm:$0xff]
    %v6360 = vpack.c.bf16 %v6358, %v6358
    %v6361 = vpack.c.bf16 %v6359, %v6359
    %v6362 = vld [vmem:[%s6] sm:$0xff]
    %v6363 = vld [vmem:[%s6 + $0x8] sm:$0xff]
    %v6364 = vld [vmem:[%s6 + $0x10] sm:$0xff]
    %v6365 = vld [vmem:[%s6 + $0x18] sm:$0xff]
    %v6366 = vld [vmem:[%s6 + $0x20] sm:$0xff]
    %v6367 = vld [vmem:[%s6 + $0x28] sm:$0xff]
    %v6368 = vld [vmem:[%s6 + $0x30] sm:$0xff]
    %v6369 = vld [vmem:[%s6 + $0x38] sm:$0xff]
    %v6370 = vld [vmem:[%s6 + $0x40] sm:$0xff]
    %v6371 = vld [vmem:[%s6 + $0x48] sm:$0xff]
    %v6372 = vld [vmem:[%s6 + $0x50] sm:$0xff]
    %v6373 = vld [vmem:[%s6 + $0x58] sm:$0xff]
    %v6374 = vld [vmem:[%s6 + $0x60] sm:$0xff]
    %v6375 = vld [vmem:[%s6 + $0x68] sm:$0xff]
    %v6376 = vld [vmem:[%s6 + $0x70] sm:$0xff]
    %v6377 = vld [vmem:[%s6 + $0x78] sm:$0xff]
    %v6378 = vld [vmem:[%s6 + $0x80] sm:$0xff]
    %v6379 = vld [vmem:[%s6 + $0x88] sm:$0xff]
    %v6380 = vld [vmem:[%s6 + $0x90] sm:$0xff]
    %v6381 = vld [vmem:[%s6 + $0x98] sm:$0xff]
    %v6382 = vld [vmem:[%s6 + $0xa0] sm:$0xff]
    %v6383 = vld [vmem:[%s6 + $0xa8] sm:$0xff]
    %v6384 = vld [vmem:[%s6 + $0xb0] sm:$0xff]
    %v6385 = vld [vmem:[%s6 + $0xb8] sm:$0xff]
    %v6386 = vld [vmem:[%s6 + $0xc0] sm:$0xff]
    %v6387 = vld [vmem:[%s6 + $0xc8] sm:$0xff]
    %v6388 = vld [vmem:[%s6 + $0xd0] sm:$0xff]
    %v6389 = vld [vmem:[%s6 + $0xd8] sm:$0xff]
    %v6390 = vld [vmem:[%s6 + $0xe0] sm:$0xff]
    %v6391 = vld [vmem:[%s6 + $0xe8] sm:$0xff]
    %v6392 = vld [vmem:[%s6 + $0xf0] sm:$0xff]
    %v6393 = vld [vmem:[%s6 + $0xf8] sm:$0xff]
    %v6394 = vld [vmem:[%s6 + $0x100] sm:$0xff]
    %v6395 = vld [vmem:[%s6 + $0x108] sm:$0xff]
    %v6396 = vld [vmem:[%s6 + $0x110] sm:$0xff]
    %v6397 = vld [vmem:[%s6 + $0x118] sm:$0xff]
    %v6398 = vld [vmem:[%s6 + $0x120] sm:$0xff]
    %v6399 = vld [vmem:[%s6 + $0x128] sm:$0xff]
    %v6400 = vld [vmem:[%s6 + $0x130] sm:$0xff]
    %v6401 = vld [vmem:[%s6 + $0x138] sm:$0xff]
    %v6402 = vld [vmem:[%s6 + $0x140] sm:$0xff]
    %v6403 = vld [vmem:[%s6 + $0x148] sm:$0xff]
    %v6404 = vld [vmem:[%s6 + $0x150] sm:$0xff]
    %v6405 = vld [vmem:[%s6 + $0x158] sm:$0xff]
    %v6406 = vld [vmem:[%s6 + $0x160] sm:$0xff]
    %v6407 = vld [vmem:[%s6 + $0x168] sm:$0xff]
    %v6408 = vld [vmem:[%s6 + $0x170] sm:$0xff]
    %v6409 = vld [vmem:[%s6 + $0x178] sm:$0xff]
    %v6410 = vld [vmem:[%s6 + $0x180] sm:$0xff]
    %v6411 = vld [vmem:[%s6 + $0x188] sm:$0xff]
    %v6412 = vld [vmem:[%s6 + $0x190] sm:$0xff]
    %v6413 = vld [vmem:[%s6 + $0x198] sm:$0xff]
    %v6414 = vld [vmem:[%s6 + $0x1a0] sm:$0xff]
    %v6415 = vld [vmem:[%s6 + $0x1a8] sm:$0xff]
    %v6416 = vld [vmem:[%s6 + $0x1b0] sm:$0xff]
    %v6417 = vld [vmem:[%s6 + $0x1b8] sm:$0xff]
    %v6418 = vld [vmem:[%s6 + $0x1c0] sm:$0xff]
    %v6419 = vld [vmem:[%s6 + $0x1c8] sm:$0xff]
    %v6420 = vld [vmem:[%s6 + $0x1d0] sm:$0xff]
    %v6421 = vld [vmem:[%s6 + $0x1d8] sm:$0xff]
    %v6422 = vld [vmem:[%s6 + $0x1e0] sm:$0xff]
    %v6423 = vld [vmem:[%s6 + $0x1e8] sm:$0xff]
    %v6424 = vld [vmem:[%s6 + $0x1f0] sm:$0xff]
    %v6425 = vld [vmem:[%s6 + $0x1f8] sm:$0xff]
    %v6426 = vld [vmem:[%s7] sm:$0xff]
    %v6427 = vld [vmem:[%s7 + $0x8] sm:$0xff]
    %v6428 = vld [vmem:[%s7 + $0x10] sm:$0xff]
    %v6429 = vld [vmem:[%s7 + $0x18] sm:$0xff]
    %v6494 = vunpack.c.l.b16 %v6362
    %v6495 = vunpack.c.h.b16 %v6362
    %v6496 = vunpack.c.l.b16 %v6363
    %v6497 = vunpack.c.h.b16 %v6363
    %v6498 = vunpack.c.l.b16 %v6364
    %v6499 = vunpack.c.h.b16 %v6364
    %v6500 = vunpack.c.l.b16 %v6365
    %v6501 = vunpack.c.h.b16 %v6365
    %v6502 = vunpack.c.l.b16 %v6366
    %v6503 = vunpack.c.h.b16 %v6366
    %v6504 = vunpack.c.l.b16 %v6367
    %v6505 = vunpack.c.h.b16 %v6367
    %v6506 = vunpack.c.l.b16 %v6368
    %v6507 = vunpack.c.h.b16 %v6368
    %v6508 = vunpack.c.l.b16 %v6369
    %v6509 = vunpack.c.h.b16 %v6369
    %v6510 = vunpack.c.l.b16 %v6370
    %v6511 = vunpack.c.h.b16 %v6370
    %v6512 = vunpack.c.l.b16 %v6371
    %v6513 = vunpack.c.h.b16 %v6371
    %v6514 = vunpack.c.l.b16 %v6372
    %v6515 = vunpack.c.h.b16 %v6372
    %v6516 = vunpack.c.l.b16 %v6373
    %v6517 = vunpack.c.h.b16 %v6373
    %v6518 = vunpack.c.l.b16 %v6374
    %v6519 = vunpack.c.h.b16 %v6374
    %v6520 = vunpack.c.l.b16 %v6375
    %v6521 = vunpack.c.h.b16 %v6375
    %v6522 = vunpack.c.l.b16 %v6376
    %v6523 = vunpack.c.h.b16 %v6376
    %v6524 = vunpack.c.l.b16 %v6377
    %v6525 = vunpack.c.h.b16 %v6377
    %v6526 = vunpack.c.l.b16 %v6378
    %v6527 = vunpack.c.h.b16 %v6378
    %v6528 = vunpack.c.l.b16 %v6379
    %v6529 = vunpack.c.h.b16 %v6379
    %v6530 = vunpack.c.l.b16 %v6380
    %v6531 = vunpack.c.h.b16 %v6380
    %v6532 = vunpack.c.l.b16 %v6381
    %v6533 = vunpack.c.h.b16 %v6381
    %v6534 = vunpack.c.l.b16 %v6382
    %v6535 = vunpack.c.h.b16 %v6382
    %v6536 = vunpack.c.l.b16 %v6383
    %v6537 = vunpack.c.h.b16 %v6383
    %v6538 = vunpack.c.l.b16 %v6384
    %v6539 = vunpack.c.h.b16 %v6384
    %v6540 = vunpack.c.l.b16 %v6385
    %v6541 = vunpack.c.h.b16 %v6385
    %v6542 = vunpack.c.l.b16 %v6386
    %v6543 = vunpack.c.h.b16 %v6386
    %v6544 = vunpack.c.l.b16 %v6387
    %v6545 = vunpack.c.h.b16 %v6387
    %v6546 = vunpack.c.l.b16 %v6388
    %v6547 = vunpack.c.h.b16 %v6388
    %v6548 = vunpack.c.l.b16 %v6389
    %v6549 = vunpack.c.h.b16 %v6389
    %v6550 = vunpack.c.l.b16 %v6390
    %v6551 = vunpack.c.h.b16 %v6390
    %v6552 = vunpack.c.l.b16 %v6391
    %v6553 = vunpack.c.h.b16 %v6391
    %v6554 = vunpack.c.l.b16 %v6392
    %v6555 = vunpack.c.h.b16 %v6392
    %v6556 = vunpack.c.l.b16 %v6393
    %v6557 = vunpack.c.h.b16 %v6393
    %v6558 = vunpack.c.l.b16 %v6394
    %v6559 = vunpack.c.h.b16 %v6394
    %v6560 = vunpack.c.l.b16 %v6395
    %v6561 = vunpack.c.h.b16 %v6395
    %v6562 = vunpack.c.l.b16 %v6396
    %v6563 = vunpack.c.h.b16 %v6396
    %v6564 = vunpack.c.l.b16 %v6397
    %v6565 = vunpack.c.h.b16 %v6397
    %v6566 = vunpack.c.l.b16 %v6398
    %v6567 = vunpack.c.h.b16 %v6398
    %v6568 = vunpack.c.l.b16 %v6399
    %v6569 = vunpack.c.h.b16 %v6399
    %v6570 = vunpack.c.l.b16 %v6400
    %v6571 = vunpack.c.h.b16 %v6400
    %v6572 = vunpack.c.l.b16 %v6401
    %v6573 = vunpack.c.h.b16 %v6401
    %v6574 = vunpack.c.l.b16 %v6402
    %v6575 = vunpack.c.h.b16 %v6402
    %v6576 = vunpack.c.l.b16 %v6403
    %v6577 = vunpack.c.h.b16 %v6403
    %v6578 = vunpack.c.l.b16 %v6404
    %v6579 = vunpack.c.h.b16 %v6404
    %v6580 = vunpack.c.l.b16 %v6405
    %v6581 = vunpack.c.h.b16 %v6405
    %v6582 = vunpack.c.l.b16 %v6406
    %v6583 = vunpack.c.h.b16 %v6406
    %v6584 = vunpack.c.l.b16 %v6407
    %v6585 = vunpack.c.h.b16 %v6407
    %v6586 = vunpack.c.l.b16 %v6408
    %v6587 = vunpack.c.h.b16 %v6408
    %v6588 = vunpack.c.l.b16 %v6409
    %v6589 = vunpack.c.h.b16 %v6409
    %v6590 = vunpack.c.l.b16 %v6410
    %v6591 = vunpack.c.h.b16 %v6410
    %v6592 = vunpack.c.l.b16 %v6411
    %v6593 = vunpack.c.h.b16 %v6411
    %v6594 = vunpack.c.l.b16 %v6412
    %v6595 = vunpack.c.h.b16 %v6412
    %v6596 = vunpack.c.l.b16 %v6413
    %v6597 = vunpack.c.h.b16 %v6413
    %v6598 = vunpack.c.l.b16 %v6414
    %v6599 = vunpack.c.h.b16 %v6414
    %v6600 = vunpack.c.l.b16 %v6415
    %v6601 = vunpack.c.h.b16 %v6415
    %v6602 = vunpack.c.l.b16 %v6416
    %v6603 = vunpack.c.h.b16 %v6416
    %v6604 = vunpack.c.l.b16 %v6417
    %v6605 = vunpack.c.h.b16 %v6417
    %v6606 = vunpack.c.l.b16 %v6418
    %v6607 = vunpack.c.h.b16 %v6418
    %v6608 = vunpack.c.l.b16 %v6419
    %v6609 = vunpack.c.h.b16 %v6419
    %v6610 = vunpack.c.l.b16 %v6420
    %v6611 = vunpack.c.h.b16 %v6420
    %v6612 = vunpack.c.l.b16 %v6421
    %v6613 = vunpack.c.h.b16 %v6421
    %v6614 = vunpack.c.l.b16 %v6422
    %v6615 = vunpack.c.h.b16 %v6422
    %v6616 = vunpack.c.l.b16 %v6423
    %v6617 = vunpack.c.h.b16 %v6423
    %v6618 = vunpack.c.l.b16 %v6424
    %v6619 = vunpack.c.h.b16 %v6424
    %v6620 = vunpack.c.l.b16 %v6425
    %v6621 = vunpack.c.h.b16 %v6425
    %v6622 = vpack.c.b16 %v6498, %v6494
    %v6623 = vpack.c.b16 %v6499, %v6495
    %v6624 = vpack.c.b16 %v6500, %v6496
    %v6625 = vpack.c.b16 %v6501, %v6497
    %v6626 = vpack.c.b16 %v6506, %v6502
    %v6627 = vpack.c.b16 %v6507, %v6503
    %v6628 = vpack.c.b16 %v6508, %v6504
    %v6629 = vpack.c.b16 %v6509, %v6505
    %v6630 = vpack.c.b16 %v6514, %v6510
    %v6631 = vpack.c.b16 %v6515, %v6511
    %v6632 = vpack.c.b16 %v6516, %v6512
    %v6633 = vpack.c.b16 %v6517, %v6513
    %v6634 = vpack.c.b16 %v6522, %v6518
    %v6635 = vpack.c.b16 %v6523, %v6519
    %v6636 = vpack.c.b16 %v6524, %v6520
    %v6637 = vpack.c.b16 %v6525, %v6521
    %v6638 = vpack.c.b16 %v6530, %v6526
    %v6639 = vpack.c.b16 %v6531, %v6527
    %v6640 = vpack.c.b16 %v6532, %v6528
    %v6641 = vpack.c.b16 %v6533, %v6529
    %v6642 = vpack.c.b16 %v6538, %v6534
    %v6643 = vpack.c.b16 %v6539, %v6535
    %v6644 = vpack.c.b16 %v6540, %v6536
    %v6645 = vpack.c.b16 %v6541, %v6537
    %v6646 = vpack.c.b16 %v6546, %v6542
    %v6647 = vpack.c.b16 %v6547, %v6543
    %v6648 = vpack.c.b16 %v6548, %v6544
    %v6649 = vpack.c.b16 %v6549, %v6545
    %v6650 = vpack.c.b16 %v6554, %v6550
    %v6651 = vpack.c.b16 %v6555, %v6551
    %v6652 = vpack.c.b16 %v6556, %v6552
    %v6653 = vpack.c.b16 %v6557, %v6553
    %v6654 = vpack.c.b16 %v6562, %v6558
    %v6655 = vpack.c.b16 %v6563, %v6559
    %v6656 = vpack.c.b16 %v6564, %v6560
    %v6657 = vpack.c.b16 %v6565, %v6561
    %v6658 = vpack.c.b16 %v6570, %v6566
    %v6659 = vpack.c.b16 %v6571, %v6567
    %v6660 = vpack.c.b16 %v6572, %v6568
    %v6661 = vpack.c.b16 %v6573, %v6569
    %v6662 = vpack.c.b16 %v6578, %v6574
    %v6663 = vpack.c.b16 %v6579, %v6575
    %v6664 = vpack.c.b16 %v6580, %v6576
    %v6665 = vpack.c.b16 %v6581, %v6577
    %v6666 = vpack.c.b16 %v6586, %v6582
    %v6667 = vpack.c.b16 %v6587, %v6583
    %v6668 = vpack.c.b16 %v6588, %v6584
    %v6669 = vpack.c.b16 %v6589, %v6585
    %v6670 = vpack.c.b16 %v6594, %v6590
    %v6671 = vpack.c.b16 %v6595, %v6591
    %v6672 = vpack.c.b16 %v6596, %v6592
    %v6673 = vpack.c.b16 %v6597, %v6593
    %v6674 = vpack.c.b16 %v6602, %v6598
    %v6675 = vpack.c.b16 %v6603, %v6599
    %v6676 = vpack.c.b16 %v6604, %v6600
    %v6677 = vpack.c.b16 %v6605, %v6601
    %v6678 = vpack.c.b16 %v6610, %v6606
    %v6679 = vpack.c.b16 %v6611, %v6607
    %v6680 = vpack.c.b16 %v6612, %v6608
    %v6681 = vpack.c.b16 %v6613, %v6609
    %v6682 = vpack.c.b16 %v6618, %v6614
    %v6683 = vpack.c.b16 %v6619, %v6615
    %v6684 = vpack.c.b16 %v6620, %v6616
    %v6685 = vpack.c.b16 %v6621, %v6617
    %6750 = vmatprep.subr.bf16.mxu0 %v6623
    %6751 = vmatpush1.bf16.msra.mxu0 %v6622
    %6752 = vmatprep.subr.bf16.mxu0 %v6627
    %6753 = vmatpush1.bf16.msra.mxu0 %v6626
    %6754 = vmatprep.subr.bf16.mxu0 %v6631
    %6755 = vmatpush1.bf16.msra.mxu0 %v6630
    %6756 = vmatprep.subr.bf16.mxu0 %v6635
    %6757 = vmatpush1.bf16.msra.mxu0 %v6634
    %6758 = vmatprep.subr.bf16.mxu0 %v6639
    %6759 = vmatpush1.bf16.msra.mxu0 %v6638
    %6760 = vmatprep.subr.bf16.mxu0 %v6643
    %6761 = vmatpush1.bf16.msra.mxu0 %v6642
    %6762 = vmatprep.subr.bf16.mxu0 %v6647
    %6763 = vmatpush1.bf16.msra.mxu0 %v6646
    %6764 = vmatprep.subr.bf16.mxu0 %v6651
    %6765 = vmatpush1.bf16.msra.mxu0 %v6650
    %6766 = vmatprep.subr.bf16.mxu0 %v6655
    %6767 = vmatpush1.bf16.msra.mxu0 %v6654
    %6768 = vmatprep.subr.bf16.mxu0 %v6659
    %6769 = vmatpush1.bf16.msra.mxu0 %v6658
    %6770 = vmatprep.subr.bf16.mxu0 %v6663
    %6771 = vmatpush1.bf16.msra.mxu0 %v6662
    %6772 = vmatprep.subr.bf16.mxu0 %v6667
    %6773 = vmatpush1.bf16.msra.mxu0 %v6666
    %6774 = vmatprep.subr.bf16.mxu0 %v6671
    %6775 = vmatpush1.bf16.msra.mxu0 %v6670
    %6776 = vmatprep.subr.bf16.mxu0 %v6675
    %6777 = vmatpush1.bf16.msra.mxu0 %v6674
    %6778 = vmatprep.subr.bf16.mxu0 %v6679
    %6779 = vmatpush1.bf16.msra.mxu0 %v6678
    %6780 = vmatprep.subr.bf16.mxu0 %v6683
    %6781 = vmatpush1.bf16.msra.mxu0 %v6682
    %6782 = vmatprep.mubr.bf16.mxu0 %v6361
    %6783 = vmatmul.mubr.bf16.gmra.mrb[0].mxu0 %v6360
    %v6784 = vpop.f32.mrb[0].mxu0
    %v6785 = vadd.f32 %v6426, %v6784
    %v6786 = vpop.f32.mrb[0].mxu0
    %v6787 = vadd.f32 %v6427, %v6786
    %v6788 = vpop.f32.mrb[0].mxu0
    %v6789 = vpop.f32.mrb[0].mxu0
    %6790 = vdwg.mxu0
    %6791 = vmatprep.subr.bf16.mxu0 %v6625
    %6792 = vmatpush1.bf16.msra.mxu0 %v6624
    %6793 = vmatprep.subr.bf16.mxu0 %v6629
    %6794 = vmatpush1.bf16.msra.mxu0 %v6628
    %6795 = vmatprep.subr.bf16.mxu0 %v6633
    %6796 = vmatpush1.bf16.msra.mxu0 %v6632
    %6797 = vmatprep.subr.bf16.mxu0 %v6637
    %6798 = vmatpush1.bf16.msra.mxu0 %v6636
    %6799 = vmatprep.subr.bf16.mxu0 %v6641
    %6800 = vmatpush1.bf16.msra.mxu0 %v6640
    %6801 = vmatprep.subr.bf16.mxu0 %v6645
    %6802 = vmatpush1.bf16.msra.mxu0 %v6644
    %6803 = vmatprep.subr.bf16.mxu0 %v6649
    %6804 = vmatpush1.bf16.msra.mxu0 %v6648
    %6805 = vmatprep.subr.bf16.mxu0 %v6653
    %6806 = vmatpush1.bf16.msra.mxu0 %v6652
    %6807 = vmatprep.subr.bf16.mxu0 %v6657
    %6808 = vmatpush1.bf16.msra.mxu0 %v6656
    %6809 = vmatprep.subr.bf16.mxu0 %v6661
    %6810 = vmatpush1.bf16.msra.mxu0 %v6660
    %6811 = vmatprep.subr.bf16.mxu0 %v6665
    %6812 = vmatpush1.bf16.msra.mxu0 %v6664
    %6813 = vmatprep.subr.bf16.mxu0 %v6669
    %6814 = vmatpush1.bf16.msra.mxu0 %v6668
    %6815 = vmatprep.subr.bf16.mxu0 %v6673
    %6816 = vmatpush1.bf16.msra.mxu0 %v6672
    %6817 = vmatprep.subr.bf16.mxu0 %v6677
    %6818 = vmatpush1.bf16.msra.mxu0 %v6676
    %6819 = vmatprep.subr.bf16.mxu0 %v6681
    %6820 = vmatpush1.bf16.msra.mxu0 %v6680
    %6821 = vmatprep.subr.bf16.mxu0 %v6685
    %6822 = vmatpush1.bf16.msra.mxu0 %v6684
    %6823 = vmatprep.mubr.bf16.mxu0 %v6361
    %6824 = vmatmul.mubr.bf16.gmra.mrb[0].mxu0 %v6360
    %v6825 = vpop.f32.mrb[0].mxu0
    %v6826 = vadd.f32 %v6428, %v6825
    %v6827 = vpop.f32.mrb[0].mxu0
    %v6828 = vadd.f32 %v6429, %v6827
    %v6829 = vpop.f32.mrb[0].mxu0
    %v6830 = vpop.f32.mrb[0].mxu0
    %6831 = vdwg.mxu0
    %v6832 = vxor.u32 %v6785, 2147483648
    %v6833 = vmul.f32 %v6832, 1.442695
    %v6834 = vpow.pop %v6833
    %v6835 = vadd.f32 %v6834, 1.0
    %v6836 = vrcp.pop %v6835
    %v6837 = vmul.f32 1.0, %v6836
    %v6838 = vxor.u32 %v6787, 2147483648
    %v6839 = vmul.f32 %v6838, 1.442695
    %v6840 = vpow.pop %v6839
    %v6841 = vadd.f32 %v6840, 1.0
    %v6842 = vrcp.pop %v6841
    %v6843 = vmul.f32 1.0, %v6842
    %v6844 = vtanh.pop %v6826
    %v6845 = vxor.u32 %v6828, 2147483648
    %v6846 = vmul.f32 %v6845, 1.442695
    %v6847 = vpow.pop %v6846
    %v6848 = vadd.f32 %v6847, 1.0
    %v6849 = vrcp.pop %v6848
    %v6850 = vmul.f32 1.0, %v6849
    %v6851 = vld [vmem:[#allocation3] sm:$0xff]
    %v6852 = vmul.f32 %v6843, %v6851
    %v6853 = vmul.f32 %v6837, %v6844
    %v6854 = vadd.f32 %v6852, %v6853
    %v6855 = vtanh.pop %v6854
    %v6856 = vmul.f32 %v6850, %v6855
    %6857 = vst [vmem:[#allocation2 + $0x8] sm:$0xff] %v6856
    %6858 = vst [vmem:[#allocation3] sm:$0xff] %v6854
    %v6859 = vpack.c.bf16 %v6856, %v6856
    %v6860 = vld [vmem:[%s8] sm:$0xf]
    %v6861 = vld [vmem:[%s8 + $0x4] sm:$0xf]
    %v6862 = vld [vmem:[%s8 + $0x8] sm:$0xf]
    %v6863 = vld [vmem:[%s8 + $0xc] sm:$0xf]
    %v6864 = vld [vmem:[%s8 + $0x10] sm:$0xf]
    %v6865 = vld [vmem:[%s8 + $0x14] sm:$0xf]
    %v6866 = vld [vmem:[%s8 + $0x18] sm:$0xf]
    %v6867 = vld [vmem:[%s8 + $0x1c] sm:$0xf]
    %v6868 = vld [vmem:[%s8 + $0x20] sm:$0xf]
    %v6869 = vld [vmem:[%s8 + $0x24] sm:$0xf]
    %v6870 = vld [vmem:[%s8 + $0x28] sm:$0xf]
    %v6871 = vld [vmem:[%s8 + $0x2c] sm:$0xf]
    %v6872 = vld [vmem:[%s8 + $0x30] sm:$0xf]
    %v6873 = vld [vmem:[%s8 + $0x34] sm:$0xf]
    %v6874 = vld [vmem:[%s8 + $0x38] sm:$0xf]
    %v6875 = vld [vmem:[%s8 + $0x3c] sm:$0xf]
    %v6876 = vld [vmem:[%s9] sm:$0xff]
    %v6893 = vunpack.c.l.b16 %v6860
    %v6894 = vunpack.c.l.b16 %v6861
    %v6895 = vunpack.c.l.b16 %v6862
    %v6896 = vunpack.c.l.b16 %v6863
    %v6897 = vunpack.c.l.b16 %v6864
    %v6898 = vunpack.c.l.b16 %v6865
    %v6899 = vunpack.c.l.b16 %v6866
    %v6900 = vunpack.c.l.b16 %v6867
    %v6901 = vunpack.c.l.b16 %v6868
    %v6902 = vunpack.c.l.b16 %v6869
    %v6903 = vunpack.c.l.b16 %v6870
    %v6904 = vunpack.c.l.b16 %v6871
    %v6905 = vunpack.c.l.b16 %v6872
    %v6906 = vunpack.c.l.b16 %v6873
    %v6907 = vunpack.c.l.b16 %v6874
    %v6908 = vunpack.c.l.b16 %v6875
    %v6909 = vpack.c.b16 %v6894, %v6893
    %v6910 = vpack.c.b16 %v6896, %v6895
    %v6911 = vpack.c.b16 %v6898, %v6897
    %v6912 = vpack.c.b16 %v6900, %v6899
    %v6913 = vpack.c.b16 %v6902, %v6901
    %v6914 = vpack.c.b16 %v6904, %v6903
    %v6915 = vpack.c.b16 %v6906, %v6905
    %v6916 = vpack.c.b16 %v6908, %v6907
    %6925 = vmatprep.subr.bf16.mxu0 0
    %6926 = vmatpush1.bf16.msra.mxu0 %v6909
    %6927 = vmatprep.subr.bf16.mxu0 0
    %6928 = vmatpush1.bf16.msra.mxu0 %v6910
    %6929 = vmatprep.subr.bf16.mxu0 0
    %6930 = vmatpush1.bf16.msra.mxu0 %v6911
    %6931 = vmatprep.subr.bf16.mxu0 0
    %6932 = vmatpush1.bf16.msra.mxu0 %v6912
    %6933 = vmatprep.subr.bf16.mxu0 0
    %6934 = vmatpush1.bf16.msra.mxu0 %v6913
    %6935 = vmatprep.subr.bf16.mxu0 0
    %6936 = vmatpush1.bf16.msra.mxu0 %v6914
    %6937 = vmatprep.subr.bf16.mxu0 0
    %6938 = vmatpush1.bf16.msra.mxu0 %v6915
    %6939 = vmatprep.subr.bf16.mxu0 0
    %6940 = vmatpush1.bf16.msra.mxu0 %v6916
    %6941 = vmatprep.subr.bf16.mxu0 0
    %6942 = vmatpush1.bf16.msra.mxu0 0
    %6943 = vmatprep.subr.bf16.mxu0 0
    %6944 = vmatpush1.bf16.msra.mxu0 0
    %6945 = vmatprep.subr.bf16.mxu0 0
    %6946 = vmatpush1.bf16.msra.mxu0 0
    %6947 = vmatprep.subr.bf16.mxu0 0
    %6948 = vmatpush1.bf16.msra.mxu0 0
    %6949 = vmatprep.subr.bf16.mxu0 0
    %6950 = vmatpush1.bf16.msra.mxu0 0
    %6951 = vmatprep.subr.bf16.mxu0 0
    %6952 = vmatpush1.bf16.msra.mxu0 0
    %6953 = vmatprep.subr.bf16.mxu0 0
    %6954 = vmatpush1.bf16.msra.mxu0 0
    %6955 = vmatprep.subr.bf16.mxu0 0
    %6956 = vmatpush1.bf16.msra.mxu0 0
    %6957 = vmatprep.mubr.bf16.mxu0 0
    %6958 = vmatmul.mubr.bf16.gmra.mrb[0].mxu0 %v6859
    %v6959 = vpop.f32.mrb[0].mxu0
    %v6960 = vadd.f32 %v6876, %v6959
    %v6961 = vpop.f32.mrb[0].mxu0
    %v6962 = vpop.f32.mrb[0].mxu0
    %v6963 = vpop.f32.mrb[0].mxu0
    %6964 = vdwg.mxu0
    %s6965 = scalar_lea.vmem [#allocation8], 32
    %6966 = vst [vmem:[%s6965] sm:$0xff] %v6960
    %s6967 = sld [smem:[#allocation5 + $0x4]]
    %p6968 = scmp.eq.s32.totalorder %s6967, 0
    // Predicated region
    $region82: #{seq2seq_forward.1} parent=1 // pred_check
      %p6969 = pneg %p6968
    $region83: #{seq2seq_forward.1} parent=1 // pred_check_branch
      %6971 = sbr.rel (%p6969) target = $region85
    $region84: #{seq2seq_forward.1} parent=1 // pred_region
      %v6972 = vlaneseq
      %v6973 = vand.u32 %v6972, 127
      %6974 = vmax.xlane.f32.xlu0 %v6960
      %v6975 = vpop.xlane.xlu0 %6974
      %vm6976 = vcmp.eq.f32.partialorder %v6960, %v6975
      %v6977 = vsel %vm6976, %v6973, 128
      %v6978 = vand.u32 %v6977, 65535
      %v6979 = vshra.s32 %v6977, 16
      %v6980 = vcvt.s32.f32 %v6978
      %v6981 = vcvt.s32.f32 %v6979
      %6982 = vmin.xlane.f32.xlu0 %v6981
      %v6983 = vpop.xlane.xlu0 %6982
      %vm6984 = vcmp.eq.f32.partialorder %v6981, %v6983
      %v6985 = vsel %vm6984, %v6980, inf
      %6986 = vmin.xlane.f32.xlu0 %v6985
      %v6987 = vpop.xlane.xlu0 %6986
      %v6988 = vcvt.f32.s32 %v6987
      %v6989 = vcvt.f32.s32 %v6983
      %v6990 = vshll.u32 %v6989, 16
      %v6991 = vadd.s32 %v6990, %v6988
      %vm6992 = vcmp.eq.s32.totalorder %v6973, %v6991
      %v6993 = vsel %vm6992, 1, 0
      %v6994 = vcvt.s32.f32 %v6993
      %v6995 = vpack.c.bf16 %v6994, %v6994
      %v6996 = vld [vmem:[%s3] sm:$0xf]
      %v6997 = vld [vmem:[%s3 + $0x4] sm:$0xf]
      %v6998 = vld [vmem:[%s3 + $0x8] sm:$0xf]
      %v6999 = vld [vmem:[%s3 + $0xc] sm:$0xf]
      %v7000 = vld [vmem:[%s3 + $0x10] sm:$0xf]
      %v7001 = vld [vmem:[%s3 + $0x14] sm:$0xf]
      %v7002 = vld [vmem:[%s3 + $0x18] sm:$0xf]
      %v7003 = vld [vmem:[%s3 + $0x1c] sm:$0xf]
      %v7004 = vld [vmem:[%s3 + $0x20] sm:$0xf]
      %v7005 = vld [vmem:[%s3 + $0x24] sm:$0xf]
      %v7006 = vld [vmem:[%s3 + $0x28] sm:$0xf]
      %v7007 = vld [vmem:[%s3 + $0x2c] sm:$0xf]
      %v7008 = vld [vmem:[%s3 + $0x30] sm:$0xf]
      %v7009 = vld [vmem:[%s3 + $0x34] sm:$0xf]
      %v7010 = vld [vmem:[%s3 + $0x38] sm:$0xf]
      %v7011 = vld [vmem:[%s3 + $0x3c] sm:$0xf]
      %v7028 = vunpack.c.l.b16 %v6996
      %v7029 = vunpack.c.l.b16 %v6997
      %v7030 = vunpack.c.l.b16 %v6998
      %v7031 = vunpack.c.l.b16 %v6999
      %v7032 = vunpack.c.l.b16 %v7000
      %v7033 = vunpack.c.l.b16 %v7001
      %v7034 = vunpack.c.l.b16 %v7002
      %v7035 = vunpack.c.l.b16 %v7003
      %v7036 = vunpack.c.l.b16 %v7004
      %v7037 = vunpack.c.l.b16 %v7005
      %v7038 = vunpack.c.l.b16 %v7006
      %v7039 = vunpack.c.l.b16 %v7007
      %v7040 = vunpack.c.l.b16 %v7008
      %v7041 = vunpack.c.l.b16 %v7009
      %v7042 = vunpack.c.l.b16 %v7010
      %v7043 = vunpack.c.l.b16 %v7011
      %v7044 = vpack.c.b16 %v7029, %v7028
      %v7045 = vpack.c.b16 %v7031, %v7030
      %v7046 = vpack.c.b16 %v7033, %v7032
      %v7047 = vpack.c.b16 %v7035, %v7034
      %v7048 = vpack.c.b16 %v7037, %v7036
      %v7049 = vpack.c.b16 %v7039, %v7038
      %v7050 = vpack.c.b16 %v7041, %v7040
      %v7051 = vpack.c.b16 %v7043, %v7042
      %7060 = vmatprep.subr.bf16.mxu0 0
      %7061 = vmatpush1.bf16.msra.mxu0 %v7044
      %7062 = vmatprep.subr.bf16.mxu0 0
      %7063 = vmatpush1.bf16.msra.mxu0 %v7045
      %7064 = vmatprep.subr.bf16.mxu0 0
      %7065 = vmatpush1.bf16.msra.mxu0 %v7046
      %7066 = vmatprep.subr.bf16.mxu0 0
      %7067 = vmatpush1.bf16.msra.mxu0 %v7047
      %7068 = vmatprep.subr.bf16.mxu0 0
      %7069 = vmatpush1.bf16.msra.mxu0 %v7048
      %7070 = vmatprep.subr.bf16.mxu0 0
      %7071 = vmatpush1.bf16.msra.mxu0 %v7049
      %7072 = vmatprep.subr.bf16.mxu0 0
      %7073 = vmatpush1.bf16.msra.mxu0 %v7050
      %7074 = vmatprep.subr.bf16.mxu0 0
      %7075 = vmatpush1.bf16.msra.mxu0 %v7051
      %7076 = vmatprep.subr.bf16.mxu0 0
      %7077 = vmatpush1.bf16.msra.mxu0 0
      %7078 = vmatprep.subr.bf16.mxu0 0
      %7079 = vmatpush1.bf16.msra.mxu0 0
      %7080 = vmatprep.subr.bf16.mxu0 0
      %7081 = vmatpush1.bf16.msra.mxu0 0
      %7082 = vmatprep.subr.bf16.mxu0 0
      %7083 = vmatpush1.bf16.msra.mxu0 0
      %7084 = vmatprep.subr.bf16.mxu0 0
      %7085 = vmatpush1.bf16.msra.mxu0 0
      %7086 = vmatprep.subr.bf16.mxu0 0
      %7087 = vmatpush1.bf16.msra.mxu0 0
      %7088 = vmatprep.subr.bf16.mxu0 0
      %7089 = vmatpush1.bf16.msra.mxu0 0
      %7090 = vmatprep.subr.bf16.mxu0 0
      %7091 = vmatpush1.bf16.msra.mxu0 0
      %7092 = vmatprep.mubr.bf16.mxu0 0
      %7093 = vmatmul.mubr.bf16.gmra.mrb[0].mxu0 %v6995
      %v7094 = vpop.f32.mrb[0].mxu0
      %v7095 = vadd.f32 0.0, %v7094
      %v7096 = vpop.f32.mrb[0].mxu0
      %v7097 = vpop.f32.mrb[0].mxu0
      %v7098 = vpop.f32.mrb[0].mxu0
      %7099 = vdwg.mxu0
      %7100 = vst [vmem:[#allocation4] sm:$0xff] %v7095
    $region85: #{seq2seq_forward.1} parent=1 // pred_fallthru
      _
    %s7101 = sld [smem:[#allocation5 + $0x4]]
    %p7102 = scmp.ne.s32.totalorder %s7101, 0
    // Predicated region
    $region86: #{seq2seq_forward.1} parent=1 // pred_check
      %p7103 = pneg %p7102
    $region87: #{seq2seq_forward.1} parent=1 // pred_check_branch
      %7105 = sbr.rel (%p7103) target = $region89
    $region88: #{seq2seq_forward.1} parent=1 // pred_region
      %s7106 = scalar_lea.vmem %s2, 32
      %v7107 = vld [vmem:[%s7106] sm:$0xff]
      %7108 = vst [vmem:[#allocation2] sm:$0xff] %v7107
    $region89: #{seq2seq_forward.1} parent=1 // pred_fallthru
      _
    %p7109 = scmp.eq.s32.totalorder %s7101, 0
    // Predicated region
    $region90: #{seq2seq_forward.1} parent=1 // pred_check
      %p7110 = pneg %p7109
    $region91: #{seq2seq_forward.1} parent=1 // pred_check_branch
      %7112 = sbr.rel (%p7110) target = $region93
    $region92: #{seq2seq_forward.1} parent=1 // pred_region
      %v7113 = vld [vmem:[#allocation4] sm:$0xff]
      %7114 = vst [vmem:[#allocation2] sm:$0xff] %v7113
    $region93: #{seq2seq_forward.1} parent=1 // pred_fallthru
      _
    %v7115 = vld [vmem:[#allocation2] sm:$0xff]
    %v7116 = vld [vmem:[#allocation2 + $0x8] sm:$0xff]
    %v7117 = vpack.c.bf16 %v7115, %v7115
    %v7118 = vpack.c.bf16 %v7116, %v7116
    %v7119 = vld [vmem:[%s6] sm:$0xff]
    %v7120 = vld [vmem:[%s6 + $0x8] sm:$0xff]
    %v7121 = vld [vmem:[%s6 + $0x10] sm:$0xff]
    %v7122 = vld [vmem:[%s6 + $0x18] sm:$0xff]
    %v7123 = vld [vmem:[%s6 + $0x20] sm:$0xff]
    %v7124 = vld [vmem:[%s6 + $0x28] sm:$0xff]
    %v7125 = vld [vmem:[%s6 + $0x30] sm:$0xff]
    %v7126 = vld [vmem:[%s6 + $0x38] sm:$0xff]
    %v7127 = vld [vmem:[%s6 + $0x40] sm:$0xff]
    %v7128 = vld [vmem:[%s6 + $0x48] sm:$0xff]
    %v7129 = vld [vmem:[%s6 + $0x50] sm:$0xff]
    %v7130 = vld [vmem:[%s6 + $0x58] sm:$0xff]
    %v7131 = vld [vmem:[%s6 + $0x60] sm:$0xff]
    %v7132 = vld [vmem:[%s6 + $0x68] sm:$0xff]
    %v7133 = vld [vmem:[%s6 + $0x70] sm:$0xff]
    %v7134 = vld [vmem:[%s6 + $0x78] sm:$0xff]
    %v7135 = vld [vmem:[%s6 + $0x80] sm:$0xff]
    %v7136 = vld [vmem:[%s6 + $0x88] sm:$0xff]
    %v7137 = vld [vmem:[%s6 + $0x90] sm:$0xff]
    %v7138 = vld [vmem:[%s6 + $0x98] sm:$0xff]
    %v7139 = vld [vmem:[%s6 + $0xa0] sm:$0xff]
    %v7140 = vld [vmem:[%s6 + $0xa8] sm:$0xff]
    %v7141 = vld [vmem:[%s6 + $0xb0] sm:$0xff]
    %v7142 = vld [vmem:[%s6 + $0xb8] sm:$0xff]
    %v7143 = vld [vmem:[%s6 + $0xc0] sm:$0xff]
    %v7144 = vld [vmem:[%s6 + $0xc8] sm:$0xff]
    %v7145 = vld [vmem:[%s6 + $0xd0] sm:$0xff]
    %v7146 = vld [vmem:[%s6 + $0xd8] sm:$0xff]
    %v7147 = vld [vmem:[%s6 + $0xe0] sm:$0xff]
    %v7148 = vld [vmem:[%s6 + $0xe8] sm:$0xff]
    %v7149 = vld [vmem:[%s6 + $0xf0] sm:$0xff]
    %v7150 = vld [vmem:[%s6 + $0xf8] sm:$0xff]
    %v7151 = vld [vmem:[%s6 + $0x100] sm:$0xff]
    %v7152 = vld [vmem:[%s6 + $0x108] sm:$0xff]
    %v7153 = vld [vmem:[%s6 + $0x110] sm:$0xff]
    %v7154 = vld [vmem:[%s6 + $0x118] sm:$0xff]
    %v7155 = vld [vmem:[%s6 + $0x120] sm:$0xff]
    %v7156 = vld [vmem:[%s6 + $0x128] sm:$0xff]
    %v7157 = vld [vmem:[%s6 + $0x130] sm:$0xff]
    %v7158 = vld [vmem:[%s6 + $0x138] sm:$0xff]
    %v7159 = vld [vmem:[%s6 + $0x140] sm:$0xff]
    %v7160 = vld [vmem:[%s6 + $0x148] sm:$0xff]
    %v7161 = vld [vmem:[%s6 + $0x150] sm:$0xff]
    %v7162 = vld [vmem:[%s6 + $0x158] sm:$0xff]
    %v7163 = vld [vmem:[%s6 + $0x160] sm:$0xff]
    %v7164 = vld [vmem:[%s6 + $0x168] sm:$0xff]
    %v7165 = vld [vmem:[%s6 + $0x170] sm:$0xff]
    %v7166 = vld [vmem:[%s6 + $0x178] sm:$0xff]
    %v7167 = vld [vmem:[%s6 + $0x180] sm:$0xff]
    %v7168 = vld [vmem:[%s6 + $0x188] sm:$0xff]
    %v7169 = vld [vmem:[%s6 + $0x190] sm:$0xff]
    %v7170 = vld [vmem:[%s6 + $0x198] sm:$0xff]
    %v7171 = vld [vmem:[%s6 + $0x1a0] sm:$0xff]
    %v7172 = vld [vmem:[%s6 + $0x1a8] sm:$0xff]
    %v7173 = vld [vmem:[%s6 + $0x1b0] sm:$0xff]
    %v7174 = vld [vmem:[%s6 + $0x1b8] sm:$0xff]
    %v7175 = vld [vmem:[%s6 + $0x1c0] sm:$0xff]
    %v7176 = vld [vmem:[%s6 + $0x1c8] sm:$0xff]
    %v7177 = vld [vmem:[%s6 + $0x1d0] sm:$0xff]
    %v7178 = vld [vmem:[%s6 + $0x1d8] sm:$0xff]
    %v7179 = vld [vmem:[%s6 + $0x1e0] sm:$0xff]
    %v7180 = vld [vmem:[%s6 + $0x1e8] sm:$0xff]
    %v7181 = vld [vmem:[%s6 + $0x1f0] sm:$0xff]
    %v7182 = vld [vmem:[%s6 + $0x1f8] sm:$0xff]
    %v7183 = vld [vmem:[%s7] sm:$0xff]
    %v7184 = vld [vmem:[%s7 + $0x8] sm:$0xff]
    %v7185 = vld [vmem:[%s7 + $0x10] sm:$0xff]
    %v7186 = vld [vmem:[%s7 + $0x18] sm:$0xff]
    %v7251 = vunpack.c.l.b16 %v7119
    %v7252 = vunpack.c.h.b16 %v7119
    %v7253 = vunpack.c.l.b16 %v7120
    %v7254 = vunpack.c.h.b16 %v7120
    %v7255 = vunpack.c.l.b16 %v7121
    %v7256 = vunpack.c.h.b16 %v7121
    %v7257 = vunpack.c.l.b16 %v7122
    %v7258 = vunpack.c.h.b16 %v7122
    %v7259 = vunpack.c.l.b16 %v7123
    %v7260 = vunpack.c.h.b16 %v7123
    %v7261 = vunpack.c.l.b16 %v7124
    %v7262 = vunpack.c.h.b16 %v7124
    %v7263 = vunpack.c.l.b16 %v7125
    %v7264 = vunpack.c.h.b16 %v7125
    %v7265 = vunpack.c.l.b16 %v7126
    %v7266 = vunpack.c.h.b16 %v7126
    %v7267 = vunpack.c.l.b16 %v7127
    %v7268 = vunpack.c.h.b16 %v7127
    %v7269 = vunpack.c.l.b16 %v7128
    %v7270 = vunpack.c.h.b16 %v7128
    %v7271 = vunpack.c.l.b16 %v7129
    %v7272 = vunpack.c.h.b16 %v7129
    %v7273 = vunpack.c.l.b16 %v7130
    %v7274 = vunpack.c.h.b16 %v7130
    %v7275 = vunpack.c.l.b16 %v7131
    %v7276 = vunpack.c.h.b16 %v7131
    %v7277 = vunpack.c.l.b16 %v7132
    %v7278 = vunpack.c.h.b16 %v7132
    %v7279 = vunpack.c.l.b16 %v7133
    %v7280 = vunpack.c.h.b16 %v7133
    %v7281 = vunpack.c.l.b16 %v7134
    %v7282 = vunpack.c.h.b16 %v7134
    %v7283 = vunpack.c.l.b16 %v7135
    %v7284 = vunpack.c.h.b16 %v7135
    %v7285 = vunpack.c.l.b16 %v7136
    %v7286 = vunpack.c.h.b16 %v7136
    %v7287 = vunpack.c.l.b16 %v7137
    %v7288 = vunpack.c.h.b16 %v7137
    %v7289 = vunpack.c.l.b16 %v7138
    %v7290 = vunpack.c.h.b16 %v7138
    %v7291 = vunpack.c.l.b16 %v7139
    %v7292 = vunpack.c.h.b16 %v7139
    %v7293 = vunpack.c.l.b16 %v7140
    %v7294 = vunpack.c.h.b16 %v7140
    %v7295 = vunpack.c.l.b16 %v7141
    %v7296 = vunpack.c.h.b16 %v7141
    %v7297 = vunpack.c.l.b16 %v7142
    %v7298 = vunpack.c.h.b16 %v7142
    %v7299 = vunpack.c.l.b16 %v7143
    %v7300 = vunpack.c.h.b16 %v7143
    %v7301 = vunpack.c.l.b16 %v7144
    %v7302 = vunpack.c.h.b16 %v7144
    %v7303 = vunpack.c.l.b16 %v7145
    %v7304 = vunpack.c.h.b16 %v7145
    %v7305 = vunpack.c.l.b16 %v7146
    %v7306 = vunpack.c.h.b16 %v7146
    %v7307 = vunpack.c.l.b16 %v7147
    %v7308 = vunpack.c.h.b16 %v7147
    %v7309 = vunpack.c.l.b16 %v7148
    %v7310 = vunpack.c.h.b16 %v7148
    %v7311 = vunpack.c.l.b16 %v7149
    %v7312 = vunpack.c.h.b16 %v7149
    %v7313 = vunpack.c.l.b16 %v7150
    %v7314 = vunpack.c.h.b16 %v7150
    %v7315 = vunpack.c.l.b16 %v7151
    %v7316 = vunpack.c.h.b16 %v7151
    %v7317 = vunpack.c.l.b16 %v7152
    %v7318 = vunpack.c.h.b16 %v7152
    %v7319 = vunpack.c.l.b16 %v7153
    %v7320 = vunpack.c.h.b16 %v7153
    %v7321 = vunpack.c.l.b16 %v7154
    %v7322 = vunpack.c.h.b16 %v7154
    %v7323 = vunpack.c.l.b16 %v7155
    %v7324 = vunpack.c.h.b16 %v7155
    %v7325 = vunpack.c.l.b16 %v7156
    %v7326 = vunpack.c.h.b16 %v7156
    %v7327 = vunpack.c.l.b16 %v7157
    %v7328 = vunpack.c.h.b16 %v7157
    %v7329 = vunpack.c.l.b16 %v7158
    %v7330 = vunpack.c.h.b16 %v7158
    %v7331 = vunpack.c.l.b16 %v7159
    %v7332 = vunpack.c.h.b16 %v7159
    %v7333 = vunpack.c.l.b16 %v7160
    %v7334 = vunpack.c.h.b16 %v7160
    %v7335 = vunpack.c.l.b16 %v7161
    %v7336 = vunpack.c.h.b16 %v7161
    %v7337 = vunpack.c.l.b16 %v7162
    %v7338 = vunpack.c.h.b16 %v7162
    %v7339 = vunpack.c.l.b16 %v7163
    %v7340 = vunpack.c.h.b16 %v7163
    %v7341 = vunpack.c.l.b16 %v7164
    %v7342 = vunpack.c.h.b16 %v7164
    %v7343 = vunpack.c.l.b16 %v7165
    %v7344 = vunpack.c.h.b16 %v7165
    %v7345 = vunpack.c.l.b16 %v7166
    %v7346 = vunpack.c.h.b16 %v7166
    %v7347 = vunpack.c.l.b16 %v7167
    %v7348 = vunpack.c.h.b16 %v7167
    %v7349 = vunpack.c.l.b16 %v7168
    %v7350 = vunpack.c.h.b16 %v7168
    %v7351 = vunpack.c.l.b16 %v7169
    %v7352 = vunpack.c.h.b16 %v7169
    %v7353 = vunpack.c.l.b16 %v7170
    %v7354 = vunpack.c.h.b16 %v7170
    %v7355 = vunpack.c.l.b16 %v7171
    %v7356 = vunpack.c.h.b16 %v7171
    %v7357 = vunpack.c.l.b16 %v7172
    %v7358 = vunpack.c.h.b16 %v7172
    %v7359 = vunpack.c.l.b16 %v7173
    %v7360 = vunpack.c.h.b16 %v7173
    %v7361 = vunpack.c.l.b16 %v7174
    %v7362 = vunpack.c.h.b16 %v7174
    %v7363 = vunpack.c.l.b16 %v7175
    %v7364 = vunpack.c.h.b16 %v7175
    %v7365 = vunpack.c.l.b16 %v7176
    %v7366 = vunpack.c.h.b16 %v7176
    %v7367 = vunpack.c.l.b16 %v7177
    %v7368 = vunpack.c.h.b16 %v7177
    %v7369 = vunpack.c.l.b16 %v7178
    %v7370 = vunpack.c.h.b16 %v7178
    %v7371 = vunpack.c.l.b16 %v7179
    %v7372 = vunpack.c.h.b16 %v7179
    %v7373 = vunpack.c.l.b16 %v7180
    %v7374 = vunpack.c.h.b16 %v7180
    %v7375 = vunpack.c.l.b16 %v7181
    %v7376 = vunpack.c.h.b16 %v7181
    %v7377 = vunpack.c.l.b16 %v7182
    %v7378 = vunpack.c.h.b16 %v7182
    %v7379 = vpack.c.b16 %v7255, %v7251
    %v7380 = vpack.c.b16 %v7256, %v7252
    %v7381 = vpack.c.b16 %v7257, %v7253
    %v7382 = vpack.c.b16 %v7258, %v7254
    %v7383 = vpack.c.b16 %v7263, %v7259
    %v7384 = vpack.c.b16 %v7264, %v7260
    %v7385 = vpack.c.b16 %v7265, %v7261
    %v7386 = vpack.c.b16 %v7266, %v7262
    %v7387 = vpack.c.b16 %v7271, %v7267
    %v7388 = vpack.c.b16 %v7272, %v7268
    %v7389 = vpack.c.b16 %v7273, %v7269
    %v7390 = vpack.c.b16 %v7274, %v7270
    %v7391 = vpack.c.b16 %v7279, %v7275
    %v7392 = vpack.c.b16 %v7280, %v7276
    %v7393 = vpack.c.b16 %v7281, %v7277
    %v7394 = vpack.c.b16 %v7282, %v7278
    %v7395 = vpack.c.b16 %v7287, %v7283
    %v7396 = vpack.c.b16 %v7288, %v7284
    %v7397 = vpack.c.b16 %v7289, %v7285
    %v7398 = vpack.c.b16 %v7290, %v7286
    %v7399 = vpack.c.b16 %v7295, %v7291
    %v7400 = vpack.c.b16 %v7296, %v7292
    %v7401 = vpack.c.b16 %v7297, %v7293
    %v7402 = vpack.c.b16 %v7298, %v7294
    %v7403 = vpack.c.b16 %v7303, %v7299
    %v7404 = vpack.c.b16 %v7304, %v7300
    %v7405 = vpack.c.b16 %v7305, %v7301
    %v7406 = vpack.c.b16 %v7306, %v7302
    %v7407 = vpack.c.b16 %v7311, %v7307
    %v7408 = vpack.c.b16 %v7312, %v7308
    %v7409 = vpack.c.b16 %v7313, %v7309
    %v7410 = vpack.c.b16 %v7314, %v7310
    %v7411 = vpack.c.b16 %v7319, %v7315
    %v7412 = vpack.c.b16 %v7320, %v7316
    %v7413 = vpack.c.b16 %v7321, %v7317
    %v7414 = vpack.c.b16 %v7322, %v7318
    %v7415 = vpack.c.b16 %v7327, %v7323
    %v7416 = vpack.c.b16 %v7328, %v7324
    %v7417 = vpack.c.b16 %v7329, %v7325
    %v7418 = vpack.c.b16 %v7330, %v7326
    %v7419 = vpack.c.b16 %v7335, %v7331
    %v7420 = vpack.c.b16 %v7336, %v7332
    %v7421 = vpack.c.b16 %v7337, %v7333
    %v7422 = vpack.c.b16 %v7338, %v7334
    %v7423 = vpack.c.b16 %v7343, %v7339
    %v7424 = vpack.c.b16 %v7344, %v7340
    %v7425 = vpack.c.b16 %v7345, %v7341
    %v7426 = vpack.c.b16 %v7346, %v7342
    %v7427 = vpack.c.b16 %v7351, %v7347
    %v7428 = vpack.c.b16 %v7352, %v7348
    %v7429 = vpack.c.b16 %v7353, %v7349
    %v7430 = vpack.c.b16 %v7354, %v7350
    %v7431 = vpack.c.b16 %v7359, %v7355
    %v7432 = vpack.c.b16 %v7360, %v7356
    %v7433 = vpack.c.b16 %v7361, %v7357
    %v7434 = vpack.c.b16 %v7362, %v7358
    %v7435 = vpack.c.b16 %v7367, %v7363
    %v7436 = vpack.c.b16 %v7368, %v7364
    %v7437 = vpack.c.b16 %v7369, %v7365
    %v7438 = vpack.c.b16 %v7370, %v7366
    %v7439 = vpack.c.b16 %v7375, %v7371
    %v7440 = vpack.c.b16 %v7376, %v7372
    %v7441 = vpack.c.b16 %v7377, %v7373
    %v7442 = vpack.c.b16 %v7378, %v7374
    %7507 = vmatprep.subr.bf16.mxu0 %v7380
    %7508 = vmatpush1.bf16.msra.mxu0 %v7379
    %7509 = vmatprep.subr.bf16.mxu0 %v7384
    %7510 = vmatpush1.bf16.msra.mxu0 %v7383
    %7511 = vmatprep.subr.bf16.mxu0 %v7388
    %7512 = vmatpush1.bf16.msra.mxu0 %v7387
    %7513 = vmatprep.subr.bf16.mxu0 %v7392
    %7514 = vmatpush1.bf16.msra.mxu0 %v7391
    %7515 = vmatprep.subr.bf16.mxu0 %v7396
    %7516 = vmatpush1.bf16.msra.mxu0 %v7395
    %7517 = vmatprep.subr.bf16.mxu0 %v7400
    %7518 = vmatpush1.bf16.msra.mxu0 %v7399
    %7519 = vmatprep.subr.bf16.mxu0 %v7404
    %7520 = vmatpush1.bf16.msra.mxu0 %v7403
    %7521 = vmatprep.subr.bf16.mxu0 %v7408
    %7522 = vmatpush1.bf16.msra.mxu0 %v7407
    %7523 = vmatprep.subr.bf16.mxu0 %v7412
    %7524 = vmatpush1.bf16.msra.mxu0 %v7411
    %7525 = vmatprep.subr.bf16.mxu0 %v7416
    %7526 = vmatpush1.bf16.msra.mxu0 %v7415
    %7527 = vmatprep.subr.bf16.mxu0 %v7420
    %7528 = vmatpush1.bf16.msra.mxu0 %v7419
    %7529 = vmatprep.subr.bf16.mxu0 %v7424
    %7530 = vmatpush1.bf16.msra.mxu0 %v7423
    %7531 = vmatprep.subr.bf16.mxu0 %v7428
    %7532 = vmatpush1.bf16.msra.mxu0 %v7427
    %7533 = vmatprep.subr.bf16.mxu0 %v7432
    %7534 = vmatpush1.bf16.msra.mxu0 %v7431
    %7535 = vmatprep.subr.bf16.mxu0 %v7436
    %7536 = vmatpush1.bf16.msra.mxu0 %v7435
    %7537 = vmatprep.subr.bf16.mxu0 %v7440
    %7538 = vmatpush1.bf16.msra.mxu0 %v7439
    %7539 = vmatprep.mubr.bf16.mxu0 %v7118
    %7540 = vmatmul.mubr.bf16.gmra.mrb[0].mxu0 %v7117
    %v7541 = vpop.f32.mrb[0].mxu0
    %v7542 = vadd.f32 %v7183, %v7541
    %v7543 = vpop.f32.mrb[0].mxu0
    %v7544 = vadd.f32 %v7184, %v7543
    %v7545 = vpop.f32.mrb[0].mxu0
    %v7546 = vpop.f32.mrb[0].mxu0
    %7547 = vdwg.mxu0
    %7548 = vmatprep.subr.bf16.mxu0 %v7382
    %7549 = vmatpush1.bf16.msra.mxu0 %v7381
    %7550 = vmatprep.subr.bf16.mxu0 %v7386
    %7551 = vmatpush1.bf16.msra.mxu0 %v7385
    %7552 = vmatprep.subr.bf16.mxu0 %v7390
    %7553 = vmatpush1.bf16.msra.mxu0 %v7389
    %7554 = vmatprep.subr.bf16.mxu0 %v7394
    %7555 = vmatpush1.bf16.msra.mxu0 %v7393
    %7556 = vmatprep.subr.bf16.mxu0 %v7398
    %7557 = vmatpush1.bf16.msra.mxu0 %v7397
    %7558 = vmatprep.subr.bf16.mxu0 %v7402
    %7559 = vmatpush1.bf16.msra.mxu0 %v7401
    %7560 = vmatprep.subr.bf16.mxu0 %v7406
    %7561 = vmatpush1.bf16.msra.mxu0 %v7405
    %7562 = vmatprep.subr.bf16.mxu0 %v7410
    %7563 = vmatpush1.bf16.msra.mxu0 %v7409
    %7564 = vmatprep.subr.bf16.mxu0 %v7414
    %7565 = vmatpush1.bf16.msra.mxu0 %v7413
    %7566 = vmatprep.subr.bf16.mxu0 %v7418
    %7567 = vmatpush1.bf16.msra.mxu0 %v7417
    %7568 = vmatprep.subr.bf16.mxu0 %v7422
    %7569 = vmatpush1.bf16.msra.mxu0 %v7421
    %7570 = vmatprep.subr.bf16.mxu0 %v7426
    %7571 = vmatpush1.bf16.msra.mxu0 %v7425
    %7572 = vmatprep.subr.bf16.mxu0 %v7430
    %7573 = vmatpush1.bf16.msra.mxu0 %v7429
    %7574 = vmatprep.subr.bf16.mxu0 %v7434
    %7575 = vmatpush1.bf16.msra.mxu0 %v7433
    %7576 = vmatprep.subr.bf16.mxu0 %v7438
    %7577 = vmatpush1.bf16.msra.mxu0 %v7437
    %7578 = vmatprep.subr.bf16.mxu0 %v7442
    %7579 = vmatpush1.bf16.msra.mxu0 %v7441
    %7580 = vmatprep.mubr.bf16.mxu0 %v7118
    %7581 = vmatmul.mubr.bf16.gmra.mrb[0].mxu0 %v7117
    %v7582 = vpop.f32.mrb[0].mxu0
    %v7583 = vadd.f32 %v7185, %v7582
    %v7584 = vpop.f32.mrb[0].mxu0
    %v7585 = vadd.f32 %v7186, %v7584
    %v7586 = vpop.f32.mrb[0].mxu0
    %v7587 = vpop.f32.mrb[0].mxu0
    %7588 = vdwg.mxu0
    %v7589 = vxor.u32 %v7542, 2147483648
    %v7590 = vmul.f32 %v7589, 1.442695
    %v7591 = vpow.pop %v7590
    %v7592 = vadd.f32 %v7591, 1.0
    %v7593 = vrcp.pop %v7592
    %v7594 = vmul.f32 1.0, %v7593
    %v7595 = vxor.u32 %v7544, 2147483648
    %v7596 = vmul.f32 %v7595, 1.442695
    %v7597 = vpow.pop %v7596
    %v7598 = vadd.f32 %v7597, 1.0
    %v7599 = vrcp.pop %v7598
    %v7600 = vmul.f32 1.0, %v7599
    %v7601 = vtanh.pop %v7583
    %v7602 = vxor.u32 %v7585, 2147483648
    %v7603 = vmul.f32 %v7602, 1.442695
    %v7604 = vpow.pop %v7603
    %v7605 = vadd.f32 %v7604, 1.0
    %v7606 = vrcp.pop %v7605
    %v7607 = vmul.f32 1.0, %v7606
    %v7608 = vld [vmem:[#allocation3] sm:$0xff]
    %v7609 = vmul.f32 %v7600, %v7608
    %v7610 = vmul.f32 %v7594, %v7601
    %v7611 = vadd.f32 %v7609, %v7610
    %v7612 = vtanh.pop %v7611
    %v7613 = vmul.f32 %v7607, %v7612
    %7614 = vst [vmem:[#allocation2 + $0x8] sm:$0xff] %v7613
    %7615 = vst [vmem:[#allocation3] sm:$0xff] %v7611
    %v7616 = vpack.c.bf16 %v7613, %v7613
    %v7617 = vld [vmem:[%s8] sm:$0xf]
    %v7618 = vld [vmem:[%s8 + $0x4] sm:$0xf]
    %v7619 = vld [vmem:[%s8 + $0x8] sm:$0xf]
    %v7620 = vld [vmem:[%s8 + $0xc] sm:$0xf]
    %v7621 = vld [vmem:[%s8 + $0x10] sm:$0xf]
    %v7622 = vld [vmem:[%s8 + $0x14] sm:$0xf]
    %v7623 = vld [vmem:[%s8 + $0x18] sm:$0xf]
    %v7624 = vld [vmem:[%s8 + $0x1c] sm:$0xf]
    %v7625 = vld [vmem:[%s8 + $0x20] sm:$0xf]
    %v7626 = vld [vmem:[%s8 + $0x24] sm:$0xf]
    %v7627 = vld [vmem:[%s8 + $0x28] sm:$0xf]
    %v7628 = vld [vmem:[%s8 + $0x2c] sm:$0xf]
    %v7629 = vld [vmem:[%s8 + $0x30] sm:$0xf]
    %v7630 = vld [vmem:[%s8 + $0x34] sm:$0xf]
    %v7631 = vld [vmem:[%s8 + $0x38] sm:$0xf]
    %v7632 = vld [vmem:[%s8 + $0x3c] sm:$0xf]
    %v7633 = vld [vmem:[%s9] sm:$0xff]
    %v7650 = vunpack.c.l.b16 %v7617
    %v7651 = vunpack.c.l.b16 %v7618
    %v7652 = vunpack.c.l.b16 %v7619
    %v7653 = vunpack.c.l.b16 %v7620
    %v7654 = vunpack.c.l.b16 %v7621
    %v7655 = vunpack.c.l.b16 %v7622
    %v7656 = vunpack.c.l.b16 %v7623
    %v7657 = vunpack.c.l.b16 %v7624
    %v7658 = vunpack.c.l.b16 %v7625
    %v7659 = vunpack.c.l.b16 %v7626
    %v7660 = vunpack.c.l.b16 %v7627
    %v7661 = vunpack.c.l.b16 %v7628
    %v7662 = vunpack.c.l.b16 %v7629
    %v7663 = vunpack.c.l.b16 %v7630
    %v7664 = vunpack.c.l.b16 %v7631
    %v7665 = vunpack.c.l.b16 %v7632
    %v7666 = vpack.c.b16 %v7651, %v7650
    %v7667 = vpack.c.b16 %v7653, %v7652
    %v7668 = vpack.c.b16 %v7655, %v7654
    %v7669 = vpack.c.b16 %v7657, %v7656
    %v7670 = vpack.c.b16 %v7659, %v7658
    %v7671 = vpack.c.b16 %v7661, %v7660
    %v7672 = vpack.c.b16 %v7663, %v7662
    %v7673 = vpack.c.b16 %v7665, %v7664
    %7682 = vmatprep.subr.bf16.mxu0 0
    %7683 = vmatpush1.bf16.msra.mxu0 %v7666
    %7684 = vmatprep.subr.bf16.mxu0 0
    %7685 = vmatpush1.bf16.msra.mxu0 %v7667
    %7686 = vmatprep.subr.bf16.mxu0 0
    %7687 = vmatpush1.bf16.msra.mxu0 %v7668
    %7688 = vmatprep.subr.bf16.mxu0 0
    %7689 = vmatpush1.bf16.msra.mxu0 %v7669
    %7690 = vmatprep.subr.bf16.mxu0 0
    %7691 = vmatpush1.bf16.msra.mxu0 %v7670
    %7692 = vmatprep.subr.bf16.mxu0 0
    %7693 = vmatpush1.bf16.msra.mxu0 %v7671
    %7694 = vmatprep.subr.bf16.mxu0 0
    %7695 = vmatpush1.bf16.msra.mxu0 %v7672
    %7696 = vmatprep.subr.bf16.mxu0 0
    %7697 = vmatpush1.bf16.msra.mxu0 %v7673
    %7698 = vmatprep.subr.bf16.mxu0 0
    %7699 = vmatpush1.bf16.msra.mxu0 0
    %7700 = vmatprep.subr.bf16.mxu0 0
    %7701 = vmatpush1.bf16.msra.mxu0 0
    %7702 = vmatprep.subr.bf16.mxu0 0
    %7703 = vmatpush1.bf16.msra.mxu0 0
    %7704 = vmatprep.subr.bf16.mxu0 0
    %7705 = vmatpush1.bf16.msra.mxu0 0
    %7706 = vmatprep.subr.bf16.mxu0 0
    %7707 = vmatpush1.bf16.msra.mxu0 0
    %7708 = vmatprep.subr.bf16.mxu0 0
    %7709 = vmatpush1.bf16.msra.mxu0 0
    %7710 = vmatprep.subr.bf16.mxu0 0
    %7711 = vmatpush1.bf16.msra.mxu0 0
    %7712 = vmatprep.subr.bf16.mxu0 0
    %7713 = vmatpush1.bf16.msra.mxu0 0
    %7714 = vmatprep.mubr.bf16.mxu0 0
    %7715 = vmatmul.mubr.bf16.gmra.mrb[0].mxu0 %v7616
    %v7716 = vpop.f32.mrb[0].mxu0
    %v7717 = vadd.f32 %v7633, %v7716
    %v7718 = vpop.f32.mrb[0].mxu0
    %v7719 = vpop.f32.mrb[0].mxu0
    %v7720 = vpop.f32.mrb[0].mxu0
    %7721 = vdwg.mxu0
    %s7722 = scalar_lea.vmem [#allocation8], 40
    %7723 = vst [vmem:[%s7722] sm:$0xff] %v7717
    %s7724 = sld [smem:[#allocation5 + $0x5]]
    %p7725 = scmp.eq.s32.totalorder %s7724, 0
    // Predicated region
    $region94: #{seq2seq_forward.1} parent=1 // pred_check
      %p7726 = pneg %p7725
    $region95: #{seq2seq_forward.1} parent=1 // pred_check_branch
      %7728 = sbr.rel (%p7726) target = $region97
    $region96: #{seq2seq_forward.1} parent=1 // pred_region
      %v7729 = vlaneseq
      %v7730 = vand.u32 %v7729, 127
      %7731 = vmax.xlane.f32.xlu0 %v7717
      %v7732 = vpop.xlane.xlu0 %7731
      %vm7733 = vcmp.eq.f32.partialorder %v7717, %v7732
      %v7734 = vsel %vm7733, %v7730, 128
      %v7735 = vand.u32 %v7734, 65535
      %v7736 = vshra.s32 %v7734, 16
      %v7737 = vcvt.s32.f32 %v7735
      %v7738 = vcvt.s32.f32 %v7736
      %7739 = vmin.xlane.f32.xlu0 %v7738
      %v7740 = vpop.xlane.xlu0 %7739
      %vm7741 = vcmp.eq.f32.partialorder %v7738, %v7740
      %v7742 = vsel %vm7741, %v7737, inf
      %7743 = vmin.xlane.f32.xlu0 %v7742
      %v7744 = vpop.xlane.xlu0 %7743
      %v7745 = vcvt.f32.s32 %v7744
      %v7746 = vcvt.f32.s32 %v7740
      %v7747 = vshll.u32 %v7746, 16
      %v7748 = vadd.s32 %v7747, %v7745
      %vm7749 = vcmp.eq.s32.totalorder %v7730, %v7748
      %v7750 = vsel %vm7749, 1, 0
      %v7751 = vcvt.s32.f32 %v7750
      %v7752 = vpack.c.bf16 %v7751, %v7751
      %v7753 = vld [vmem:[%s3] sm:$0xf]
      %v7754 = vld [vmem:[%s3 + $0x4] sm:$0xf]
      %v7755 = vld [vmem:[%s3 + $0x8] sm:$0xf]
      %v7756 = vld [vmem:[%s3 + $0xc] sm:$0xf]
      %v7757 = vld [vmem:[%s3 + $0x10] sm:$0xf]
      %v7758 = vld [vmem:[%s3 + $0x14] sm:$0xf]
      %v7759 = vld [vmem:[%s3 + $0x18] sm:$0xf]
      %v7760 = vld [vmem:[%s3 + $0x1c] sm:$0xf]
      %v7761 = vld [vmem:[%s3 + $0x20] sm:$0xf]
      %v7762 = vld [vmem:[%s3 + $0x24] sm:$0xf]
      %v7763 = vld [vmem:[%s3 + $0x28] sm:$0xf]
      %v7764 = vld [vmem:[%s3 + $0x2c] sm:$0xf]
      %v7765 = vld [vmem:[%s3 + $0x30] sm:$0xf]
      %v7766 = vld [vmem:[%s3 + $0x34] sm:$0xf]
      %v7767 = vld [vmem:[%s3 + $0x38] sm:$0xf]
      %v7768 = vld [vmem:[%s3 + $0x3c] sm:$0xf]
      %v7785 = vunpack.c.l.b16 %v7753
      %v7786 = vunpack.c.l.b16 %v7754
      %v7787 = vunpack.c.l.b16 %v7755
      %v7788 = vunpack.c.l.b16 %v7756
      %v7789 = vunpack.c.l.b16 %v7757
      %v7790 = vunpack.c.l.b16 %v7758
      %v7791 = vunpack.c.l.b16 %v7759
      %v7792 = vunpack.c.l.b16 %v7760
      %v7793 = vunpack.c.l.b16 %v7761
      %v7794 = vunpack.c.l.b16 %v7762
      %v7795 = vunpack.c.l.b16 %v7763
      %v7796 = vunpack.c.l.b16 %v7764
      %v7797 = vunpack.c.l.b16 %v7765
      %v7798 = vunpack.c.l.b16 %v7766
      %v7799 = vunpack.c.l.b16 %v7767
      %v7800 = vunpack.c.l.b16 %v7768
      %v7801 = vpack.c.b16 %v7786, %v7785
      %v7802 = vpack.c.b16 %v7788, %v7787
      %v7803 = vpack.c.b16 %v7790, %v7789
      %v7804 = vpack.c.b16 %v7792, %v7791
      %v7805 = vpack.c.b16 %v7794, %v7793
      %v7806 = vpack.c.b16 %v7796, %v7795
      %v7807 = vpack.c.b16 %v7798, %v7797
      %v7808 = vpack.c.b16 %v7800, %v7799
      %7817 = vmatprep.subr.bf16.mxu0 0
      %7818 = vmatpush1.bf16.msra.mxu0 %v7801
      %7819 = vmatprep.subr.bf16.mxu0 0
      %7820 = vmatpush1.bf16.msra.mxu0 %v7802
      %7821 = vmatprep.subr.bf16.mxu0 0
      %7822 = vmatpush1.bf16.msra.mxu0 %v7803
      %7823 = vmatprep.subr.bf16.mxu0 0
      %7824 = vmatpush1.bf16.msra.mxu0 %v7804
      %7825 = vmatprep.subr.bf16.mxu0 0
      %7826 = vmatpush1.bf16.msra.mxu0 %v7805
      %7827 = vmatprep.subr.bf16.mxu0 0
      %7828 = vmatpush1.bf16.msra.mxu0 %v7806
      %7829 = vmatprep.subr.bf16.mxu0 0
      %7830 = vmatpush1.bf16.msra.mxu0 %v7807
      %7831 = vmatprep.subr.bf16.mxu0 0
      %7832 = vmatpush1.bf16.msra.mxu0 %v7808
      %7833 = vmatprep.subr.bf16.mxu0 0
      %7834 = vmatpush1.bf16.msra.mxu0 0
      %7835 = vmatprep.subr.bf16.mxu0 0
      %7836 = vmatpush1.bf16.msra.mxu0 0
      %7837 = vmatprep.subr.bf16.mxu0 0
      %7838 = vmatpush1.bf16.msra.mxu0 0
      %7839 = vmatprep.subr.bf16.mxu0 0
      %7840 = vmatpush1.bf16.msra.mxu0 0
      %7841 = vmatprep.subr.bf16.mxu0 0
      %7842 = vmatpush1.bf16.msra.mxu0 0
      %7843 = vmatprep.subr.bf16.mxu0 0
      %7844 = vmatpush1.bf16.msra.mxu0 0
      %7845 = vmatprep.subr.bf16.mxu0 0
      %7846 = vmatpush1.bf16.msra.mxu0 0
      %7847 = vmatprep.subr.bf16.mxu0 0
      %7848 = vmatpush1.bf16.msra.mxu0 0
      %7849 = vmatprep.mubr.bf16.mxu0 0
      %7850 = vmatmul.mubr.bf16.gmra.mrb[0].mxu0 %v7752
      %v7851 = vpop.f32.mrb[0].mxu0
      %v7852 = vadd.f32 0.0, %v7851
      %v7853 = vpop.f32.mrb[0].mxu0
      %v7854 = vpop.f32.mrb[0].mxu0
      %v7855 = vpop.f32.mrb[0].mxu0
      %7856 = vdwg.mxu0
      %7857 = vst [vmem:[#allocation4] sm:$0xff] %v7852
    $region97: #{seq2seq_forward.1} parent=1 // pred_fallthru
      _
    %s7858 = sld [smem:[#allocation5 + $0x5]]
    %p7859 = scmp.ne.s32.totalorder %s7858, 0
    // Predicated region
    $region98: #{seq2seq_forward.1} parent=1 // pred_check
      %p7860 = pneg %p7859
    $region99: #{seq2seq_forward.1} parent=1 // pred_check_branch
      %7862 = sbr.rel (%p7860) target = $region101
    $region100: #{seq2seq_forward.1} parent=1 // pred_region
      %s7863 = scalar_lea.vmem %s2, 40
      %v7864 = vld [vmem:[%s7863] sm:$0xff]
      %7865 = vst [vmem:[#allocation2] sm:$0xff] %v7864
    $region101: #{seq2seq_forward.1} parent=1 // pred_fallthru
      _
    %p7866 = scmp.eq.s32.totalorder %s7858, 0
    // Predicated region
    $region102: #{seq2seq_forward.1} parent=1 // pred_check
      %p7867 = pneg %p7866
    $region103: #{seq2seq_forward.1} parent=1 // pred_check_branch
      %7869 = sbr.rel (%p7867) target = $region105
    $region104: #{seq2seq_forward.1} parent=1 // pred_region
      %v7870 = vld [vmem:[#allocation4] sm:$0xff]
      %7871 = vst [vmem:[#allocation2] sm:$0xff] %v7870
    $region105: #{seq2seq_forward.1} parent=1 // pred_fallthru
      _
    %v7872 = vld [vmem:[#allocation2] sm:$0xff]
    %v7873 = vld [vmem:[#allocation2 + $0x8] sm:$0xff]
    %v7874 = vpack.c.bf16 %v7872, %v7872
    %v7875 = vpack.c.bf16 %v7873, %v7873
    %v7876 = vld [vmem:[%s6] sm:$0xff]
    %v7877 = vld [vmem:[%s6 + $0x8] sm:$0xff]
    %v7878 = vld [vmem:[%s6 + $0x10] sm:$0xff]
    %v7879 = vld [vmem:[%s6 + $0x18] sm:$0xff]
    %v7880 = vld [vmem:[%s6 + $0x20] sm:$0xff]
    %v7881 = vld [vmem:[%s6 + $0x28] sm:$0xff]
    %v7882 = vld [vmem:[%s6 + $0x30] sm:$0xff]
    %v7883 = vld [vmem:[%s6 + $0x38] sm:$0xff]
    %v7884 = vld [vmem:[%s6 + $0x40] sm:$0xff]
    %v7885 = vld [vmem:[%s6 + $0x48] sm:$0xff]
    %v7886 = vld [vmem:[%s6 + $0x50] sm:$0xff]
    %v7887 = vld [vmem:[%s6 + $0x58] sm:$0xff]
    %v7888 = vld [vmem:[%s6 + $0x60] sm:$0xff]
    %v7889 = vld [vmem:[%s6 + $0x68] sm:$0xff]
    %v7890 = vld [vmem:[%s6 + $0x70] sm:$0xff]
    %v7891 = vld [vmem:[%s6 + $0x78] sm:$0xff]
    %v7892 = vld [vmem:[%s6 + $0x80] sm:$0xff]
    %v7893 = vld [vmem:[%s6 + $0x88] sm:$0xff]
    %v7894 = vld [vmem:[%s6 + $0x90] sm:$0xff]
    %v7895 = vld [vmem:[%s6 + $0x98] sm:$0xff]
    %v7896 = vld [vmem:[%s6 + $0xa0] sm:$0xff]
    %v7897 = vld [vmem:[%s6 + $0xa8] sm:$0xff]
    %v7898 = vld [vmem:[%s6 + $0xb0] sm:$0xff]
    %v7899 = vld [vmem:[%s6 + $0xb8] sm:$0xff]
    %v7900 = vld [vmem:[%s6 + $0xc0] sm:$0xff]
    %v7901 = vld [vmem:[%s6 + $0xc8] sm:$0xff]
    %v7902 = vld [vmem:[%s6 + $0xd0] sm:$0xff]
    %v7903 = vld [vmem:[%s6 + $0xd8] sm:$0xff]
    %v7904 = vld [vmem:[%s6 + $0xe0] sm:$0xff]
    %v7905 = vld [vmem:[%s6 + $0xe8] sm:$0xff]
    %v7906 = vld [vmem:[%s6 + $0xf0] sm:$0xff]
    %v7907 = vld [vmem:[%s6 + $0xf8] sm:$0xff]
    %v7908 = vld [vmem:[%s6 + $0x100] sm:$0xff]
    %v7909 = vld [vmem:[%s6 + $0x108] sm:$0xff]
    %v7910 = vld [vmem:[%s6 + $0x110] sm:$0xff]
    %v7911 = vld [vmem:[%s6 + $0x118] sm:$0xff]
    %v7912 = vld [vmem:[%s6 + $0x120] sm:$0xff]
    %v7913 = vld [vmem:[%s6 + $0x128] sm:$0xff]
    %v7914 = vld [vmem:[%s6 + $0x130] sm:$0xff]
    %v7915 = vld [vmem:[%s6 + $0x138] sm:$0xff]
    %v7916 = vld [vmem:[%s6 + $0x140] sm:$0xff]
    %v7917 = vld [vmem:[%s6 + $0x148] sm:$0xff]
    %v7918 = vld [vmem:[%s6 + $0x150] sm:$0xff]
    %v7919 = vld [vmem:[%s6 + $0x158] sm:$0xff]
    %v7920 = vld [vmem:[%s6 + $0x160] sm:$0xff]
    %v7921 = vld [vmem:[%s6 + $0x168] sm:$0xff]
    %v7922 = vld [vmem:[%s6 + $0x170] sm:$0xff]
    %v7923 = vld [vmem:[%s6 + $0x178] sm:$0xff]
    %v7924 = vld [vmem:[%s6 + $0x180] sm:$0xff]
    %v7925 = vld [vmem:[%s6 + $0x188] sm:$0xff]
    %v7926 = vld [vmem:[%s6 + $0x190] sm:$0xff]
    %v7927 = vld [vmem:[%s6 + $0x198] sm:$0xff]
    %v7928 = vld [vmem:[%s6 + $0x1a0] sm:$0xff]
    %v7929 = vld [vmem:[%s6 + $0x1a8] sm:$0xff]
    %v7930 = vld [vmem:[%s6 + $0x1b0] sm:$0xff]
    %v7931 = vld [vmem:[%s6 + $0x1b8] sm:$0xff]
    %v7932 = vld [vmem:[%s6 + $0x1c0] sm:$0xff]
    %v7933 = vld [vmem:[%s6 + $0x1c8] sm:$0xff]
    %v7934 = vld [vmem:[%s6 + $0x1d0] sm:$0xff]
    %v7935 = vld [vmem:[%s6 + $0x1d8] sm:$0xff]
    %v7936 = vld [vmem:[%s6 + $0x1e0] sm:$0xff]
    %v7937 = vld [vmem:[%s6 + $0x1e8] sm:$0xff]
    %v7938 = vld [vmem:[%s6 + $0x1f0] sm:$0xff]
    %v7939 = vld [vmem:[%s6 + $0x1f8] sm:$0xff]
    %v7940 = vld [vmem:[%s7] sm:$0xff]
    %v7941 = vld [vmem:[%s7 + $0x8] sm:$0xff]
    %v7942 = vld [vmem:[%s7 + $0x10] sm:$0xff]
    %v7943 = vld [vmem:[%s7 + $0x18] sm:$0xff]
    %v8008 = vunpack.c.l.b16 %v7876
    %v8009 = vunpack.c.h.b16 %v7876
    %v8010 = vunpack.c.l.b16 %v7877
    %v8011 = vunpack.c.h.b16 %v7877
    %v8012 = vunpack.c.l.b16 %v7878
    %v8013 = vunpack.c.h.b16 %v7878
    %v8014 = vunpack.c.l.b16 %v7879
    %v8015 = vunpack.c.h.b16 %v7879
    %v8016 = vunpack.c.l.b16 %v7880
    %v8017 = vunpack.c.h.b16 %v7880
    %v8018 = vunpack.c.l.b16 %v7881
    %v8019 = vunpack.c.h.b16 %v7881
    %v8020 = vunpack.c.l.b16 %v7882
    %v8021 = vunpack.c.h.b16 %v7882
    %v8022 = vunpack.c.l.b16 %v7883
    %v8023 = vunpack.c.h.b16 %v7883
    %v8024 = vunpack.c.l.b16 %v7884
    %v8025 = vunpack.c.h.b16 %v7884
    %v8026 = vunpack.c.l.b16 %v7885
    %v8027 = vunpack.c.h.b16 %v7885
    %v8028 = vunpack.c.l.b16 %v7886
    %v8029 = vunpack.c.h.b16 %v7886
    %v8030 = vunpack.c.l.b16 %v7887
    %v8031 = vunpack.c.h.b16 %v7887
    %v8032 = vunpack.c.l.b16 %v7888
    %v8033 = vunpack.c.h.b16 %v7888
    %v8034 = vunpack.c.l.b16 %v7889
    %v8035 = vunpack.c.h.b16 %v7889
    %v8036 = vunpack.c.l.b16 %v7890
    %v8037 = vunpack.c.h.b16 %v7890
    %v8038 = vunpack.c.l.b16 %v7891
    %v8039 = vunpack.c.h.b16 %v7891
    %v8040 = vunpack.c.l.b16 %v7892
    %v8041 = vunpack.c.h.b16 %v7892
    %v8042 = vunpack.c.l.b16 %v7893
    %v8043 = vunpack.c.h.b16 %v7893
    %v8044 = vunpack.c.l.b16 %v7894
    %v8045 = vunpack.c.h.b16 %v7894
    %v8046 = vunpack.c.l.b16 %v7895
    %v8047 = vunpack.c.h.b16 %v7895
    %v8048 = vunpack.c.l.b16 %v7896
    %v8049 = vunpack.c.h.b16 %v7896
    %v8050 = vunpack.c.l.b16 %v7897
    %v8051 = vunpack.c.h.b16 %v7897
    %v8052 = vunpack.c.l.b16 %v7898
    %v8053 = vunpack.c.h.b16 %v7898
    %v8054 = vunpack.c.l.b16 %v7899
    %v8055 = vunpack.c.h.b16 %v7899
    %v8056 = vunpack.c.l.b16 %v7900
    %v8057 = vunpack.c.h.b16 %v7900
    %v8058 = vunpack.c.l.b16 %v7901
    %v8059 = vunpack.c.h.b16 %v7901
    %v8060 = vunpack.c.l.b16 %v7902
    %v8061 = vunpack.c.h.b16 %v7902
    %v8062 = vunpack.c.l.b16 %v7903
    %v8063 = vunpack.c.h.b16 %v7903
    %v8064 = vunpack.c.l.b16 %v7904
    %v8065 = vunpack.c.h.b16 %v7904
    %v8066 = vunpack.c.l.b16 %v7905
    %v8067 = vunpack.c.h.b16 %v7905
    %v8068 = vunpack.c.l.b16 %v7906
    %v8069 = vunpack.c.h.b16 %v7906
    %v8070 = vunpack.c.l.b16 %v7907
    %v8071 = vunpack.c.h.b16 %v7907
    %v8072 = vunpack.c.l.b16 %v7908
    %v8073 = vunpack.c.h.b16 %v7908
    %v8074 = vunpack.c.l.b16 %v7909
    %v8075 = vunpack.c.h.b16 %v7909
    %v8076 = vunpack.c.l.b16 %v7910
    %v8077 = vunpack.c.h.b16 %v7910
    %v8078 = vunpack.c.l.b16 %v7911
    %v8079 = vunpack.c.h.b16 %v7911
    %v8080 = vunpack.c.l.b16 %v7912
    %v8081 = vunpack.c.h.b16 %v7912
    %v8082 = vunpack.c.l.b16 %v7913
    %v8083 = vunpack.c.h.b16 %v7913
    %v8084 = vunpack.c.l.b16 %v7914
    %v8085 = vunpack.c.h.b16 %v7914
    %v8086 = vunpack.c.l.b16 %v7915
    %v8087 = vunpack.c.h.b16 %v7915
    %v8088 = vunpack.c.l.b16 %v7916
    %v8089 = vunpack.c.h.b16 %v7916
    %v8090 = vunpack.c.l.b16 %v7917
    %v8091 = vunpack.c.h.b16 %v7917
    %v8092 = vunpack.c.l.b16 %v7918
    %v8093 = vunpack.c.h.b16 %v7918
    %v8094 = vunpack.c.l.b16 %v7919
    %v8095 = vunpack.c.h.b16 %v7919
    %v8096 = vunpack.c.l.b16 %v7920
    %v8097 = vunpack.c.h.b16 %v7920
    %v8098 = vunpack.c.l.b16 %v7921
    %v8099 = vunpack.c.h.b16 %v7921
    %v8100 = vunpack.c.l.b16 %v7922
    %v8101 = vunpack.c.h.b16 %v7922
    %v8102 = vunpack.c.l.b16 %v7923
    %v8103 = vunpack.c.h.b16 %v7923
    %v8104 = vunpack.c.l.b16 %v7924
    %v8105 = vunpack.c.h.b16 %v7924
    %v8106 = vunpack.c.l.b16 %v7925
    %v8107 = vunpack.c.h.b16 %v7925
    %v8108 = vunpack.c.l.b16 %v7926
    %v8109 = vunpack.c.h.b16 %v7926
    %v8110 = vunpack.c.l.b16 %v7927
    %v8111 = vunpack.c.h.b16 %v7927
    %v8112 = vunpack.c.l.b16 %v7928
    %v8113 = vunpack.c.h.b16 %v7928
    %v8114 = vunpack.c.l.b16 %v7929
    %v8115 = vunpack.c.h.b16 %v7929
    %v8116 = vunpack.c.l.b16 %v7930
    %v8117 = vunpack.c.h.b16 %v7930
    %v8118 = vunpack.c.l.b16 %v7931
    %v8119 = vunpack.c.h.b16 %v7931
    %v8120 = vunpack.c.l.b16 %v7932
    %v8121 = vunpack.c.h.b16 %v7932
    %v8122 = vunpack.c.l.b16 %v7933
    %v8123 = vunpack.c.h.b16 %v7933
    %v8124 = vunpack.c.l.b16 %v7934
    %v8125 = vunpack.c.h.b16 %v7934
    %v8126 = vunpack.c.l.b16 %v7935
    %v8127 = vunpack.c.h.b16 %v7935
    %v8128 = vunpack.c.l.b16 %v7936
    %v8129 = vunpack.c.h.b16 %v7936
    %v8130 = vunpack.c.l.b16 %v7937
    %v8131 = vunpack.c.h.b16 %v7937
    %v8132 = vunpack.c.l.b16 %v7938
    %v8133 = vunpack.c.h.b16 %v7938
    %v8134 = vunpack.c.l.b16 %v7939
    %v8135 = vunpack.c.h.b16 %v7939
    %v8136 = vpack.c.b16 %v8012, %v8008
    %v8137 = vpack.c.b16 %v8013, %v8009
    %v8138 = vpack.c.b16 %v8014, %v8010
    %v8139 = vpack.c.b16 %v8015, %v8011
    %v8140 = vpack.c.b16 %v8020, %v8016
    %v8141 = vpack.c.b16 %v8021, %v8017
    %v8142 = vpack.c.b16 %v8022, %v8018
    %v8143 = vpack.c.b16 %v8023, %v8019
    %v8144 = vpack.c.b16 %v8028, %v8024
    %v8145 = vpack.c.b16 %v8029, %v8025
    %v8146 = vpack.c.b16 %v8030, %v8026
    %v8147 = vpack.c.b16 %v8031, %v8027
    %v8148 = vpack.c.b16 %v8036, %v8032
    %v8149 = vpack.c.b16 %v8037, %v8033
    %v8150 = vpack.c.b16 %v8038, %v8034
    %v8151 = vpack.c.b16 %v8039, %v8035
    %v8152 = vpack.c.b16 %v8044, %v8040
    %v8153 = vpack.c.b16 %v8045, %v8041
    %v8154 = vpack.c.b16 %v8046, %v8042
    %v8155 = vpack.c.b16 %v8047, %v8043
    %v8156 = vpack.c.b16 %v8052, %v8048
    %v8157 = vpack.c.b16 %v8053, %v8049
    %v8158 = vpack.c.b16 %v8054, %v8050
    %v8159 = vpack.c.b16 %v8055, %v8051
    %v8160 = vpack.c.b16 %v8060, %v8056
    %v8161 = vpack.c.b16 %v8061, %v8057
    %v8162 = vpack.c.b16 %v8062, %v8058
    %v8163 = vpack.c.b16 %v8063, %v8059
    %v8164 = vpack.c.b16 %v8068, %v8064
    %v8165 = vpack.c.b16 %v8069, %v8065
    %v8166 = vpack.c.b16 %v8070, %v8066
    %v8167 = vpack.c.b16 %v8071, %v8067
    %v8168 = vpack.c.b16 %v8076, %v8072
    %v8169 = vpack.c.b16 %v8077, %v8073
    %v8170 = vpack.c.b16 %v8078, %v8074
    %v8171 = vpack.c.b16 %v8079, %v8075
    %v8172 = vpack.c.b16 %v8084, %v8080
    %v8173 = vpack.c.b16 %v8085, %v8081
    %v8174 = vpack.c.b16 %v8086, %v8082
    %v8175 = vpack.c.b16 %v8087, %v8083
    %v8176 = vpack.c.b16 %v8092, %v8088
    %v8177 = vpack.c.b16 %v8093, %v8089
    %v8178 = vpack.c.b16 %v8094, %v8090
    %v8179 = vpack.c.b16 %v8095, %v8091
    %v8180 = vpack.c.b16 %v8100, %v8096
    %v8181 = vpack.c.b16 %v8101, %v8097
    %v8182 = vpack.c.b16 %v8102, %v8098
    %v8183 = vpack.c.b16 %v8103, %v8099
    %v8184 = vpack.c.b16 %v8108, %v8104
    %v8185 = vpack.c.b16 %v8109, %v8105
    %v8186 = vpack.c.b16 %v8110, %v8106
    %v8187 = vpack.c.b16 %v8111, %v8107
    %v8188 = vpack.c.b16 %v8116, %v8112
    %v8189 = vpack.c.b16 %v8117, %v8113
    %v8190 = vpack.c.b16 %v8118, %v8114
    %v8191 = vpack.c.b16 %v8119, %v8115
    %v8192 = vpack.c.b16 %v8124, %v8120
    %v8193 = vpack.c.b16 %v8125, %v8121
    %v8194 = vpack.c.b16 %v8126, %v8122
    %v8195 = vpack.c.b16 %v8127, %v8123
    %v8196 = vpack.c.b16 %v8132, %v8128
    %v8197 = vpack.c.b16 %v8133, %v8129
    %v8198 = vpack.c.b16 %v8134, %v8130
    %v8199 = vpack.c.b16 %v8135, %v8131
    %8264 = vmatprep.subr.bf16.mxu0 %v8137
    %8265 = vmatpush1.bf16.msra.mxu0 %v8136
    %8266 = vmatprep.subr.bf16.mxu0 %v8141
    %8267 = vmatpush1.bf16.msra.mxu0 %v8140
    %8268 = vmatprep.subr.bf16.mxu0 %v8145
    %8269 = vmatpush1.bf16.msra.mxu0 %v8144
    %8270 = vmatprep.subr.bf16.mxu0 %v8149
    %8271 = vmatpush1.bf16.msra.mxu0 %v8148
    %8272 = vmatprep.subr.bf16.mxu0 %v8153
    %8273 = vmatpush1.bf16.msra.mxu0 %v8152
    %8274 = vmatprep.subr.bf16.mxu0 %v8157
    %8275 = vmatpush1.bf16.msra.mxu0 %v8156
    %8276 = vmatprep.subr.bf16.mxu0 %v8161
    %8277 = vmatpush1.bf16.msra.mxu0 %v8160
    %8278 = vmatprep.subr.bf16.mxu0 %v8165
    %8279 = vmatpush1.bf16.msra.mxu0 %v8164
    %8280 = vmatprep.subr.bf16.mxu0 %v8169
    %8281 = vmatpush1.bf16.msra.mxu0 %v8168
    %8282 = vmatprep.subr.bf16.mxu0 %v8173
    %8283 = vmatpush1.bf16.msra.mxu0 %v8172
    %8284 = vmatprep.subr.bf16.mxu0 %v8177
    %8285 = vmatpush1.bf16.msra.mxu0 %v8176
    %8286 = vmatprep.subr.bf16.mxu0 %v8181
    %8287 = vmatpush1.bf16.msra.mxu0 %v8180
    %8288 = vmatprep.subr.bf16.mxu0 %v8185
    %8289 = vmatpush1.bf16.msra.mxu0 %v8184
    %8290 = vmatprep.subr.bf16.mxu0 %v8189
    %8291 = vmatpush1.bf16.msra.mxu0 %v8188
    %8292 = vmatprep.subr.bf16.mxu0 %v8193
    %8293 = vmatpush1.bf16.msra.mxu0 %v8192
    %8294 = vmatprep.subr.bf16.mxu0 %v8197
    %8295 = vmatpush1.bf16.msra.mxu0 %v8196
    %8296 = vmatprep.mubr.bf16.mxu0 %v7875
    %8297 = vmatmul.mubr.bf16.gmra.mrb[0].mxu0 %v7874
    %v8298 = vpop.f32.mrb[0].mxu0
    %v8299 = vadd.f32 %v7940, %v8298
    %v8300 = vpop.f32.mrb[0].mxu0
    %v8301 = vadd.f32 %v7941, %v8300
    %v8302 = vpop.f32.mrb[0].mxu0
    %v8303 = vpop.f32.mrb[0].mxu0
    %8304 = vdwg.mxu0
    %8305 = vmatprep.subr.bf16.mxu0 %v8139
    %8306 = vmatpush1.bf16.msra.mxu0 %v8138
    %8307 = vmatprep.subr.bf16.mxu0 %v8143
    %8308 = vmatpush1.bf16.msra.mxu0 %v8142
    %8309 = vmatprep.subr.bf16.mxu0 %v8147
    %8310 = vmatpush1.bf16.msra.mxu0 %v8146
    %8311 = vmatprep.subr.bf16.mxu0 %v8151
    %8312 = vmatpush1.bf16.msra.mxu0 %v8150
    %8313 = vmatprep.subr.bf16.mxu0 %v8155
    %8314 = vmatpush1.bf16.msra.mxu0 %v8154
    %8315 = vmatprep.subr.bf16.mxu0 %v8159
    %8316 = vmatpush1.bf16.msra.mxu0 %v8158
    %8317 = vmatprep.subr.bf16.mxu0 %v8163
    %8318 = vmatpush1.bf16.msra.mxu0 %v8162
    %8319 = vmatprep.subr.bf16.mxu0 %v8167
    %8320 = vmatpush1.bf16.msra.mxu0 %v8166
    %8321 = vmatprep.subr.bf16.mxu0 %v8171
    %8322 = vmatpush1.bf16.msra.mxu0 %v8170
    %8323 = vmatprep.subr.bf16.mxu0 %v8175
    %8324 = vmatpush1.bf16.msra.mxu0 %v8174
    %8325 = vmatprep.subr.bf16.mxu0 %v8179
    %8326 = vmatpush1.bf16.msra.mxu0 %v8178
    %8327 = vmatprep.subr.bf16.mxu0 %v8183
    %8328 = vmatpush1.bf16.msra.mxu0 %v8182
    %8329 = vmatprep.subr.bf16.mxu0 %v8187
    %8330 = vmatpush1.bf16.msra.mxu0 %v8186
    %8331 = vmatprep.subr.bf16.mxu0 %v8191
    %8332 = vmatpush1.bf16.msra.mxu0 %v8190
    %8333 = vmatprep.subr.bf16.mxu0 %v8195
    %8334 = vmatpush1.bf16.msra.mxu0 %v8194
    %8335 = vmatprep.subr.bf16.mxu0 %v8199
    %8336 = vmatpush1.bf16.msra.mxu0 %v8198
    %8337 = vmatprep.mubr.bf16.mxu0 %v7875
    %8338 = vmatmul.mubr.bf16.gmra.mrb[0].mxu0 %v7874
    %v8339 = vpop.f32.mrb[0].mxu0
    %v8340 = vadd.f32 %v7942, %v8339
    %v8341 = vpop.f32.mrb[0].mxu0
    %v8342 = vadd.f32 %v7943, %v8341
    %v8343 = vpop.f32.mrb[0].mxu0
    %v8344 = vpop.f32.mrb[0].mxu0
    %8345 = vdwg.mxu0
    %v8346 = vxor.u32 %v8299, 2147483648
    %v8347 = vmul.f32 %v8346, 1.442695
    %v8348 = vpow.pop %v8347
    %v8349 = vadd.f32 %v8348, 1.0
    %v8350 = vrcp.pop %v8349
    %v8351 = vmul.f32 1.0, %v8350
    %v8352 = vxor.u32 %v8301, 2147483648
    %v8353 = vmul.f32 %v8352, 1.442695
    %v8354 = vpow.pop %v8353
    %v8355 = vadd.f32 %v8354, 1.0
    %v8356 = vrcp.pop %v8355
    %v8357 = vmul.f32 1.0, %v8356
    %v8358 = vtanh.pop %v8340
    %v8359 = vxor.u32 %v8342, 2147483648
    %v8360 = vmul.f32 %v8359, 1.442695
    %v8361 = vpow.pop %v8360
    %v8362 = vadd.f32 %v8361, 1.0
    %v8363 = vrcp.pop %v8362
    %v8364 = vmul.f32 1.0, %v8363
    %v8365 = vld [vmem:[#allocation3] sm:$0xff]
    %v8366 = vmul.f32 %v8357, %v8365
    %v8367 = vmul.f32 %v8351, %v8358
    %v8368 = vadd.f32 %v8366, %v8367
    %v8369 = vtanh.pop %v8368
    %v8370 = vmul.f32 %v8364, %v8369
    %8371 = vst [vmem:[#allocation2 + $0x8] sm:$0xff] %v8370
    %8372 = vst [vmem:[#allocation3] sm:$0xff] %v8368
    %v8373 = vpack.c.bf16 %v8370, %v8370
    %v8374 = vld [vmem:[%s8] sm:$0xf]
    %v8375 = vld [vmem:[%s8 + $0x4] sm:$0xf]
    %v8376 = vld [vmem:[%s8 + $0x8] sm:$0xf]
    %v8377 = vld [vmem:[%s8 + $0xc] sm:$0xf]
    %v8378 = vld [vmem:[%s8 + $0x10] sm:$0xf]
    %v8379 = vld [vmem:[%s8 + $0x14] sm:$0xf]
    %v8380 = vld [vmem:[%s8 + $0x18] sm:$0xf]
    %v8381 = vld [vmem:[%s8 + $0x1c] sm:$0xf]
    %v8382 = vld [vmem:[%s8 + $0x20] sm:$0xf]
    %v8383 = vld [vmem:[%s8 + $0x24] sm:$0xf]
    %v8384 = vld [vmem:[%s8 + $0x28] sm:$0xf]
    %v8385 = vld [vmem:[%s8 + $0x2c] sm:$0xf]
    %v8386 = vld [vmem:[%s8 + $0x30] sm:$0xf]
    %v8387 = vld [vmem:[%s8 + $0x34] sm:$0xf]
    %v8388 = vld [vmem:[%s8 + $0x38] sm:$0xf]
    %v8389 = vld [vmem:[%s8 + $0x3c] sm:$0xf]
    %v8390 = vld [vmem:[%s9] sm:$0xff]
    %v8407 = vunpack.c.l.b16 %v8374
    %v8408 = vunpack.c.l.b16 %v8375
    %v8409 = vunpack.c.l.b16 %v8376
    %v8410 = vunpack.c.l.b16 %v8377
    %v8411 = vunpack.c.l.b16 %v8378
    %v8412 = vunpack.c.l.b16 %v8379
    %v8413 = vunpack.c.l.b16 %v8380
    %v8414 = vunpack.c.l.b16 %v8381
    %v8415 = vunpack.c.l.b16 %v8382
    %v8416 = vunpack.c.l.b16 %v8383
    %v8417 = vunpack.c.l.b16 %v8384
    %v8418 = vunpack.c.l.b16 %v8385
    %v8419 = vunpack.c.l.b16 %v8386
    %v8420 = vunpack.c.l.b16 %v8387
    %v8421 = vunpack.c.l.b16 %v8388
    %v8422 = vunpack.c.l.b16 %v8389
    %v8423 = vpack.c.b16 %v8408, %v8407
    %v8424 = vpack.c.b16 %v8410, %v8409
    %v8425 = vpack.c.b16 %v8412, %v8411
    %v8426 = vpack.c.b16 %v8414, %v8413
    %v8427 = vpack.c.b16 %v8416, %v8415
    %v8428 = vpack.c.b16 %v8418, %v8417
    %v8429 = vpack.c.b16 %v8420, %v8419
    %v8430 = vpack.c.b16 %v8422, %v8421
    %8439 = vmatprep.subr.bf16.mxu0 0
    %8440 = vmatpush1.bf16.msra.mxu0 %v8423
    %8441 = vmatprep.subr.bf16.mxu0 0
    %8442 = vmatpush1.bf16.msra.mxu0 %v8424
    %8443 = vmatprep.subr.bf16.mxu0 0
    %8444 = vmatpush1.bf16.msra.mxu0 %v8425
    %8445 = vmatprep.subr.bf16.mxu0 0
    %8446 = vmatpush1.bf16.msra.mxu0 %v8426
    %8447 = vmatprep.subr.bf16.mxu0 0
    %8448 = vmatpush1.bf16.msra.mxu0 %v8427
    %8449 = vmatprep.subr.bf16.mxu0 0
    %8450 = vmatpush1.bf16.msra.mxu0 %v8428
    %8451 = vmatprep.subr.bf16.mxu0 0
    %8452 = vmatpush1.bf16.msra.mxu0 %v8429
    %8453 = vmatprep.subr.bf16.mxu0 0
    %8454 = vmatpush1.bf16.msra.mxu0 %v8430
    %8455 = vmatprep.subr.bf16.mxu0 0
    %8456 = vmatpush1.bf16.msra.mxu0 0
    %8457 = vmatprep.subr.bf16.mxu0 0
    %8458 = vmatpush1.bf16.msra.mxu0 0
    %8459 = vmatprep.subr.bf16.mxu0 0
    %8460 = vmatpush1.bf16.msra.mxu0 0
    %8461 = vmatprep.subr.bf16.mxu0 0
    %8462 = vmatpush1.bf16.msra.mxu0 0
    %8463 = vmatprep.subr.bf16.mxu0 0
    %8464 = vmatpush1.bf16.msra.mxu0 0
    %8465 = vmatprep.subr.bf16.mxu0 0
    %8466 = vmatpush1.bf16.msra.mxu0 0
    %8467 = vmatprep.subr.bf16.mxu0 0
    %8468 = vmatpush1.bf16.msra.mxu0 0
    %8469 = vmatprep.subr.bf16.mxu0 0
    %8470 = vmatpush1.bf16.msra.mxu0 0
    %8471 = vmatprep.mubr.bf16.mxu0 0
    %8472 = vmatmul.mubr.bf16.gmra.mrb[0].mxu0 %v8373
    %v8473 = vpop.f32.mrb[0].mxu0
    %v8474 = vadd.f32 %v8390, %v8473
    %v8475 = vpop.f32.mrb[0].mxu0
    %v8476 = vpop.f32.mrb[0].mxu0
    %v8477 = vpop.f32.mrb[0].mxu0
    %8478 = vdwg.mxu0
    %s8479 = scalar_lea.vmem [#allocation8], 48
    %8480 = vst [vmem:[%s8479] sm:$0xff] %v8474
    %s8481 = sld [smem:[#allocation5 + $0x6]]
    %p8482 = scmp.eq.s32.totalorder %s8481, 0
    // Predicated region
    $region106: #{seq2seq_forward.1} parent=1 // pred_check
      %p8483 = pneg %p8482
    $region107: #{seq2seq_forward.1} parent=1 // pred_check_branch
      %8485 = sbr.rel (%p8483) target = $region109
    $region108: #{seq2seq_forward.1} parent=1 // pred_region
      %v8486 = vlaneseq
      %v8487 = vand.u32 %v8486, 127
      %8488 = vmax.xlane.f32.xlu0 %v8474
      %v8489 = vpop.xlane.xlu0 %8488
      %vm8490 = vcmp.eq.f32.partialorder %v8474, %v8489
      %v8491 = vsel %vm8490, %v8487, 128
      %v8492 = vand.u32 %v8491, 65535
      %v8493 = vshra.s32 %v8491, 16
      %v8494 = vcvt.s32.f32 %v8492
      %v8495 = vcvt.s32.f32 %v8493
      %8496 = vmin.xlane.f32.xlu0 %v8495
      %v8497 = vpop.xlane.xlu0 %8496
      %vm8498 = vcmp.eq.f32.partialorder %v8495, %v8497
      %v8499 = vsel %vm8498, %v8494, inf
      %8500 = vmin.xlane.f32.xlu0 %v8499
      %v8501 = vpop.xlane.xlu0 %8500
      %v8502 = vcvt.f32.s32 %v8501
      %v8503 = vcvt.f32.s32 %v8497
      %v8504 = vshll.u32 %v8503, 16
      %v8505 = vadd.s32 %v8504, %v8502
      %vm8506 = vcmp.eq.s32.totalorder %v8487, %v8505
      %v8507 = vsel %vm8506, 1, 0
      %v8508 = vcvt.s32.f32 %v8507
      %v8509 = vpack.c.bf16 %v8508, %v8508
      %v8510 = vld [vmem:[%s3] sm:$0xf]
      %v8511 = vld [vmem:[%s3 + $0x4] sm:$0xf]
      %v8512 = vld [vmem:[%s3 + $0x8] sm:$0xf]
      %v8513 = vld [vmem:[%s3 + $0xc] sm:$0xf]
      %v8514 = vld [vmem:[%s3 + $0x10] sm:$0xf]
      %v8515 = vld [vmem:[%s3 + $0x14] sm:$0xf]
      %v8516 = vld [vmem:[%s3 + $0x18] sm:$0xf]
      %v8517 = vld [vmem:[%s3 + $0x1c] sm:$0xf]
      %v8518 = vld [vmem:[%s3 + $0x20] sm:$0xf]
      %v8519 = vld [vmem:[%s3 + $0x24] sm:$0xf]
      %v8520 = vld [vmem:[%s3 + $0x28] sm:$0xf]
      %v8521 = vld [vmem:[%s3 + $0x2c] sm:$0xf]
      %v8522 = vld [vmem:[%s3 + $0x30] sm:$0xf]
      %v8523 = vld [vmem:[%s3 + $0x34] sm:$0xf]
      %v8524 = vld [vmem:[%s3 + $0x38] sm:$0xf]
      %v8525 = vld [vmem:[%s3 + $0x3c] sm:$0xf]
      %v8542 = vunpack.c.l.b16 %v8510
      %v8543 = vunpack.c.l.b16 %v8511
      %v8544 = vunpack.c.l.b16 %v8512
      %v8545 = vunpack.c.l.b16 %v8513
      %v8546 = vunpack.c.l.b16 %v8514
      %v8547 = vunpack.c.l.b16 %v8515
      %v8548 = vunpack.c.l.b16 %v8516
      %v8549 = vunpack.c.l.b16 %v8517
      %v8550 = vunpack.c.l.b16 %v8518
      %v8551 = vunpack.c.l.b16 %v8519
      %v8552 = vunpack.c.l.b16 %v8520
      %v8553 = vunpack.c.l.b16 %v8521
      %v8554 = vunpack.c.l.b16 %v8522
      %v8555 = vunpack.c.l.b16 %v8523
      %v8556 = vunpack.c.l.b16 %v8524
      %v8557 = vunpack.c.l.b16 %v8525
      %v8558 = vpack.c.b16 %v8543, %v8542
      %v8559 = vpack.c.b16 %v8545, %v8544
      %v8560 = vpack.c.b16 %v8547, %v8546
      %v8561 = vpack.c.b16 %v8549, %v8548
      %v8562 = vpack.c.b16 %v8551, %v8550
      %v8563 = vpack.c.b16 %v8553, %v8552
      %v8564 = vpack.c.b16 %v8555, %v8554
      %v8565 = vpack.c.b16 %v8557, %v8556
      %8574 = vmatprep.subr.bf16.mxu0 0
      %8575 = vmatpush1.bf16.msra.mxu0 %v8558
      %8576 = vmatprep.subr.bf16.mxu0 0
      %8577 = vmatpush1.bf16.msra.mxu0 %v8559
      %8578 = vmatprep.subr.bf16.mxu0 0
      %8579 = vmatpush1.bf16.msra.mxu0 %v8560
      %8580 = vmatprep.subr.bf16.mxu0 0
      %8581 = vmatpush1.bf16.msra.mxu0 %v8561
      %8582 = vmatprep.subr.bf16.mxu0 0
      %8583 = vmatpush1.bf16.msra.mxu0 %v8562
      %8584 = vmatprep.subr.bf16.mxu0 0
      %8585 = vmatpush1.bf16.msra.mxu0 %v8563
      %8586 = vmatprep.subr.bf16.mxu0 0
      %8587 = vmatpush1.bf16.msra.mxu0 %v8564
      %8588 = vmatprep.subr.bf16.mxu0 0
      %8589 = vmatpush1.bf16.msra.mxu0 %v8565
      %8590 = vmatprep.subr.bf16.mxu0 0
      %8591 = vmatpush1.bf16.msra.mxu0 0
      %8592 = vmatprep.subr.bf16.mxu0 0
      %8593 = vmatpush1.bf16.msra.mxu0 0
      %8594 = vmatprep.subr.bf16.mxu0 0
      %8595 = vmatpush1.bf16.msra.mxu0 0
      %8596 = vmatprep.subr.bf16.mxu0 0
      %8597 = vmatpush1.bf16.msra.mxu0 0
      %8598 = vmatprep.subr.bf16.mxu0 0
      %8599 = vmatpush1.bf16.msra.mxu0 0
      %8600 = vmatprep.subr.bf16.mxu0 0
      %8601 = vmatpush1.bf16.msra.mxu0 0
      %8602 = vmatprep.subr.bf16.mxu0 0
      %8603 = vmatpush1.bf16.msra.mxu0 0
      %8604 = vmatprep.subr.bf16.mxu0 0
      %8605 = vmatpush1.bf16.msra.mxu0 0
      %8606 = vmatprep.mubr.bf16.mxu0 0
      %8607 = vmatmul.mubr.bf16.gmra.mrb[0].mxu0 %v8509
      %v8608 = vpop.f32.mrb[0].mxu0
      %v8609 = vadd.f32 0.0, %v8608
      %v8610 = vpop.f32.mrb[0].mxu0
      %v8611 = vpop.f32.mrb[0].mxu0
      %v8612 = vpop.f32.mrb[0].mxu0
      %8613 = vdwg.mxu0
      %8614 = vst [vmem:[#allocation4] sm:$0xff] %v8609
    $region109: #{seq2seq_forward.1} parent=1 // pred_fallthru
      _
    %s8615 = sld [smem:[#allocation5 + $0x6]]
    %p8616 = scmp.ne.s32.totalorder %s8615, 0
    // Predicated region
    $region110: #{seq2seq_forward.1} parent=1 // pred_check
      %p8617 = pneg %p8616
    $region111: #{seq2seq_forward.1} parent=1 // pred_check_branch
      %8619 = sbr.rel (%p8617) target = $region113
    $region112: #{seq2seq_forward.1} parent=1 // pred_region
      %s8620 = scalar_lea.vmem %s2, 48
      %v8621 = vld [vmem:[%s8620] sm:$0xff]
      %8622 = vst [vmem:[#allocation2] sm:$0xff] %v8621
    $region113: #{seq2seq_forward.1} parent=1 // pred_fallthru
      _
    %p8623 = scmp.eq.s32.totalorder %s8615, 0
    // Predicated region
    $region114: #{seq2seq_forward.1} parent=1 // pred_check
      %p8624 = pneg %p8623
    $region115: #{seq2seq_forward.1} parent=1 // pred_check_branch
      %8626 = sbr.rel (%p8624) target = $region117
    $region116: #{seq2seq_forward.1} parent=1 // pred_region
      %v8627 = vld [vmem:[#allocation4] sm:$0xff]
      %8628 = vst [vmem:[#allocation2] sm:$0xff] %v8627
    $region117: #{seq2seq_forward.1} parent=1 // pred_fallthru
      _
    %v8629 = vld [vmem:[#allocation2] sm:$0xff]
    %v8630 = vld [vmem:[#allocation2 + $0x8] sm:$0xff]
    %v8631 = vpack.c.bf16 %v8629, %v8629
    %v8632 = vpack.c.bf16 %v8630, %v8630
    %v8633 = vld [vmem:[%s6] sm:$0xff]
    %v8634 = vld [vmem:[%s6 + $0x8] sm:$0xff]
    %v8635 = vld [vmem:[%s6 + $0x10] sm:$0xff]
    %v8636 = vld [vmem:[%s6 + $0x18] sm:$0xff]
    %v8637 = vld [vmem:[%s6 + $0x20] sm:$0xff]
    %v8638 = vld [vmem:[%s6 + $0x28] sm:$0xff]
    %v8639 = vld [vmem:[%s6 + $0x30] sm:$0xff]
    %v8640 = vld [vmem:[%s6 + $0x38] sm:$0xff]
    %v8641 = vld [vmem:[%s6 + $0x40] sm:$0xff]
    %v8642 = vld [vmem:[%s6 + $0x48] sm:$0xff]
    %v8643 = vld [vmem:[%s6 + $0x50] sm:$0xff]
    %v8644 = vld [vmem:[%s6 + $0x58] sm:$0xff]
    %v8645 = vld [vmem:[%s6 + $0x60] sm:$0xff]
    %v8646 = vld [vmem:[%s6 + $0x68] sm:$0xff]
    %v8647 = vld [vmem:[%s6 + $0x70] sm:$0xff]
    %v8648 = vld [vmem:[%s6 + $0x78] sm:$0xff]
    %v8649 = vld [vmem:[%s6 + $0x80] sm:$0xff]
    %v8650 = vld [vmem:[%s6 + $0x88] sm:$0xff]
    %v8651 = vld [vmem:[%s6 + $0x90] sm:$0xff]
    %v8652 = vld [vmem:[%s6 + $0x98] sm:$0xff]
    %v8653 = vld [vmem:[%s6 + $0xa0] sm:$0xff]
    %v8654 = vld [vmem:[%s6 + $0xa8] sm:$0xff]
    %v8655 = vld [vmem:[%s6 + $0xb0] sm:$0xff]
    %v8656 = vld [vmem:[%s6 + $0xb8] sm:$0xff]
    %v8657 = vld [vmem:[%s6 + $0xc0] sm:$0xff]
    %v8658 = vld [vmem:[%s6 + $0xc8] sm:$0xff]
    %v8659 = vld [vmem:[%s6 + $0xd0] sm:$0xff]
    %v8660 = vld [vmem:[%s6 + $0xd8] sm:$0xff]
    %v8661 = vld [vmem:[%s6 + $0xe0] sm:$0xff]
    %v8662 = vld [vmem:[%s6 + $0xe8] sm:$0xff]
    %v8663 = vld [vmem:[%s6 + $0xf0] sm:$0xff]
    %v8664 = vld [vmem:[%s6 + $0xf8] sm:$0xff]
    %v8665 = vld [vmem:[%s6 + $0x100] sm:$0xff]
    %v8666 = vld [vmem:[%s6 + $0x108] sm:$0xff]
    %v8667 = vld [vmem:[%s6 + $0x110] sm:$0xff]
    %v8668 = vld [vmem:[%s6 + $0x118] sm:$0xff]
    %v8669 = vld [vmem:[%s6 + $0x120] sm:$0xff]
    %v8670 = vld [vmem:[%s6 + $0x128] sm:$0xff]
    %v8671 = vld [vmem:[%s6 + $0x130] sm:$0xff]
    %v8672 = vld [vmem:[%s6 + $0x138] sm:$0xff]
    %v8673 = vld [vmem:[%s6 + $0x140] sm:$0xff]
    %v8674 = vld [vmem:[%s6 + $0x148] sm:$0xff]
    %v8675 = vld [vmem:[%s6 + $0x150] sm:$0xff]
    %v8676 = vld [vmem:[%s6 + $0x158] sm:$0xff]
    %v8677 = vld [vmem:[%s6 + $0x160] sm:$0xff]
    %v8678 = vld [vmem:[%s6 + $0x168] sm:$0xff]
    %v8679 = vld [vmem:[%s6 + $0x170] sm:$0xff]
    %v8680 = vld [vmem:[%s6 + $0x178] sm:$0xff]
    %v8681 = vld [vmem:[%s6 + $0x180] sm:$0xff]
    %v8682 = vld [vmem:[%s6 + $0x188] sm:$0xff]
    %v8683 = vld [vmem:[%s6 + $0x190] sm:$0xff]
    %v8684 = vld [vmem:[%s6 + $0x198] sm:$0xff]
    %v8685 = vld [vmem:[%s6 + $0x1a0] sm:$0xff]
    %v8686 = vld [vmem:[%s6 + $0x1a8] sm:$0xff]
    %v8687 = vld [vmem:[%s6 + $0x1b0] sm:$0xff]
    %v8688 = vld [vmem:[%s6 + $0x1b8] sm:$0xff]
    %v8689 = vld [vmem:[%s6 + $0x1c0] sm:$0xff]
    %v8690 = vld [vmem:[%s6 + $0x1c8] sm:$0xff]
    %v8691 = vld [vmem:[%s6 + $0x1d0] sm:$0xff]
    %v8692 = vld [vmem:[%s6 + $0x1d8] sm:$0xff]
    %v8693 = vld [vmem:[%s6 + $0x1e0] sm:$0xff]
    %v8694 = vld [vmem:[%s6 + $0x1e8] sm:$0xff]
    %v8695 = vld [vmem:[%s6 + $0x1f0] sm:$0xff]
    %v8696 = vld [vmem:[%s6 + $0x1f8] sm:$0xff]
    %v8697 = vld [vmem:[%s7] sm:$0xff]
    %v8698 = vld [vmem:[%s7 + $0x8] sm:$0xff]
    %v8699 = vld [vmem:[%s7 + $0x10] sm:$0xff]
    %v8700 = vld [vmem:[%s7 + $0x18] sm:$0xff]
    %v8765 = vunpack.c.l.b16 %v8633
    %v8766 = vunpack.c.h.b16 %v8633
    %v8767 = vunpack.c.l.b16 %v8634
    %v8768 = vunpack.c.h.b16 %v8634
    %v8769 = vunpack.c.l.b16 %v8635
    %v8770 = vunpack.c.h.b16 %v8635
    %v8771 = vunpack.c.l.b16 %v8636
    %v8772 = vunpack.c.h.b16 %v8636
    %v8773 = vunpack.c.l.b16 %v8637
    %v8774 = vunpack.c.h.b16 %v8637
    %v8775 = vunpack.c.l.b16 %v8638
    %v8776 = vunpack.c.h.b16 %v8638
    %v8777 = vunpack.c.l.b16 %v8639
    %v8778 = vunpack.c.h.b16 %v8639
    %v8779 = vunpack.c.l.b16 %v8640
    %v8780 = vunpack.c.h.b16 %v8640
    %v8781 = vunpack.c.l.b16 %v8641
    %v8782 = vunpack.c.h.b16 %v8641
    %v8783 = vunpack.c.l.b16 %v8642
    %v8784 = vunpack.c.h.b16 %v8642
    %v8785 = vunpack.c.l.b16 %v8643
    %v8786 = vunpack.c.h.b16 %v8643
    %v8787 = vunpack.c.l.b16 %v8644
    %v8788 = vunpack.c.h.b16 %v8644
    %v8789 = vunpack.c.l.b16 %v8645
    %v8790 = vunpack.c.h.b16 %v8645
    %v8791 = vunpack.c.l.b16 %v8646
    %v8792 = vunpack.c.h.b16 %v8646
    %v8793 = vunpack.c.l.b16 %v8647
    %v8794 = vunpack.c.h.b16 %v8647
    %v8795 = vunpack.c.l.b16 %v8648
    %v8796 = vunpack.c.h.b16 %v8648
    %v8797 = vunpack.c.l.b16 %v8649
    %v8798 = vunpack.c.h.b16 %v8649
    %v8799 = vunpack.c.l.b16 %v8650
    %v8800 = vunpack.c.h.b16 %v8650
    %v8801 = vunpack.c.l.b16 %v8651
    %v8802 = vunpack.c.h.b16 %v8651
    %v8803 = vunpack.c.l.b16 %v8652
    %v8804 = vunpack.c.h.b16 %v8652
    %v8805 = vunpack.c.l.b16 %v8653
    %v8806 = vunpack.c.h.b16 %v8653
    %v8807 = vunpack.c.l.b16 %v8654
    %v8808 = vunpack.c.h.b16 %v8654
    %v8809 = vunpack.c.l.b16 %v8655
    %v8810 = vunpack.c.h.b16 %v8655
    %v8811 = vunpack.c.l.b16 %v8656
    %v8812 = vunpack.c.h.b16 %v8656
    %v8813 = vunpack.c.l.b16 %v8657
    %v8814 = vunpack.c.h.b16 %v8657
    %v8815 = vunpack.c.l.b16 %v8658
    %v8816 = vunpack.c.h.b16 %v8658
    %v8817 = vunpack.c.l.b16 %v8659
    %v8818 = vunpack.c.h.b16 %v8659
    %v8819 = vunpack.c.l.b16 %v8660
    %v8820 = vunpack.c.h.b16 %v8660
    %v8821 = vunpack.c.l.b16 %v8661
    %v8822 = vunpack.c.h.b16 %v8661
    %v8823 = vunpack.c.l.b16 %v8662
    %v8824 = vunpack.c.h.b16 %v8662
    %v8825 = vunpack.c.l.b16 %v8663
    %v8826 = vunpack.c.h.b16 %v8663
    %v8827 = vunpack.c.l.b16 %v8664
    %v8828 = vunpack.c.h.b16 %v8664
    %v8829 = vunpack.c.l.b16 %v8665
    %v8830 = vunpack.c.h.b16 %v8665
    %v8831 = vunpack.c.l.b16 %v8666
    %v8832 = vunpack.c.h.b16 %v8666
    %v8833 = vunpack.c.l.b16 %v8667
    %v8834 = vunpack.c.h.b16 %v8667
    %v8835 = vunpack.c.l.b16 %v8668
    %v8836 = vunpack.c.h.b16 %v8668
    %v8837 = vunpack.c.l.b16 %v8669
    %v8838 = vunpack.c.h.b16 %v8669
    %v8839 = vunpack.c.l.b16 %v8670
    %v8840 = vunpack.c.h.b16 %v8670
    %v8841 = vunpack.c.l.b16 %v8671
    %v8842 = vunpack.c.h.b16 %v8671
    %v8843 = vunpack.c.l.b16 %v8672
    %v8844 = vunpack.c.h.b16 %v8672
    %v8845 = vunpack.c.l.b16 %v8673
    %v8846 = vunpack.c.h.b16 %v8673
    %v8847 = vunpack.c.l.b16 %v8674
    %v8848 = vunpack.c.h.b16 %v8674
    %v8849 = vunpack.c.l.b16 %v8675
    %v8850 = vunpack.c.h.b16 %v8675
    %v8851 = vunpack.c.l.b16 %v8676
    %v8852 = vunpack.c.h.b16 %v8676
    %v8853 = vunpack.c.l.b16 %v8677
    %v8854 = vunpack.c.h.b16 %v8677
    %v8855 = vunpack.c.l.b16 %v8678
    %v8856 = vunpack.c.h.b16 %v8678
    %v8857 = vunpack.c.l.b16 %v8679
    %v8858 = vunpack.c.h.b16 %v8679
    %v8859 = vunpack.c.l.b16 %v8680
    %v8860 = vunpack.c.h.b16 %v8680
    %v8861 = vunpack.c.l.b16 %v8681
    %v8862 = vunpack.c.h.b16 %v8681
    %v8863 = vunpack.c.l.b16 %v8682
    %v8864 = vunpack.c.h.b16 %v8682
    %v8865 = vunpack.c.l.b16 %v8683
    %v8866 = vunpack.c.h.b16 %v8683
    %v8867 = vunpack.c.l.b16 %v8684
    %v8868 = vunpack.c.h.b16 %v8684
    %v8869 = vunpack.c.l.b16 %v8685
    %v8870 = vunpack.c.h.b16 %v8685
    %v8871 = vunpack.c.l.b16 %v8686
    %v8872 = vunpack.c.h.b16 %v8686
    %v8873 = vunpack.c.l.b16 %v8687
    %v8874 = vunpack.c.h.b16 %v8687
    %v8875 = vunpack.c.l.b16 %v8688
    %v8876 = vunpack.c.h.b16 %v8688
    %v8877 = vunpack.c.l.b16 %v8689
    %v8878 = vunpack.c.h.b16 %v8689
    %v8879 = vunpack.c.l.b16 %v8690
    %v8880 = vunpack.c.h.b16 %v8690
    %v8881 = vunpack.c.l.b16 %v8691
    %v8882 = vunpack.c.h.b16 %v8691
    %v8883 = vunpack.c.l.b16 %v8692
    %v8884 = vunpack.c.h.b16 %v8692
    %v8885 = vunpack.c.l.b16 %v8693
    %v8886 = vunpack.c.h.b16 %v8693
    %v8887 = vunpack.c.l.b16 %v8694
    %v8888 = vunpack.c.h.b16 %v8694
    %v8889 = vunpack.c.l.b16 %v8695
    %v8890 = vunpack.c.h.b16 %v8695
    %v8891 = vunpack.c.l.b16 %v8696
    %v8892 = vunpack.c.h.b16 %v8696
    %v8893 = vpack.c.b16 %v8769, %v8765
    %v8894 = vpack.c.b16 %v8770, %v8766
    %v8895 = vpack.c.b16 %v8771, %v8767
    %v8896 = vpack.c.b16 %v8772, %v8768
    %v8897 = vpack.c.b16 %v8777, %v8773
    %v8898 = vpack.c.b16 %v8778, %v8774
    %v8899 = vpack.c.b16 %v8779, %v8775
    %v8900 = vpack.c.b16 %v8780, %v8776
    %v8901 = vpack.c.b16 %v8785, %v8781
    %v8902 = vpack.c.b16 %v8786, %v8782
    %v8903 = vpack.c.b16 %v8787, %v8783
    %v8904 = vpack.c.b16 %v8788, %v8784
    %v8905 = vpack.c.b16 %v8793, %v8789
    %v8906 = vpack.c.b16 %v8794, %v8790
    %v8907 = vpack.c.b16 %v8795, %v8791
    %v8908 = vpack.c.b16 %v8796, %v8792
    %v8909 = vpack.c.b16 %v8801, %v8797
    %v8910 = vpack.c.b16 %v8802, %v8798
    %v8911 = vpack.c.b16 %v8803, %v8799
    %v8912 = vpack.c.b16 %v8804, %v8800
    %v8913 = vpack.c.b16 %v8809, %v8805
    %v8914 = vpack.c.b16 %v8810, %v8806
    %v8915 = vpack.c.b16 %v8811, %v8807
    %v8916 = vpack.c.b16 %v8812, %v8808
    %v8917 = vpack.c.b16 %v8817, %v8813
    %v8918 = vpack.c.b16 %v8818, %v8814
    %v8919 = vpack.c.b16 %v8819, %v8815
    %v8920 = vpack.c.b16 %v8820, %v8816
    %v8921 = vpack.c.b16 %v8825, %v8821
    %v8922 = vpack.c.b16 %v8826, %v8822
    %v8923 = vpack.c.b16 %v8827, %v8823
    %v8924 = vpack.c.b16 %v8828, %v8824
    %v8925 = vpack.c.b16 %v8833, %v8829
    %v8926 = vpack.c.b16 %v8834, %v8830
    %v8927 = vpack.c.b16 %v8835, %v8831
    %v8928 = vpack.c.b16 %v8836, %v8832
    %v8929 = vpack.c.b16 %v8841, %v8837
    %v8930 = vpack.c.b16 %v8842, %v8838
    %v8931 = vpack.c.b16 %v8843, %v8839
    %v8932 = vpack.c.b16 %v8844, %v8840
    %v8933 = vpack.c.b16 %v8849, %v8845
    %v8934 = vpack.c.b16 %v8850, %v8846
    %v8935 = vpack.c.b16 %v8851, %v8847
    %v8936 = vpack.c.b16 %v8852, %v8848
    %v8937 = vpack.c.b16 %v8857, %v8853
    %v8938 = vpack.c.b16 %v8858, %v8854
    %v8939 = vpack.c.b16 %v8859, %v8855
    %v8940 = vpack.c.b16 %v8860, %v8856
    %v8941 = vpack.c.b16 %v8865, %v8861
    %v8942 = vpack.c.b16 %v8866, %v8862
    %v8943 = vpack.c.b16 %v8867, %v8863
    %v8944 = vpack.c.b16 %v8868, %v8864
    %v8945 = vpack.c.b16 %v8873, %v8869
    %v8946 = vpack.c.b16 %v8874, %v8870
    %v8947 = vpack.c.b16 %v8875, %v8871
    %v8948 = vpack.c.b16 %v8876, %v8872
    %v8949 = vpack.c.b16 %v8881, %v8877
    %v8950 = vpack.c.b16 %v8882, %v8878
    %v8951 = vpack.c.b16 %v8883, %v8879
    %v8952 = vpack.c.b16 %v8884, %v8880
    %v8953 = vpack.c.b16 %v8889, %v8885
    %v8954 = vpack.c.b16 %v8890, %v8886
    %v8955 = vpack.c.b16 %v8891, %v8887
    %v8956 = vpack.c.b16 %v8892, %v8888
    %9021 = vmatprep.subr.bf16.mxu0 %v8894
    %9022 = vmatpush1.bf16.msra.mxu0 %v8893
    %9023 = vmatprep.subr.bf16.mxu0 %v8898
    %9024 = vmatpush1.bf16.msra.mxu0 %v8897
    %9025 = vmatprep.subr.bf16.mxu0 %v8902
    %9026 = vmatpush1.bf16.msra.mxu0 %v8901
    %9027 = vmatprep.subr.bf16.mxu0 %v8906
    %9028 = vmatpush1.bf16.msra.mxu0 %v8905
    %9029 = vmatprep.subr.bf16.mxu0 %v8910
    %9030 = vmatpush1.bf16.msra.mxu0 %v8909
    %9031 = vmatprep.subr.bf16.mxu0 %v8914
    %9032 = vmatpush1.bf16.msra.mxu0 %v8913
    %9033 = vmatprep.subr.bf16.mxu0 %v8918
    %9034 = vmatpush1.bf16.msra.mxu0 %v8917
    %9035 = vmatprep.subr.bf16.mxu0 %v8922
    %9036 = vmatpush1.bf16.msra.mxu0 %v8921
    %9037 = vmatprep.subr.bf16.mxu0 %v8926
    %9038 = vmatpush1.bf16.msra.mxu0 %v8925
    %9039 = vmatprep.subr.bf16.mxu0 %v8930
    %9040 = vmatpush1.bf16.msra.mxu0 %v8929
    %9041 = vmatprep.subr.bf16.mxu0 %v8934
    %9042 = vmatpush1.bf16.msra.mxu0 %v8933
    %9043 = vmatprep.subr.bf16.mxu0 %v8938
    %9044 = vmatpush1.bf16.msra.mxu0 %v8937
    %9045 = vmatprep.subr.bf16.mxu0 %v8942
    %9046 = vmatpush1.bf16.msra.mxu0 %v8941
    %9047 = vmatprep.subr.bf16.mxu0 %v8946
    %9048 = vmatpush1.bf16.msra.mxu0 %v8945
    %9049 = vmatprep.subr.bf16.mxu0 %v8950
    %9050 = vmatpush1.bf16.msra.mxu0 %v8949
    %9051 = vmatprep.subr.bf16.mxu0 %v8954
    %9052 = vmatpush1.bf16.msra.mxu0 %v8953
    %9053 = vmatprep.mubr.bf16.mxu0 %v8632
    %9054 = vmatmul.mubr.bf16.gmra.mrb[0].mxu0 %v8631
    %v9055 = vpop.f32.mrb[0].mxu0
    %v9056 = vadd.f32 %v8697, %v9055
    %v9057 = vpop.f32.mrb[0].mxu0
    %v9058 = vadd.f32 %v8698, %v9057
    %v9059 = vpop.f32.mrb[0].mxu0
    %v9060 = vpop.f32.mrb[0].mxu0
    %9061 = vdwg.mxu0
    %9062 = vmatprep.subr.bf16.mxu0 %v8896
    %9063 = vmatpush1.bf16.msra.mxu0 %v8895
    %9064 = vmatprep.subr.bf16.mxu0 %v8900
    %9065 = vmatpush1.bf16.msra.mxu0 %v8899
    %9066 = vmatprep.subr.bf16.mxu0 %v8904
    %9067 = vmatpush1.bf16.msra.mxu0 %v8903
    %9068 = vmatprep.subr.bf16.mxu0 %v8908
    %9069 = vmatpush1.bf16.msra.mxu0 %v8907
    %9070 = vmatprep.subr.bf16.mxu0 %v8912
    %9071 = vmatpush1.bf16.msra.mxu0 %v8911
    %9072 = vmatprep.subr.bf16.mxu0 %v8916
    %9073 = vmatpush1.bf16.msra.mxu0 %v8915
    %9074 = vmatprep.subr.bf16.mxu0 %v8920
    %9075 = vmatpush1.bf16.msra.mxu0 %v8919
    %9076 = vmatprep.subr.bf16.mxu0 %v8924
    %9077 = vmatpush1.bf16.msra.mxu0 %v8923
    %9078 = vmatprep.subr.bf16.mxu0 %v8928
    %9079 = vmatpush1.bf16.msra.mxu0 %v8927
    %9080 = vmatprep.subr.bf16.mxu0 %v8932
    %9081 = vmatpush1.bf16.msra.mxu0 %v8931
    %9082 = vmatprep.subr.bf16.mxu0 %v8936
    %9083 = vmatpush1.bf16.msra.mxu0 %v8935
    %9084 = vmatprep.subr.bf16.mxu0 %v8940
    %9085 = vmatpush1.bf16.msra.mxu0 %v8939
    %9086 = vmatprep.subr.bf16.mxu0 %v8944
    %9087 = vmatpush1.bf16.msra.mxu0 %v8943
    %9088 = vmatprep.subr.bf16.mxu0 %v8948
    %9089 = vmatpush1.bf16.msra.mxu0 %v8947
    %9090 = vmatprep.subr.bf16.mxu0 %v8952
    %9091 = vmatpush1.bf16.msra.mxu0 %v8951
    %9092 = vmatprep.subr.bf16.mxu0 %v8956
    %9093 = vmatpush1.bf16.msra.mxu0 %v8955
    %9094 = vmatprep.mubr.bf16.mxu0 %v8632
    %9095 = vmatmul.mubr.bf16.gmra.mrb[0].mxu0 %v8631
    %v9096 = vpop.f32.mrb[0].mxu0
    %v9097 = vadd.f32 %v8699, %v9096
    %v9098 = vpop.f32.mrb[0].mxu0
    %v9099 = vadd.f32 %v8700, %v9098
    %v9100 = vpop.f32.mrb[0].mxu0
    %v9101 = vpop.f32.mrb[0].mxu0
    %9102 = vdwg.mxu0
    %v9103 = vxor.u32 %v9056, 2147483648
    %v9104 = vmul.f32 %v9103, 1.442695
    %v9105 = vpow.pop %v9104
    %v9106 = vadd.f32 %v9105, 1.0
    %v9107 = vrcp.pop %v9106
    %v9108 = vmul.f32 1.0, %v9107
    %v9109 = vxor.u32 %v9058, 2147483648
    %v9110 = vmul.f32 %v9109, 1.442695
    %v9111 = vpow.pop %v9110
    %v9112 = vadd.f32 %v9111, 1.0
    %v9113 = vrcp.pop %v9112
    %v9114 = vmul.f32 1.0, %v9113
    %v9115 = vtanh.pop %v9097
    %v9116 = vxor.u32 %v9099, 2147483648
    %v9117 = vmul.f32 %v9116, 1.442695
    %v9118 = vpow.pop %v9117
    %v9119 = vadd.f32 %v9118, 1.0
    %v9120 = vrcp.pop %v9119
    %v9121 = vmul.f32 1.0, %v9120
    %v9122 = vld [vmem:[#allocation3] sm:$0xff]
    %v9123 = vmul.f32 %v9114, %v9122
    %v9124 = vmul.f32 %v9108, %v9115
    %v9125 = vadd.f32 %v9123, %v9124
    %v9126 = vtanh.pop %v9125
    %v9127 = vmul.f32 %v9121, %v9126
    %9128 = vst [vmem:[#allocation2 + $0x8] sm:$0xff] %v9127
    %9129 = vst [vmem:[#allocation3] sm:$0xff] %v9125
    %v9130 = vpack.c.bf16 %v9127, %v9127
    %v9131 = vld [vmem:[%s8] sm:$0xf]
    %v9132 = vld [vmem:[%s8 + $0x4] sm:$0xf]
    %v9133 = vld [vmem:[%s8 + $0x8] sm:$0xf]
    %v9134 = vld [vmem:[%s8 + $0xc] sm:$0xf]
    %v9135 = vld [vmem:[%s8 + $0x10] sm:$0xf]
    %v9136 = vld [vmem:[%s8 + $0x14] sm:$0xf]
    %v9137 = vld [vmem:[%s8 + $0x18] sm:$0xf]
    %v9138 = vld [vmem:[%s8 + $0x1c] sm:$0xf]
    %v9139 = vld [vmem:[%s8 + $0x20] sm:$0xf]
    %v9140 = vld [vmem:[%s8 + $0x24] sm:$0xf]
    %v9141 = vld [vmem:[%s8 + $0x28] sm:$0xf]
    %v9142 = vld [vmem:[%s8 + $0x2c] sm:$0xf]
    %v9143 = vld [vmem:[%s8 + $0x30] sm:$0xf]
    %v9144 = vld [vmem:[%s8 + $0x34] sm:$0xf]
    %v9145 = vld [vmem:[%s8 + $0x38] sm:$0xf]
    %v9146 = vld [vmem:[%s8 + $0x3c] sm:$0xf]
    %v9147 = vld [vmem:[%s9] sm:$0xff]
    %v9164 = vunpack.c.l.b16 %v9131
    %v9165 = vunpack.c.l.b16 %v9132
    %v9166 = vunpack.c.l.b16 %v9133
    %v9167 = vunpack.c.l.b16 %v9134
    %v9168 = vunpack.c.l.b16 %v9135
    %v9169 = vunpack.c.l.b16 %v9136
    %v9170 = vunpack.c.l.b16 %v9137
    %v9171 = vunpack.c.l.b16 %v9138
    %v9172 = vunpack.c.l.b16 %v9139
    %v9173 = vunpack.c.l.b16 %v9140
    %v9174 = vunpack.c.l.b16 %v9141
    %v9175 = vunpack.c.l.b16 %v9142
    %v9176 = vunpack.c.l.b16 %v9143
    %v9177 = vunpack.c.l.b16 %v9144
    %v9178 = vunpack.c.l.b16 %v9145
    %v9179 = vunpack.c.l.b16 %v9146
    %v9180 = vpack.c.b16 %v9165, %v9164
    %v9181 = vpack.c.b16 %v9167, %v9166
    %v9182 = vpack.c.b16 %v9169, %v9168
    %v9183 = vpack.c.b16 %v9171, %v9170
    %v9184 = vpack.c.b16 %v9173, %v9172
    %v9185 = vpack.c.b16 %v9175, %v9174
    %v9186 = vpack.c.b16 %v9177, %v9176
    %v9187 = vpack.c.b16 %v9179, %v9178
    %9196 = vmatprep.subr.bf16.mxu0 0
    %9197 = vmatpush1.bf16.msra.mxu0 %v9180
    %9198 = vmatprep.subr.bf16.mxu0 0
    %9199 = vmatpush1.bf16.msra.mxu0 %v9181
    %9200 = vmatprep.subr.bf16.mxu0 0
    %9201 = vmatpush1.bf16.msra.mxu0 %v9182
    %9202 = vmatprep.subr.bf16.mxu0 0
    %9203 = vmatpush1.bf16.msra.mxu0 %v9183
    %9204 = vmatprep.subr.bf16.mxu0 0
    %9205 = vmatpush1.bf16.msra.mxu0 %v9184
    %9206 = vmatprep.subr.bf16.mxu0 0
    %9207 = vmatpush1.bf16.msra.mxu0 %v9185
    %9208 = vmatprep.subr.bf16.mxu0 0
    %9209 = vmatpush1.bf16.msra.mxu0 %v9186
    %9210 = vmatprep.subr.bf16.mxu0 0
    %9211 = vmatpush1.bf16.msra.mxu0 %v9187
    %9212 = vmatprep.subr.bf16.mxu0 0
    %9213 = vmatpush1.bf16.msra.mxu0 0
    %9214 = vmatprep.subr.bf16.mxu0 0
    %9215 = vmatpush1.bf16.msra.mxu0 0
    %9216 = vmatprep.subr.bf16.mxu0 0
    %9217 = vmatpush1.bf16.msra.mxu0 0
    %9218 = vmatprep.subr.bf16.mxu0 0
    %9219 = vmatpush1.bf16.msra.mxu0 0
    %9220 = vmatprep.subr.bf16.mxu0 0
    %9221 = vmatpush1.bf16.msra.mxu0 0
    %9222 = vmatprep.subr.bf16.mxu0 0
    %9223 = vmatpush1.bf16.msra.mxu0 0
    %9224 = vmatprep.subr.bf16.mxu0 0
    %9225 = vmatpush1.bf16.msra.mxu0 0
    %9226 = vmatprep.subr.bf16.mxu0 0
    %9227 = vmatpush1.bf16.msra.mxu0 0
    %9228 = vmatprep.mubr.bf16.mxu0 0
    %9229 = vmatmul.mubr.bf16.gmra.mrb[0].mxu0 %v9130
    %v9230 = vpop.f32.mrb[0].mxu0
    %v9231 = vadd.f32 %v9147, %v9230
    %v9232 = vpop.f32.mrb[0].mxu0
    %v9233 = vpop.f32.mrb[0].mxu0
    %v9234 = vpop.f32.mrb[0].mxu0
    %9235 = vdwg.mxu0
    %s9236 = scalar_lea.vmem [#allocation8], 56
    %9237 = vst [vmem:[%s9236] sm:$0xff] %v9231
    // Predicated region
    $region118: #{seq2seq_forward.1} parent=1 // pred_check
      _
    $region119: #{seq2seq_forward.1} parent=1 // pred_check_branch
      %9239 = sbr.rel (0) target = $region121
    $region120: #{seq2seq_forward.1} parent=1 // pred_region
      %s9241 = ssub.s32 1024, 1024
      %9242 = vsyncadd [#allocation6], %s9241
      %s9243 = sshll.u32 [#allocation8], 4
      %s9244 = int_to_ptr.vmem [resolvable:$true] %s9243
      %9249 = dma.vmem_to_hbm [thread:$0]  %s9244, 1024, %s10, [#allocation6], 128, 128, 8
    $region121: #{seq2seq_forward.1} parent=1 // pred_fallthru
      _
    // Predicated region
    $region122: #{seq2seq_forward.1} parent=1 // pred_check
      _
    $region123: #{seq2seq_forward.1} parent=1 // pred_check_branch
      %9251 = sbr.rel (0) target = $region125
    $region124: #{seq2seq_forward.1} parent=1 // pred_region
      %9252 = dma.done [#allocation6], 1024
    $region125: #{seq2seq_forward.1} parent=1 // pred_fallthru
      _
    %9253 = vsyncpa [#allocation6], 1
    %9254 = vsyncpa [#allocation7], 1

</llo_original>
